<compile_context>
chip_gen: v7x
topology: tpu7x:2x2x1
jax: 0.10.0
libtpu: 0.0.40
codegen_flags: <defaults>
</compile_context>

<pallas_src>
import math
import functools

import jax
import jax.numpy as jnp
from jax.experimental import pallas as pl
from jax.experimental.pallas import tpu as pltpu


def _mha_kernel(x_ref, w_qkv_ref, b_qkv_ref, w_o_ref, b_o_ref, o_ref,
                q_scr, k_scr, v_scr, *, heads, softmax_dtype):
    """Self-attention for one (batch, query-tile) grid step.

    x_ref:      (1, C, L)   full sequence, channels-major, f32
    w_qkv_ref:  (3C, C)     packed in_proj weight, q rows pre-scaled, bf16
    b_qkv_ref:  (3C, 1)     packed in_proj bias, q rows pre-scaled, f32
    w_o_ref:    (C, C)      out_proj.weight, bf16
    b_o_ref:    (C, 1)      out_proj.bias, f32
    o_ref:      (1, C, tq)  output tile, f32
    q/k/v_scr:  (heads, dh, L) f32 VMEM scratch, persists across q tiles
    """
    qi = pl.program_id(1)
    C = w_o_ref.shape[0]
    dh = C // heads
    L = x_ref.shape[2]
    tq = o_ref.shape[2]

    # Fused QKV projection over the full sequence, once per batch element.
    # Correct because the q-tile axis is the inner, sequential ("arbitrary")
    # grid axis, so scratch written at qi==0 is visible to every later tile.
    @pl.when(qi == 0)
    def _():
        x_all = x_ref[0].astype(jnp.bfloat16)                               # (C, L)
        qkv = jnp.dot(w_qkv_ref[...], x_all,
                      preferred_element_type=jnp.float32) + b_qkv_ref[...]  # (3C, L) f32
        q_scr[...] = qkv[:C].reshape(heads, dh, L)
        k_scr[...] = qkv[C:2 * C].reshape(heads, dh, L)
        v_scr[...] = qkv[2 * C:].reshape(heads, dh, L)

    # Slice this tile's queries straight out of VMEM scratch (no extra HBM read).
    i0 = pl.multiple_of(qi * tq, tq)
    q = q_scr[:, :, pl.ds(i0, tq)]                                          # (h, dh, tq) f32
    k = k_scr[...]                                                          # (h, dh, L)  f32

    # Scores for all heads in one batched contraction over dh (no head loop).
    s = jnp.einsum("hdq,hdk->hqk", q, k,
                   preferred_element_type=jnp.float32)                      # (h, tq, L) f32

    # Softmax over keys (lane axis).  Row-max / row-sum stay in f32; on parts
    # with bf16 EUP/VPU (v6e/v7x) the exp and normalization run in bf16.
    m = jnp.max(s, axis=-1, keepdims=True)
    if softmax_dtype == jnp.bfloat16:
        p = jnp.exp((s - m).astype(jnp.bfloat16))
        l = jnp.sum(p, axis=-1, keepdims=True, dtype=jnp.float32)
        p = p * pl.reciprocal(l, approx=True).astype(jnp.bfloat16)
    else:  # v5e and older: no bf16 VPU/EUP -> keep softmax math in f32.
        p = jnp.exp(s - m)
        l = jnp.sum(p, axis=-1, keepdims=True)
        p = (p * pl.reciprocal(l, approx=True)).astype(jnp.bfloat16)

    # Context for all heads; output comes out directly as (h, dh, tq).
    v = v_scr[...].astype(jnp.bfloat16)                                     # small cast (C*L)
    ctx = jnp.einsum("hdk,hqk->hdq", v, p,
                     preferred_element_type=jnp.float32)                    # (h, dh, tq) f32
    ctx = ctx.reshape(C, tq).astype(jnp.bfloat16)

    out = (jnp.dot(w_o_ref[...], ctx, preferred_element_type=jnp.float32)
           + b_o_ref[...])                                                  # (C, tq) f32
    o_ref[0] = out.astype(o_ref.dtype)


def _pick_tq(heads, L):
    """One tile per batch when the (h, L, L) f32 score tensor is small; else
    lane-dense 128-multiple tiles."""
    budget = 8 * 2 ** 20
    if heads * L * L * 4 <= budget:
        return L
    for t in (512, 256, 128):
        if L % t == 0 and heads * t * L * 4 <= budget:
            return t
    return 128 if L % 128 == 0 else L


def _softmax_dtype():
    """bf16 softmax math only on parts with bf16 EUP/VPU (v6e / v7x)."""
    try:
        kind = jax.devices()[0].device_kind.lower()
    except Exception:
        return jnp.float32
    if any(v in kind for v in ("v2", "v3", "v4", "v5")):
        return jnp.float32
    return jnp.bfloat16


def mha_pallas(x_bcl, w_qkv, b_qkv, w_o, b_o, *, heads, tq, softmax_dtype):
    B, C, L = x_bcl.shape
    assert C % heads == 0 and L % tq == 0
    dh = C // heads

    kernel = functools.partial(_mha_kernel, heads=heads,
                               softmax_dtype=softmax_dtype)

    # Rough live-VMEM estimate -> explicit scoped limit (v5e default is 16 MiB,
    # v6e/v7x 32 MiB); capped below v7x's 64 MiB physical VMEM.
    est = (2 * C * L * 4                      # x block (double-buffered)
           + 2 * C * tq * 4                   # out block (double-buffered)
           + 3 * heads * dh * L * 4           # q/k/v scratch
           + 2 * (3 * C * C + C * C) * 2      # weights (bf16, double-buffered)
           + 2 * (3 * C + C) * 4              # biases
           + 2 * heads * tq * L * 4)          # live scores + probabilities
    vmem_limit = int(min(max(2 * est, 32 * 2 ** 20), 56 * 2 ** 20))

    return pl.pallas_call(
        kernel,
        out_shape=jax.ShapeDtypeStruct((B, C, L), jnp.float32),
        grid_spec=pltpu.PrefetchScalarGridSpec(
            num_scalar_prefetch=0,
            grid=(B, L // tq),
            in_specs=[
                pl.BlockSpec((1, C, L), lambda b, q: (b, 0, 0)),    # full seq (QKV proj)
                pl.BlockSpec((3 * C, C), lambda b, q: (0, 0)),      # packed in_proj W
                pl.BlockSpec((3 * C, 1), lambda b, q: (0, 0)),      # packed in_proj b
                pl.BlockSpec((C, C), lambda b, q: (0, 0)),          # out_proj W
                pl.BlockSpec((C, 1), lambda b, q: (0, 0)),          # out_proj b
            ],
            out_specs=pl.BlockSpec((1, C, tq), lambda b, q: (b, 0, q)),
            scratch_shapes=[
                pltpu.VMEM((heads, dh, L), jnp.float32),   # Q (full seq)
                pltpu.VMEM((heads, dh, L), jnp.float32),   # K
                pltpu.VMEM((heads, dh, L), jnp.float32),   # V
            ],
        ),
        compiler_params=pltpu.CompilerParams(
            dimension_semantics=("parallel", "arbitrary"),
            vmem_limit_bytes=vmem_limit),
    )(x_bcl, w_qkv, b_qkv, w_o, b_o)


def multi_head_attention_forward(x_nchw, params, *, heads):
    """Mirrors multi_head_attention.forward: (B,C,H,W) -> (B,C,H,W)."""
    B, C, H, W = x_nchw.shape
    L = H * W
    dh = C // heads
    scale = 1.0 / math.sqrt(dh)

    # NCHW -> (B, C, L) and back are free views; the kernel is channels-major.
    x_bcl = x_nchw.reshape(B, C, L)

    # One-time parameter prep: fold the 1/sqrt(dh) query scale into the q rows
    # of the packed in_proj weight/bias, keep weights in bf16 for the MXU and
    # biases in f32.
    w_in = params["in_proj_weight"]
    b_in = params["in_proj_bias"]
    w_qkv = jnp.concatenate([w_in[:C] * scale, w_in[C:]], axis=0).astype(jnp.bfloat16)
    b_qkv = jnp.concatenate([b_in[:C] * scale, b_in[C:]], axis=0)[:, None].astype(jnp.float32)
    w_o = params["out_proj_weight"].astype(jnp.bfloat16)
    b_o = params["out_proj_bias"][:, None].astype(jnp.float32)

    tq = _pick_tq(heads, L)
    out_bcl = mha_pallas(x_bcl, w_qkv, b_qkv, w_o, b_o,
                         heads=heads, tq=tq, softmax_dtype=_softmax_dtype())
    return out_bcl.reshape(B, C, H, W)


def _reference_forward(x_nchw, params, *, heads):
    """Plain-JAX f32 reference of nn.MultiheadAttention self-attention."""
    B, C, H, W = x_nchw.shape
    L = H * W
    dh = C // heads
    x = jnp.transpose(x_nchw.reshape(B, C, L), (0, 2, 1)).astype(jnp.float32)  # (B,L,C)
    qkv = jnp.einsum("blc,dc->bld", x, params["in_proj_weight"]) \
        + params["in_proj_bias"]
    q, k, v = qkv[..., :C], qkv[..., C:2 * C], qkv[..., 2 * C:]

    def split_heads(t):  # (B, L, C) -> (B, heads, L, dh)
        return jnp.transpose(t.reshape(B, L, heads, dh), (0, 2, 1, 3))

    q, k, v = split_heads(q) / math.sqrt(dh), split_heads(k), split_heads(v)
    s = jnp.einsum("bhqd,bhkd->bhqk", q, k)
    p = jax.nn.softmax(s, axis=-1)
    o = jnp.einsum("bhqk,bhkd->bhqd", p, v)
    o = jnp.transpose(o, (0, 2, 1, 3)).reshape(B, L, C)
    o = jnp.einsum("blc,dc->bld", o, params["out_proj_weight"]) \
        + params["out_proj_bias"]
    return jnp.transpose(o, (0, 2, 1)).reshape(B, C, H, W)


if __name__ == "__main__":
    B, C, H, W = 2, 64, 16, 16     # L = 256 -> one lane-dense 256-wide q tile per batch
    heads = 8
    assert C % heads == 0

    key = jax.random.PRNGKey(0)
    kx, k1, k2, k3, k4 = jax.random.split(key, 5)

    x = jax.random.normal(kx, (B, C, H, W), dtype=jnp.float32)

    # Deterministic synthetic parameters (shapes follow nn.MultiheadAttention(C, heads)).
    params = {
        "in_proj_weight": 0.05 * jax.random.normal(k1, (3 * C, C), dtype=jnp.float32),
        "in_proj_bias": 0.05 * jax.random.normal(k2, (3 * C,), dtype=jnp.float32),
        "out_proj_weight": 0.05 * jax.random.normal(k3, (C, C), dtype=jnp.float32),
        "out_proj_bias": 0.05 * jax.random.normal(k4, (C,), dtype=jnp.float32),
    }

    out = multi_head_attention_forward(x, params, heads=heads)
    out = jax.block_until_ready(out)
    assert out.shape == (B, C, H, W)

    ref = _reference_forward(x, params, heads=heads)
    # bf16 MXU / (optionally) bf16 softmax path vs f32 reference -> loosened tolerance.
    err = float(jnp.max(jnp.abs(out - ref)))
    assert jnp.allclose(out, ref, atol=2e-2, rtol=2e-2), err

    print("KERNEL_OK")
</pallas_src>

<mosaic_0001>
module attributes {stable_mosaic.version = 11 : i64} {
  func.func @_mha_kernel(%arg0: i32, %arg1: i32, %arg2: memref<1x64x256xf32, #tpu.memory_space<vmem>>, %arg3: memref<192x64xbf16, #tpu.memory_space<vmem>>, %arg4: memref<192x1xf32, #tpu.memory_space<vmem>>, %arg5: memref<64x64xbf16, #tpu.memory_space<vmem>>, %arg6: memref<64x1xf32, #tpu.memory_space<vmem>>, %arg7: memref<1x64x256xf32, #tpu.memory_space<vmem>>, %arg8: memref<8x8x256xf32, #tpu.memory_space<vmem>>, %arg9: memref<8x8x256xf32, #tpu.memory_space<vmem>>, %arg10: memref<8x8x256xf32, #tpu.memory_space<vmem>>) attributes {dimension_semantics = [#tpu.dimension_semantics<parallel>, #tpu.dimension_semantics<arbitrary>], iteration_bounds = array<i64: 2, 1>, scalar_prefetch = 0 : i64, scratch_operands = 3 : i64, tpu.core_type = #tpu.core_type<tc>, window_params = [{transform_indices = @transform_0, window_bounds = array<i64: 1, 64, 256>}, {pipeline_mode = #tpu.pipeline_mode<synchronous>, transform_indices = @transform_1, window_bounds = array<i64: 192, 64>}, {pipeline_mode = #tpu.pipeline_mode<synchronous>, transform_indices = @transform_2, window_bounds = array<i64: 192, 1>}, {pipeline_mode = #tpu.pipeline_mode<synchronous>, transform_indices = @transform_3, window_bounds = array<i64: 64, 64>}, {pipeline_mode = #tpu.pipeline_mode<synchronous>, transform_indices = @transform_4, window_bounds = array<i64: 64, 1>}, {transform_indices = @transform_5, window_bounds = array<i64: 1, 64, 256>}]} {
    %c0_i32 = arith.constant 0 : i32
    %0 = arith.cmpi eq, %arg1, %c0_i32 : i32
    %1 = arith.extui %0 : i1 to i32
    %c0_i32_0 = arith.constant 0 : i32
    %2 = arith.cmpi ne, %1, %c0_i32_0 : i32
    scf.if %2 {
      %c0_19 = arith.constant 0 : index
      %c0_20 = arith.constant 0 : index
      %c0_21 = arith.constant 0 : index
      %35 = vector.load %arg2[%c0_19, %c0_20, %c0_21] : memref<1x64x256xf32, #tpu.memory_space<vmem>>, vector<1x64x256xf32>
      %36 = vector.shape_cast %35 : vector<1x64x256xf32> to vector<64x256xf32>
      %37 = arith.truncf %36 : vector<64x256xf32> to vector<64x256xbf16>
      %c0_22 = arith.constant 0 : index
      %c0_23 = arith.constant 0 : index
      %38 = vector.load %arg3[%c0_22, %c0_23] : memref<192x64xbf16, #tpu.memory_space<vmem>>, vector<192x64xbf16>
      %cst_24 = arith.constant dense<0.000000e+00> : vector<192x256xf32>
      %39 = tpu.matmul %38, %37, %cst_24 {dimension_numbers = #tpu.dot_dimension_numbers<[1], [0], [0], [1], [0, 0, 1, 1], [], []>} : vector<192x64xbf16>, vector<64x256xbf16>, vector<192x256xf32> -> vector<192x256xf32>
      %c0_25 = arith.constant 0 : index
      %c0_26 = arith.constant 0 : index
      %40 = vector.load %arg4[%c0_25, %c0_26] : memref<192x1xf32, #tpu.memory_space<vmem>>, vector<192x1xf32>
      %41 = vector.broadcast %40 : vector<192x1xf32> to vector<192x256xf32>
      %42 = arith.addf %39, %41 : vector<192x256xf32>
      %43 = vector.extract_strided_slice %42 {offsets = [0, 0], sizes = [64, 256], strides = [1, 1]} : vector<192x256xf32> to vector<64x256xf32>
      %44 = vector.shape_cast %43 : vector<64x256xf32> to vector<8x8x256xf32>
      %c0_27 = arith.constant 0 : index
      %c0_28 = arith.constant 0 : index
      %c0_29 = arith.constant 0 : index
      %45 = vector.load %arg8[%c0_27, %c0_28, %c0_29] : memref<8x8x256xf32, #tpu.memory_space<vmem>>, vector<8x8x256xf32>
      tpu.vector_store %arg8[%c0_27, %c0_28, %c0_29], %44 {strides = array<i32>} : memref<8x8x256xf32, #tpu.memory_space<vmem>>, vector<8x8x256xf32>,
      %46 = vector.extract_strided_slice %42 {offsets = [64, 0], sizes = [64, 256], strides = [1, 1]} : vector<192x256xf32> to vector<64x256xf32>
      %47 = vector.shape_cast %46 : vector<64x256xf32> to vector<8x8x256xf32>
      %c0_30 = arith.constant 0 : index
      %c0_31 = arith.constant 0 : index
      %c0_32 = arith.constant 0 : index
      %48 = vector.load %arg9[%c0_30, %c0_31, %c0_32] : memref<8x8x256xf32, #tpu.memory_space<vmem>>, vector<8x8x256xf32>
      tpu.vector_store %arg9[%c0_30, %c0_31, %c0_32], %47 {strides = array<i32>} : memref<8x8x256xf32, #tpu.memory_space<vmem>>, vector<8x8x256xf32>,
      %49 = vector.extract_strided_slice %42 {offsets = [128, 0], sizes = [64, 256], strides = [1, 1]} : vector<192x256xf32> to vector<64x256xf32>
      %50 = vector.shape_cast %49 : vector<64x256xf32> to vector<8x8x256xf32>
      %c0_33 = arith.constant 0 : index
      %c0_34 = arith.constant 0 : index
      %c0_35 = arith.constant 0 : index
      %51 = vector.load %arg10[%c0_33, %c0_34, %c0_35] : memref<8x8x256xf32, #tpu.memory_space<vmem>>, vector<8x8x256xf32>
      tpu.vector_store %arg10[%c0_33, %c0_34, %c0_35], %50 {strides = array<i32>} : memref<8x8x256xf32, #tpu.memory_space<vmem>>, vector<8x8x256xf32>,
    } else {
    }
    %c256_i32 = arith.constant 256 : i32
    %3 = arith.muli %arg1, %c256_i32 : i32
    %4 = tpu.assume_multiple %3, 256 : i32
    %c0 = arith.constant 0 : index
    %c0_1 = arith.constant 0 : index
    %5 = arith.index_cast %4 : i32 to index
    %6 = vector.load %arg8[%c0, %c0_1, %5] : memref<8x8x256xf32, #tpu.memory_space<vmem>>, vector<8x8x256xf32>
    %c0_2 = arith.constant 0 : index
    %c0_3 = arith.constant 0 : index
    %c0_4 = arith.constant 0 : index
    %7 = vector.load %arg9[%c0_2, %c0_3, %c0_4] : memref<8x8x256xf32, #tpu.memory_space<vmem>>, vector<8x8x256xf32>
    "tpu.trace_start"() <{level = 10 : i32, message = "hdq,hdk->hqk"}> : () -> ()
    %cst = arith.constant dense<0.000000e+00> : vector<8x256x256xf32>
    %8 = tpu.matmul %6, %7, %cst {dimension_numbers = #tpu.dot_dimension_numbers<[1], [1], [2], [2], [0, 0, 0, 2, 1, 2], [0], [0]>} : vector<8x8x256xf32>, vector<8x8x256xf32>, vector<8x256x256xf32> -> vector<8x256x256xf32>
    "tpu.trace_stop"() : () -> ()
    %cst_5 = arith.constant dense<0xFF800000> : vector<8x256xf32>
    %9 = vector.multi_reduction <maximumf>, %8, %cst_5 [2] : vector<8x256x256xf32> to vector<8x256xf32>
    %10 = vector.shape_cast %9 : vector<8x256xf32> to vector<8x256x1xf32>
    %11 = vector.broadcast %10 : vector<8x256x1xf32> to vector<8x256x256xf32>
    %12 = arith.subf %8, %11 : vector<8x256x256xf32>
    %13 = arith.truncf %12 : vector<8x256x256xf32> to vector<8x256x256xbf16>
    %14 = math.exp %13 : vector<8x256x256xbf16>
    %15 = arith.extf %14 : vector<8x256x256xbf16> to vector<8x256x256xf32>
    %cst_6 = arith.constant dense<0.000000e+00> : vector<8x256xf32>
    %16 = vector.multi_reduction <add>, %15, %cst_6 [2] : vector<8x256x256xf32> to vector<8x256xf32>
    %17 = vector.shape_cast %16 : vector<8x256xf32> to vector<8x256x1xf32>
    %18 = tpu.reciprocal %17 {approx = true} : vector<8x256x1xf32> -> vector<8x256x1xf32>
    %19 = arith.truncf %18 : vector<8x256x1xf32> to vector<8x256x1xbf16>
    %20 = vector.broadcast %19 : vector<8x256x1xbf16> to vector<8x256x256xbf16>
    %21 = arith.mulf %14, %20 : vector<8x256x256xbf16>
    %c0_7 = arith.constant 0 : index
    %c0_8 = arith.constant 0 : index
    %c0_9 = arith.constant 0 : index
    %22 = vector.load %arg10[%c0_7, %c0_8, %c0_9] : memref<8x8x256xf32, #tpu.memory_space<vmem>>, vector<8x8x256xf32>
    %23 = arith.truncf %22 : vector<8x8x256xf32> to vector<8x8x256xbf16>
    "tpu.trace_start"() <{level = 10 : i32, message = "hdk,hqk->hdq"}> : () -> ()
    %cst_10 = arith.constant dense<0.000000e+00> : vector<8x8x256xf32>
    %24 = tpu.matmul %23, %21, %cst_10 {dimension_numbers = #tpu.dot_dimension_numbers<[2], [2], [1], [1], [0, 0, 0, 1, 1, 1], [0], [0]>} : vector<8x8x256xbf16>, vector<8x256x256xbf16>, vector<8x8x256xf32> -> vector<8x8x256xf32>
    "tpu.trace_stop"() : () -> ()
    %25 = vector.shape_cast %24 : vector<8x8x256xf32> to vector<64x256xf32>
    %26 = arith.truncf %25 : vector<64x256xf32> to vector<64x256xbf16>
    %c0_11 = arith.constant 0 : index
    %c0_12 = arith.constant 0 : index
    %27 = vector.load %arg5[%c0_11, %c0_12] : memref<64x64xbf16, #tpu.memory_space<vmem>>, vector<64x64xbf16>
    %cst_13 = arith.constant dense<0.000000e+00> : vector<64x256xf32>
    %28 = tpu.matmul %27, %26, %cst_13 {dimension_numbers = #tpu.dot_dimension_numbers<[1], [0], [0], [1], [0, 0, 1, 1], [], []>} : vector<64x64xbf16>, vector<64x256xbf16>, vector<64x256xf32> -> vector<64x256xf32>
    %c0_14 = arith.constant 0 : index
    %c0_15 = arith.constant 0 : index
    %29 = vector.load %arg6[%c0_14, %c0_15] : memref<64x1xf32, #tpu.memory_space<vmem>>, vector<64x1xf32>
    %30 = vector.broadcast %29 : vector<64x1xf32> to vector<64x256xf32>
    %31 = arith.addf %28, %30 : vector<64x256xf32>
    %c0_16 = arith.constant 0 : index
    %c0_17 = arith.constant 0 : index
    %c0_18 = arith.constant 0 : index
    %32 = vector.load %arg7[%c0_16, %c0_17, %c0_18] : memref<1x64x256xf32, #tpu.memory_space<vmem>>, vector<1x64x256xf32>
    %33 = vector.shape_cast %32 : vector<1x64x256xf32> to vector<64x256xf32>
    %34 = vector.shape_cast %31 : vector<64x256xf32> to vector<1x64x256xf32>
    tpu.vector_store %arg7[%c0_16, %c0_17, %c0_18], %34 {strides = array<i32>} : memref<1x64x256xf32, #tpu.memory_space<vmem>>, vector<1x64x256xf32>,
    return
  }
  func.func @transform_0(%arg0: i32, %arg1: i32) -> (i32, i32, i32) {
    %c0_i32 = arith.constant 0 : i32
    %c0_i32_0 = arith.constant 0 : i32
    %c0_i32_1 = arith.constant 0 : i32
    return %arg0, %c0_i32, %c0_i32_0 : i32, i32, i32
  }
  func.func @transform_1(%arg0: i32, %arg1: i32) -> (i32, i32) {
    %c0_i32 = arith.constant 0 : i32
    %c0_i32_0 = arith.constant 0 : i32
    %c0_i32_1 = arith.constant 0 : i32
    return %c0_i32, %c0_i32_0 : i32, i32
  }
  func.func @transform_2(%arg0: i32, %arg1: i32) -> (i32, i32) {
    %c0_i32 = arith.constant 0 : i32
    %c0_i32_0 = arith.constant 0 : i32
    %c0_i32_1 = arith.constant 0 : i32
    return %c0_i32, %c0_i32_0 : i32, i32
  }
  func.func @transform_3(%arg0: i32, %arg1: i32) -> (i32, i32) {
    %c0_i32 = arith.constant 0 : i32
    %c0_i32_0 = arith.constant 0 : i32
    %c0_i32_1 = arith.constant 0 : i32
    return %c0_i32, %c0_i32_0 : i32, i32
  }
  func.func @transform_4(%arg0: i32, %arg1: i32) -> (i32, i32) {
    %c0_i32 = arith.constant 0 : i32
    %c0_i32_0 = arith.constant 0 : i32
    %c0_i32_1 = arith.constant 0 : i32
    return %c0_i32, %c0_i32_0 : i32, i32
  }
  func.func @transform_5(%arg0: i32, %arg1: i32) -> (i32, i32, i32) {
    %c0_i32 = arith.constant 0 : i32
    %c0_i32_0 = arith.constant 0 : i32
    return %arg0, %c0_i32, %arg1 : i32, i32, i32
  }
}

</mosaic_0001>

<llo_original>
// kernel: tpu_custom_call.1
$region0: #{tpu_custom_call.1}
  #allocation0 [shape = 'u32[]', space=smem, size = 0x4, offset = 0x4, fixed_abs, tag = 'smem constant byte address 0x4 - core index']
  #allocation1 [shape = 'u32[144,128]{1,0:T(1,128)}', space=vmem, size = 0x12000, scoped, tag = 'internal scratch']
  #allocation2 [shape = 'f32[8,8,256]{2,1,0:T(8,128)}', space=vmem, size = 0x10000, scoped, tag = 'scratch operand']
  #allocation3 [shape = 'f32[8,8,256]{2,1,0:T(8,128)}', space=vmem, size = 0x10000, scoped, tag = 'scratch operand']
  #allocation4 [shape = 'f32[8,8,256]{2,1,0:T(8,128)}', space=vmem, size = 0x10000, scoped, tag = 'scratch operand']
  %s0 = inlined_call_operand.vmem [shape: f32[2,64,256], index: 0, kind: input, shape index: {}]
  %s1 = inlined_call_operand.vmem [shape: bf16[192,64], index: 1, kind: input, shape index: {}]
  %s2 = inlined_call_operand.vmem [shape: f32[192,1], index: 2, kind: input, shape index: {}]
  %s3 = inlined_call_operand.vmem [shape: bf16[64,64], index: 3, kind: input, shape index: {}]
  %s4 = inlined_call_operand.vmem [shape: f32[64,1], index: 4, kind: input, shape index: {}]
  %s5 = inlined_call_operand.hbm [shape: f32[2,64,256], index: 5, kind: output, shape index: {}]
  %s6 = sld [smem:[#allocation0]]
  $region57: #{tpu_custom_call.1} parent=0
    _
  %s8 = ssub.s32 1, %s6
  %s9 = scalar_select 0, %s8, %s6
  $region1: #{tpu_custom_call.1} parent=0
    #allocation5 [shape = 'u8[131072]{0}', space=vmem, size = 0x20000, scoped, tag = 'output window, operand 0']
    #allocation6 [shape = 's32[2]{0}', space=sflag, size = 0x8, scoped, tag = 'scoped memory for tpu_custom_call.1']
    %10 = vsyncpa [#allocation6], 0
    %s11 = scalar_lea.sflag [#allocation6], 1
    %12 = vsyncpa %s11, 0
    loop: start=0, step=1, limit=4
    $region2: #{tpu_custom_call.1} parent=1 // loop_pre_header
      _
    $region3: #{tpu_custom_call.1} parent=1 // loop_header
      %s14 = sphi 0, %s18
      %p15 = scmp.ge.s32.totalorder %s14, 4
      %s21 = sphi 0, %s33
      %s22 = sphi 0, %s29
      %s23 = sphi 0, %s21
      %s24 = sphi 0, %s22
      %s25 = sphi 0, %s23
      %s26 = sphi 0, %s24
      %s36 = sphi 0, %s38
      %s39 = sphi 0, %s36
      %s40 = sphi 0, %s39
      %s56 = sphi 0, %s40
      %s60 = sphi 0, %s60
      %s62 = sphi 0, %s60
      %s63 = sphi 0, %s62
      %s77 = sphi 0, %s63
      %s81 = sphi 0, %s81
      %s83 = sphi 0, %s81
      %s84 = sphi 0, %s83
      %s98 = sphi 0, %s84
      %s102 = sphi 0, %s102
      %s104 = sphi 0, %s102
      %s105 = sphi 0, %s104
      %s119 = sphi 0, %s105
      %s123 = sphi 0, %s123
      %s125 = sphi 0, %s123
      %s126 = sphi 0, %s125
      %s140 = sphi 0, %s126
      %s148 = sphi 0, %s150
      %s151 = sphi 0, %s148
      %s152 = sphi 0, %s151
      %s168 = sphi 0, %s152
    $region4: #{tpu_custom_call.1} parent=1 // loop_header_branch
      %17 = sbr.rel (%p15) target = $region8
    $region5: #{tpu_custom_call.1} parent=1 // loop_body
      %s19 = ssub.s32 %s14, 1
      %s20 = ssub.s32 %s14, 2
      %s27 = sadd.s32 1, %s22
      %p28 = scmp.ge.s32.totalorder %s27, 1
      %s29 = scalar_select %p28, 0, %s27
      %s30 = sadd.s32 1, %s21
      %s31 = scalar_select %p28, %s30, %s21
      %p32 = scmp.ge.s32.totalorder %s31, 2
      %s33 = scalar_select %p32, 0, %s31
      %s34 = ssub.s32 %s21, %s33
      %p35 = scmp.eq.s32.totalorder %s34, 0
      %s37 = sadd.s32 %s36, 1
      %s38 = scalar_select %p35, %s36, %s37
      %p41 = pneg %p35
      %p42 = scmp.eq.s32.totalorder %s14, 1
      %p43 = por %p41, %p42
      %p44 = scmp.ne.s32.totalorder %s36, %s39
      %p45 = scmp.eq.s32.totalorder %s14, 0
      %p46 = por %p44, %p45
      %p47 = scmp.ne.s32.totalorder %s36, %s39
      %p48 = scmp.eq.s32.totalorder %s19, 1
      %p49 = por %p47, %p48
      %p50 = scmp.ne.s32.totalorder %s39, %s40
      %p51 = scmp.eq.s32.totalorder %s19, 0
      %p52 = por %p50, %p51
      %p53 = scmp.ne.s32.totalorder %s39, %s40
      %p54 = scmp.eq.s32.totalorder %s20, 1
      %p55 = por %p53, %p54
      %p57 = scmp.ne.s32.totalorder %s40, %s56
      %p58 = scmp.eq.s32.totalorder %s20, 0
      %p59 = por %p57, %p58
      %s61 = sadd.s32 %s60, 1
      %p64 = scmp.eq.s32.totalorder %s14, 1
      %p65 = scmp.ne.s32.totalorder %s60, %s62
      %p66 = scmp.eq.s32.totalorder %s14, 0
      %p67 = por %p65, %p66
      %p68 = scmp.ne.s32.totalorder %s60, %s62
      %p69 = scmp.eq.s32.totalorder %s19, 1
      %p70 = por %p68, %p69
      %p71 = scmp.ne.s32.totalorder %s62, %s63
      %p72 = scmp.eq.s32.totalorder %s19, 0
      %p73 = por %p71, %p72
      %p74 = scmp.ne.s32.totalorder %s62, %s63
      %p75 = scmp.eq.s32.totalorder %s20, 1
      %p76 = por %p74, %p75
      %p78 = scmp.ne.s32.totalorder %s63, %s77
      %p79 = scmp.eq.s32.totalorder %s20, 0
      %p80 = por %p78, %p79
      %s82 = sadd.s32 %s81, 1
      %p85 = scmp.eq.s32.totalorder %s14, 1
      %p86 = scmp.ne.s32.totalorder %s81, %s83
      %p87 = scmp.eq.s32.totalorder %s14, 0
      %p88 = por %p86, %p87
      %p89 = scmp.ne.s32.totalorder %s81, %s83
      %p90 = scmp.eq.s32.totalorder %s19, 1
      %p91 = por %p89, %p90
      %p92 = scmp.ne.s32.totalorder %s83, %s84
      %p93 = scmp.eq.s32.totalorder %s19, 0
      %p94 = por %p92, %p93
      %p95 = scmp.ne.s32.totalorder %s83, %s84
      %p96 = scmp.eq.s32.totalorder %s20, 1
      %p97 = por %p95, %p96
      %p99 = scmp.ne.s32.totalorder %s84, %s98
      %p100 = scmp.eq.s32.totalorder %s20, 0
      %p101 = por %p99, %p100
      %s103 = sadd.s32 %s102, 1
      %p106 = scmp.eq.s32.totalorder %s14, 1
      %p107 = scmp.ne.s32.totalorder %s102, %s104
      %p108 = scmp.eq.s32.totalorder %s14, 0
      %p109 = por %p107, %p108
      %p110 = scmp.ne.s32.totalorder %s102, %s104
      %p111 = scmp.eq.s32.totalorder %s19, 1
      %p112 = por %p110, %p111
      %p113 = scmp.ne.s32.totalorder %s104, %s105
      %p114 = scmp.eq.s32.totalorder %s19, 0
      %p115 = por %p113, %p114
      %p116 = scmp.ne.s32.totalorder %s104, %s105
      %p117 = scmp.eq.s32.totalorder %s20, 1
      %p118 = por %p116, %p117
      %p120 = scmp.ne.s32.totalorder %s105, %s119
      %p121 = scmp.eq.s32.totalorder %s20, 0
      %p122 = por %p120, %p121
      %s124 = sadd.s32 %s123, 1
      %p127 = scmp.eq.s32.totalorder %s14, 1
      %p128 = scmp.ne.s32.totalorder %s123, %s125
      %p129 = scmp.eq.s32.totalorder %s14, 0
      %p130 = por %p128, %p129
      %p131 = scmp.ne.s32.totalorder %s123, %s125
      %p132 = scmp.eq.s32.totalorder %s19, 1
      %p133 = por %p131, %p132
      %p134 = scmp.ne.s32.totalorder %s125, %s126
      %p135 = scmp.eq.s32.totalorder %s19, 0
      %p136 = por %p134, %p135
      %p137 = scmp.ne.s32.totalorder %s125, %s126
      %p138 = scmp.eq.s32.totalorder %s20, 1
      %p139 = por %p137, %p138
      %p141 = scmp.ne.s32.totalorder %s126, %s140
      %p142 = scmp.eq.s32.totalorder %s20, 0
      %p143 = por %p141, %p142
      %s144 = ssub.s32 %s21, %s33
      %s145 = ssub.s32 %s22, %s29
      %s146 = sor.u32 %s144, %s145
      %p147 = scmp.eq.s32.totalorder %s146, 0
      %s149 = sadd.s32 %s148, 1
      %s150 = scalar_select %p147, %s148, %s149
      %p153 = pneg %p147
      %p154 = scmp.eq.s32.totalorder %s14, 1
      %p155 = por %p153, %p154
      %p156 = scmp.ne.s32.totalorder %s148, %s151
      %p157 = scmp.eq.s32.totalorder %s14, 0
      %p158 = por %p156, %p157
      %p159 = scmp.ne.s32.totalorder %s148, %s151
      %p160 = scmp.eq.s32.totalorder %s19, 1
      %p161 = por %p159, %p160
      %p162 = scmp.ne.s32.totalorder %s151, %s152
      %p163 = scmp.eq.s32.totalorder %s19, 0
      %p164 = por %p162, %p163
      %p165 = scmp.ne.s32.totalorder %s151, %s152
      %p166 = scmp.eq.s32.totalorder %s20, 1
      %p167 = por %p165, %p166
      %p169 = scmp.ne.s32.totalorder %s152, %s168
      %p170 = scmp.eq.s32.totalorder %s20, 0
      %p171 = por %p169, %p170
      %p172 = scmp.le.s32.totalorder 1, %s14
      %p173 = scmp.lt.s32.totalorder %s14, 3
      %p174 = pnand %p172, %p173
      %p175 = pneg %p174
      // Predicated region
      $region9: #{tpu_custom_call.1} parent=5 // pred_check
        _
      $region10: #{tpu_custom_call.1} parent=5 // pred_check_branch
        %177 = sbr.rel (%p174) target = $region12
      $region11: #{tpu_custom_call.1} parent=5 // pred_region
        %s178 = ssub.s32 %s14, 1
        // Predicated region
        $region13: #{tpu_custom_call.1} parent=11 // pred_check
          %p179 = pneg %p73
        $region14: #{tpu_custom_call.1} parent=11 // pred_check_branch
          %181 = sbr.rel (%p179) target = $region16
        $region15: #{tpu_custom_call.1} parent=11 // pred_region
          _
        $region16: #{tpu_custom_call.1} parent=11 // pred_fallthru
          _
        // Predicated region
        $region17: #{tpu_custom_call.1} parent=11 // pred_check
          %p182 = pneg %p94
        $region18: #{tpu_custom_call.1} parent=11 // pred_check_branch
          %184 = sbr.rel (%p182) target = $region20
        $region19: #{tpu_custom_call.1} parent=11 // pred_region
          _
        $region20: #{tpu_custom_call.1} parent=11 // pred_fallthru
          _
        // Predicated region
        $region21: #{tpu_custom_call.1} parent=11 // pred_check
          %p185 = pneg %p115
        $region22: #{tpu_custom_call.1} parent=11 // pred_check_branch
          %187 = sbr.rel (%p185) target = $region24
        $region23: #{tpu_custom_call.1} parent=11 // pred_region
          _
        $region24: #{tpu_custom_call.1} parent=11 // pred_fallthru
          _
        // Predicated region
        $region25: #{tpu_custom_call.1} parent=11 // pred_check
          %p188 = pneg %p136
        $region26: #{tpu_custom_call.1} parent=11 // pred_check_branch
          %190 = sbr.rel (%p188) target = $region28
        $region27: #{tpu_custom_call.1} parent=11 // pred_region
          _
        $region28: #{tpu_custom_call.1} parent=11 // pred_fallthru
          _
      $region12: #{tpu_custom_call.1} parent=5 // pred_fallthru
        _
      %p191 = scmp.lt.s32.totalorder %s14, 2
      // Predicated region
      $region29: #{tpu_custom_call.1} parent=5 // pred_check
        %p192 = pneg %p191
      $region30: #{tpu_custom_call.1} parent=5 // pred_check_branch
        %194 = sbr.rel (%p192) target = $region32
      $region31: #{tpu_custom_call.1} parent=5 // pred_region
        // Predicated region
        $region33: #{tpu_custom_call.1} parent=31 // pred_check
          %p195 = pneg %p46
        $region34: #{tpu_custom_call.1} parent=31 // pred_check_branch
          %197 = sbr.rel (%p195) target = $region36
        $region35: #{tpu_custom_call.1} parent=31 // pred_region
          %p198 = scmp.lt.s32.totalorder %s21, 1
          %s199 = scalar_select %p198, %s21, 1
          %s200 = smul.addr %s199, 16
          %s201 = smul.addr %s200, 8
          %s202 = scalar_lea.vmem %s0, %s201
        $region36: #{tpu_custom_call.1} parent=31 // pred_fallthru
          _
      $region32: #{tpu_custom_call.1} parent=5 // pred_fallthru
        _
      %p203 = scmp.le.s32.totalorder 1, %s14
      %p204 = scmp.lt.s32.totalorder %s14, 3
      %p205 = pnand %p203, %p204
      %p206 = pneg %p205
      // Predicated region
      $region37: #{tpu_custom_call.1} parent=5 // pred_check
        _
      $region38: #{tpu_custom_call.1} parent=5 // pred_check_branch
        %208 = sbr.rel (%p205) target = $region40
      $region39: #{tpu_custom_call.1} parent=5 // pred_region
        %s209 = ssub.s32 %s14, 1
        %p210 = scmp.lt.s32.totalorder %s23, 1
        %s211 = scalar_select %p210, %s23, 1
        %s212 = smul.addr %s211, 16
        %s213 = smul.addr %s212, 8
        %s214 = scalar_lea.vmem %s0, %s213
        %p215 = pneg %p52
        %p216 = pneg %p49
        %p217 = pneg %p73
        %p218 = pneg %p70
        %p219 = pneg %p94
        %p220 = pneg %p91
        %p221 = pneg %p115
        %p222 = pneg %p112
        %p223 = pneg %p136
        %p224 = pneg %p133
        %p225 = pneg %p164
        %p226 = pneg %p161
        %s227 = sand.u32 %s151, 1
        %s228 = scalar_lea.sflag [#allocation6], %s227
        %s229 = sand.u32 %s151, 1
        %s230 = smul.addr %s229, 128
        %s231 = scalar_lea.vmem [#allocation5], %s230
        %p232 = scmp.lt.s32.totalorder %s23, 1
        %s233 = scalar_select %p232, %s23, 1
        %s234 = smul.addr %s233, 16
        %s235 = smul.addr %s234, 8
        %s236 = scalar_lea.vmem %s0, %s235
        %s237 = smul.u32 2, %s24
        %p239 = scmp.eq.s32.totalorder %s24, 0
        // Predicated region
        $region41: #{tpu_custom_call.1} parent=39 // pred_check
          %p240 = pneg %p239
        $region42: #{tpu_custom_call.1} parent=39 // pred_check_branch
          %242 = sbr.rel (%p240) target = $region44
        $region43: #{tpu_custom_call.1} parent=39 // pred_region
          %v243 = vld [vmem:[%s236] sm:$0xff]
          %v244 = vld [vmem:[%s236 + $0x8] sm:$0xff]
          %v245 = vld [vmem:[%s236 + $0x10] sm:$0xff]
          %v246 = vld [vmem:[%s236 + $0x18] sm:$0xff]
          %v247 = vld [vmem:[%s236 + $0x20] sm:$0xff]
          %v248 = vld [vmem:[%s236 + $0x28] sm:$0xff]
          %v249 = vld [vmem:[%s236 + $0x30] sm:$0xff]
          %v250 = vld [vmem:[%s236 + $0x38] sm:$0xff]
          %v251 = vld [vmem:[%s236 + $0x40] sm:$0xff]
          %v252 = vld [vmem:[%s236 + $0x48] sm:$0xff]
          %v253 = vld [vmem:[%s236 + $0x50] sm:$0xff]
          %v254 = vld [vmem:[%s236 + $0x58] sm:$0xff]
          %v255 = vld [vmem:[%s236 + $0x60] sm:$0xff]
          %v256 = vld [vmem:[%s236 + $0x68] sm:$0xff]
          %v257 = vld [vmem:[%s236 + $0x70] sm:$0xff]
          %v258 = vld [vmem:[%s236 + $0x78] sm:$0xff]
          %v259 = vpack.c.bf16 %v245, %v243
          %v260 = vpack.c.bf16 %v246, %v244
          %v261 = vpack.c.bf16 %v249, %v247
          %v262 = vpack.c.bf16 %v250, %v248
          %v263 = vpack.c.bf16 %v253, %v251
          %v264 = vpack.c.bf16 %v254, %v252
          %v265 = vpack.c.bf16 %v257, %v255
          %v266 = vpack.c.bf16 %v258, %v256
          %v267 = vld [vmem:[%s1] sm:$0xf]
          %v268 = vld [vmem:[%s1 + $0x4] sm:$0xf]
          %v269 = vld [vmem:[%s1 + $0x8] sm:$0xf]
          %v270 = vld [vmem:[%s1 + $0xc] sm:$0xf]
          %v271 = vld [vmem:[%s1 + $0x10] sm:$0xf]
          %v272 = vld [vmem:[%s1 + $0x14] sm:$0xf]
          %v273 = vld [vmem:[%s1 + $0x18] sm:$0xf]
          %v274 = vld [vmem:[%s1 + $0x1c] sm:$0xf]
          %v275 = vld [vmem:[%s1 + $0x20] sm:$0xf]
          %v276 = vld [vmem:[%s1 + $0x24] sm:$0xf]
          %v277 = vld [vmem:[%s1 + $0x28] sm:$0xf]
          %v278 = vld [vmem:[%s1 + $0x2c] sm:$0xf]
          %v279 = vld [vmem:[%s1 + $0x30] sm:$0xf]
          %v280 = vld [vmem:[%s1 + $0x34] sm:$0xf]
          %v281 = vld [vmem:[%s1 + $0x38] sm:$0xf]
          %v282 = vld [vmem:[%s1 + $0x3c] sm:$0xf]
          %v283 = vld [vmem:[%s1 + $0x40] sm:$0xf]
          %v284 = vld [vmem:[%s1 + $0x44] sm:$0xf]
          %v285 = vld [vmem:[%s1 + $0x48] sm:$0xf]
          %v286 = vld [vmem:[%s1 + $0x4c] sm:$0xf]
          %v287 = vld [vmem:[%s1 + $0x50] sm:$0xf]
          %v288 = vld [vmem:[%s1 + $0x54] sm:$0xf]
          %v289 = vld [vmem:[%s1 + $0x58] sm:$0xf]
          %v290 = vld [vmem:[%s1 + $0x5c] sm:$0xf]
          %v291 = vld [vmem:[%s2] sm:$0xff]
          %v292 = vld [vmem:[%s2 + $0x8] sm:$0xff]
          %v293 = vld [vmem:[%s2 + $0x10] sm:$0xff]
          %v294 = vld [vmem:[%s2 + $0x18] sm:$0xff]
          %v295 = vld [vmem:[%s2 + $0x20] sm:$0xff]
          %v296 = vld [vmem:[%s2 + $0x28] sm:$0xff]
          %v297 = vld [vmem:[%s2 + $0x30] sm:$0xff]
          %v298 = vld [vmem:[%s2 + $0x38] sm:$0xff]
          %v299 = vld [vmem:[%s2 + $0x40] sm:$0xff]
          %v300 = vld [vmem:[%s2 + $0x48] sm:$0xff]
          %v301 = vld [vmem:[%s2 + $0x50] sm:$0xff]
          %v302 = vld [vmem:[%s2 + $0x58] sm:$0xff]
          %v303 = vld [vmem:[%s2 + $0x60] sm:$0xff]
          %v304 = vld [vmem:[%s2 + $0x68] sm:$0xff]
          %v305 = vld [vmem:[%s2 + $0x70] sm:$0xff]
          %v306 = vld [vmem:[%s2 + $0x78] sm:$0xff]
          %v307 = vld [vmem:[%s2 + $0x80] sm:$0xff]
          %v308 = vld [vmem:[%s2 + $0x88] sm:$0xff]
          %v309 = vld [vmem:[%s2 + $0x90] sm:$0xff]
          %v310 = vld [vmem:[%s2 + $0x98] sm:$0xff]
          %v311 = vld [vmem:[%s2 + $0xa0] sm:$0xff]
          %v312 = vld [vmem:[%s2 + $0xa8] sm:$0xff]
          %v313 = vld [vmem:[%s2 + $0xb0] sm:$0xff]
          %v314 = vld [vmem:[%s2 + $0xb8] sm:$0xff]
          %316 = vset.pattern.permute.xlu0 0
          %317 = vperm.xlu0 %316, %v291
          %v318 = vpop.permute.xlu0 %317
          %321 = vset.pattern.permute.xlu0 0
          %322 = vperm.xlu0 %321, %v292
          %v323 = vpop.permute.xlu0 %322
          %326 = vset.pattern.permute.xlu0 0
          %327 = vperm.xlu0 %326, %v293
          %v328 = vpop.permute.xlu0 %327
          %331 = vset.pattern.permute.xlu0 0
          %332 = vperm.xlu0 %331, %v294
          %v333 = vpop.permute.xlu0 %332
          %336 = vset.pattern.permute.xlu0 0
          %337 = vperm.xlu0 %336, %v295
          %v338 = vpop.permute.xlu0 %337
          %341 = vset.pattern.permute.xlu0 0
          %342 = vperm.xlu0 %341, %v296
          %v343 = vpop.permute.xlu0 %342
          %346 = vset.pattern.permute.xlu0 0
          %347 = vperm.xlu0 %346, %v297
          %v348 = vpop.permute.xlu0 %347
          %351 = vset.pattern.permute.xlu0 0
          %352 = vperm.xlu0 %351, %v298
          %v353 = vpop.permute.xlu0 %352
          %356 = vset.pattern.permute.xlu0 0
          %357 = vperm.xlu0 %356, %v299
          %v358 = vpop.permute.xlu0 %357
          %361 = vset.pattern.permute.xlu0 0
          %362 = vperm.xlu0 %361, %v300
          %v363 = vpop.permute.xlu0 %362
          %366 = vset.pattern.permute.xlu0 0
          %367 = vperm.xlu0 %366, %v301
          %v368 = vpop.permute.xlu0 %367
          %371 = vset.pattern.permute.xlu0 0
          %372 = vperm.xlu0 %371, %v302
          %v373 = vpop.permute.xlu0 %372
          %376 = vset.pattern.permute.xlu0 0
          %377 = vperm.xlu0 %376, %v303
          %v378 = vpop.permute.xlu0 %377
          %381 = vset.pattern.permute.xlu0 0
          %382 = vperm.xlu0 %381, %v304
          %v383 = vpop.permute.xlu0 %382
          %386 = vset.pattern.permute.xlu0 0
          %387 = vperm.xlu0 %386, %v305
          %v388 = vpop.permute.xlu0 %387
          %391 = vset.pattern.permute.xlu0 0
          %392 = vperm.xlu0 %391, %v306
          %v393 = vpop.permute.xlu0 %392
          %396 = vset.pattern.permute.xlu0 0
          %397 = vperm.xlu0 %396, %v307
          %v398 = vpop.permute.xlu0 %397
          %401 = vset.pattern.permute.xlu0 0
          %402 = vperm.xlu0 %401, %v308
          %v403 = vpop.permute.xlu0 %402
          %406 = vset.pattern.permute.xlu0 0
          %407 = vperm.xlu0 %406, %v309
          %v408 = vpop.permute.xlu0 %407
          %411 = vset.pattern.permute.xlu0 0
          %412 = vperm.xlu0 %411, %v310
          %v413 = vpop.permute.xlu0 %412
          %416 = vset.pattern.permute.xlu0 0
          %417 = vperm.xlu0 %416, %v311
          %v418 = vpop.permute.xlu0 %417
          %421 = vset.pattern.permute.xlu0 0
          %422 = vperm.xlu0 %421, %v312
          %v423 = vpop.permute.xlu0 %422
          %426 = vset.pattern.permute.xlu0 0
          %427 = vperm.xlu0 %426, %v313
          %v428 = vpop.permute.xlu0 %427
          %431 = vset.pattern.permute.xlu0 0
          %432 = vperm.xlu0 %431, %v314
          %v433 = vpop.permute.xlu0 %432
          %v459 = vunpack.c.l.b16 %v267
          %v460 = vunpack.c.l.b16 %v268
          %v461 = vunpack.c.l.b16 %v269
          %v462 = vunpack.c.l.b16 %v270
          %v463 = vunpack.c.l.b16 %v271
          %v464 = vunpack.c.l.b16 %v272
          %v465 = vunpack.c.l.b16 %v273
          %v466 = vunpack.c.l.b16 %v274
          %v467 = vunpack.c.l.b16 %v275
          %v468 = vunpack.c.l.b16 %v276
          %v469 = vunpack.c.l.b16 %v277
          %v470 = vunpack.c.l.b16 %v278
          %v471 = vunpack.c.l.b16 %v279
          %v472 = vunpack.c.l.b16 %v280
          %v473 = vunpack.c.l.b16 %v281
          %v474 = vunpack.c.l.b16 %v282
          %v475 = vunpack.c.l.b16 %v283
          %v476 = vunpack.c.l.b16 %v284
          %v477 = vunpack.c.l.b16 %v285
          %v478 = vunpack.c.l.b16 %v286
          %v479 = vunpack.c.l.b16 %v287
          %v480 = vunpack.c.l.b16 %v288
          %v481 = vunpack.c.l.b16 %v289
          %v482 = vunpack.c.l.b16 %v290
          %v483 = vpack.c.b16 %v460, %v459
          %v484 = vpack.c.b16 %v462, %v461
          %v485 = vpack.c.b16 %v464, %v463
          %v486 = vpack.c.b16 %v466, %v465
          %v487 = vpack.c.b16 %v468, %v467
          %v488 = vpack.c.b16 %v470, %v469
          %v489 = vpack.c.b16 %v472, %v471
          %v490 = vpack.c.b16 %v474, %v473
          %v491 = vpack.c.b16 %v476, %v475
          %v492 = vpack.c.b16 %v478, %v477
          %v493 = vpack.c.b16 %v480, %v479
          %v494 = vpack.c.b16 %v482, %v481
          %vm495 = vcmask 523264
          %v497 = vsel %vm495, %v483, 0
          %v500 = vsel %vm495, %v484, 0
          %v503 = vsel %vm495, %v485, 0
          %v506 = vsel %vm495, %v486, 0
          %v509 = vsel %vm495, %v487, 0
          %v512 = vsel %vm495, %v488, 0
          %v515 = vsel %vm495, %v489, 0
          %v518 = vsel %vm495, %v490, 0
          %v521 = vsel %vm495, %v491, 0
          %v524 = vsel %vm495, %v492, 0
          %v527 = vsel %vm495, %v493, 0
          %v530 = vsel %vm495, %v494, 0
          %532 = vmatprep.subr.bf16.mxu0 %v260
          %533 = vmatpush1.bf16.msra.mxu0 %v259
          %534 = vmatprep.subr.bf16.mxu0 %v262
          %535 = vmatpush1.bf16.msra.mxu0 %v261
          %536 = vmatprep.subr.bf16.mxu0 %v264
          %537 = vmatpush1.bf16.msra.mxu0 %v263
          %538 = vmatprep.subr.bf16.mxu0 %v266
          %539 = vmatpush1.bf16.msra.mxu0 %v265
          %540 = vmatprep.subr.bf16.mxu0 0
          %541 = vmatpush1.bf16.msra.mxu0 0
          %542 = vmatprep.subr.bf16.mxu0 0
          %543 = vmatpush1.bf16.msra.mxu0 0
          %544 = vmatprep.subr.bf16.mxu0 0
          %545 = vmatpush1.bf16.msra.mxu0 0
          %546 = vmatprep.subr.bf16.mxu0 0
          %547 = vmatpush1.bf16.msra.mxu0 0
          %548 = vmatprep.subr.bf16.mxu0 0
          %549 = vmatpush1.bf16.msra.mxu0 0
          %550 = vmatprep.subr.bf16.mxu0 0
          %551 = vmatpush1.bf16.msra.mxu0 0
          %552 = vmatprep.subr.bf16.mxu0 0
          %553 = vmatpush1.bf16.msra.mxu0 0
          %554 = vmatprep.subr.bf16.mxu0 0
          %555 = vmatpush1.bf16.msra.mxu0 0
          %556 = vmatprep.subr.bf16.mxu0 0
          %557 = vmatpush1.bf16.msra.mxu0 0
          %558 = vmatprep.subr.bf16.mxu0 0
          %559 = vmatpush1.bf16.msra.mxu0 0
          %560 = vmatprep.subr.bf16.mxu0 0
          %561 = vmatpush1.bf16.msra.mxu0 0
          %562 = vmatprep.subr.bf16.mxu0 0
          %563 = vmatpush1.bf16.msra.mxu0 0
          %564 = vmatprep.mubr.bf16.mxu0 0
          %565 = vmatmul.mubr.bf16.gmra.mrb[0].mxu0 %v497
          %v566 = vpop.f32.mrb[0].mxu0
          %v567 = vadd.f32 %v318, %v566
          %v568 = vpop.f32.mrb[0].mxu0
          %v569 = vadd.f32 %v318, %v568
          %v570 = vpop.f32.mrb[0].mxu0
          %v571 = vadd.f32 %v323, %v570
          %v572 = vpop.f32.mrb[0].mxu0
          %v573 = vadd.f32 %v323, %v572
          %574 = vmatprep.mubr.bf16.mxu0 0
          %575 = vmatmul.mubr.bf16.gmra.mrb[0].mxu0 %v500
          %v576 = vpop.f32.mrb[0].mxu0
          %v577 = vadd.f32 %v328, %v576
          %v578 = vpop.f32.mrb[0].mxu0
          %v579 = vadd.f32 %v328, %v578
          %v580 = vpop.f32.mrb[0].mxu0
          %v581 = vadd.f32 %v333, %v580
          %v582 = vpop.f32.mrb[0].mxu0
          %v583 = vadd.f32 %v333, %v582
          %584 = vmatprep.mubr.bf16.mxu0 0
          %585 = vmatmul.mubr.bf16.gmra.mrb[0].mxu0 %v503
          %v586 = vpop.f32.mrb[0].mxu0
          %v587 = vadd.f32 %v338, %v586
          %v588 = vpop.f32.mrb[0].mxu0
          %v589 = vadd.f32 %v338, %v588
          %v590 = vpop.f32.mrb[0].mxu0
          %v591 = vadd.f32 %v343, %v590
          %v592 = vpop.f32.mrb[0].mxu0
          %v593 = vadd.f32 %v343, %v592
          %594 = vmatprep.mubr.bf16.mxu0 0
          %595 = vmatmul.mubr.bf16.gmra.mrb[0].mxu0 %v506
          %v596 = vpop.f32.mrb[0].mxu0
          %v597 = vadd.f32 %v348, %v596
          %v598 = vpop.f32.mrb[0].mxu0
          %v599 = vadd.f32 %v348, %v598
          %v600 = vpop.f32.mrb[0].mxu0
          %v601 = vadd.f32 %v353, %v600
          %v602 = vpop.f32.mrb[0].mxu0
          %v603 = vadd.f32 %v353, %v602
          %604 = vmatprep.mubr.bf16.mxu0 0
          %605 = vmatmul.mubr.bf16.gmra.mrb[0].mxu0 %v509
          %v606 = vpop.f32.mrb[0].mxu0
          %v607 = vadd.f32 %v358, %v606
          %v608 = vpop.f32.mrb[0].mxu0
          %v609 = vadd.f32 %v358, %v608
          %v610 = vpop.f32.mrb[0].mxu0
          %v611 = vadd.f32 %v363, %v610
          %v612 = vpop.f32.mrb[0].mxu0
          %v613 = vadd.f32 %v363, %v612
          %614 = vmatprep.mubr.bf16.mxu0 0
          %615 = vmatmul.mubr.bf16.gmra.mrb[0].mxu0 %v512
          %v616 = vpop.f32.mrb[0].mxu0
          %v617 = vadd.f32 %v368, %v616
          %v618 = vpop.f32.mrb[0].mxu0
          %v619 = vadd.f32 %v368, %v618
          %v620 = vpop.f32.mrb[0].mxu0
          %v621 = vadd.f32 %v373, %v620
          %v622 = vpop.f32.mrb[0].mxu0
          %v623 = vadd.f32 %v373, %v622
          %624 = vmatprep.mubr.bf16.mxu0 0
          %625 = vmatmul.mubr.bf16.gmra.mrb[0].mxu0 %v515
          %v626 = vpop.f32.mrb[0].mxu0
          %v627 = vadd.f32 %v378, %v626
          %v628 = vpop.f32.mrb[0].mxu0
          %v629 = vadd.f32 %v378, %v628
          %v630 = vpop.f32.mrb[0].mxu0
          %v631 = vadd.f32 %v383, %v630
          %v632 = vpop.f32.mrb[0].mxu0
          %v633 = vadd.f32 %v383, %v632
          %634 = vmatprep.mubr.bf16.mxu0 0
          %635 = vmatmul.mubr.bf16.gmra.mrb[0].mxu0 %v518
          %v636 = vpop.f32.mrb[0].mxu0
          %v637 = vadd.f32 %v388, %v636
          %v638 = vpop.f32.mrb[0].mxu0
          %v639 = vadd.f32 %v388, %v638
          %v640 = vpop.f32.mrb[0].mxu0
          %v641 = vadd.f32 %v393, %v640
          %v642 = vpop.f32.mrb[0].mxu0
          %v643 = vadd.f32 %v393, %v642
          %644 = vmatprep.mubr.bf16.mxu0 0
          %645 = vmatmul.mubr.bf16.gmra.mrb[0].mxu0 %v521
          %v646 = vpop.f32.mrb[0].mxu0
          %v647 = vadd.f32 %v398, %v646
          %v648 = vpop.f32.mrb[0].mxu0
          %v649 = vadd.f32 %v398, %v648
          %v650 = vpop.f32.mrb[0].mxu0
          %v651 = vadd.f32 %v403, %v650
          %v652 = vpop.f32.mrb[0].mxu0
          %v653 = vadd.f32 %v403, %v652
          %654 = vmatprep.mubr.bf16.mxu0 0
          %655 = vmatmul.mubr.bf16.gmra.mrb[0].mxu0 %v524
          %v656 = vpop.f32.mrb[0].mxu0
          %v657 = vadd.f32 %v408, %v656
          %v658 = vpop.f32.mrb[0].mxu0
          %v659 = vadd.f32 %v408, %v658
          %v660 = vpop.f32.mrb[0].mxu0
          %v661 = vadd.f32 %v413, %v660
          %v662 = vpop.f32.mrb[0].mxu0
          %v663 = vadd.f32 %v413, %v662
          %664 = vmatprep.mubr.bf16.mxu0 0
          %665 = vmatmul.mubr.bf16.gmra.mrb[0].mxu0 %v527
          %v666 = vpop.f32.mrb[0].mxu0
          %v667 = vadd.f32 %v418, %v666
          %v668 = vpop.f32.mrb[0].mxu0
          %v669 = vadd.f32 %v418, %v668
          %v670 = vpop.f32.mrb[0].mxu0
          %v671 = vadd.f32 %v423, %v670
          %v672 = vpop.f32.mrb[0].mxu0
          %v673 = vadd.f32 %v423, %v672
          %674 = vmatprep.mubr.bf16.mxu0 0
          %675 = vmatmul.mubr.bf16.gmra.mrb[0].mxu0 %v530
          %v676 = vpop.f32.mrb[0].mxu0
          %v677 = vadd.f32 %v428, %v676
          %v678 = vpop.f32.mrb[0].mxu0
          %v679 = vadd.f32 %v428, %v678
          %v680 = vpop.f32.mrb[0].mxu0
          %v681 = vadd.f32 %v433, %v680
          %v682 = vpop.f32.mrb[0].mxu0
          %v683 = vadd.f32 %v433, %v682
          %684 = vdwg.mxu0
          %685 = vst [vmem:[#allocation2] sm:$0xff] %v567
          %686 = vst [vmem:[#allocation2 + $0x8] sm:$0xff] %v569
          %687 = vst [vmem:[#allocation2 + $0x10] sm:$0xff] %v571
          %688 = vst [vmem:[#allocation2 + $0x18] sm:$0xff] %v573
          %689 = vst [vmem:[#allocation2 + $0x20] sm:$0xff] %v577
          %690 = vst [vmem:[#allocation2 + $0x28] sm:$0xff] %v579
          %691 = vst [vmem:[#allocation2 + $0x30] sm:$0xff] %v581
          %692 = vst [vmem:[#allocation2 + $0x38] sm:$0xff] %v583
          %693 = vst [vmem:[#allocation2 + $0x40] sm:$0xff] %v587
          %694 = vst [vmem:[#allocation2 + $0x48] sm:$0xff] %v589
          %695 = vst [vmem:[#allocation2 + $0x50] sm:$0xff] %v591
          %696 = vst [vmem:[#allocation2 + $0x58] sm:$0xff] %v593
          %697 = vst [vmem:[#allocation2 + $0x60] sm:$0xff] %v597
          %698 = vst [vmem:[#allocation2 + $0x68] sm:$0xff] %v599
          %699 = vst [vmem:[#allocation2 + $0x70] sm:$0xff] %v601
          %700 = vst [vmem:[#allocation2 + $0x78] sm:$0xff] %v603
          %701 = vst [vmem:[#allocation3] sm:$0xff] %v607
          %702 = vst [vmem:[#allocation3 + $0x8] sm:$0xff] %v609
          %703 = vst [vmem:[#allocation3 + $0x10] sm:$0xff] %v611
          %704 = vst [vmem:[#allocation3 + $0x18] sm:$0xff] %v613
          %705 = vst [vmem:[#allocation3 + $0x20] sm:$0xff] %v617
          %706 = vst [vmem:[#allocation3 + $0x28] sm:$0xff] %v619
          %707 = vst [vmem:[#allocation3 + $0x30] sm:$0xff] %v621
          %708 = vst [vmem:[#allocation3 + $0x38] sm:$0xff] %v623
          %709 = vst [vmem:[#allocation3 + $0x40] sm:$0xff] %v627
          %710 = vst [vmem:[#allocation3 + $0x48] sm:$0xff] %v629
          %711 = vst [vmem:[#allocation3 + $0x50] sm:$0xff] %v631
          %712 = vst [vmem:[#allocation3 + $0x58] sm:$0xff] %v633
          %713 = vst [vmem:[#allocation3 + $0x60] sm:$0xff] %v637
          %714 = vst [vmem:[#allocation3 + $0x68] sm:$0xff] %v639
          %715 = vst [vmem:[#allocation3 + $0x70] sm:$0xff] %v641
          %716 = vst [vmem:[#allocation3 + $0x78] sm:$0xff] %v643
          %717 = vst [vmem:[#allocation4] sm:$0xff] %v647
          %718 = vst [vmem:[#allocation4 + $0x8] sm:$0xff] %v649
          %719 = vst [vmem:[#allocation4 + $0x10] sm:$0xff] %v651
          %720 = vst [vmem:[#allocation4 + $0x18] sm:$0xff] %v653
          %721 = vst [vmem:[#allocation4 + $0x20] sm:$0xff] %v657
          %722 = vst [vmem:[#allocation4 + $0x28] sm:$0xff] %v659
          %723 = vst [vmem:[#allocation4 + $0x30] sm:$0xff] %v661
          %724 = vst [vmem:[#allocation4 + $0x38] sm:$0xff] %v663
          %725 = vst [vmem:[#allocation4 + $0x40] sm:$0xff] %v667
          %726 = vst [vmem:[#allocation4 + $0x48] sm:$0xff] %v669
          %727 = vst [vmem:[#allocation4 + $0x50] sm:$0xff] %v671
          %728 = vst [vmem:[#allocation4 + $0x58] sm:$0xff] %v673
          %729 = vst [vmem:[#allocation4 + $0x60] sm:$0xff] %v677
          %730 = vst [vmem:[#allocation4 + $0x68] sm:$0xff] %v679
          %731 = vst [vmem:[#allocation4 + $0x70] sm:$0xff] %v681
          %732 = vst [vmem:[#allocation4 + $0x78] sm:$0xff] %v683
        $region44: #{tpu_custom_call.1} parent=39 // pred_fallthru
          _
        %s733 = smul.u32 %s24, 256
        %s734 = sshra.s32 %s733, 7
        %s735 = sand.u32 %s733, 127
        %s736 = smul.addr %s734, 8
        %s737 = scalar_lea.vmem [#allocation2], %s736
        %v738 = vld [vmem:[%s737] sm:$0xff]
        %v739 = vld [vmem:[%s737 + $0x8] sm:$0xff]
        %v740 = vld [vmem:[%s737 + $0x10] sm:$0xff]
        %v741 = vld [vmem:[%s737 + $0x18] sm:$0xff]
        %v742 = vld [vmem:[%s737 + $0x20] sm:$0xff]
        %v743 = vld [vmem:[%s737 + $0x28] sm:$0xff]
        %v744 = vld [vmem:[%s737 + $0x30] sm:$0xff]
        %v745 = vld [vmem:[%s737 + $0x38] sm:$0xff]
        %v746 = vld [vmem:[%s737 + $0x40] sm:$0xff]
        %v747 = vld [vmem:[%s737 + $0x48] sm:$0xff]
        %v748 = vld [vmem:[%s737 + $0x50] sm:$0xff]
        %v749 = vld [vmem:[%s737 + $0x58] sm:$0xff]
        %v750 = vld [vmem:[%s737 + $0x60] sm:$0xff]
        %v751 = vld [vmem:[%s737 + $0x68] sm:$0xff]
        %v752 = vld [vmem:[%s737 + $0x70] sm:$0xff]
        %v753 = vld [vmem:[%s737 + $0x78] sm:$0xff]
        %v754 = vld [vmem:[#allocation3] sm:$0xff]
        %v755 = vld [vmem:[#allocation3 + $0x8] sm:$0xff]
        %v756 = vld [vmem:[#allocation3 + $0x10] sm:$0xff]
        %v757 = vld [vmem:[#allocation3 + $0x18] sm:$0xff]
        %v758 = vld [vmem:[#allocation3 + $0x20] sm:$0xff]
        %v759 = vld [vmem:[#allocation3 + $0x28] sm:$0xff]
        %v760 = vld [vmem:[#allocation3 + $0x30] sm:$0xff]
        %v761 = vld [vmem:[#allocation3 + $0x38] sm:$0xff]
        %v762 = vld [vmem:[#allocation3 + $0x40] sm:$0xff]
        %v763 = vld [vmem:[#allocation3 + $0x48] sm:$0xff]
        %v764 = vld [vmem:[#allocation3 + $0x50] sm:$0xff]
        %v765 = vld [vmem:[#allocation3 + $0x58] sm:$0xff]
        %v766 = vld [vmem:[#allocation3 + $0x60] sm:$0xff]
        %v767 = vld [vmem:[#allocation3 + $0x68] sm:$0xff]
        %v768 = vld [vmem:[#allocation3 + $0x70] sm:$0xff]
        %v769 = vld [vmem:[#allocation3 + $0x78] sm:$0xff]
        %770 = vxpose.xlu0.b32.start [1/16] %v738, 128
        %771 = vxpose.xlu0.b32.cont [2/16] 0.0, 128
        %772 = vxpose.xlu0.b32.cont [3/16] 0.0, 128
        %773 = vxpose.xlu0.b32.cont [4/16] 0.0, 128
        %774 = vxpose.xlu0.b32.cont [5/16] 0.0, 128
        %775 = vxpose.xlu0.b32.cont [6/16] 0.0, 128
        %776 = vxpose.xlu0.b32.cont [7/16] 0.0, 128
        %777 = vxpose.xlu0.b32.cont [8/16] 0.0, 128
        %778 = vxpose.xlu0.b32.cont [9/16] 0.0, 128
        %779 = vxpose.xlu0.b32.cont [10/16] 0.0, 128
        %780 = vxpose.xlu0.b32.cont [11/16] 0.0, 128
        %781 = vxpose.xlu0.b32.cont [12/16] 0.0, 128
        %782 = vxpose.xlu0.b32.cont [13/16] 0.0, 128
        %783 = vxpose.xlu0.b32.cont [14/16] 0.0, 128
        %784 = vxpose.xlu0.b32.cont [15/16] 0.0, 128
        %785 = vxpose.xlu0.b32.end [16/16] 0.0, 128
        %v786 = vpop.trf.xlu0
        %v787 = vpop.trf.xlu0
        %v788 = vpop.trf.xlu0
        %v789 = vpop.trf.xlu0
        %v790 = vpop.trf.xlu0
        %v791 = vpop.trf.xlu0
        %v792 = vpop.trf.xlu0
        %v793 = vpop.trf.xlu0
        %v794 = vpop.trf.xlu0
        %v795 = vpop.trf.xlu0
        %v796 = vpop.trf.xlu0
        %v797 = vpop.trf.xlu0
        %v798 = vpop.trf.xlu0
        %v799 = vpop.trf.xlu0
        %v800 = vpop.trf.xlu0
        %v801 = vpop.trf.xlu0
        %802 = vxpose.xlu0.b32.start [1/16] %v739, 128
        %803 = vxpose.xlu0.b32.cont [2/16] 0.0, 128
        %804 = vxpose.xlu0.b32.cont [3/16] 0.0, 128
        %805 = vxpose.xlu0.b32.cont [4/16] 0.0, 128
        %806 = vxpose.xlu0.b32.cont [5/16] 0.0, 128
        %807 = vxpose.xlu0.b32.cont [6/16] 0.0, 128
        %808 = vxpose.xlu0.b32.cont [7/16] 0.0, 128
        %809 = vxpose.xlu0.b32.cont [8/16] 0.0, 128
        %810 = vxpose.xlu0.b32.cont [9/16] 0.0, 128
        %811 = vxpose.xlu0.b32.cont [10/16] 0.0, 128
        %812 = vxpose.xlu0.b32.cont [11/16] 0.0, 128
        %813 = vxpose.xlu0.b32.cont [12/16] 0.0, 128
        %814 = vxpose.xlu0.b32.cont [13/16] 0.0, 128
        %815 = vxpose.xlu0.b32.cont [14/16] 0.0, 128
        %816 = vxpose.xlu0.b32.cont [15/16] 0.0, 128
        %817 = vxpose.xlu0.b32.end [16/16] 0.0, 128
        %v818 = vpop.trf.xlu0
        %v819 = vpop.trf.xlu0
        %v820 = vpop.trf.xlu0
        %v821 = vpop.trf.xlu0
        %v822 = vpop.trf.xlu0
        %v823 = vpop.trf.xlu0
        %v824 = vpop.trf.xlu0
        %v825 = vpop.trf.xlu0
        %v826 = vpop.trf.xlu0
        %v827 = vpop.trf.xlu0
        %v828 = vpop.trf.xlu0
        %v829 = vpop.trf.xlu0
        %v830 = vpop.trf.xlu0
        %v831 = vpop.trf.xlu0
        %v832 = vpop.trf.xlu0
        %v833 = vpop.trf.xlu0
        %vm834 = vcmask 64512
        %v836 = vsel %vm834, %v786, 0
        %v839 = vsel %vm834, %v787, 0
        %v842 = vsel %vm834, %v788, 0
        %v845 = vsel %vm834, %v789, 0
        %v848 = vsel %vm834, %v790, 0
        %v851 = vsel %vm834, %v791, 0
        %v854 = vsel %vm834, %v792, 0
        %v857 = vsel %vm834, %v793, 0
        %v860 = vsel %vm834, %v794, 0
        %v863 = vsel %vm834, %v795, 0
        %v866 = vsel %vm834, %v796, 0
        %v869 = vsel %vm834, %v797, 0
        %v872 = vsel %vm834, %v798, 0
        %v875 = vsel %vm834, %v799, 0
        %v878 = vsel %vm834, %v800, 0
        %v881 = vsel %vm834, %v801, 0
        %v884 = vsel %vm834, %v818, 0
        %v887 = vsel %vm834, %v819, 0
        %v890 = vsel %vm834, %v820, 0
        %v893 = vsel %vm834, %v821, 0
        %v896 = vsel %vm834, %v822, 0
        %v899 = vsel %vm834, %v823, 0
        %v902 = vsel %vm834, %v824, 0
        %v905 = vsel %vm834, %v825, 0
        %v908 = vsel %vm834, %v826, 0
        %v911 = vsel %vm834, %v827, 0
        %v914 = vsel %vm834, %v828, 0
        %v917 = vsel %vm834, %v829, 0
        %v920 = vsel %vm834, %v830, 0
        %v923 = vsel %vm834, %v831, 0
        %v926 = vsel %vm834, %v832, 0
        %v929 = vsel %vm834, %v833, 0
        %931 = vmatprep.subr.mxu0 %v755
        %932 = vmatpush1.msra.mxu0 %v754
        %933 = vmatprep.subr.mxu0 0.0
        %934 = vmatpush1.msra.mxu0 0.0
        %935 = vmatprep.subr.mxu0 0.0
        %936 = vmatpush1.msra.mxu0 0.0
        %937 = vmatprep.subr.mxu0 0.0
        %938 = vmatpush1.msra.mxu0 0.0
        %939 = vmatprep.subr.mxu0 0.0
        %940 = vmatpush1.msra.mxu0 0.0
        %941 = vmatprep.subr.mxu0 0.0
        %942 = vmatpush1.msra.mxu0 0.0
        %943 = vmatprep.subr.mxu0 0.0
        %944 = vmatpush1.msra.mxu0 0.0
        %945 = vmatprep.subr.mxu0 0.0
        %946 = vmatpush1.msra.mxu0 0.0
        %947 = vmatprep.subr.mxu0 0.0
        %948 = vmatpush1.msra.mxu0 0.0
        %949 = vmatprep.subr.mxu0 0.0
        %950 = vmatpush1.msra.mxu0 0.0
        %951 = vmatprep.subr.mxu0 0.0
        %952 = vmatpush1.msra.mxu0 0.0
        %953 = vmatprep.subr.mxu0 0.0
        %954 = vmatpush1.msra.mxu0 0.0
        %955 = vmatprep.subr.mxu0 0.0
        %956 = vmatpush1.msra.mxu0 0.0
        %957 = vmatprep.subr.mxu0 0.0
        %958 = vmatpush1.msra.mxu0 0.0
        %959 = vmatprep.subr.mxu0 0.0
        %960 = vmatpush1.msra.mxu0 0.0
        %961 = vmatprep.subr.mxu0 0.0
        %962 = vmatpush1.msra.mxu0 0.0
        %963 = vmatprep.subr.mxu0 0.0
        %964 = vmatpush1.msra.mxu0 0.0
        %965 = vmatprep.subr.mxu0 0.0
        %966 = vmatpush1.msra.mxu0 0.0
        %967 = vmatprep.subr.mxu0 0.0
        %968 = vmatpush1.msra.mxu0 0.0
        %969 = vmatprep.subr.mxu0 0.0
        %970 = vmatpush1.msra.mxu0 0.0
        %971 = vmatprep.subr.mxu0 0.0
        %972 = vmatpush1.msra.mxu0 0.0
        %973 = vmatprep.subr.mxu0 0.0
        %974 = vmatpush1.msra.mxu0 0.0
        %975 = vmatprep.subr.mxu0 0.0
        %976 = vmatpush1.msra.mxu0 0.0
        %977 = vmatprep.subr.mxu0 0.0
        %978 = vmatpush1.msra.mxu0 0.0
        %979 = vmatprep.subr.mxu0 0.0
        %980 = vmatpush1.msra.mxu0 0.0
        %981 = vmatprep.subr.mxu0 0.0
        %982 = vmatpush1.msra.mxu0 0.0
        %983 = vmatprep.subr.mxu0 0.0
        %984 = vmatpush1.msra.mxu0 0.0
        %985 = vmatprep.subr.mxu0 0.0
        %986 = vmatpush1.msra.mxu0 0.0
        %987 = vmatprep.subr.mxu0 0.0
        %988 = vmatpush1.msra.mxu0 0.0
        %989 = vmatprep.subr.mxu0 0.0
        %990 = vmatpush1.msra.mxu0 0.0
        %991 = vmatprep.subr.mxu0 0.0
        %992 = vmatpush1.msra.mxu0 0.0
        %993 = vmatprep.subr.mxu0 0.0
        %994 = vmatpush1.msra.mxu0 0.0
        %995 = vmatprep.mubr.f32.mxu0 0.0
        %996 = vmatmul.mubr.f32.gmra.mrb[0].mxu0 %v836
        %v997 = vpop.f32.mrb[0].mxu0
        %v998 = vadd.f32 0.0, %v997
        %v999 = vpop.f32.mrb[0].mxu0
        %v1000 = vadd.f32 0.0, %v999
        %1001 = vmatprep.mubr.f32.mxu0 0.0
        %1002 = vmatmul.mubr.f32.gmra.mrb[0].mxu0 %v839
        %v1003 = vpop.f32.mrb[0].mxu0
        %v1004 = vadd.f32 0.0, %v1003
        %v1005 = vpop.f32.mrb[0].mxu0
        %v1006 = vadd.f32 0.0, %v1005
        %1007 = vmatprep.mubr.f32.mxu0 0.0
        %1008 = vmatmul.mubr.f32.gmra.mrb[0].mxu0 %v842
        %v1009 = vpop.f32.mrb[0].mxu0
        %v1010 = vadd.f32 0.0, %v1009
        %v1011 = vpop.f32.mrb[0].mxu0
        %v1012 = vadd.f32 0.0, %v1011
        %1013 = vmatprep.mubr.f32.mxu0 0.0
        %1014 = vmatmul.mubr.f32.gmra.mrb[0].mxu0 %v845
        %v1015 = vpop.f32.mrb[0].mxu0
        %v1016 = vadd.f32 0.0, %v1015
        %v1017 = vpop.f32.mrb[0].mxu0
        %v1018 = vadd.f32 0.0, %v1017
        %1019 = vmatprep.mubr.f32.mxu0 0.0
        %1020 = vmatmul.mubr.f32.gmra.mrb[0].mxu0 %v848
        %v1021 = vpop.f32.mrb[0].mxu0
        %v1022 = vadd.f32 0.0, %v1021
        %v1023 = vpop.f32.mrb[0].mxu0
        %v1024 = vadd.f32 0.0, %v1023
        %1025 = vmatprep.mubr.f32.mxu0 0.0
        %1026 = vmatmul.mubr.f32.gmra.mrb[0].mxu0 %v851
        %v1027 = vpop.f32.mrb[0].mxu0
        %v1028 = vadd.f32 0.0, %v1027
        %v1029 = vpop.f32.mrb[0].mxu0
        %v1030 = vadd.f32 0.0, %v1029
        %1031 = vmatprep.mubr.f32.mxu0 0.0
        %1032 = vmatmul.mubr.f32.gmra.mrb[0].mxu0 %v854
        %v1033 = vpop.f32.mrb[0].mxu0
        %v1034 = vadd.f32 0.0, %v1033
        %v1035 = vpop.f32.mrb[0].mxu0
        %v1036 = vadd.f32 0.0, %v1035
        %1037 = vmatprep.mubr.f32.mxu0 0.0
        %1038 = vmatmul.mubr.f32.gmra.mrb[0].mxu0 %v857
        %v1039 = vpop.f32.mrb[0].mxu0
        %v1040 = vadd.f32 0.0, %v1039
        %v1041 = vpop.f32.mrb[0].mxu0
        %v1042 = vadd.f32 0.0, %v1041
        %1043 = vmatprep.mubr.f32.mxu0 0.0
        %1044 = vmatmul.mubr.f32.gmra.mrb[0].mxu0 %v860
        %v1045 = vpop.f32.mrb[0].mxu0
        %v1046 = vadd.f32 0.0, %v1045
        %v1047 = vpop.f32.mrb[0].mxu0
        %v1048 = vadd.f32 0.0, %v1047
        %1049 = vmatprep.mubr.f32.mxu0 0.0
        %1050 = vmatmul.mubr.f32.gmra.mrb[0].mxu0 %v863
        %v1051 = vpop.f32.mrb[0].mxu0
        %v1052 = vadd.f32 0.0, %v1051
        %v1053 = vpop.f32.mrb[0].mxu0
        %v1054 = vadd.f32 0.0, %v1053
        %1055 = vmatprep.mubr.f32.mxu0 0.0
        %1056 = vmatmul.mubr.f32.gmra.mrb[0].mxu0 %v866
        %v1057 = vpop.f32.mrb[0].mxu0
        %v1058 = vadd.f32 0.0, %v1057
        %v1059 = vpop.f32.mrb[0].mxu0
        %v1060 = vadd.f32 0.0, %v1059
        %1061 = vmatprep.mubr.f32.mxu0 0.0
        %1062 = vmatmul.mubr.f32.gmra.mrb[0].mxu0 %v869
        %v1063 = vpop.f32.mrb[0].mxu0
        %v1064 = vadd.f32 0.0, %v1063
        %v1065 = vpop.f32.mrb[0].mxu0
        %v1066 = vadd.f32 0.0, %v1065
        %1067 = vmatprep.mubr.f32.mxu0 0.0
        %1068 = vmatmul.mubr.f32.gmra.mrb[0].mxu0 %v872
        %v1069 = vpop.f32.mrb[0].mxu0
        %v1070 = vadd.f32 0.0, %v1069
        %v1071 = vpop.f32.mrb[0].mxu0
        %v1072 = vadd.f32 0.0, %v1071
        %1073 = vmatprep.mubr.f32.mxu0 0.0
        %1074 = vmatmul.mubr.f32.gmra.mrb[0].mxu0 %v875
        %v1075 = vpop.f32.mrb[0].mxu0
        %v1076 = vadd.f32 0.0, %v1075
        %v1077 = vpop.f32.mrb[0].mxu0
        %v1078 = vadd.f32 0.0, %v1077
        %1079 = vmatprep.mubr.f32.mxu0 0.0
        %1080 = vmatmul.mubr.f32.gmra.mrb[0].mxu0 %v878
        %v1081 = vpop.f32.mrb[0].mxu0
        %v1082 = vadd.f32 0.0, %v1081
        %v1083 = vpop.f32.mrb[0].mxu0
        %v1084 = vadd.f32 0.0, %v1083
        %1085 = vmatprep.mubr.f32.mxu0 0.0
        %1086 = vmatmul.mubr.f32.gmra.mrb[0].mxu0 %v881
        %v1087 = vpop.f32.mrb[0].mxu0
        %v1088 = vadd.f32 0.0, %v1087
        %v1089 = vpop.f32.mrb[0].mxu0
        %v1090 = vadd.f32 0.0, %v1089
        %1091 = vmatprep.mubr.f32.mxu0 0.0
        %1092 = vmatmul.mubr.f32.gmra.mrb[0].mxu0 %v884
        %v1093 = vpop.f32.mrb[0].mxu0
        %v1094 = vadd.f32 0.0, %v1093
        %v1095 = vpop.f32.mrb[0].mxu0
        %v1096 = vadd.f32 0.0, %v1095
        %1097 = vmatprep.mubr.f32.mxu0 0.0
        %1098 = vmatmul.mubr.f32.gmra.mrb[0].mxu0 %v887
        %v1099 = vpop.f32.mrb[0].mxu0
        %v1100 = vadd.f32 0.0, %v1099
        %v1101 = vpop.f32.mrb[0].mxu0
        %v1102 = vadd.f32 0.0, %v1101
        %1103 = vmatprep.mubr.f32.mxu0 0.0
        %1104 = vmatmul.mubr.f32.gmra.mrb[0].mxu0 %v890
        %v1105 = vpop.f32.mrb[0].mxu0
        %v1106 = vadd.f32 0.0, %v1105
        %v1107 = vpop.f32.mrb[0].mxu0
        %v1108 = vadd.f32 0.0, %v1107
        %1109 = vmatprep.mubr.f32.mxu0 0.0
        %1110 = vmatmul.mubr.f32.gmra.mrb[0].mxu0 %v893
        %v1111 = vpop.f32.mrb[0].mxu0
        %v1112 = vadd.f32 0.0, %v1111
        %v1113 = vpop.f32.mrb[0].mxu0
        %v1114 = vadd.f32 0.0, %v1113
        %1115 = vmatprep.mubr.f32.mxu0 0.0
        %1116 = vmatmul.mubr.f32.gmra.mrb[0].mxu0 %v896
        %v1117 = vpop.f32.mrb[0].mxu0
        %v1118 = vadd.f32 0.0, %v1117
        %v1119 = vpop.f32.mrb[0].mxu0
        %v1120 = vadd.f32 0.0, %v1119
        %1121 = vmatprep.mubr.f32.mxu0 0.0
        %1122 = vmatmul.mubr.f32.gmra.mrb[0].mxu0 %v899
        %v1123 = vpop.f32.mrb[0].mxu0
        %v1124 = vadd.f32 0.0, %v1123
        %v1125 = vpop.f32.mrb[0].mxu0
        %v1126 = vadd.f32 0.0, %v1125
        %1127 = vmatprep.mubr.f32.mxu0 0.0
        %1128 = vmatmul.mubr.f32.gmra.mrb[0].mxu0 %v902
        %v1129 = vpop.f32.mrb[0].mxu0
        %v1130 = vadd.f32 0.0, %v1129
        %v1131 = vpop.f32.mrb[0].mxu0
        %v1132 = vadd.f32 0.0, %v1131
        %1133 = vmatprep.mubr.f32.mxu0 0.0
        %1134 = vmatmul.mubr.f32.gmra.mrb[0].mxu0 %v905
        %v1135 = vpop.f32.mrb[0].mxu0
        %v1136 = vadd.f32 0.0, %v1135
        %v1137 = vpop.f32.mrb[0].mxu0
        %v1138 = vadd.f32 0.0, %v1137
        %1139 = vmatprep.mubr.f32.mxu0 0.0
        %1140 = vmatmul.mubr.f32.gmra.mrb[0].mxu0 %v908
        %v1141 = vpop.f32.mrb[0].mxu0
        %v1142 = vadd.f32 0.0, %v1141
        %v1143 = vpop.f32.mrb[0].mxu0
        %v1144 = vadd.f32 0.0, %v1143
        %1145 = vmatprep.mubr.f32.mxu0 0.0
        %1146 = vmatmul.mubr.f32.gmra.mrb[0].mxu0 %v911
        %v1147 = vpop.f32.mrb[0].mxu0
        %v1148 = vadd.f32 0.0, %v1147
        %v1149 = vpop.f32.mrb[0].mxu0
        %v1150 = vadd.f32 0.0, %v1149
        %1151 = vmatprep.mubr.f32.mxu0 0.0
        %1152 = vmatmul.mubr.f32.gmra.mrb[0].mxu0 %v914
        %v1153 = vpop.f32.mrb[0].mxu0
        %v1154 = vadd.f32 0.0, %v1153
        %v1155 = vpop.f32.mrb[0].mxu0
        %v1156 = vadd.f32 0.0, %v1155
        %1157 = vmatprep.mubr.f32.mxu0 0.0
        %1158 = vmatmul.mubr.f32.gmra.mrb[0].mxu0 %v917
        %v1159 = vpop.f32.mrb[0].mxu0
        %v1160 = vadd.f32 0.0, %v1159
        %v1161 = vpop.f32.mrb[0].mxu0
        %v1162 = vadd.f32 0.0, %v1161
        %1163 = vmatprep.mubr.f32.mxu0 0.0
        %1164 = vmatmul.mubr.f32.gmra.mrb[0].mxu0 %v920
        %v1165 = vpop.f32.mrb[0].mxu0
        %v1166 = vadd.f32 0.0, %v1165
        %v1167 = vpop.f32.mrb[0].mxu0
        %v1168 = vadd.f32 0.0, %v1167
        %1169 = vmatprep.mubr.f32.mxu0 0.0
        %1170 = vmatmul.mubr.f32.gmra.mrb[0].mxu0 %v923
        %v1171 = vpop.f32.mrb[0].mxu0
        %v1172 = vadd.f32 0.0, %v1171
        %v1173 = vpop.f32.mrb[0].mxu0
        %v1174 = vadd.f32 0.0, %v1173
        %1175 = vmatprep.mubr.f32.mxu0 0.0
        %1176 = vmatmul.mubr.f32.gmra.mrb[0].mxu0 %v926
        %v1177 = vpop.f32.mrb[0].mxu0
        %v1178 = vadd.f32 0.0, %v1177
        %v1179 = vpop.f32.mrb[0].mxu0
        %v1180 = vadd.f32 0.0, %v1179
        %1181 = vmatprep.mubr.f32.mxu0 0.0
        %1182 = vmatmul.mubr.f32.gmra.mrb[0].mxu0 %v929
        %v1183 = vpop.f32.mrb[0].mxu0
        %v1184 = vadd.f32 0.0, %v1183
        %v1185 = vpop.f32.mrb[0].mxu0
        %v1186 = vadd.f32 0.0, %v1185
        %1187 = vdwg.mxu0
        %1188 = vxpose.xlu0.b32.start [1/16] %v740, 128
        %1189 = vxpose.xlu0.b32.cont [2/16] 0.0, 128
        %1190 = vxpose.xlu0.b32.cont [3/16] 0.0, 128
        %1191 = vxpose.xlu0.b32.cont [4/16] 0.0, 128
        %1192 = vxpose.xlu0.b32.cont [5/16] 0.0, 128
        %1193 = vxpose.xlu0.b32.cont [6/16] 0.0, 128
        %1194 = vxpose.xlu0.b32.cont [7/16] 0.0, 128
        %1195 = vxpose.xlu0.b32.cont [8/16] 0.0, 128
        %1196 = vxpose.xlu0.b32.cont [9/16] 0.0, 128
        %1197 = vxpose.xlu0.b32.cont [10/16] 0.0, 128
        %1198 = vxpose.xlu0.b32.cont [11/16] 0.0, 128
        %1199 = vxpose.xlu0.b32.cont [12/16] 0.0, 128
        %1200 = vxpose.xlu0.b32.cont [13/16] 0.0, 128
        %1201 = vxpose.xlu0.b32.cont [14/16] 0.0, 128
        %1202 = vxpose.xlu0.b32.cont [15/16] 0.0, 128
        %1203 = vxpose.xlu0.b32.end [16/16] 0.0, 128
        %v1204 = vpop.trf.xlu0
        %v1205 = vpop.trf.xlu0
        %v1206 = vpop.trf.xlu0
        %v1207 = vpop.trf.xlu0
        %v1208 = vpop.trf.xlu0
        %v1209 = vpop.trf.xlu0
        %v1210 = vpop.trf.xlu0
        %v1211 = vpop.trf.xlu0
        %v1212 = vpop.trf.xlu0
        %v1213 = vpop.trf.xlu0
        %v1214 = vpop.trf.xlu0
        %v1215 = vpop.trf.xlu0
        %v1216 = vpop.trf.xlu0
        %v1217 = vpop.trf.xlu0
        %v1218 = vpop.trf.xlu0
        %v1219 = vpop.trf.xlu0
        %1220 = vxpose.xlu0.b32.start [1/16] %v741, 128
        %1221 = vxpose.xlu0.b32.cont [2/16] 0.0, 128
        %1222 = vxpose.xlu0.b32.cont [3/16] 0.0, 128
        %1223 = vxpose.xlu0.b32.cont [4/16] 0.0, 128
        %1224 = vxpose.xlu0.b32.cont [5/16] 0.0, 128
        %1225 = vxpose.xlu0.b32.cont [6/16] 0.0, 128
        %1226 = vxpose.xlu0.b32.cont [7/16] 0.0, 128
        %1227 = vxpose.xlu0.b32.cont [8/16] 0.0, 128
        %1228 = vxpose.xlu0.b32.cont [9/16] 0.0, 128
        %1229 = vxpose.xlu0.b32.cont [10/16] 0.0, 128
        %1230 = vxpose.xlu0.b32.cont [11/16] 0.0, 128
        %1231 = vxpose.xlu0.b32.cont [12/16] 0.0, 128
        %1232 = vxpose.xlu0.b32.cont [13/16] 0.0, 128
        %1233 = vxpose.xlu0.b32.cont [14/16] 0.0, 128
        %1234 = vxpose.xlu0.b32.cont [15/16] 0.0, 128
        %1235 = vxpose.xlu0.b32.end [16/16] 0.0, 128
        %v1236 = vpop.trf.xlu0
        %v1237 = vpop.trf.xlu0
        %v1238 = vpop.trf.xlu0
        %v1239 = vpop.trf.xlu0
        %v1240 = vpop.trf.xlu0
        %v1241 = vpop.trf.xlu0
        %v1242 = vpop.trf.xlu0
        %v1243 = vpop.trf.xlu0
        %v1244 = vpop.trf.xlu0
        %v1245 = vpop.trf.xlu0
        %v1246 = vpop.trf.xlu0
        %v1247 = vpop.trf.xlu0
        %v1248 = vpop.trf.xlu0
        %v1249 = vpop.trf.xlu0
        %v1250 = vpop.trf.xlu0
        %v1251 = vpop.trf.xlu0
        %v1253 = vsel %vm834, %v1204, 0
        %v1256 = vsel %vm834, %v1205, 0
        %v1259 = vsel %vm834, %v1206, 0
        %v1262 = vsel %vm834, %v1207, 0
        %v1265 = vsel %vm834, %v1208, 0
        %v1268 = vsel %vm834, %v1209, 0
        %v1271 = vsel %vm834, %v1210, 0
        %v1274 = vsel %vm834, %v1211, 0
        %v1277 = vsel %vm834, %v1212, 0
        %v1280 = vsel %vm834, %v1213, 0
        %v1283 = vsel %vm834, %v1214, 0
        %v1286 = vsel %vm834, %v1215, 0
        %v1289 = vsel %vm834, %v1216, 0
        %v1292 = vsel %vm834, %v1217, 0
        %v1295 = vsel %vm834, %v1218, 0
        %v1298 = vsel %vm834, %v1219, 0
        %v1301 = vsel %vm834, %v1236, 0
        %v1304 = vsel %vm834, %v1237, 0
        %v1307 = vsel %vm834, %v1238, 0
        %v1310 = vsel %vm834, %v1239, 0
        %v1313 = vsel %vm834, %v1240, 0
        %v1316 = vsel %vm834, %v1241, 0
        %v1319 = vsel %vm834, %v1242, 0
        %v1322 = vsel %vm834, %v1243, 0
        %v1325 = vsel %vm834, %v1244, 0
        %v1328 = vsel %vm834, %v1245, 0
        %v1331 = vsel %vm834, %v1246, 0
        %v1334 = vsel %vm834, %v1247, 0
        %v1337 = vsel %vm834, %v1248, 0
        %v1340 = vsel %vm834, %v1249, 0
        %v1343 = vsel %vm834, %v1250, 0
        %v1346 = vsel %vm834, %v1251, 0
        %1348 = vmatprep.subr.mxu0 %v757
        %1349 = vmatpush1.msra.mxu0 %v756
        %1350 = vmatprep.subr.mxu0 0.0
        %1351 = vmatpush1.msra.mxu0 0.0
        %1352 = vmatprep.subr.mxu0 0.0
        %1353 = vmatpush1.msra.mxu0 0.0
        %1354 = vmatprep.subr.mxu0 0.0
        %1355 = vmatpush1.msra.mxu0 0.0
        %1356 = vmatprep.subr.mxu0 0.0
        %1357 = vmatpush1.msra.mxu0 0.0
        %1358 = vmatprep.subr.mxu0 0.0
        %1359 = vmatpush1.msra.mxu0 0.0
        %1360 = vmatprep.subr.mxu0 0.0
        %1361 = vmatpush1.msra.mxu0 0.0
        %1362 = vmatprep.subr.mxu0 0.0
        %1363 = vmatpush1.msra.mxu0 0.0
        %1364 = vmatprep.subr.mxu0 0.0
        %1365 = vmatpush1.msra.mxu0 0.0
        %1366 = vmatprep.subr.mxu0 0.0
        %1367 = vmatpush1.msra.mxu0 0.0
        %1368 = vmatprep.subr.mxu0 0.0
        %1369 = vmatpush1.msra.mxu0 0.0
        %1370 = vmatprep.subr.mxu0 0.0
        %1371 = vmatpush1.msra.mxu0 0.0
        %1372 = vmatprep.subr.mxu0 0.0
        %1373 = vmatpush1.msra.mxu0 0.0
        %1374 = vmatprep.subr.mxu0 0.0
        %1375 = vmatpush1.msra.mxu0 0.0
        %1376 = vmatprep.subr.mxu0 0.0
        %1377 = vmatpush1.msra.mxu0 0.0
        %1378 = vmatprep.subr.mxu0 0.0
        %1379 = vmatpush1.msra.mxu0 0.0
        %1380 = vmatprep.subr.mxu0 0.0
        %1381 = vmatpush1.msra.mxu0 0.0
        %1382 = vmatprep.subr.mxu0 0.0
        %1383 = vmatpush1.msra.mxu0 0.0
        %1384 = vmatprep.subr.mxu0 0.0
        %1385 = vmatpush1.msra.mxu0 0.0
        %1386 = vmatprep.subr.mxu0 0.0
        %1387 = vmatpush1.msra.mxu0 0.0
        %1388 = vmatprep.subr.mxu0 0.0
        %1389 = vmatpush1.msra.mxu0 0.0
        %1390 = vmatprep.subr.mxu0 0.0
        %1391 = vmatpush1.msra.mxu0 0.0
        %1392 = vmatprep.subr.mxu0 0.0
        %1393 = vmatpush1.msra.mxu0 0.0
        %1394 = vmatprep.subr.mxu0 0.0
        %1395 = vmatpush1.msra.mxu0 0.0
        %1396 = vmatprep.subr.mxu0 0.0
        %1397 = vmatpush1.msra.mxu0 0.0
        %1398 = vmatprep.subr.mxu0 0.0
        %1399 = vmatpush1.msra.mxu0 0.0
        %1400 = vmatprep.subr.mxu0 0.0
        %1401 = vmatpush1.msra.mxu0 0.0
        %1402 = vmatprep.subr.mxu0 0.0
        %1403 = vmatpush1.msra.mxu0 0.0
        %1404 = vmatprep.subr.mxu0 0.0
        %1405 = vmatpush1.msra.mxu0 0.0
        %1406 = vmatprep.subr.mxu0 0.0
        %1407 = vmatpush1.msra.mxu0 0.0
        %1408 = vmatprep.subr.mxu0 0.0
        %1409 = vmatpush1.msra.mxu0 0.0
        %1410 = vmatprep.subr.mxu0 0.0
        %1411 = vmatpush1.msra.mxu0 0.0
        %1412 = vmatprep.mubr.f32.mxu0 0.0
        %1413 = vmatmul.mubr.f32.gmra.mrb[0].mxu0 %v1253
        %v1414 = vpop.f32.mrb[0].mxu0
        %v1415 = vadd.f32 0.0, %v1414
        %v1416 = vpop.f32.mrb[0].mxu0
        %v1417 = vadd.f32 0.0, %v1416
        %1418 = vmatprep.mubr.f32.mxu0 0.0
        %1419 = vmatmul.mubr.f32.gmra.mrb[0].mxu0 %v1256
        %v1420 = vpop.f32.mrb[0].mxu0
        %v1421 = vadd.f32 0.0, %v1420
        %v1422 = vpop.f32.mrb[0].mxu0
        %v1423 = vadd.f32 0.0, %v1422
        %1424 = vmatprep.mubr.f32.mxu0 0.0
        %1425 = vmatmul.mubr.f32.gmra.mrb[0].mxu0 %v1259
        %v1426 = vpop.f32.mrb[0].mxu0
        %v1427 = vadd.f32 0.0, %v1426
        %v1428 = vpop.f32.mrb[0].mxu0
        %v1429 = vadd.f32 0.0, %v1428
        %1430 = vmatprep.mubr.f32.mxu0 0.0
        %1431 = vmatmul.mubr.f32.gmra.mrb[0].mxu0 %v1262
        %v1432 = vpop.f32.mrb[0].mxu0
        %v1433 = vadd.f32 0.0, %v1432
        %v1434 = vpop.f32.mrb[0].mxu0
        %v1435 = vadd.f32 0.0, %v1434
        %1436 = vmatprep.mubr.f32.mxu0 0.0
        %1437 = vmatmul.mubr.f32.gmra.mrb[0].mxu0 %v1265
        %v1438 = vpop.f32.mrb[0].mxu0
        %v1439 = vadd.f32 0.0, %v1438
        %v1440 = vpop.f32.mrb[0].mxu0
        %v1441 = vadd.f32 0.0, %v1440
        %1442 = vmatprep.mubr.f32.mxu0 0.0
        %1443 = vmatmul.mubr.f32.gmra.mrb[0].mxu0 %v1268
        %v1444 = vpop.f32.mrb[0].mxu0
        %v1445 = vadd.f32 0.0, %v1444
        %v1446 = vpop.f32.mrb[0].mxu0
        %v1447 = vadd.f32 0.0, %v1446
        %1448 = vmatprep.mubr.f32.mxu0 0.0
        %1449 = vmatmul.mubr.f32.gmra.mrb[0].mxu0 %v1271
        %v1450 = vpop.f32.mrb[0].mxu0
        %v1451 = vadd.f32 0.0, %v1450
        %v1452 = vpop.f32.mrb[0].mxu0
        %v1453 = vadd.f32 0.0, %v1452
        %1454 = vmatprep.mubr.f32.mxu0 0.0
        %1455 = vmatmul.mubr.f32.gmra.mrb[0].mxu0 %v1274
        %v1456 = vpop.f32.mrb[0].mxu0
        %v1457 = vadd.f32 0.0, %v1456
        %v1458 = vpop.f32.mrb[0].mxu0
        %v1459 = vadd.f32 0.0, %v1458
        %1460 = vmatprep.mubr.f32.mxu0 0.0
        %1461 = vmatmul.mubr.f32.gmra.mrb[0].mxu0 %v1277
        %v1462 = vpop.f32.mrb[0].mxu0
        %v1463 = vadd.f32 0.0, %v1462
        %v1464 = vpop.f32.mrb[0].mxu0
        %v1465 = vadd.f32 0.0, %v1464
        %1466 = vmatprep.mubr.f32.mxu0 0.0
        %1467 = vmatmul.mubr.f32.gmra.mrb[0].mxu0 %v1280
        %v1468 = vpop.f32.mrb[0].mxu0
        %v1469 = vadd.f32 0.0, %v1468
        %v1470 = vpop.f32.mrb[0].mxu0
        %v1471 = vadd.f32 0.0, %v1470
        %1472 = vmatprep.mubr.f32.mxu0 0.0
        %1473 = vmatmul.mubr.f32.gmra.mrb[0].mxu0 %v1283
        %v1474 = vpop.f32.mrb[0].mxu0
        %v1475 = vadd.f32 0.0, %v1474
        %v1476 = vpop.f32.mrb[0].mxu0
        %v1477 = vadd.f32 0.0, %v1476
        %1478 = vmatprep.mubr.f32.mxu0 0.0
        %1479 = vmatmul.mubr.f32.gmra.mrb[0].mxu0 %v1286
        %v1480 = vpop.f32.mrb[0].mxu0
        %v1481 = vadd.f32 0.0, %v1480
        %v1482 = vpop.f32.mrb[0].mxu0
        %v1483 = vadd.f32 0.0, %v1482
        %1484 = vmatprep.mubr.f32.mxu0 0.0
        %1485 = vmatmul.mubr.f32.gmra.mrb[0].mxu0 %v1289
        %v1486 = vpop.f32.mrb[0].mxu0
        %v1487 = vadd.f32 0.0, %v1486
        %v1488 = vpop.f32.mrb[0].mxu0
        %v1489 = vadd.f32 0.0, %v1488
        %1490 = vmatprep.mubr.f32.mxu0 0.0
        %1491 = vmatmul.mubr.f32.gmra.mrb[0].mxu0 %v1292
        %v1492 = vpop.f32.mrb[0].mxu0
        %v1493 = vadd.f32 0.0, %v1492
        %v1494 = vpop.f32.mrb[0].mxu0
        %v1495 = vadd.f32 0.0, %v1494
        %1496 = vmatprep.mubr.f32.mxu0 0.0
        %1497 = vmatmul.mubr.f32.gmra.mrb[0].mxu0 %v1295
        %v1498 = vpop.f32.mrb[0].mxu0
        %v1499 = vadd.f32 0.0, %v1498
        %v1500 = vpop.f32.mrb[0].mxu0
        %v1501 = vadd.f32 0.0, %v1500
        %1502 = vmatprep.mubr.f32.mxu0 0.0
        %1503 = vmatmul.mubr.f32.gmra.mrb[0].mxu0 %v1298
        %v1504 = vpop.f32.mrb[0].mxu0
        %v1505 = vadd.f32 0.0, %v1504
        %v1506 = vpop.f32.mrb[0].mxu0
        %v1507 = vadd.f32 0.0, %v1506
        %1508 = vmatprep.mubr.f32.mxu0 0.0
        %1509 = vmatmul.mubr.f32.gmra.mrb[0].mxu0 %v1301
        %v1510 = vpop.f32.mrb[0].mxu0
        %v1511 = vadd.f32 0.0, %v1510
        %v1512 = vpop.f32.mrb[0].mxu0
        %v1513 = vadd.f32 0.0, %v1512
        %1514 = vmatprep.mubr.f32.mxu0 0.0
        %1515 = vmatmul.mubr.f32.gmra.mrb[0].mxu0 %v1304
        %v1516 = vpop.f32.mrb[0].mxu0
        %v1517 = vadd.f32 0.0, %v1516
        %v1518 = vpop.f32.mrb[0].mxu0
        %v1519 = vadd.f32 0.0, %v1518
        %1520 = vmatprep.mubr.f32.mxu0 0.0
        %1521 = vmatmul.mubr.f32.gmra.mrb[0].mxu0 %v1307
        %v1522 = vpop.f32.mrb[0].mxu0
        %v1523 = vadd.f32 0.0, %v1522
        %v1524 = vpop.f32.mrb[0].mxu0
        %v1525 = vadd.f32 0.0, %v1524
        %1526 = vmatprep.mubr.f32.mxu0 0.0
        %1527 = vmatmul.mubr.f32.gmra.mrb[0].mxu0 %v1310
        %v1528 = vpop.f32.mrb[0].mxu0
        %v1529 = vadd.f32 0.0, %v1528
        %v1530 = vpop.f32.mrb[0].mxu0
        %v1531 = vadd.f32 0.0, %v1530
        %1532 = vmatprep.mubr.f32.mxu0 0.0
        %1533 = vmatmul.mubr.f32.gmra.mrb[0].mxu0 %v1313
        %v1534 = vpop.f32.mrb[0].mxu0
        %v1535 = vadd.f32 0.0, %v1534
        %v1536 = vpop.f32.mrb[0].mxu0
        %v1537 = vadd.f32 0.0, %v1536
        %1538 = vmatprep.mubr.f32.mxu0 0.0
        %1539 = vmatmul.mubr.f32.gmra.mrb[0].mxu0 %v1316
        %v1540 = vpop.f32.mrb[0].mxu0
        %v1541 = vadd.f32 0.0, %v1540
        %v1542 = vpop.f32.mrb[0].mxu0
        %v1543 = vadd.f32 0.0, %v1542
        %1544 = vmatprep.mubr.f32.mxu0 0.0
        %1545 = vmatmul.mubr.f32.gmra.mrb[0].mxu0 %v1319
        %v1546 = vpop.f32.mrb[0].mxu0
        %v1547 = vadd.f32 0.0, %v1546
        %v1548 = vpop.f32.mrb[0].mxu0
        %v1549 = vadd.f32 0.0, %v1548
        %1550 = vmatprep.mubr.f32.mxu0 0.0
        %1551 = vmatmul.mubr.f32.gmra.mrb[0].mxu0 %v1322
        %v1552 = vpop.f32.mrb[0].mxu0
        %v1553 = vadd.f32 0.0, %v1552
        %v1554 = vpop.f32.mrb[0].mxu0
        %v1555 = vadd.f32 0.0, %v1554
        %1556 = vmatprep.mubr.f32.mxu0 0.0
        %1557 = vmatmul.mubr.f32.gmra.mrb[0].mxu0 %v1325
        %v1558 = vpop.f32.mrb[0].mxu0
        %v1559 = vadd.f32 0.0, %v1558
        %v1560 = vpop.f32.mrb[0].mxu0
        %v1561 = vadd.f32 0.0, %v1560
        %1562 = vmatprep.mubr.f32.mxu0 0.0
        %1563 = vmatmul.mubr.f32.gmra.mrb[0].mxu0 %v1328
        %v1564 = vpop.f32.mrb[0].mxu0
        %v1565 = vadd.f32 0.0, %v1564
        %v1566 = vpop.f32.mrb[0].mxu0
        %v1567 = vadd.f32 0.0, %v1566
        %1568 = vmatprep.mubr.f32.mxu0 0.0
        %1569 = vmatmul.mubr.f32.gmra.mrb[0].mxu0 %v1331
        %v1570 = vpop.f32.mrb[0].mxu0
        %v1571 = vadd.f32 0.0, %v1570
        %v1572 = vpop.f32.mrb[0].mxu0
        %v1573 = vadd.f32 0.0, %v1572
        %1574 = vmatprep.mubr.f32.mxu0 0.0
        %1575 = vmatmul.mubr.f32.gmra.mrb[0].mxu0 %v1334
        %v1576 = vpop.f32.mrb[0].mxu0
        %v1577 = vadd.f32 0.0, %v1576
        %v1578 = vpop.f32.mrb[0].mxu0
        %v1579 = vadd.f32 0.0, %v1578
        %1580 = vmatprep.mubr.f32.mxu0 0.0
        %1581 = vmatmul.mubr.f32.gmra.mrb[0].mxu0 %v1337
        %v1582 = vpop.f32.mrb[0].mxu0
        %v1583 = vadd.f32 0.0, %v1582
        %v1584 = vpop.f32.mrb[0].mxu0
        %v1585 = vadd.f32 0.0, %v1584
        %1586 = vmatprep.mubr.f32.mxu0 0.0
        %1587 = vmatmul.mubr.f32.gmra.mrb[0].mxu0 %v1340
        %v1588 = vpop.f32.mrb[0].mxu0
        %v1589 = vadd.f32 0.0, %v1588
        %v1590 = vpop.f32.mrb[0].mxu0
        %v1591 = vadd.f32 0.0, %v1590
        %1592 = vmatprep.mubr.f32.mxu0 0.0
        %1593 = vmatmul.mubr.f32.gmra.mrb[0].mxu0 %v1343
        %v1594 = vpop.f32.mrb[0].mxu0
        %v1595 = vadd.f32 0.0, %v1594
        %v1596 = vpop.f32.mrb[0].mxu0
        %v1597 = vadd.f32 0.0, %v1596
        %1598 = vmatprep.mubr.f32.mxu0 0.0
        %1599 = vmatmul.mubr.f32.gmra.mrb[0].mxu0 %v1346
        %v1600 = vpop.f32.mrb[0].mxu0
        %v1601 = vadd.f32 0.0, %v1600
        %v1602 = vpop.f32.mrb[0].mxu0
        %v1603 = vadd.f32 0.0, %v1602
        %1604 = vdwg.mxu0
        %1605 = vxpose.xlu0.b32.start [1/16] %v742, 128
        %1606 = vxpose.xlu0.b32.cont [2/16] 0.0, 128
        %1607 = vxpose.xlu0.b32.cont [3/16] 0.0, 128
        %1608 = vxpose.xlu0.b32.cont [4/16] 0.0, 128
        %1609 = vxpose.xlu0.b32.cont [5/16] 0.0, 128
        %1610 = vxpose.xlu0.b32.cont [6/16] 0.0, 128
        %1611 = vxpose.xlu0.b32.cont [7/16] 0.0, 128
        %1612 = vxpose.xlu0.b32.cont [8/16] 0.0, 128
        %1613 = vxpose.xlu0.b32.cont [9/16] 0.0, 128
        %1614 = vxpose.xlu0.b32.cont [10/16] 0.0, 128
        %1615 = vxpose.xlu0.b32.cont [11/16] 0.0, 128
        %1616 = vxpose.xlu0.b32.cont [12/16] 0.0, 128
        %1617 = vxpose.xlu0.b32.cont [13/16] 0.0, 128
        %1618 = vxpose.xlu0.b32.cont [14/16] 0.0, 128
        %1619 = vxpose.xlu0.b32.cont [15/16] 0.0, 128
        %1620 = vxpose.xlu0.b32.end [16/16] 0.0, 128
        %v1621 = vpop.trf.xlu0
        %v1622 = vpop.trf.xlu0
        %v1623 = vpop.trf.xlu0
        %v1624 = vpop.trf.xlu0
        %v1625 = vpop.trf.xlu0
        %v1626 = vpop.trf.xlu0
        %v1627 = vpop.trf.xlu0
        %v1628 = vpop.trf.xlu0
        %v1629 = vpop.trf.xlu0
        %v1630 = vpop.trf.xlu0
        %v1631 = vpop.trf.xlu0
        %v1632 = vpop.trf.xlu0
        %v1633 = vpop.trf.xlu0
        %v1634 = vpop.trf.xlu0
        %v1635 = vpop.trf.xlu0
        %v1636 = vpop.trf.xlu0
        %1637 = vxpose.xlu0.b32.start [1/16] %v743, 128
        %1638 = vxpose.xlu0.b32.cont [2/16] 0.0, 128
        %1639 = vxpose.xlu0.b32.cont [3/16] 0.0, 128
        %1640 = vxpose.xlu0.b32.cont [4/16] 0.0, 128
        %1641 = vxpose.xlu0.b32.cont [5/16] 0.0, 128
        %1642 = vxpose.xlu0.b32.cont [6/16] 0.0, 128
        %1643 = vxpose.xlu0.b32.cont [7/16] 0.0, 128
        %1644 = vxpose.xlu0.b32.cont [8/16] 0.0, 128
        %1645 = vxpose.xlu0.b32.cont [9/16] 0.0, 128
        %1646 = vxpose.xlu0.b32.cont [10/16] 0.0, 128
        %1647 = vxpose.xlu0.b32.cont [11/16] 0.0, 128
        %1648 = vxpose.xlu0.b32.cont [12/16] 0.0, 128
        %1649 = vxpose.xlu0.b32.cont [13/16] 0.0, 128
        %1650 = vxpose.xlu0.b32.cont [14/16] 0.0, 128
        %1651 = vxpose.xlu0.b32.cont [15/16] 0.0, 128
        %1652 = vxpose.xlu0.b32.end [16/16] 0.0, 128
        %v1653 = vpop.trf.xlu0
        %v1654 = vpop.trf.xlu0
        %v1655 = vpop.trf.xlu0
        %v1656 = vpop.trf.xlu0
        %v1657 = vpop.trf.xlu0
        %v1658 = vpop.trf.xlu0
        %v1659 = vpop.trf.xlu0
        %v1660 = vpop.trf.xlu0
        %v1661 = vpop.trf.xlu0
        %v1662 = vpop.trf.xlu0
        %v1663 = vpop.trf.xlu0
        %v1664 = vpop.trf.xlu0
        %v1665 = vpop.trf.xlu0
        %v1666 = vpop.trf.xlu0
        %v1667 = vpop.trf.xlu0
        %v1668 = vpop.trf.xlu0
        %v1670 = vsel %vm834, %v1621, 0
        %v1673 = vsel %vm834, %v1622, 0
        %v1676 = vsel %vm834, %v1623, 0
        %v1679 = vsel %vm834, %v1624, 0
        %v1682 = vsel %vm834, %v1625, 0
        %v1685 = vsel %vm834, %v1626, 0
        %v1688 = vsel %vm834, %v1627, 0
        %v1691 = vsel %vm834, %v1628, 0
        %v1694 = vsel %vm834, %v1629, 0
        %v1697 = vsel %vm834, %v1630, 0
        %v1700 = vsel %vm834, %v1631, 0
        %v1703 = vsel %vm834, %v1632, 0
        %v1706 = vsel %vm834, %v1633, 0
        %v1709 = vsel %vm834, %v1634, 0
        %v1712 = vsel %vm834, %v1635, 0
        %v1715 = vsel %vm834, %v1636, 0
        %v1718 = vsel %vm834, %v1653, 0
        %v1721 = vsel %vm834, %v1654, 0
        %v1724 = vsel %vm834, %v1655, 0
        %v1727 = vsel %vm834, %v1656, 0
        %v1730 = vsel %vm834, %v1657, 0
        %v1733 = vsel %vm834, %v1658, 0
        %v1736 = vsel %vm834, %v1659, 0
        %v1739 = vsel %vm834, %v1660, 0
        %v1742 = vsel %vm834, %v1661, 0
        %v1745 = vsel %vm834, %v1662, 0
        %v1748 = vsel %vm834, %v1663, 0
        %v1751 = vsel %vm834, %v1664, 0
        %v1754 = vsel %vm834, %v1665, 0
        %v1757 = vsel %vm834, %v1666, 0
        %v1760 = vsel %vm834, %v1667, 0
        %v1763 = vsel %vm834, %v1668, 0
        %1765 = vmatprep.subr.mxu0 %v759
        %1766 = vmatpush1.msra.mxu0 %v758
        %1767 = vmatprep.subr.mxu0 0.0
        %1768 = vmatpush1.msra.mxu0 0.0
        %1769 = vmatprep.subr.mxu0 0.0
        %1770 = vmatpush1.msra.mxu0 0.0
        %1771 = vmatprep.subr.mxu0 0.0
        %1772 = vmatpush1.msra.mxu0 0.0
        %1773 = vmatprep.subr.mxu0 0.0
        %1774 = vmatpush1.msra.mxu0 0.0
        %1775 = vmatprep.subr.mxu0 0.0
        %1776 = vmatpush1.msra.mxu0 0.0
        %1777 = vmatprep.subr.mxu0 0.0
        %1778 = vmatpush1.msra.mxu0 0.0
        %1779 = vmatprep.subr.mxu0 0.0
        %1780 = vmatpush1.msra.mxu0 0.0
        %1781 = vmatprep.subr.mxu0 0.0
        %1782 = vmatpush1.msra.mxu0 0.0
        %1783 = vmatprep.subr.mxu0 0.0
        %1784 = vmatpush1.msra.mxu0 0.0
        %1785 = vmatprep.subr.mxu0 0.0
        %1786 = vmatpush1.msra.mxu0 0.0
        %1787 = vmatprep.subr.mxu0 0.0
        %1788 = vmatpush1.msra.mxu0 0.0
        %1789 = vmatprep.subr.mxu0 0.0
        %1790 = vmatpush1.msra.mxu0 0.0
        %1791 = vmatprep.subr.mxu0 0.0
        %1792 = vmatpush1.msra.mxu0 0.0
        %1793 = vmatprep.subr.mxu0 0.0
        %1794 = vmatpush1.msra.mxu0 0.0
        %1795 = vmatprep.subr.mxu0 0.0
        %1796 = vmatpush1.msra.mxu0 0.0
        %1797 = vmatprep.subr.mxu0 0.0
        %1798 = vmatpush1.msra.mxu0 0.0
        %1799 = vmatprep.subr.mxu0 0.0
        %1800 = vmatpush1.msra.mxu0 0.0
        %1801 = vmatprep.subr.mxu0 0.0
        %1802 = vmatpush1.msra.mxu0 0.0
        %1803 = vmatprep.subr.mxu0 0.0
        %1804 = vmatpush1.msra.mxu0 0.0
        %1805 = vmatprep.subr.mxu0 0.0
        %1806 = vmatpush1.msra.mxu0 0.0
        %1807 = vmatprep.subr.mxu0 0.0
        %1808 = vmatpush1.msra.mxu0 0.0
        %1809 = vmatprep.subr.mxu0 0.0
        %1810 = vmatpush1.msra.mxu0 0.0
        %1811 = vmatprep.subr.mxu0 0.0
        %1812 = vmatpush1.msra.mxu0 0.0
        %1813 = vmatprep.subr.mxu0 0.0
        %1814 = vmatpush1.msra.mxu0 0.0
        %1815 = vmatprep.subr.mxu0 0.0
        %1816 = vmatpush1.msra.mxu0 0.0
        %1817 = vmatprep.subr.mxu0 0.0
        %1818 = vmatpush1.msra.mxu0 0.0
        %1819 = vmatprep.subr.mxu0 0.0
        %1820 = vmatpush1.msra.mxu0 0.0
        %1821 = vmatprep.subr.mxu0 0.0
        %1822 = vmatpush1.msra.mxu0 0.0
        %1823 = vmatprep.subr.mxu0 0.0
        %1824 = vmatpush1.msra.mxu0 0.0
        %1825 = vmatprep.subr.mxu0 0.0
        %1826 = vmatpush1.msra.mxu0 0.0
        %1827 = vmatprep.subr.mxu0 0.0
        %1828 = vmatpush1.msra.mxu0 0.0
        %1829 = vmatprep.mubr.f32.mxu0 0.0
        %1830 = vmatmul.mubr.f32.gmra.mrb[0].mxu0 %v1670
        %v1831 = vpop.f32.mrb[0].mxu0
        %v1832 = vadd.f32 0.0, %v1831
        %v1833 = vpop.f32.mrb[0].mxu0
        %v1834 = vadd.f32 0.0, %v1833
        %1835 = vmatprep.mubr.f32.mxu0 0.0
        %1836 = vmatmul.mubr.f32.gmra.mrb[0].mxu0 %v1673
        %v1837 = vpop.f32.mrb[0].mxu0
        %v1838 = vadd.f32 0.0, %v1837
        %v1839 = vpop.f32.mrb[0].mxu0
        %v1840 = vadd.f32 0.0, %v1839
        %1841 = vmatprep.mubr.f32.mxu0 0.0
        %1842 = vmatmul.mubr.f32.gmra.mrb[0].mxu0 %v1676
        %v1843 = vpop.f32.mrb[0].mxu0
        %v1844 = vadd.f32 0.0, %v1843
        %v1845 = vpop.f32.mrb[0].mxu0
        %v1846 = vadd.f32 0.0, %v1845
        %1847 = vmatprep.mubr.f32.mxu0 0.0
        %1848 = vmatmul.mubr.f32.gmra.mrb[0].mxu0 %v1679
        %v1849 = vpop.f32.mrb[0].mxu0
        %v1850 = vadd.f32 0.0, %v1849
        %v1851 = vpop.f32.mrb[0].mxu0
        %v1852 = vadd.f32 0.0, %v1851
        %1853 = vmatprep.mubr.f32.mxu0 0.0
        %1854 = vmatmul.mubr.f32.gmra.mrb[0].mxu0 %v1682
        %v1855 = vpop.f32.mrb[0].mxu0
        %v1856 = vadd.f32 0.0, %v1855
        %v1857 = vpop.f32.mrb[0].mxu0
        %v1858 = vadd.f32 0.0, %v1857
        %1859 = vmatprep.mubr.f32.mxu0 0.0
        %1860 = vmatmul.mubr.f32.gmra.mrb[0].mxu0 %v1685
        %v1861 = vpop.f32.mrb[0].mxu0
        %v1862 = vadd.f32 0.0, %v1861
        %v1863 = vpop.f32.mrb[0].mxu0
        %v1864 = vadd.f32 0.0, %v1863
        %1865 = vmatprep.mubr.f32.mxu0 0.0
        %1866 = vmatmul.mubr.f32.gmra.mrb[0].mxu0 %v1688
        %v1867 = vpop.f32.mrb[0].mxu0
        %v1868 = vadd.f32 0.0, %v1867
        %v1869 = vpop.f32.mrb[0].mxu0
        %v1870 = vadd.f32 0.0, %v1869
        %1871 = vmatprep.mubr.f32.mxu0 0.0
        %1872 = vmatmul.mubr.f32.gmra.mrb[0].mxu0 %v1691
        %v1873 = vpop.f32.mrb[0].mxu0
        %v1874 = vadd.f32 0.0, %v1873
        %v1875 = vpop.f32.mrb[0].mxu0
        %v1876 = vadd.f32 0.0, %v1875
        %1877 = vmatprep.mubr.f32.mxu0 0.0
        %1878 = vmatmul.mubr.f32.gmra.mrb[0].mxu0 %v1694
        %v1879 = vpop.f32.mrb[0].mxu0
        %v1880 = vadd.f32 0.0, %v1879
        %v1881 = vpop.f32.mrb[0].mxu0
        %v1882 = vadd.f32 0.0, %v1881
        %1883 = vmatprep.mubr.f32.mxu0 0.0
        %1884 = vmatmul.mubr.f32.gmra.mrb[0].mxu0 %v1697
        %v1885 = vpop.f32.mrb[0].mxu0
        %v1886 = vadd.f32 0.0, %v1885
        %v1887 = vpop.f32.mrb[0].mxu0
        %v1888 = vadd.f32 0.0, %v1887
        %1889 = vmatprep.mubr.f32.mxu0 0.0
        %1890 = vmatmul.mubr.f32.gmra.mrb[0].mxu0 %v1700
        %v1891 = vpop.f32.mrb[0].mxu0
        %v1892 = vadd.f32 0.0, %v1891
        %v1893 = vpop.f32.mrb[0].mxu0
        %v1894 = vadd.f32 0.0, %v1893
        %1895 = vmatprep.mubr.f32.mxu0 0.0
        %1896 = vmatmul.mubr.f32.gmra.mrb[0].mxu0 %v1703
        %v1897 = vpop.f32.mrb[0].mxu0
        %v1898 = vadd.f32 0.0, %v1897
        %v1899 = vpop.f32.mrb[0].mxu0
        %v1900 = vadd.f32 0.0, %v1899
        %1901 = vmatprep.mubr.f32.mxu0 0.0
        %1902 = vmatmul.mubr.f32.gmra.mrb[0].mxu0 %v1706
        %v1903 = vpop.f32.mrb[0].mxu0
        %v1904 = vadd.f32 0.0, %v1903
        %v1905 = vpop.f32.mrb[0].mxu0
        %v1906 = vadd.f32 0.0, %v1905
        %1907 = vmatprep.mubr.f32.mxu0 0.0
        %1908 = vmatmul.mubr.f32.gmra.mrb[0].mxu0 %v1709
        %v1909 = vpop.f32.mrb[0].mxu0
        %v1910 = vadd.f32 0.0, %v1909
        %v1911 = vpop.f32.mrb[0].mxu0
        %v1912 = vadd.f32 0.0, %v1911
        %1913 = vmatprep.mubr.f32.mxu0 0.0
        %1914 = vmatmul.mubr.f32.gmra.mrb[0].mxu0 %v1712
        %v1915 = vpop.f32.mrb[0].mxu0
        %v1916 = vadd.f32 0.0, %v1915
        %v1917 = vpop.f32.mrb[0].mxu0
        %v1918 = vadd.f32 0.0, %v1917
        %1919 = vmatprep.mubr.f32.mxu0 0.0
        %1920 = vmatmul.mubr.f32.gmra.mrb[0].mxu0 %v1715
        %v1921 = vpop.f32.mrb[0].mxu0
        %v1922 = vadd.f32 0.0, %v1921
        %v1923 = vpop.f32.mrb[0].mxu0
        %v1924 = vadd.f32 0.0, %v1923
        %1925 = vmatprep.mubr.f32.mxu0 0.0
        %1926 = vmatmul.mubr.f32.gmra.mrb[0].mxu0 %v1718
        %v1927 = vpop.f32.mrb[0].mxu0
        %v1928 = vadd.f32 0.0, %v1927
        %v1929 = vpop.f32.mrb[0].mxu0
        %v1930 = vadd.f32 0.0, %v1929
        %1931 = vmatprep.mubr.f32.mxu0 0.0
        %1932 = vmatmul.mubr.f32.gmra.mrb[0].mxu0 %v1721
        %v1933 = vpop.f32.mrb[0].mxu0
        %v1934 = vadd.f32 0.0, %v1933
        %v1935 = vpop.f32.mrb[0].mxu0
        %v1936 = vadd.f32 0.0, %v1935
        %1937 = vmatprep.mubr.f32.mxu0 0.0
        %1938 = vmatmul.mubr.f32.gmra.mrb[0].mxu0 %v1724
        %v1939 = vpop.f32.mrb[0].mxu0
        %v1940 = vadd.f32 0.0, %v1939
        %v1941 = vpop.f32.mrb[0].mxu0
        %v1942 = vadd.f32 0.0, %v1941
        %1943 = vmatprep.mubr.f32.mxu0 0.0
        %1944 = vmatmul.mubr.f32.gmra.mrb[0].mxu0 %v1727
        %v1945 = vpop.f32.mrb[0].mxu0
        %v1946 = vadd.f32 0.0, %v1945
        %v1947 = vpop.f32.mrb[0].mxu0
        %v1948 = vadd.f32 0.0, %v1947
        %1949 = vmatprep.mubr.f32.mxu0 0.0
        %1950 = vmatmul.mubr.f32.gmra.mrb[0].mxu0 %v1730
        %v1951 = vpop.f32.mrb[0].mxu0
        %v1952 = vadd.f32 0.0, %v1951
        %v1953 = vpop.f32.mrb[0].mxu0
        %v1954 = vadd.f32 0.0, %v1953
        %1955 = vmatprep.mubr.f32.mxu0 0.0
        %1956 = vmatmul.mubr.f32.gmra.mrb[0].mxu0 %v1733
        %v1957 = vpop.f32.mrb[0].mxu0
        %v1958 = vadd.f32 0.0, %v1957
        %v1959 = vpop.f32.mrb[0].mxu0
        %v1960 = vadd.f32 0.0, %v1959
        %1961 = vmatprep.mubr.f32.mxu0 0.0
        %1962 = vmatmul.mubr.f32.gmra.mrb[0].mxu0 %v1736
        %v1963 = vpop.f32.mrb[0].mxu0
        %v1964 = vadd.f32 0.0, %v1963
        %v1965 = vpop.f32.mrb[0].mxu0
        %v1966 = vadd.f32 0.0, %v1965
        %1967 = vmatprep.mubr.f32.mxu0 0.0
        %1968 = vmatmul.mubr.f32.gmra.mrb[0].mxu0 %v1739
        %v1969 = vpop.f32.mrb[0].mxu0
        %v1970 = vadd.f32 0.0, %v1969
        %v1971 = vpop.f32.mrb[0].mxu0
        %v1972 = vadd.f32 0.0, %v1971
        %1973 = vmatprep.mubr.f32.mxu0 0.0
        %1974 = vmatmul.mubr.f32.gmra.mrb[0].mxu0 %v1742
        %v1975 = vpop.f32.mrb[0].mxu0
        %v1976 = vadd.f32 0.0, %v1975
        %v1977 = vpop.f32.mrb[0].mxu0
        %v1978 = vadd.f32 0.0, %v1977
        %1979 = vmatprep.mubr.f32.mxu0 0.0
        %1980 = vmatmul.mubr.f32.gmra.mrb[0].mxu0 %v1745
        %v1981 = vpop.f32.mrb[0].mxu0
        %v1982 = vadd.f32 0.0, %v1981
        %v1983 = vpop.f32.mrb[0].mxu0
        %v1984 = vadd.f32 0.0, %v1983
        %1985 = vmatprep.mubr.f32.mxu0 0.0
        %1986 = vmatmul.mubr.f32.gmra.mrb[0].mxu0 %v1748
        %v1987 = vpop.f32.mrb[0].mxu0
        %v1988 = vadd.f32 0.0, %v1987
        %v1989 = vpop.f32.mrb[0].mxu0
        %v1990 = vadd.f32 0.0, %v1989
        %1991 = vmatprep.mubr.f32.mxu0 0.0
        %1992 = vmatmul.mubr.f32.gmra.mrb[0].mxu0 %v1751
        %v1993 = vpop.f32.mrb[0].mxu0
        %v1994 = vadd.f32 0.0, %v1993
        %v1995 = vpop.f32.mrb[0].mxu0
        %v1996 = vadd.f32 0.0, %v1995
        %1997 = vmatprep.mubr.f32.mxu0 0.0
        %1998 = vmatmul.mubr.f32.gmra.mrb[0].mxu0 %v1754
        %v1999 = vpop.f32.mrb[0].mxu0
        %v2000 = vadd.f32 0.0, %v1999
        %v2001 = vpop.f32.mrb[0].mxu0
        %v2002 = vadd.f32 0.0, %v2001
        %2003 = vmatprep.mubr.f32.mxu0 0.0
        %2004 = vmatmul.mubr.f32.gmra.mrb[0].mxu0 %v1757
        %v2005 = vpop.f32.mrb[0].mxu0
        %v2006 = vadd.f32 0.0, %v2005
        %v2007 = vpop.f32.mrb[0].mxu0
        %v2008 = vadd.f32 0.0, %v2007
        %2009 = vmatprep.mubr.f32.mxu0 0.0
        %2010 = vmatmul.mubr.f32.gmra.mrb[0].mxu0 %v1760
        %v2011 = vpop.f32.mrb[0].mxu0
        %v2012 = vadd.f32 0.0, %v2011
        %v2013 = vpop.f32.mrb[0].mxu0
        %v2014 = vadd.f32 0.0, %v2013
        %2015 = vmatprep.mubr.f32.mxu0 0.0
        %2016 = vmatmul.mubr.f32.gmra.mrb[0].mxu0 %v1763
        %v2017 = vpop.f32.mrb[0].mxu0
        %v2018 = vadd.f32 0.0, %v2017
        %v2019 = vpop.f32.mrb[0].mxu0
        %v2020 = vadd.f32 0.0, %v2019
        %2021 = vdwg.mxu0
        %2022 = vxpose.xlu0.b32.start [1/16] %v744, 128
        %2023 = vxpose.xlu0.b32.cont [2/16] 0.0, 128
        %2024 = vxpose.xlu0.b32.cont [3/16] 0.0, 128
        %2025 = vxpose.xlu0.b32.cont [4/16] 0.0, 128
        %2026 = vxpose.xlu0.b32.cont [5/16] 0.0, 128
        %2027 = vxpose.xlu0.b32.cont [6/16] 0.0, 128
        %2028 = vxpose.xlu0.b32.cont [7/16] 0.0, 128
        %2029 = vxpose.xlu0.b32.cont [8/16] 0.0, 128
        %2030 = vxpose.xlu0.b32.cont [9/16] 0.0, 128
        %2031 = vxpose.xlu0.b32.cont [10/16] 0.0, 128
        %2032 = vxpose.xlu0.b32.cont [11/16] 0.0, 128
        %2033 = vxpose.xlu0.b32.cont [12/16] 0.0, 128
        %2034 = vxpose.xlu0.b32.cont [13/16] 0.0, 128
        %2035 = vxpose.xlu0.b32.cont [14/16] 0.0, 128
        %2036 = vxpose.xlu0.b32.cont [15/16] 0.0, 128
        %2037 = vxpose.xlu0.b32.end [16/16] 0.0, 128
        %v2038 = vpop.trf.xlu0
        %v2039 = vpop.trf.xlu0
        %v2040 = vpop.trf.xlu0
        %v2041 = vpop.trf.xlu0
        %v2042 = vpop.trf.xlu0
        %v2043 = vpop.trf.xlu0
        %v2044 = vpop.trf.xlu0
        %v2045 = vpop.trf.xlu0
        %v2046 = vpop.trf.xlu0
        %v2047 = vpop.trf.xlu0
        %v2048 = vpop.trf.xlu0
        %v2049 = vpop.trf.xlu0
        %v2050 = vpop.trf.xlu0
        %v2051 = vpop.trf.xlu0
        %v2052 = vpop.trf.xlu0
        %v2053 = vpop.trf.xlu0
        %2054 = vxpose.xlu0.b32.start [1/16] %v745, 128
        %2055 = vxpose.xlu0.b32.cont [2/16] 0.0, 128
        %2056 = vxpose.xlu0.b32.cont [3/16] 0.0, 128
        %2057 = vxpose.xlu0.b32.cont [4/16] 0.0, 128
        %2058 = vxpose.xlu0.b32.cont [5/16] 0.0, 128
        %2059 = vxpose.xlu0.b32.cont [6/16] 0.0, 128
        %2060 = vxpose.xlu0.b32.cont [7/16] 0.0, 128
        %2061 = vxpose.xlu0.b32.cont [8/16] 0.0, 128
        %2062 = vxpose.xlu0.b32.cont [9/16] 0.0, 128
        %2063 = vxpose.xlu0.b32.cont [10/16] 0.0, 128
        %2064 = vxpose.xlu0.b32.cont [11/16] 0.0, 128
        %2065 = vxpose.xlu0.b32.cont [12/16] 0.0, 128
        %2066 = vxpose.xlu0.b32.cont [13/16] 0.0, 128
        %2067 = vxpose.xlu0.b32.cont [14/16] 0.0, 128
        %2068 = vxpose.xlu0.b32.cont [15/16] 0.0, 128
        %2069 = vxpose.xlu0.b32.end [16/16] 0.0, 128
        %v2070 = vpop.trf.xlu0
        %v2071 = vpop.trf.xlu0
        %v2072 = vpop.trf.xlu0
        %v2073 = vpop.trf.xlu0
        %v2074 = vpop.trf.xlu0
        %v2075 = vpop.trf.xlu0
        %v2076 = vpop.trf.xlu0
        %v2077 = vpop.trf.xlu0
        %v2078 = vpop.trf.xlu0
        %v2079 = vpop.trf.xlu0
        %v2080 = vpop.trf.xlu0
        %v2081 = vpop.trf.xlu0
        %v2082 = vpop.trf.xlu0
        %v2083 = vpop.trf.xlu0
        %v2084 = vpop.trf.xlu0
        %v2085 = vpop.trf.xlu0
        %v2087 = vsel %vm834, %v2038, 0
        %v2090 = vsel %vm834, %v2039, 0
        %v2093 = vsel %vm834, %v2040, 0
        %v2096 = vsel %vm834, %v2041, 0
        %v2099 = vsel %vm834, %v2042, 0
        %v2102 = vsel %vm834, %v2043, 0
        %v2105 = vsel %vm834, %v2044, 0
        %v2108 = vsel %vm834, %v2045, 0
        %v2111 = vsel %vm834, %v2046, 0
        %v2114 = vsel %vm834, %v2047, 0
        %v2117 = vsel %vm834, %v2048, 0
        %v2120 = vsel %vm834, %v2049, 0
        %v2123 = vsel %vm834, %v2050, 0
        %v2126 = vsel %vm834, %v2051, 0
        %v2129 = vsel %vm834, %v2052, 0
        %v2132 = vsel %vm834, %v2053, 0
        %v2135 = vsel %vm834, %v2070, 0
        %v2138 = vsel %vm834, %v2071, 0
        %v2141 = vsel %vm834, %v2072, 0
        %v2144 = vsel %vm834, %v2073, 0
        %v2147 = vsel %vm834, %v2074, 0
        %v2150 = vsel %vm834, %v2075, 0
        %v2153 = vsel %vm834, %v2076, 0
        %v2156 = vsel %vm834, %v2077, 0
        %v2159 = vsel %vm834, %v2078, 0
        %v2162 = vsel %vm834, %v2079, 0
        %v2165 = vsel %vm834, %v2080, 0
        %v2168 = vsel %vm834, %v2081, 0
        %v2171 = vsel %vm834, %v2082, 0
        %v2174 = vsel %vm834, %v2083, 0
        %v2177 = vsel %vm834, %v2084, 0
        %v2180 = vsel %vm834, %v2085, 0
        %2182 = vmatprep.subr.mxu0 %v761
        %2183 = vmatpush1.msra.mxu0 %v760
        %2184 = vmatprep.subr.mxu0 0.0
        %2185 = vmatpush1.msra.mxu0 0.0
        %2186 = vmatprep.subr.mxu0 0.0
        %2187 = vmatpush1.msra.mxu0 0.0
        %2188 = vmatprep.subr.mxu0 0.0
        %2189 = vmatpush1.msra.mxu0 0.0
        %2190 = vmatprep.subr.mxu0 0.0
        %2191 = vmatpush1.msra.mxu0 0.0
        %2192 = vmatprep.subr.mxu0 0.0
        %2193 = vmatpush1.msra.mxu0 0.0
        %2194 = vmatprep.subr.mxu0 0.0
        %2195 = vmatpush1.msra.mxu0 0.0
        %2196 = vmatprep.subr.mxu0 0.0
        %2197 = vmatpush1.msra.mxu0 0.0
        %2198 = vmatprep.subr.mxu0 0.0
        %2199 = vmatpush1.msra.mxu0 0.0
        %2200 = vmatprep.subr.mxu0 0.0
        %2201 = vmatpush1.msra.mxu0 0.0
        %2202 = vmatprep.subr.mxu0 0.0
        %2203 = vmatpush1.msra.mxu0 0.0
        %2204 = vmatprep.subr.mxu0 0.0
        %2205 = vmatpush1.msra.mxu0 0.0
        %2206 = vmatprep.subr.mxu0 0.0
        %2207 = vmatpush1.msra.mxu0 0.0
        %2208 = vmatprep.subr.mxu0 0.0
        %2209 = vmatpush1.msra.mxu0 0.0
        %2210 = vmatprep.subr.mxu0 0.0
        %2211 = vmatpush1.msra.mxu0 0.0
        %2212 = vmatprep.subr.mxu0 0.0
        %2213 = vmatpush1.msra.mxu0 0.0
        %2214 = vmatprep.subr.mxu0 0.0
        %2215 = vmatpush1.msra.mxu0 0.0
        %2216 = vmatprep.subr.mxu0 0.0
        %2217 = vmatpush1.msra.mxu0 0.0
        %2218 = vmatprep.subr.mxu0 0.0
        %2219 = vmatpush1.msra.mxu0 0.0
        %2220 = vmatprep.subr.mxu0 0.0
        %2221 = vmatpush1.msra.mxu0 0.0
        %2222 = vmatprep.subr.mxu0 0.0
        %2223 = vmatpush1.msra.mxu0 0.0
        %2224 = vmatprep.subr.mxu0 0.0
        %2225 = vmatpush1.msra.mxu0 0.0
        %2226 = vmatprep.subr.mxu0 0.0
        %2227 = vmatpush1.msra.mxu0 0.0
        %2228 = vmatprep.subr.mxu0 0.0
        %2229 = vmatpush1.msra.mxu0 0.0
        %2230 = vmatprep.subr.mxu0 0.0
        %2231 = vmatpush1.msra.mxu0 0.0
        %2232 = vmatprep.subr.mxu0 0.0
        %2233 = vmatpush1.msra.mxu0 0.0
        %2234 = vmatprep.subr.mxu0 0.0
        %2235 = vmatpush1.msra.mxu0 0.0
        %2236 = vmatprep.subr.mxu0 0.0
        %2237 = vmatpush1.msra.mxu0 0.0
        %2238 = vmatprep.subr.mxu0 0.0
        %2239 = vmatpush1.msra.mxu0 0.0
        %2240 = vmatprep.subr.mxu0 0.0
        %2241 = vmatpush1.msra.mxu0 0.0
        %2242 = vmatprep.subr.mxu0 0.0
        %2243 = vmatpush1.msra.mxu0 0.0
        %2244 = vmatprep.subr.mxu0 0.0
        %2245 = vmatpush1.msra.mxu0 0.0
        %2246 = vmatprep.mubr.f32.mxu0 0.0
        %2247 = vmatmul.mubr.f32.gmra.mrb[0].mxu0 %v2087
        %v2248 = vpop.f32.mrb[0].mxu0
        %v2249 = vadd.f32 0.0, %v2248
        %v2250 = vpop.f32.mrb[0].mxu0
        %v2251 = vadd.f32 0.0, %v2250
        %2252 = vmatprep.mubr.f32.mxu0 0.0
        %2253 = vmatmul.mubr.f32.gmra.mrb[0].mxu0 %v2090
        %v2254 = vpop.f32.mrb[0].mxu0
        %v2255 = vadd.f32 0.0, %v2254
        %v2256 = vpop.f32.mrb[0].mxu0
        %v2257 = vadd.f32 0.0, %v2256
        %2258 = vmatprep.mubr.f32.mxu0 0.0
        %2259 = vmatmul.mubr.f32.gmra.mrb[0].mxu0 %v2093
        %v2260 = vpop.f32.mrb[0].mxu0
        %v2261 = vadd.f32 0.0, %v2260
        %v2262 = vpop.f32.mrb[0].mxu0
        %v2263 = vadd.f32 0.0, %v2262
        %2264 = vmatprep.mubr.f32.mxu0 0.0
        %2265 = vmatmul.mubr.f32.gmra.mrb[0].mxu0 %v2096
        %v2266 = vpop.f32.mrb[0].mxu0
        %v2267 = vadd.f32 0.0, %v2266
        %v2268 = vpop.f32.mrb[0].mxu0
        %v2269 = vadd.f32 0.0, %v2268
        %2270 = vmatprep.mubr.f32.mxu0 0.0
        %2271 = vmatmul.mubr.f32.gmra.mrb[0].mxu0 %v2099
        %v2272 = vpop.f32.mrb[0].mxu0
        %v2273 = vadd.f32 0.0, %v2272
        %v2274 = vpop.f32.mrb[0].mxu0
        %v2275 = vadd.f32 0.0, %v2274
        %2276 = vmatprep.mubr.f32.mxu0 0.0
        %2277 = vmatmul.mubr.f32.gmra.mrb[0].mxu0 %v2102
        %v2278 = vpop.f32.mrb[0].mxu0
        %v2279 = vadd.f32 0.0, %v2278
        %v2280 = vpop.f32.mrb[0].mxu0
        %v2281 = vadd.f32 0.0, %v2280
        %2282 = vmatprep.mubr.f32.mxu0 0.0
        %2283 = vmatmul.mubr.f32.gmra.mrb[0].mxu0 %v2105
        %v2284 = vpop.f32.mrb[0].mxu0
        %v2285 = vadd.f32 0.0, %v2284
        %v2286 = vpop.f32.mrb[0].mxu0
        %v2287 = vadd.f32 0.0, %v2286
        %2288 = vmatprep.mubr.f32.mxu0 0.0
        %2289 = vmatmul.mubr.f32.gmra.mrb[0].mxu0 %v2108
        %v2290 = vpop.f32.mrb[0].mxu0
        %v2291 = vadd.f32 0.0, %v2290
        %v2292 = vpop.f32.mrb[0].mxu0
        %v2293 = vadd.f32 0.0, %v2292
        %2294 = vmatprep.mubr.f32.mxu0 0.0
        %2295 = vmatmul.mubr.f32.gmra.mrb[0].mxu0 %v2111
        %v2296 = vpop.f32.mrb[0].mxu0
        %v2297 = vadd.f32 0.0, %v2296
        %v2298 = vpop.f32.mrb[0].mxu0
        %v2299 = vadd.f32 0.0, %v2298
        %2300 = vmatprep.mubr.f32.mxu0 0.0
        %2301 = vmatmul.mubr.f32.gmra.mrb[0].mxu0 %v2114
        %v2302 = vpop.f32.mrb[0].mxu0
        %v2303 = vadd.f32 0.0, %v2302
        %v2304 = vpop.f32.mrb[0].mxu0
        %v2305 = vadd.f32 0.0, %v2304
        %2306 = vmatprep.mubr.f32.mxu0 0.0
        %2307 = vmatmul.mubr.f32.gmra.mrb[0].mxu0 %v2117
        %v2308 = vpop.f32.mrb[0].mxu0
        %v2309 = vadd.f32 0.0, %v2308
        %v2310 = vpop.f32.mrb[0].mxu0
        %v2311 = vadd.f32 0.0, %v2310
        %2312 = vmatprep.mubr.f32.mxu0 0.0
        %2313 = vmatmul.mubr.f32.gmra.mrb[0].mxu0 %v2120
        %v2314 = vpop.f32.mrb[0].mxu0
        %v2315 = vadd.f32 0.0, %v2314
        %v2316 = vpop.f32.mrb[0].mxu0
        %v2317 = vadd.f32 0.0, %v2316
        %2318 = vmatprep.mubr.f32.mxu0 0.0
        %2319 = vmatmul.mubr.f32.gmra.mrb[0].mxu0 %v2123
        %v2320 = vpop.f32.mrb[0].mxu0
        %v2321 = vadd.f32 0.0, %v2320
        %v2322 = vpop.f32.mrb[0].mxu0
        %v2323 = vadd.f32 0.0, %v2322
        %2324 = vmatprep.mubr.f32.mxu0 0.0
        %2325 = vmatmul.mubr.f32.gmra.mrb[0].mxu0 %v2126
        %v2326 = vpop.f32.mrb[0].mxu0
        %v2327 = vadd.f32 0.0, %v2326
        %v2328 = vpop.f32.mrb[0].mxu0
        %v2329 = vadd.f32 0.0, %v2328
        %2330 = vmatprep.mubr.f32.mxu0 0.0
        %2331 = vmatmul.mubr.f32.gmra.mrb[0].mxu0 %v2129
        %v2332 = vpop.f32.mrb[0].mxu0
        %v2333 = vadd.f32 0.0, %v2332
        %v2334 = vpop.f32.mrb[0].mxu0
        %v2335 = vadd.f32 0.0, %v2334
        %2336 = vmatprep.mubr.f32.mxu0 0.0
        %2337 = vmatmul.mubr.f32.gmra.mrb[0].mxu0 %v2132
        %v2338 = vpop.f32.mrb[0].mxu0
        %v2339 = vadd.f32 0.0, %v2338
        %v2340 = vpop.f32.mrb[0].mxu0
        %v2341 = vadd.f32 0.0, %v2340
        %2342 = vmatprep.mubr.f32.mxu0 0.0
        %2343 = vmatmul.mubr.f32.gmra.mrb[0].mxu0 %v2135
        %v2344 = vpop.f32.mrb[0].mxu0
        %v2345 = vadd.f32 0.0, %v2344
        %v2346 = vpop.f32.mrb[0].mxu0
        %v2347 = vadd.f32 0.0, %v2346
        %2348 = vmatprep.mubr.f32.mxu0 0.0
        %2349 = vmatmul.mubr.f32.gmra.mrb[0].mxu0 %v2138
        %v2350 = vpop.f32.mrb[0].mxu0
        %v2351 = vadd.f32 0.0, %v2350
        %v2352 = vpop.f32.mrb[0].mxu0
        %v2353 = vadd.f32 0.0, %v2352
        %2354 = vmatprep.mubr.f32.mxu0 0.0
        %2355 = vmatmul.mubr.f32.gmra.mrb[0].mxu0 %v2141
        %v2356 = vpop.f32.mrb[0].mxu0
        %v2357 = vadd.f32 0.0, %v2356
        %v2358 = vpop.f32.mrb[0].mxu0
        %v2359 = vadd.f32 0.0, %v2358
        %2360 = vmatprep.mubr.f32.mxu0 0.0
        %2361 = vmatmul.mubr.f32.gmra.mrb[0].mxu0 %v2144
        %v2362 = vpop.f32.mrb[0].mxu0
        %v2363 = vadd.f32 0.0, %v2362
        %v2364 = vpop.f32.mrb[0].mxu0
        %v2365 = vadd.f32 0.0, %v2364
        %2366 = vmatprep.mubr.f32.mxu0 0.0
        %2367 = vmatmul.mubr.f32.gmra.mrb[0].mxu0 %v2147
        %v2368 = vpop.f32.mrb[0].mxu0
        %v2369 = vadd.f32 0.0, %v2368
        %v2370 = vpop.f32.mrb[0].mxu0
        %v2371 = vadd.f32 0.0, %v2370
        %2372 = vmatprep.mubr.f32.mxu0 0.0
        %2373 = vmatmul.mubr.f32.gmra.mrb[0].mxu0 %v2150
        %v2374 = vpop.f32.mrb[0].mxu0
        %v2375 = vadd.f32 0.0, %v2374
        %v2376 = vpop.f32.mrb[0].mxu0
        %v2377 = vadd.f32 0.0, %v2376
        %2378 = vmatprep.mubr.f32.mxu0 0.0
        %2379 = vmatmul.mubr.f32.gmra.mrb[0].mxu0 %v2153
        %v2380 = vpop.f32.mrb[0].mxu0
        %v2381 = vadd.f32 0.0, %v2380
        %v2382 = vpop.f32.mrb[0].mxu0
        %v2383 = vadd.f32 0.0, %v2382
        %2384 = vmatprep.mubr.f32.mxu0 0.0
        %2385 = vmatmul.mubr.f32.gmra.mrb[0].mxu0 %v2156
        %v2386 = vpop.f32.mrb[0].mxu0
        %v2387 = vadd.f32 0.0, %v2386
        %v2388 = vpop.f32.mrb[0].mxu0
        %v2389 = vadd.f32 0.0, %v2388
        %2390 = vmatprep.mubr.f32.mxu0 0.0
        %2391 = vmatmul.mubr.f32.gmra.mrb[0].mxu0 %v2159
        %v2392 = vpop.f32.mrb[0].mxu0
        %v2393 = vadd.f32 0.0, %v2392
        %v2394 = vpop.f32.mrb[0].mxu0
        %v2395 = vadd.f32 0.0, %v2394
        %2396 = vmatprep.mubr.f32.mxu0 0.0
        %2397 = vmatmul.mubr.f32.gmra.mrb[0].mxu0 %v2162
        %v2398 = vpop.f32.mrb[0].mxu0
        %v2399 = vadd.f32 0.0, %v2398
        %v2400 = vpop.f32.mrb[0].mxu0
        %v2401 = vadd.f32 0.0, %v2400
        %2402 = vmatprep.mubr.f32.mxu0 0.0
        %2403 = vmatmul.mubr.f32.gmra.mrb[0].mxu0 %v2165
        %v2404 = vpop.f32.mrb[0].mxu0
        %v2405 = vadd.f32 0.0, %v2404
        %v2406 = vpop.f32.mrb[0].mxu0
        %v2407 = vadd.f32 0.0, %v2406
        %2408 = vmatprep.mubr.f32.mxu0 0.0
        %2409 = vmatmul.mubr.f32.gmra.mrb[0].mxu0 %v2168
        %v2410 = vpop.f32.mrb[0].mxu0
        %v2411 = vadd.f32 0.0, %v2410
        %v2412 = vpop.f32.mrb[0].mxu0
        %v2413 = vadd.f32 0.0, %v2412
        %2414 = vmatprep.mubr.f32.mxu0 0.0
        %2415 = vmatmul.mubr.f32.gmra.mrb[0].mxu0 %v2171
        %v2416 = vpop.f32.mrb[0].mxu0
        %v2417 = vadd.f32 0.0, %v2416
        %v2418 = vpop.f32.mrb[0].mxu0
        %v2419 = vadd.f32 0.0, %v2418
        %2420 = vmatprep.mubr.f32.mxu0 0.0
        %2421 = vmatmul.mubr.f32.gmra.mrb[0].mxu0 %v2174
        %v2422 = vpop.f32.mrb[0].mxu0
        %v2423 = vadd.f32 0.0, %v2422
        %v2424 = vpop.f32.mrb[0].mxu0
        %v2425 = vadd.f32 0.0, %v2424
        %2426 = vmatprep.mubr.f32.mxu0 0.0
        %2427 = vmatmul.mubr.f32.gmra.mrb[0].mxu0 %v2177
        %v2428 = vpop.f32.mrb[0].mxu0
        %v2429 = vadd.f32 0.0, %v2428
        %v2430 = vpop.f32.mrb[0].mxu0
        %v2431 = vadd.f32 0.0, %v2430
        %2432 = vmatprep.mubr.f32.mxu0 0.0
        %2433 = vmatmul.mubr.f32.gmra.mrb[0].mxu0 %v2180
        %v2434 = vpop.f32.mrb[0].mxu0
        %v2435 = vadd.f32 0.0, %v2434
        %v2436 = vpop.f32.mrb[0].mxu0
        %v2437 = vadd.f32 0.0, %v2436
        %2438 = vdwg.mxu0
        %2439 = vxpose.xlu0.b32.start [1/16] %v746, 128
        %2440 = vxpose.xlu0.b32.cont [2/16] 0.0, 128
        %2441 = vxpose.xlu0.b32.cont [3/16] 0.0, 128
        %2442 = vxpose.xlu0.b32.cont [4/16] 0.0, 128
        %2443 = vxpose.xlu0.b32.cont [5/16] 0.0, 128
        %2444 = vxpose.xlu0.b32.cont [6/16] 0.0, 128
        %2445 = vxpose.xlu0.b32.cont [7/16] 0.0, 128
        %2446 = vxpose.xlu0.b32.cont [8/16] 0.0, 128
        %2447 = vxpose.xlu0.b32.cont [9/16] 0.0, 128
        %2448 = vxpose.xlu0.b32.cont [10/16] 0.0, 128
        %2449 = vxpose.xlu0.b32.cont [11/16] 0.0, 128
        %2450 = vxpose.xlu0.b32.cont [12/16] 0.0, 128
        %2451 = vxpose.xlu0.b32.cont [13/16] 0.0, 128
        %2452 = vxpose.xlu0.b32.cont [14/16] 0.0, 128
        %2453 = vxpose.xlu0.b32.cont [15/16] 0.0, 128
        %2454 = vxpose.xlu0.b32.end [16/16] 0.0, 128
        %v2455 = vpop.trf.xlu0
        %v2456 = vpop.trf.xlu0
        %v2457 = vpop.trf.xlu0
        %v2458 = vpop.trf.xlu0
        %v2459 = vpop.trf.xlu0
        %v2460 = vpop.trf.xlu0
        %v2461 = vpop.trf.xlu0
        %v2462 = vpop.trf.xlu0
        %v2463 = vpop.trf.xlu0
        %v2464 = vpop.trf.xlu0
        %v2465 = vpop.trf.xlu0
        %v2466 = vpop.trf.xlu0
        %v2467 = vpop.trf.xlu0
        %v2468 = vpop.trf.xlu0
        %v2469 = vpop.trf.xlu0
        %v2470 = vpop.trf.xlu0
        %2471 = vxpose.xlu0.b32.start [1/16] %v747, 128
        %2472 = vxpose.xlu0.b32.cont [2/16] 0.0, 128
        %2473 = vxpose.xlu0.b32.cont [3/16] 0.0, 128
        %2474 = vxpose.xlu0.b32.cont [4/16] 0.0, 128
        %2475 = vxpose.xlu0.b32.cont [5/16] 0.0, 128
        %2476 = vxpose.xlu0.b32.cont [6/16] 0.0, 128
        %2477 = vxpose.xlu0.b32.cont [7/16] 0.0, 128
        %2478 = vxpose.xlu0.b32.cont [8/16] 0.0, 128
        %2479 = vxpose.xlu0.b32.cont [9/16] 0.0, 128
        %2480 = vxpose.xlu0.b32.cont [10/16] 0.0, 128
        %2481 = vxpose.xlu0.b32.cont [11/16] 0.0, 128
        %2482 = vxpose.xlu0.b32.cont [12/16] 0.0, 128
        %2483 = vxpose.xlu0.b32.cont [13/16] 0.0, 128
        %2484 = vxpose.xlu0.b32.cont [14/16] 0.0, 128
        %2485 = vxpose.xlu0.b32.cont [15/16] 0.0, 128
        %2486 = vxpose.xlu0.b32.end [16/16] 0.0, 128
        %v2487 = vpop.trf.xlu0
        %v2488 = vpop.trf.xlu0
        %v2489 = vpop.trf.xlu0
        %v2490 = vpop.trf.xlu0
        %v2491 = vpop.trf.xlu0
        %v2492 = vpop.trf.xlu0
        %v2493 = vpop.trf.xlu0
        %v2494 = vpop.trf.xlu0
        %v2495 = vpop.trf.xlu0
        %v2496 = vpop.trf.xlu0
        %v2497 = vpop.trf.xlu0
        %v2498 = vpop.trf.xlu0
        %v2499 = vpop.trf.xlu0
        %v2500 = vpop.trf.xlu0
        %v2501 = vpop.trf.xlu0
        %v2502 = vpop.trf.xlu0
        %v2504 = vsel %vm834, %v2455, 0
        %v2507 = vsel %vm834, %v2456, 0
        %v2510 = vsel %vm834, %v2457, 0
        %v2513 = vsel %vm834, %v2458, 0
        %v2516 = vsel %vm834, %v2459, 0
        %v2519 = vsel %vm834, %v2460, 0
        %v2522 = vsel %vm834, %v2461, 0
        %v2525 = vsel %vm834, %v2462, 0
        %v2528 = vsel %vm834, %v2463, 0
        %v2531 = vsel %vm834, %v2464, 0
        %v2534 = vsel %vm834, %v2465, 0
        %v2537 = vsel %vm834, %v2466, 0
        %v2540 = vsel %vm834, %v2467, 0
        %v2543 = vsel %vm834, %v2468, 0
        %v2546 = vsel %vm834, %v2469, 0
        %v2549 = vsel %vm834, %v2470, 0
        %v2552 = vsel %vm834, %v2487, 0
        %v2555 = vsel %vm834, %v2488, 0
        %v2558 = vsel %vm834, %v2489, 0
        %v2561 = vsel %vm834, %v2490, 0
        %v2564 = vsel %vm834, %v2491, 0
        %v2567 = vsel %vm834, %v2492, 0
        %v2570 = vsel %vm834, %v2493, 0
        %v2573 = vsel %vm834, %v2494, 0
        %v2576 = vsel %vm834, %v2495, 0
        %v2579 = vsel %vm834, %v2496, 0
        %v2582 = vsel %vm834, %v2497, 0
        %v2585 = vsel %vm834, %v2498, 0
        %v2588 = vsel %vm834, %v2499, 0
        %v2591 = vsel %vm834, %v2500, 0
        %v2594 = vsel %vm834, %v2501, 0
        %v2597 = vsel %vm834, %v2502, 0
        %2599 = vmatprep.subr.mxu0 %v763
        %2600 = vmatpush1.msra.mxu0 %v762
        %2601 = vmatprep.subr.mxu0 0.0
        %2602 = vmatpush1.msra.mxu0 0.0
        %2603 = vmatprep.subr.mxu0 0.0
        %2604 = vmatpush1.msra.mxu0 0.0
        %2605 = vmatprep.subr.mxu0 0.0
        %2606 = vmatpush1.msra.mxu0 0.0
        %2607 = vmatprep.subr.mxu0 0.0
        %2608 = vmatpush1.msra.mxu0 0.0
        %2609 = vmatprep.subr.mxu0 0.0
        %2610 = vmatpush1.msra.mxu0 0.0
        %2611 = vmatprep.subr.mxu0 0.0
        %2612 = vmatpush1.msra.mxu0 0.0
        %2613 = vmatprep.subr.mxu0 0.0
        %2614 = vmatpush1.msra.mxu0 0.0
        %2615 = vmatprep.subr.mxu0 0.0
        %2616 = vmatpush1.msra.mxu0 0.0
        %2617 = vmatprep.subr.mxu0 0.0
        %2618 = vmatpush1.msra.mxu0 0.0
        %2619 = vmatprep.subr.mxu0 0.0
        %2620 = vmatpush1.msra.mxu0 0.0
        %2621 = vmatprep.subr.mxu0 0.0
        %2622 = vmatpush1.msra.mxu0 0.0
        %2623 = vmatprep.subr.mxu0 0.0
        %2624 = vmatpush1.msra.mxu0 0.0
        %2625 = vmatprep.subr.mxu0 0.0
        %2626 = vmatpush1.msra.mxu0 0.0
        %2627 = vmatprep.subr.mxu0 0.0
        %2628 = vmatpush1.msra.mxu0 0.0
        %2629 = vmatprep.subr.mxu0 0.0
        %2630 = vmatpush1.msra.mxu0 0.0
        %2631 = vmatprep.subr.mxu0 0.0
        %2632 = vmatpush1.msra.mxu0 0.0
        %2633 = vmatprep.subr.mxu0 0.0
        %2634 = vmatpush1.msra.mxu0 0.0
        %2635 = vmatprep.subr.mxu0 0.0
        %2636 = vmatpush1.msra.mxu0 0.0
        %2637 = vmatprep.subr.mxu0 0.0
        %2638 = vmatpush1.msra.mxu0 0.0
        %2639 = vmatprep.subr.mxu0 0.0
        %2640 = vmatpush1.msra.mxu0 0.0
        %2641 = vmatprep.subr.mxu0 0.0
        %2642 = vmatpush1.msra.mxu0 0.0
        %2643 = vmatprep.subr.mxu0 0.0
        %2644 = vmatpush1.msra.mxu0 0.0
        %2645 = vmatprep.subr.mxu0 0.0
        %2646 = vmatpush1.msra.mxu0 0.0
        %2647 = vmatprep.subr.mxu0 0.0
        %2648 = vmatpush1.msra.mxu0 0.0
        %2649 = vmatprep.subr.mxu0 0.0
        %2650 = vmatpush1.msra.mxu0 0.0
        %2651 = vmatprep.subr.mxu0 0.0
        %2652 = vmatpush1.msra.mxu0 0.0
        %2653 = vmatprep.subr.mxu0 0.0
        %2654 = vmatpush1.msra.mxu0 0.0
        %2655 = vmatprep.subr.mxu0 0.0
        %2656 = vmatpush1.msra.mxu0 0.0
        %2657 = vmatprep.subr.mxu0 0.0
        %2658 = vmatpush1.msra.mxu0 0.0
        %2659 = vmatprep.subr.mxu0 0.0
        %2660 = vmatpush1.msra.mxu0 0.0
        %2661 = vmatprep.subr.mxu0 0.0
        %2662 = vmatpush1.msra.mxu0 0.0
        %2663 = vmatprep.mubr.f32.mxu0 0.0
        %2664 = vmatmul.mubr.f32.gmra.mrb[0].mxu0 %v2504
        %v2665 = vpop.f32.mrb[0].mxu0
        %v2666 = vadd.f32 0.0, %v2665
        %v2667 = vpop.f32.mrb[0].mxu0
        %v2668 = vadd.f32 0.0, %v2667
        %2669 = vmatprep.mubr.f32.mxu0 0.0
        %2670 = vmatmul.mubr.f32.gmra.mrb[0].mxu0 %v2507
        %v2671 = vpop.f32.mrb[0].mxu0
        %v2672 = vadd.f32 0.0, %v2671
        %v2673 = vpop.f32.mrb[0].mxu0
        %v2674 = vadd.f32 0.0, %v2673
        %2675 = vmatprep.mubr.f32.mxu0 0.0
        %2676 = vmatmul.mubr.f32.gmra.mrb[0].mxu0 %v2510
        %v2677 = vpop.f32.mrb[0].mxu0
        %v2678 = vadd.f32 0.0, %v2677
        %v2679 = vpop.f32.mrb[0].mxu0
        %v2680 = vadd.f32 0.0, %v2679
        %2681 = vmatprep.mubr.f32.mxu0 0.0
        %2682 = vmatmul.mubr.f32.gmra.mrb[0].mxu0 %v2513
        %v2683 = vpop.f32.mrb[0].mxu0
        %v2684 = vadd.f32 0.0, %v2683
        %v2685 = vpop.f32.mrb[0].mxu0
        %v2686 = vadd.f32 0.0, %v2685
        %2687 = vmatprep.mubr.f32.mxu0 0.0
        %2688 = vmatmul.mubr.f32.gmra.mrb[0].mxu0 %v2516
        %v2689 = vpop.f32.mrb[0].mxu0
        %v2690 = vadd.f32 0.0, %v2689
        %v2691 = vpop.f32.mrb[0].mxu0
        %v2692 = vadd.f32 0.0, %v2691
        %2693 = vmatprep.mubr.f32.mxu0 0.0
        %2694 = vmatmul.mubr.f32.gmra.mrb[0].mxu0 %v2519
        %v2695 = vpop.f32.mrb[0].mxu0
        %v2696 = vadd.f32 0.0, %v2695
        %v2697 = vpop.f32.mrb[0].mxu0
        %v2698 = vadd.f32 0.0, %v2697
        %2699 = vmatprep.mubr.f32.mxu0 0.0
        %2700 = vmatmul.mubr.f32.gmra.mrb[0].mxu0 %v2522
        %v2701 = vpop.f32.mrb[0].mxu0
        %v2702 = vadd.f32 0.0, %v2701
        %v2703 = vpop.f32.mrb[0].mxu0
        %v2704 = vadd.f32 0.0, %v2703
        %2705 = vmatprep.mubr.f32.mxu0 0.0
        %2706 = vmatmul.mubr.f32.gmra.mrb[0].mxu0 %v2525
        %v2707 = vpop.f32.mrb[0].mxu0
        %v2708 = vadd.f32 0.0, %v2707
        %v2709 = vpop.f32.mrb[0].mxu0
        %v2710 = vadd.f32 0.0, %v2709
        %2711 = vmatprep.mubr.f32.mxu0 0.0
        %2712 = vmatmul.mubr.f32.gmra.mrb[0].mxu0 %v2528
        %v2713 = vpop.f32.mrb[0].mxu0
        %v2714 = vadd.f32 0.0, %v2713
        %v2715 = vpop.f32.mrb[0].mxu0
        %v2716 = vadd.f32 0.0, %v2715
        %2717 = vmatprep.mubr.f32.mxu0 0.0
        %2718 = vmatmul.mubr.f32.gmra.mrb[0].mxu0 %v2531
        %v2719 = vpop.f32.mrb[0].mxu0
        %v2720 = vadd.f32 0.0, %v2719
        %v2721 = vpop.f32.mrb[0].mxu0
        %v2722 = vadd.f32 0.0, %v2721
        %2723 = vmatprep.mubr.f32.mxu0 0.0
        %2724 = vmatmul.mubr.f32.gmra.mrb[0].mxu0 %v2534
        %v2725 = vpop.f32.mrb[0].mxu0
        %v2726 = vadd.f32 0.0, %v2725
        %v2727 = vpop.f32.mrb[0].mxu0
        %v2728 = vadd.f32 0.0, %v2727
        %2729 = vmatprep.mubr.f32.mxu0 0.0
        %2730 = vmatmul.mubr.f32.gmra.mrb[0].mxu0 %v2537
        %v2731 = vpop.f32.mrb[0].mxu0
        %v2732 = vadd.f32 0.0, %v2731
        %v2733 = vpop.f32.mrb[0].mxu0
        %v2734 = vadd.f32 0.0, %v2733
        %2735 = vmatprep.mubr.f32.mxu0 0.0
        %2736 = vmatmul.mubr.f32.gmra.mrb[0].mxu0 %v2540
        %v2737 = vpop.f32.mrb[0].mxu0
        %v2738 = vadd.f32 0.0, %v2737
        %v2739 = vpop.f32.mrb[0].mxu0
        %v2740 = vadd.f32 0.0, %v2739
        %2741 = vmatprep.mubr.f32.mxu0 0.0
        %2742 = vmatmul.mubr.f32.gmra.mrb[0].mxu0 %v2543
        %v2743 = vpop.f32.mrb[0].mxu0
        %v2744 = vadd.f32 0.0, %v2743
        %v2745 = vpop.f32.mrb[0].mxu0
        %v2746 = vadd.f32 0.0, %v2745
        %2747 = vmatprep.mubr.f32.mxu0 0.0
        %2748 = vmatmul.mubr.f32.gmra.mrb[0].mxu0 %v2546
        %v2749 = vpop.f32.mrb[0].mxu0
        %v2750 = vadd.f32 0.0, %v2749
        %v2751 = vpop.f32.mrb[0].mxu0
        %v2752 = vadd.f32 0.0, %v2751
        %2753 = vmatprep.mubr.f32.mxu0 0.0
        %2754 = vmatmul.mubr.f32.gmra.mrb[0].mxu0 %v2549
        %v2755 = vpop.f32.mrb[0].mxu0
        %v2756 = vadd.f32 0.0, %v2755
        %v2757 = vpop.f32.mrb[0].mxu0
        %v2758 = vadd.f32 0.0, %v2757
        %2759 = vmatprep.mubr.f32.mxu0 0.0
        %2760 = vmatmul.mubr.f32.gmra.mrb[0].mxu0 %v2552
        %v2761 = vpop.f32.mrb[0].mxu0
        %v2762 = vadd.f32 0.0, %v2761
        %v2763 = vpop.f32.mrb[0].mxu0
        %v2764 = vadd.f32 0.0, %v2763
        %2765 = vmatprep.mubr.f32.mxu0 0.0
        %2766 = vmatmul.mubr.f32.gmra.mrb[0].mxu0 %v2555
        %v2767 = vpop.f32.mrb[0].mxu0
        %v2768 = vadd.f32 0.0, %v2767
        %v2769 = vpop.f32.mrb[0].mxu0
        %v2770 = vadd.f32 0.0, %v2769
        %2771 = vmatprep.mubr.f32.mxu0 0.0
        %2772 = vmatmul.mubr.f32.gmra.mrb[0].mxu0 %v2558
        %v2773 = vpop.f32.mrb[0].mxu0
        %v2774 = vadd.f32 0.0, %v2773
        %v2775 = vpop.f32.mrb[0].mxu0
        %v2776 = vadd.f32 0.0, %v2775
        %2777 = vmatprep.mubr.f32.mxu0 0.0
        %2778 = vmatmul.mubr.f32.gmra.mrb[0].mxu0 %v2561
        %v2779 = vpop.f32.mrb[0].mxu0
        %v2780 = vadd.f32 0.0, %v2779
        %v2781 = vpop.f32.mrb[0].mxu0
        %v2782 = vadd.f32 0.0, %v2781
        %2783 = vmatprep.mubr.f32.mxu0 0.0
        %2784 = vmatmul.mubr.f32.gmra.mrb[0].mxu0 %v2564
        %v2785 = vpop.f32.mrb[0].mxu0
        %v2786 = vadd.f32 0.0, %v2785
        %v2787 = vpop.f32.mrb[0].mxu0
        %v2788 = vadd.f32 0.0, %v2787
        %2789 = vmatprep.mubr.f32.mxu0 0.0
        %2790 = vmatmul.mubr.f32.gmra.mrb[0].mxu0 %v2567
        %v2791 = vpop.f32.mrb[0].mxu0
        %v2792 = vadd.f32 0.0, %v2791
        %v2793 = vpop.f32.mrb[0].mxu0
        %v2794 = vadd.f32 0.0, %v2793
        %2795 = vmatprep.mubr.f32.mxu0 0.0
        %2796 = vmatmul.mubr.f32.gmra.mrb[0].mxu0 %v2570
        %v2797 = vpop.f32.mrb[0].mxu0
        %v2798 = vadd.f32 0.0, %v2797
        %v2799 = vpop.f32.mrb[0].mxu0
        %v2800 = vadd.f32 0.0, %v2799
        %2801 = vmatprep.mubr.f32.mxu0 0.0
        %2802 = vmatmul.mubr.f32.gmra.mrb[0].mxu0 %v2573
        %v2803 = vpop.f32.mrb[0].mxu0
        %v2804 = vadd.f32 0.0, %v2803
        %v2805 = vpop.f32.mrb[0].mxu0
        %v2806 = vadd.f32 0.0, %v2805
        %2807 = vmatprep.mubr.f32.mxu0 0.0
        %2808 = vmatmul.mubr.f32.gmra.mrb[0].mxu0 %v2576
        %v2809 = vpop.f32.mrb[0].mxu0
        %v2810 = vadd.f32 0.0, %v2809
        %v2811 = vpop.f32.mrb[0].mxu0
        %v2812 = vadd.f32 0.0, %v2811
        %2813 = vmatprep.mubr.f32.mxu0 0.0
        %2814 = vmatmul.mubr.f32.gmra.mrb[0].mxu0 %v2579
        %v2815 = vpop.f32.mrb[0].mxu0
        %v2816 = vadd.f32 0.0, %v2815
        %v2817 = vpop.f32.mrb[0].mxu0
        %v2818 = vadd.f32 0.0, %v2817
        %2819 = vmatprep.mubr.f32.mxu0 0.0
        %2820 = vmatmul.mubr.f32.gmra.mrb[0].mxu0 %v2582
        %v2821 = vpop.f32.mrb[0].mxu0
        %v2822 = vadd.f32 0.0, %v2821
        %v2823 = vpop.f32.mrb[0].mxu0
        %v2824 = vadd.f32 0.0, %v2823
        %2825 = vmatprep.mubr.f32.mxu0 0.0
        %2826 = vmatmul.mubr.f32.gmra.mrb[0].mxu0 %v2585
        %v2827 = vpop.f32.mrb[0].mxu0
        %v2828 = vadd.f32 0.0, %v2827
        %v2829 = vpop.f32.mrb[0].mxu0
        %v2830 = vadd.f32 0.0, %v2829
        %2831 = vmatprep.mubr.f32.mxu0 0.0
        %2832 = vmatmul.mubr.f32.gmra.mrb[0].mxu0 %v2588
        %v2833 = vpop.f32.mrb[0].mxu0
        %v2834 = vadd.f32 0.0, %v2833
        %v2835 = vpop.f32.mrb[0].mxu0
        %v2836 = vadd.f32 0.0, %v2835
        %2837 = vmatprep.mubr.f32.mxu0 0.0
        %2838 = vmatmul.mubr.f32.gmra.mrb[0].mxu0 %v2591
        %v2839 = vpop.f32.mrb[0].mxu0
        %v2840 = vadd.f32 0.0, %v2839
        %v2841 = vpop.f32.mrb[0].mxu0
        %v2842 = vadd.f32 0.0, %v2841
        %2843 = vmatprep.mubr.f32.mxu0 0.0
        %2844 = vmatmul.mubr.f32.gmra.mrb[0].mxu0 %v2594
        %v2845 = vpop.f32.mrb[0].mxu0
        %v2846 = vadd.f32 0.0, %v2845
        %v2847 = vpop.f32.mrb[0].mxu0
        %v2848 = vadd.f32 0.0, %v2847
        %2849 = vmatprep.mubr.f32.mxu0 0.0
        %2850 = vmatmul.mubr.f32.gmra.mrb[0].mxu0 %v2597
        %v2851 = vpop.f32.mrb[0].mxu0
        %v2852 = vadd.f32 0.0, %v2851
        %v2853 = vpop.f32.mrb[0].mxu0
        %v2854 = vadd.f32 0.0, %v2853
        %2855 = vdwg.mxu0
        %2856 = vxpose.xlu0.b32.start [1/16] %v748, 128
        %2857 = vxpose.xlu0.b32.cont [2/16] 0.0, 128
        %2858 = vxpose.xlu0.b32.cont [3/16] 0.0, 128
        %2859 = vxpose.xlu0.b32.cont [4/16] 0.0, 128
        %2860 = vxpose.xlu0.b32.cont [5/16] 0.0, 128
        %2861 = vxpose.xlu0.b32.cont [6/16] 0.0, 128
        %2862 = vxpose.xlu0.b32.cont [7/16] 0.0, 128
        %2863 = vxpose.xlu0.b32.cont [8/16] 0.0, 128
        %2864 = vxpose.xlu0.b32.cont [9/16] 0.0, 128
        %2865 = vxpose.xlu0.b32.cont [10/16] 0.0, 128
        %2866 = vxpose.xlu0.b32.cont [11/16] 0.0, 128
        %2867 = vxpose.xlu0.b32.cont [12/16] 0.0, 128
        %2868 = vxpose.xlu0.b32.cont [13/16] 0.0, 128
        %2869 = vxpose.xlu0.b32.cont [14/16] 0.0, 128
        %2870 = vxpose.xlu0.b32.cont [15/16] 0.0, 128
        %2871 = vxpose.xlu0.b32.end [16/16] 0.0, 128
        %v2872 = vpop.trf.xlu0
        %v2873 = vpop.trf.xlu0
        %v2874 = vpop.trf.xlu0
        %v2875 = vpop.trf.xlu0
        %v2876 = vpop.trf.xlu0
        %v2877 = vpop.trf.xlu0
        %v2878 = vpop.trf.xlu0
        %v2879 = vpop.trf.xlu0
        %v2880 = vpop.trf.xlu0
        %v2881 = vpop.trf.xlu0
        %v2882 = vpop.trf.xlu0
        %v2883 = vpop.trf.xlu0
        %v2884 = vpop.trf.xlu0
        %v2885 = vpop.trf.xlu0
        %v2886 = vpop.trf.xlu0
        %v2887 = vpop.trf.xlu0
        %2888 = vxpose.xlu0.b32.start [1/16] %v749, 128
        %2889 = vxpose.xlu0.b32.cont [2/16] 0.0, 128
        %2890 = vxpose.xlu0.b32.cont [3/16] 0.0, 128
        %2891 = vxpose.xlu0.b32.cont [4/16] 0.0, 128
        %2892 = vxpose.xlu0.b32.cont [5/16] 0.0, 128
        %2893 = vxpose.xlu0.b32.cont [6/16] 0.0, 128
        %2894 = vxpose.xlu0.b32.cont [7/16] 0.0, 128
        %2895 = vxpose.xlu0.b32.cont [8/16] 0.0, 128
        %2896 = vxpose.xlu0.b32.cont [9/16] 0.0, 128
        %2897 = vxpose.xlu0.b32.cont [10/16] 0.0, 128
        %2898 = vxpose.xlu0.b32.cont [11/16] 0.0, 128
        %2899 = vxpose.xlu0.b32.cont [12/16] 0.0, 128
        %2900 = vxpose.xlu0.b32.cont [13/16] 0.0, 128
        %2901 = vxpose.xlu0.b32.cont [14/16] 0.0, 128
        %2902 = vxpose.xlu0.b32.cont [15/16] 0.0, 128
        %2903 = vxpose.xlu0.b32.end [16/16] 0.0, 128
        %v2904 = vpop.trf.xlu0
        %v2905 = vpop.trf.xlu0
        %v2906 = vpop.trf.xlu0
        %v2907 = vpop.trf.xlu0
        %v2908 = vpop.trf.xlu0
        %v2909 = vpop.trf.xlu0
        %v2910 = vpop.trf.xlu0
        %v2911 = vpop.trf.xlu0
        %v2912 = vpop.trf.xlu0
        %v2913 = vpop.trf.xlu0
        %v2914 = vpop.trf.xlu0
        %v2915 = vpop.trf.xlu0
        %v2916 = vpop.trf.xlu0
        %v2917 = vpop.trf.xlu0
        %v2918 = vpop.trf.xlu0
        %v2919 = vpop.trf.xlu0
        %v2921 = vsel %vm834, %v2872, 0
        %v2924 = vsel %vm834, %v2873, 0
        %v2927 = vsel %vm834, %v2874, 0
        %v2930 = vsel %vm834, %v2875, 0
        %v2933 = vsel %vm834, %v2876, 0
        %v2936 = vsel %vm834, %v2877, 0
        %v2939 = vsel %vm834, %v2878, 0
        %v2942 = vsel %vm834, %v2879, 0
        %v2945 = vsel %vm834, %v2880, 0
        %v2948 = vsel %vm834, %v2881, 0
        %v2951 = vsel %vm834, %v2882, 0
        %v2954 = vsel %vm834, %v2883, 0
        %v2957 = vsel %vm834, %v2884, 0
        %v2960 = vsel %vm834, %v2885, 0
        %v2963 = vsel %vm834, %v2886, 0
        %v2966 = vsel %vm834, %v2887, 0
        %v2969 = vsel %vm834, %v2904, 0
        %v2972 = vsel %vm834, %v2905, 0
        %v2975 = vsel %vm834, %v2906, 0
        %v2978 = vsel %vm834, %v2907, 0
        %v2981 = vsel %vm834, %v2908, 0
        %v2984 = vsel %vm834, %v2909, 0
        %v2987 = vsel %vm834, %v2910, 0
        %v2990 = vsel %vm834, %v2911, 0
        %v2993 = vsel %vm834, %v2912, 0
        %v2996 = vsel %vm834, %v2913, 0
        %v2999 = vsel %vm834, %v2914, 0
        %v3002 = vsel %vm834, %v2915, 0
        %v3005 = vsel %vm834, %v2916, 0
        %v3008 = vsel %vm834, %v2917, 0
        %v3011 = vsel %vm834, %v2918, 0
        %v3014 = vsel %vm834, %v2919, 0
        %3016 = vmatprep.subr.mxu0 %v765
        %3017 = vmatpush1.msra.mxu0 %v764
        %3018 = vmatprep.subr.mxu0 0.0
        %3019 = vmatpush1.msra.mxu0 0.0
        %3020 = vmatprep.subr.mxu0 0.0
        %3021 = vmatpush1.msra.mxu0 0.0
        %3022 = vmatprep.subr.mxu0 0.0
        %3023 = vmatpush1.msra.mxu0 0.0
        %3024 = vmatprep.subr.mxu0 0.0
        %3025 = vmatpush1.msra.mxu0 0.0
        %3026 = vmatprep.subr.mxu0 0.0
        %3027 = vmatpush1.msra.mxu0 0.0
        %3028 = vmatprep.subr.mxu0 0.0
        %3029 = vmatpush1.msra.mxu0 0.0
        %3030 = vmatprep.subr.mxu0 0.0
        %3031 = vmatpush1.msra.mxu0 0.0
        %3032 = vmatprep.subr.mxu0 0.0
        %3033 = vmatpush1.msra.mxu0 0.0
        %3034 = vmatprep.subr.mxu0 0.0
        %3035 = vmatpush1.msra.mxu0 0.0
        %3036 = vmatprep.subr.mxu0 0.0
        %3037 = vmatpush1.msra.mxu0 0.0
        %3038 = vmatprep.subr.mxu0 0.0
        %3039 = vmatpush1.msra.mxu0 0.0
        %3040 = vmatprep.subr.mxu0 0.0
        %3041 = vmatpush1.msra.mxu0 0.0
        %3042 = vmatprep.subr.mxu0 0.0
        %3043 = vmatpush1.msra.mxu0 0.0
        %3044 = vmatprep.subr.mxu0 0.0
        %3045 = vmatpush1.msra.mxu0 0.0
        %3046 = vmatprep.subr.mxu0 0.0
        %3047 = vmatpush1.msra.mxu0 0.0
        %3048 = vmatprep.subr.mxu0 0.0
        %3049 = vmatpush1.msra.mxu0 0.0
        %3050 = vmatprep.subr.mxu0 0.0
        %3051 = vmatpush1.msra.mxu0 0.0
        %3052 = vmatprep.subr.mxu0 0.0
        %3053 = vmatpush1.msra.mxu0 0.0
        %3054 = vmatprep.subr.mxu0 0.0
        %3055 = vmatpush1.msra.mxu0 0.0
        %3056 = vmatprep.subr.mxu0 0.0
        %3057 = vmatpush1.msra.mxu0 0.0
        %3058 = vmatprep.subr.mxu0 0.0
        %3059 = vmatpush1.msra.mxu0 0.0
        %3060 = vmatprep.subr.mxu0 0.0
        %3061 = vmatpush1.msra.mxu0 0.0
        %3062 = vmatprep.subr.mxu0 0.0
        %3063 = vmatpush1.msra.mxu0 0.0
        %3064 = vmatprep.subr.mxu0 0.0
        %3065 = vmatpush1.msra.mxu0 0.0
        %3066 = vmatprep.subr.mxu0 0.0
        %3067 = vmatpush1.msra.mxu0 0.0
        %3068 = vmatprep.subr.mxu0 0.0
        %3069 = vmatpush1.msra.mxu0 0.0
        %3070 = vmatprep.subr.mxu0 0.0
        %3071 = vmatpush1.msra.mxu0 0.0
        %3072 = vmatprep.subr.mxu0 0.0
        %3073 = vmatpush1.msra.mxu0 0.0
        %3074 = vmatprep.subr.mxu0 0.0
        %3075 = vmatpush1.msra.mxu0 0.0
        %3076 = vmatprep.subr.mxu0 0.0
        %3077 = vmatpush1.msra.mxu0 0.0
        %3078 = vmatprep.subr.mxu0 0.0
        %3079 = vmatpush1.msra.mxu0 0.0
        %3080 = vmatprep.mubr.f32.mxu0 0.0
        %3081 = vmatmul.mubr.f32.gmra.mrb[0].mxu0 %v2921
        %v3082 = vpop.f32.mrb[0].mxu0
        %v3083 = vadd.f32 0.0, %v3082
        %v3084 = vpop.f32.mrb[0].mxu0
        %v3085 = vadd.f32 0.0, %v3084
        %3086 = vmatprep.mubr.f32.mxu0 0.0
        %3087 = vmatmul.mubr.f32.gmra.mrb[0].mxu0 %v2924
        %v3088 = vpop.f32.mrb[0].mxu0
        %v3089 = vadd.f32 0.0, %v3088
        %v3090 = vpop.f32.mrb[0].mxu0
        %v3091 = vadd.f32 0.0, %v3090
        %3092 = vmatprep.mubr.f32.mxu0 0.0
        %3093 = vmatmul.mubr.f32.gmra.mrb[0].mxu0 %v2927
        %v3094 = vpop.f32.mrb[0].mxu0
        %v3095 = vadd.f32 0.0, %v3094
        %v3096 = vpop.f32.mrb[0].mxu0
        %v3097 = vadd.f32 0.0, %v3096
        %3098 = vmatprep.mubr.f32.mxu0 0.0
        %3099 = vmatmul.mubr.f32.gmra.mrb[0].mxu0 %v2930
        %v3100 = vpop.f32.mrb[0].mxu0
        %v3101 = vadd.f32 0.0, %v3100
        %v3102 = vpop.f32.mrb[0].mxu0
        %v3103 = vadd.f32 0.0, %v3102
        %3104 = vmatprep.mubr.f32.mxu0 0.0
        %3105 = vmatmul.mubr.f32.gmra.mrb[0].mxu0 %v2933
        %v3106 = vpop.f32.mrb[0].mxu0
        %v3107 = vadd.f32 0.0, %v3106
        %v3108 = vpop.f32.mrb[0].mxu0
        %v3109 = vadd.f32 0.0, %v3108
        %3110 = vmatprep.mubr.f32.mxu0 0.0
        %3111 = vmatmul.mubr.f32.gmra.mrb[0].mxu0 %v2936
        %v3112 = vpop.f32.mrb[0].mxu0
        %v3113 = vadd.f32 0.0, %v3112
        %v3114 = vpop.f32.mrb[0].mxu0
        %v3115 = vadd.f32 0.0, %v3114
        %3116 = vmatprep.mubr.f32.mxu0 0.0
        %3117 = vmatmul.mubr.f32.gmra.mrb[0].mxu0 %v2939
        %v3118 = vpop.f32.mrb[0].mxu0
        %v3119 = vadd.f32 0.0, %v3118
        %v3120 = vpop.f32.mrb[0].mxu0
        %v3121 = vadd.f32 0.0, %v3120
        %3122 = vmatprep.mubr.f32.mxu0 0.0
        %3123 = vmatmul.mubr.f32.gmra.mrb[0].mxu0 %v2942
        %v3124 = vpop.f32.mrb[0].mxu0
        %v3125 = vadd.f32 0.0, %v3124
        %v3126 = vpop.f32.mrb[0].mxu0
        %v3127 = vadd.f32 0.0, %v3126
        %3128 = vmatprep.mubr.f32.mxu0 0.0
        %3129 = vmatmul.mubr.f32.gmra.mrb[0].mxu0 %v2945
        %v3130 = vpop.f32.mrb[0].mxu0
        %v3131 = vadd.f32 0.0, %v3130
        %v3132 = vpop.f32.mrb[0].mxu0
        %v3133 = vadd.f32 0.0, %v3132
        %3134 = vmatprep.mubr.f32.mxu0 0.0
        %3135 = vmatmul.mubr.f32.gmra.mrb[0].mxu0 %v2948
        %v3136 = vpop.f32.mrb[0].mxu0
        %v3137 = vadd.f32 0.0, %v3136
        %v3138 = vpop.f32.mrb[0].mxu0
        %v3139 = vadd.f32 0.0, %v3138
        %3140 = vmatprep.mubr.f32.mxu0 0.0
        %3141 = vmatmul.mubr.f32.gmra.mrb[0].mxu0 %v2951
        %v3142 = vpop.f32.mrb[0].mxu0
        %v3143 = vadd.f32 0.0, %v3142
        %v3144 = vpop.f32.mrb[0].mxu0
        %v3145 = vadd.f32 0.0, %v3144
        %3146 = vmatprep.mubr.f32.mxu0 0.0
        %3147 = vmatmul.mubr.f32.gmra.mrb[0].mxu0 %v2954
        %v3148 = vpop.f32.mrb[0].mxu0
        %v3149 = vadd.f32 0.0, %v3148
        %v3150 = vpop.f32.mrb[0].mxu0
        %v3151 = vadd.f32 0.0, %v3150
        %3152 = vmatprep.mubr.f32.mxu0 0.0
        %3153 = vmatmul.mubr.f32.gmra.mrb[0].mxu0 %v2957
        %v3154 = vpop.f32.mrb[0].mxu0
        %v3155 = vadd.f32 0.0, %v3154
        %v3156 = vpop.f32.mrb[0].mxu0
        %v3157 = vadd.f32 0.0, %v3156
        %3158 = vmatprep.mubr.f32.mxu0 0.0
        %3159 = vmatmul.mubr.f32.gmra.mrb[0].mxu0 %v2960
        %v3160 = vpop.f32.mrb[0].mxu0
        %v3161 = vadd.f32 0.0, %v3160
        %v3162 = vpop.f32.mrb[0].mxu0
        %v3163 = vadd.f32 0.0, %v3162
        %3164 = vmatprep.mubr.f32.mxu0 0.0
        %3165 = vmatmul.mubr.f32.gmra.mrb[0].mxu0 %v2963
        %v3166 = vpop.f32.mrb[0].mxu0
        %v3167 = vadd.f32 0.0, %v3166
        %v3168 = vpop.f32.mrb[0].mxu0
        %v3169 = vadd.f32 0.0, %v3168
        %3170 = vmatprep.mubr.f32.mxu0 0.0
        %3171 = vmatmul.mubr.f32.gmra.mrb[0].mxu0 %v2966
        %v3172 = vpop.f32.mrb[0].mxu0
        %v3173 = vadd.f32 0.0, %v3172
        %v3174 = vpop.f32.mrb[0].mxu0
        %v3175 = vadd.f32 0.0, %v3174
        %3176 = vmatprep.mubr.f32.mxu0 0.0
        %3177 = vmatmul.mubr.f32.gmra.mrb[0].mxu0 %v2969
        %v3178 = vpop.f32.mrb[0].mxu0
        %v3179 = vadd.f32 0.0, %v3178
        %v3180 = vpop.f32.mrb[0].mxu0
        %v3181 = vadd.f32 0.0, %v3180
        %3182 = vmatprep.mubr.f32.mxu0 0.0
        %3183 = vmatmul.mubr.f32.gmra.mrb[0].mxu0 %v2972
        %v3184 = vpop.f32.mrb[0].mxu0
        %v3185 = vadd.f32 0.0, %v3184
        %v3186 = vpop.f32.mrb[0].mxu0
        %v3187 = vadd.f32 0.0, %v3186
        %3188 = vmatprep.mubr.f32.mxu0 0.0
        %3189 = vmatmul.mubr.f32.gmra.mrb[0].mxu0 %v2975
        %v3190 = vpop.f32.mrb[0].mxu0
        %v3191 = vadd.f32 0.0, %v3190
        %v3192 = vpop.f32.mrb[0].mxu0
        %v3193 = vadd.f32 0.0, %v3192
        %3194 = vmatprep.mubr.f32.mxu0 0.0
        %3195 = vmatmul.mubr.f32.gmra.mrb[0].mxu0 %v2978
        %v3196 = vpop.f32.mrb[0].mxu0
        %v3197 = vadd.f32 0.0, %v3196
        %v3198 = vpop.f32.mrb[0].mxu0
        %v3199 = vadd.f32 0.0, %v3198
        %3200 = vmatprep.mubr.f32.mxu0 0.0
        %3201 = vmatmul.mubr.f32.gmra.mrb[0].mxu0 %v2981
        %v3202 = vpop.f32.mrb[0].mxu0
        %v3203 = vadd.f32 0.0, %v3202
        %v3204 = vpop.f32.mrb[0].mxu0
        %v3205 = vadd.f32 0.0, %v3204
        %3206 = vmatprep.mubr.f32.mxu0 0.0
        %3207 = vmatmul.mubr.f32.gmra.mrb[0].mxu0 %v2984
        %v3208 = vpop.f32.mrb[0].mxu0
        %v3209 = vadd.f32 0.0, %v3208
        %v3210 = vpop.f32.mrb[0].mxu0
        %v3211 = vadd.f32 0.0, %v3210
        %3212 = vmatprep.mubr.f32.mxu0 0.0
        %3213 = vmatmul.mubr.f32.gmra.mrb[0].mxu0 %v2987
        %v3214 = vpop.f32.mrb[0].mxu0
        %v3215 = vadd.f32 0.0, %v3214
        %v3216 = vpop.f32.mrb[0].mxu0
        %v3217 = vadd.f32 0.0, %v3216
        %3218 = vmatprep.mubr.f32.mxu0 0.0
        %3219 = vmatmul.mubr.f32.gmra.mrb[0].mxu0 %v2990
        %v3220 = vpop.f32.mrb[0].mxu0
        %v3221 = vadd.f32 0.0, %v3220
        %v3222 = vpop.f32.mrb[0].mxu0
        %v3223 = vadd.f32 0.0, %v3222
        %3224 = vmatprep.mubr.f32.mxu0 0.0
        %3225 = vmatmul.mubr.f32.gmra.mrb[0].mxu0 %v2993
        %v3226 = vpop.f32.mrb[0].mxu0
        %v3227 = vadd.f32 0.0, %v3226
        %v3228 = vpop.f32.mrb[0].mxu0
        %v3229 = vadd.f32 0.0, %v3228
        %3230 = vmatprep.mubr.f32.mxu0 0.0
        %3231 = vmatmul.mubr.f32.gmra.mrb[0].mxu0 %v2996
        %v3232 = vpop.f32.mrb[0].mxu0
        %v3233 = vadd.f32 0.0, %v3232
        %v3234 = vpop.f32.mrb[0].mxu0
        %v3235 = vadd.f32 0.0, %v3234
        %3236 = vmatprep.mubr.f32.mxu0 0.0
        %3237 = vmatmul.mubr.f32.gmra.mrb[0].mxu0 %v2999
        %v3238 = vpop.f32.mrb[0].mxu0
        %v3239 = vadd.f32 0.0, %v3238
        %v3240 = vpop.f32.mrb[0].mxu0
        %v3241 = vadd.f32 0.0, %v3240
        %3242 = vmatprep.mubr.f32.mxu0 0.0
        %3243 = vmatmul.mubr.f32.gmra.mrb[0].mxu0 %v3002
        %v3244 = vpop.f32.mrb[0].mxu0
        %v3245 = vadd.f32 0.0, %v3244
        %v3246 = vpop.f32.mrb[0].mxu0
        %v3247 = vadd.f32 0.0, %v3246
        %3248 = vmatprep.mubr.f32.mxu0 0.0
        %3249 = vmatmul.mubr.f32.gmra.mrb[0].mxu0 %v3005
        %v3250 = vpop.f32.mrb[0].mxu0
        %v3251 = vadd.f32 0.0, %v3250
        %v3252 = vpop.f32.mrb[0].mxu0
        %v3253 = vadd.f32 0.0, %v3252
        %3254 = vmatprep.mubr.f32.mxu0 0.0
        %3255 = vmatmul.mubr.f32.gmra.mrb[0].mxu0 %v3008
        %v3256 = vpop.f32.mrb[0].mxu0
        %v3257 = vadd.f32 0.0, %v3256
        %v3258 = vpop.f32.mrb[0].mxu0
        %v3259 = vadd.f32 0.0, %v3258
        %3260 = vmatprep.mubr.f32.mxu0 0.0
        %3261 = vmatmul.mubr.f32.gmra.mrb[0].mxu0 %v3011
        %v3262 = vpop.f32.mrb[0].mxu0
        %v3263 = vadd.f32 0.0, %v3262
        %v3264 = vpop.f32.mrb[0].mxu0
        %v3265 = vadd.f32 0.0, %v3264
        %3266 = vmatprep.mubr.f32.mxu0 0.0
        %3267 = vmatmul.mubr.f32.gmra.mrb[0].mxu0 %v3014
        %v3268 = vpop.f32.mrb[0].mxu0
        %v3269 = vadd.f32 0.0, %v3268
        %v3270 = vpop.f32.mrb[0].mxu0
        %v3271 = vadd.f32 0.0, %v3270
        %3272 = vdwg.mxu0
        %3273 = vxpose.xlu0.b32.start [1/16] %v750, 128
        %3274 = vxpose.xlu0.b32.cont [2/16] 0.0, 128
        %3275 = vxpose.xlu0.b32.cont [3/16] 0.0, 128
        %3276 = vxpose.xlu0.b32.cont [4/16] 0.0, 128
        %3277 = vxpose.xlu0.b32.cont [5/16] 0.0, 128
        %3278 = vxpose.xlu0.b32.cont [6/16] 0.0, 128
        %3279 = vxpose.xlu0.b32.cont [7/16] 0.0, 128
        %3280 = vxpose.xlu0.b32.cont [8/16] 0.0, 128
        %3281 = vxpose.xlu0.b32.cont [9/16] 0.0, 128
        %3282 = vxpose.xlu0.b32.cont [10/16] 0.0, 128
        %3283 = vxpose.xlu0.b32.cont [11/16] 0.0, 128
        %3284 = vxpose.xlu0.b32.cont [12/16] 0.0, 128
        %3285 = vxpose.xlu0.b32.cont [13/16] 0.0, 128
        %3286 = vxpose.xlu0.b32.cont [14/16] 0.0, 128
        %3287 = vxpose.xlu0.b32.cont [15/16] 0.0, 128
        %3288 = vxpose.xlu0.b32.end [16/16] 0.0, 128
        %v3289 = vpop.trf.xlu0
        %v3290 = vpop.trf.xlu0
        %v3291 = vpop.trf.xlu0
        %v3292 = vpop.trf.xlu0
        %v3293 = vpop.trf.xlu0
        %v3294 = vpop.trf.xlu0
        %v3295 = vpop.trf.xlu0
        %v3296 = vpop.trf.xlu0
        %v3297 = vpop.trf.xlu0
        %v3298 = vpop.trf.xlu0
        %v3299 = vpop.trf.xlu0
        %v3300 = vpop.trf.xlu0
        %v3301 = vpop.trf.xlu0
        %v3302 = vpop.trf.xlu0
        %v3303 = vpop.trf.xlu0
        %v3304 = vpop.trf.xlu0
        %3305 = vxpose.xlu0.b32.start [1/16] %v751, 128
        %3306 = vxpose.xlu0.b32.cont [2/16] 0.0, 128
        %3307 = vxpose.xlu0.b32.cont [3/16] 0.0, 128
        %3308 = vxpose.xlu0.b32.cont [4/16] 0.0, 128
        %3309 = vxpose.xlu0.b32.cont [5/16] 0.0, 128
        %3310 = vxpose.xlu0.b32.cont [6/16] 0.0, 128
        %3311 = vxpose.xlu0.b32.cont [7/16] 0.0, 128
        %3312 = vxpose.xlu0.b32.cont [8/16] 0.0, 128
        %3313 = vxpose.xlu0.b32.cont [9/16] 0.0, 128
        %3314 = vxpose.xlu0.b32.cont [10/16] 0.0, 128
        %3315 = vxpose.xlu0.b32.cont [11/16] 0.0, 128
        %3316 = vxpose.xlu0.b32.cont [12/16] 0.0, 128
        %3317 = vxpose.xlu0.b32.cont [13/16] 0.0, 128
        %3318 = vxpose.xlu0.b32.cont [14/16] 0.0, 128
        %3319 = vxpose.xlu0.b32.cont [15/16] 0.0, 128
        %3320 = vxpose.xlu0.b32.end [16/16] 0.0, 128
        %v3321 = vpop.trf.xlu0
        %v3322 = vpop.trf.xlu0
        %v3323 = vpop.trf.xlu0
        %v3324 = vpop.trf.xlu0
        %v3325 = vpop.trf.xlu0
        %v3326 = vpop.trf.xlu0
        %v3327 = vpop.trf.xlu0
        %v3328 = vpop.trf.xlu0
        %v3329 = vpop.trf.xlu0
        %v3330 = vpop.trf.xlu0
        %v3331 = vpop.trf.xlu0
        %v3332 = vpop.trf.xlu0
        %v3333 = vpop.trf.xlu0
        %v3334 = vpop.trf.xlu0
        %v3335 = vpop.trf.xlu0
        %v3336 = vpop.trf.xlu0
        %v3338 = vsel %vm834, %v3289, 0
        %v3341 = vsel %vm834, %v3290, 0
        %v3344 = vsel %vm834, %v3291, 0
        %v3347 = vsel %vm834, %v3292, 0
        %v3350 = vsel %vm834, %v3293, 0
        %v3353 = vsel %vm834, %v3294, 0
        %v3356 = vsel %vm834, %v3295, 0
        %v3359 = vsel %vm834, %v3296, 0
        %v3362 = vsel %vm834, %v3297, 0
        %v3365 = vsel %vm834, %v3298, 0
        %v3368 = vsel %vm834, %v3299, 0
        %v3371 = vsel %vm834, %v3300, 0
        %v3374 = vsel %vm834, %v3301, 0
        %v3377 = vsel %vm834, %v3302, 0
        %v3380 = vsel %vm834, %v3303, 0
        %v3383 = vsel %vm834, %v3304, 0
        %v3386 = vsel %vm834, %v3321, 0
        %v3389 = vsel %vm834, %v3322, 0
        %v3392 = vsel %vm834, %v3323, 0
        %v3395 = vsel %vm834, %v3324, 0
        %v3398 = vsel %vm834, %v3325, 0
        %v3401 = vsel %vm834, %v3326, 0
        %v3404 = vsel %vm834, %v3327, 0
        %v3407 = vsel %vm834, %v3328, 0
        %v3410 = vsel %vm834, %v3329, 0
        %v3413 = vsel %vm834, %v3330, 0
        %v3416 = vsel %vm834, %v3331, 0
        %v3419 = vsel %vm834, %v3332, 0
        %v3422 = vsel %vm834, %v3333, 0
        %v3425 = vsel %vm834, %v3334, 0
        %v3428 = vsel %vm834, %v3335, 0
        %v3431 = vsel %vm834, %v3336, 0
        %3433 = vmatprep.subr.mxu0 %v767
        %3434 = vmatpush1.msra.mxu0 %v766
        %3435 = vmatprep.subr.mxu0 0.0
        %3436 = vmatpush1.msra.mxu0 0.0
        %3437 = vmatprep.subr.mxu0 0.0
        %3438 = vmatpush1.msra.mxu0 0.0
        %3439 = vmatprep.subr.mxu0 0.0
        %3440 = vmatpush1.msra.mxu0 0.0
        %3441 = vmatprep.subr.mxu0 0.0
        %3442 = vmatpush1.msra.mxu0 0.0
        %3443 = vmatprep.subr.mxu0 0.0
        %3444 = vmatpush1.msra.mxu0 0.0
        %3445 = vmatprep.subr.mxu0 0.0
        %3446 = vmatpush1.msra.mxu0 0.0
        %3447 = vmatprep.subr.mxu0 0.0
        %3448 = vmatpush1.msra.mxu0 0.0
        %3449 = vmatprep.subr.mxu0 0.0
        %3450 = vmatpush1.msra.mxu0 0.0
        %3451 = vmatprep.subr.mxu0 0.0
        %3452 = vmatpush1.msra.mxu0 0.0
        %3453 = vmatprep.subr.mxu0 0.0
        %3454 = vmatpush1.msra.mxu0 0.0
        %3455 = vmatprep.subr.mxu0 0.0
        %3456 = vmatpush1.msra.mxu0 0.0
        %3457 = vmatprep.subr.mxu0 0.0
        %3458 = vmatpush1.msra.mxu0 0.0
        %3459 = vmatprep.subr.mxu0 0.0
        %3460 = vmatpush1.msra.mxu0 0.0
        %3461 = vmatprep.subr.mxu0 0.0
        %3462 = vmatpush1.msra.mxu0 0.0
        %3463 = vmatprep.subr.mxu0 0.0
        %3464 = vmatpush1.msra.mxu0 0.0
        %3465 = vmatprep.subr.mxu0 0.0
        %3466 = vmatpush1.msra.mxu0 0.0
        %3467 = vmatprep.subr.mxu0 0.0
        %3468 = vmatpush1.msra.mxu0 0.0
        %3469 = vmatprep.subr.mxu0 0.0
        %3470 = vmatpush1.msra.mxu0 0.0
        %3471 = vmatprep.subr.mxu0 0.0
        %3472 = vmatpush1.msra.mxu0 0.0
        %3473 = vmatprep.subr.mxu0 0.0
        %3474 = vmatpush1.msra.mxu0 0.0
        %3475 = vmatprep.subr.mxu0 0.0
        %3476 = vmatpush1.msra.mxu0 0.0
        %3477 = vmatprep.subr.mxu0 0.0
        %3478 = vmatpush1.msra.mxu0 0.0
        %3479 = vmatprep.subr.mxu0 0.0
        %3480 = vmatpush1.msra.mxu0 0.0
        %3481 = vmatprep.subr.mxu0 0.0
        %3482 = vmatpush1.msra.mxu0 0.0
        %3483 = vmatprep.subr.mxu0 0.0
        %3484 = vmatpush1.msra.mxu0 0.0
        %3485 = vmatprep.subr.mxu0 0.0
        %3486 = vmatpush1.msra.mxu0 0.0
        %3487 = vmatprep.subr.mxu0 0.0
        %3488 = vmatpush1.msra.mxu0 0.0
        %3489 = vmatprep.subr.mxu0 0.0
        %3490 = vmatpush1.msra.mxu0 0.0
        %3491 = vmatprep.subr.mxu0 0.0
        %3492 = vmatpush1.msra.mxu0 0.0
        %3493 = vmatprep.subr.mxu0 0.0
        %3494 = vmatpush1.msra.mxu0 0.0
        %3495 = vmatprep.subr.mxu0 0.0
        %3496 = vmatpush1.msra.mxu0 0.0
        %3497 = vmatprep.mubr.f32.mxu0 0.0
        %3498 = vmatmul.mubr.f32.gmra.mrb[0].mxu0 %v3338
        %v3499 = vpop.f32.mrb[0].mxu0
        %v3500 = vadd.f32 0.0, %v3499
        %v3501 = vpop.f32.mrb[0].mxu0
        %v3502 = vadd.f32 0.0, %v3501
        %3503 = vmatprep.mubr.f32.mxu0 0.0
        %3504 = vmatmul.mubr.f32.gmra.mrb[0].mxu0 %v3341
        %v3505 = vpop.f32.mrb[0].mxu0
        %v3506 = vadd.f32 0.0, %v3505
        %v3507 = vpop.f32.mrb[0].mxu0
        %v3508 = vadd.f32 0.0, %v3507
        %3509 = vmatprep.mubr.f32.mxu0 0.0
        %3510 = vmatmul.mubr.f32.gmra.mrb[0].mxu0 %v3344
        %v3511 = vpop.f32.mrb[0].mxu0
        %v3512 = vadd.f32 0.0, %v3511
        %v3513 = vpop.f32.mrb[0].mxu0
        %v3514 = vadd.f32 0.0, %v3513
        %3515 = vmatprep.mubr.f32.mxu0 0.0
        %3516 = vmatmul.mubr.f32.gmra.mrb[0].mxu0 %v3347
        %v3517 = vpop.f32.mrb[0].mxu0
        %v3518 = vadd.f32 0.0, %v3517
        %v3519 = vpop.f32.mrb[0].mxu0
        %v3520 = vadd.f32 0.0, %v3519
        %3521 = vmatprep.mubr.f32.mxu0 0.0
        %3522 = vmatmul.mubr.f32.gmra.mrb[0].mxu0 %v3350
        %v3523 = vpop.f32.mrb[0].mxu0
        %v3524 = vadd.f32 0.0, %v3523
        %v3525 = vpop.f32.mrb[0].mxu0
        %v3526 = vadd.f32 0.0, %v3525
        %3527 = vmatprep.mubr.f32.mxu0 0.0
        %3528 = vmatmul.mubr.f32.gmra.mrb[0].mxu0 %v3353
        %v3529 = vpop.f32.mrb[0].mxu0
        %v3530 = vadd.f32 0.0, %v3529
        %v3531 = vpop.f32.mrb[0].mxu0
        %v3532 = vadd.f32 0.0, %v3531
        %3533 = vmatprep.mubr.f32.mxu0 0.0
        %3534 = vmatmul.mubr.f32.gmra.mrb[0].mxu0 %v3356
        %v3535 = vpop.f32.mrb[0].mxu0
        %v3536 = vadd.f32 0.0, %v3535
        %v3537 = vpop.f32.mrb[0].mxu0
        %v3538 = vadd.f32 0.0, %v3537
        %3539 = vmatprep.mubr.f32.mxu0 0.0
        %3540 = vmatmul.mubr.f32.gmra.mrb[0].mxu0 %v3359
        %v3541 = vpop.f32.mrb[0].mxu0
        %v3542 = vadd.f32 0.0, %v3541
        %v3543 = vpop.f32.mrb[0].mxu0
        %v3544 = vadd.f32 0.0, %v3543
        %3545 = vmatprep.mubr.f32.mxu0 0.0
        %3546 = vmatmul.mubr.f32.gmra.mrb[0].mxu0 %v3362
        %v3547 = vpop.f32.mrb[0].mxu0
        %v3548 = vadd.f32 0.0, %v3547
        %v3549 = vpop.f32.mrb[0].mxu0
        %v3550 = vadd.f32 0.0, %v3549
        %3551 = vmatprep.mubr.f32.mxu0 0.0
        %3552 = vmatmul.mubr.f32.gmra.mrb[0].mxu0 %v3365
        %v3553 = vpop.f32.mrb[0].mxu0
        %v3554 = vadd.f32 0.0, %v3553
        %v3555 = vpop.f32.mrb[0].mxu0
        %v3556 = vadd.f32 0.0, %v3555
        %3557 = vmatprep.mubr.f32.mxu0 0.0
        %3558 = vmatmul.mubr.f32.gmra.mrb[0].mxu0 %v3368
        %v3559 = vpop.f32.mrb[0].mxu0
        %v3560 = vadd.f32 0.0, %v3559
        %v3561 = vpop.f32.mrb[0].mxu0
        %v3562 = vadd.f32 0.0, %v3561
        %3563 = vmatprep.mubr.f32.mxu0 0.0
        %3564 = vmatmul.mubr.f32.gmra.mrb[0].mxu0 %v3371
        %v3565 = vpop.f32.mrb[0].mxu0
        %v3566 = vadd.f32 0.0, %v3565
        %v3567 = vpop.f32.mrb[0].mxu0
        %v3568 = vadd.f32 0.0, %v3567
        %3569 = vmatprep.mubr.f32.mxu0 0.0
        %3570 = vmatmul.mubr.f32.gmra.mrb[0].mxu0 %v3374
        %v3571 = vpop.f32.mrb[0].mxu0
        %v3572 = vadd.f32 0.0, %v3571
        %v3573 = vpop.f32.mrb[0].mxu0
        %v3574 = vadd.f32 0.0, %v3573
        %3575 = vmatprep.mubr.f32.mxu0 0.0
        %3576 = vmatmul.mubr.f32.gmra.mrb[0].mxu0 %v3377
        %v3577 = vpop.f32.mrb[0].mxu0
        %v3578 = vadd.f32 0.0, %v3577
        %v3579 = vpop.f32.mrb[0].mxu0
        %v3580 = vadd.f32 0.0, %v3579
        %3581 = vmatprep.mubr.f32.mxu0 0.0
        %3582 = vmatmul.mubr.f32.gmra.mrb[0].mxu0 %v3380
        %v3583 = vpop.f32.mrb[0].mxu0
        %v3584 = vadd.f32 0.0, %v3583
        %v3585 = vpop.f32.mrb[0].mxu0
        %v3586 = vadd.f32 0.0, %v3585
        %3587 = vmatprep.mubr.f32.mxu0 0.0
        %3588 = vmatmul.mubr.f32.gmra.mrb[0].mxu0 %v3383
        %v3589 = vpop.f32.mrb[0].mxu0
        %v3590 = vadd.f32 0.0, %v3589
        %v3591 = vpop.f32.mrb[0].mxu0
        %v3592 = vadd.f32 0.0, %v3591
        %3593 = vmatprep.mubr.f32.mxu0 0.0
        %3594 = vmatmul.mubr.f32.gmra.mrb[0].mxu0 %v3386
        %v3595 = vpop.f32.mrb[0].mxu0
        %v3596 = vadd.f32 0.0, %v3595
        %v3597 = vpop.f32.mrb[0].mxu0
        %v3598 = vadd.f32 0.0, %v3597
        %3599 = vmatprep.mubr.f32.mxu0 0.0
        %3600 = vmatmul.mubr.f32.gmra.mrb[0].mxu0 %v3389
        %v3601 = vpop.f32.mrb[0].mxu0
        %v3602 = vadd.f32 0.0, %v3601
        %v3603 = vpop.f32.mrb[0].mxu0
        %v3604 = vadd.f32 0.0, %v3603
        %3605 = vmatprep.mubr.f32.mxu0 0.0
        %3606 = vmatmul.mubr.f32.gmra.mrb[0].mxu0 %v3392
        %v3607 = vpop.f32.mrb[0].mxu0
        %v3608 = vadd.f32 0.0, %v3607
        %v3609 = vpop.f32.mrb[0].mxu0
        %v3610 = vadd.f32 0.0, %v3609
        %3611 = vmatprep.mubr.f32.mxu0 0.0
        %3612 = vmatmul.mubr.f32.gmra.mrb[0].mxu0 %v3395
        %v3613 = vpop.f32.mrb[0].mxu0
        %v3614 = vadd.f32 0.0, %v3613
        %v3615 = vpop.f32.mrb[0].mxu0
        %v3616 = vadd.f32 0.0, %v3615
        %3617 = vmatprep.mubr.f32.mxu0 0.0
        %3618 = vmatmul.mubr.f32.gmra.mrb[0].mxu0 %v3398
        %v3619 = vpop.f32.mrb[0].mxu0
        %v3620 = vadd.f32 0.0, %v3619
        %v3621 = vpop.f32.mrb[0].mxu0
        %v3622 = vadd.f32 0.0, %v3621
        %3623 = vmatprep.mubr.f32.mxu0 0.0
        %3624 = vmatmul.mubr.f32.gmra.mrb[0].mxu0 %v3401
        %v3625 = vpop.f32.mrb[0].mxu0
        %v3626 = vadd.f32 0.0, %v3625
        %v3627 = vpop.f32.mrb[0].mxu0
        %v3628 = vadd.f32 0.0, %v3627
        %3629 = vmatprep.mubr.f32.mxu0 0.0
        %3630 = vmatmul.mubr.f32.gmra.mrb[0].mxu0 %v3404
        %v3631 = vpop.f32.mrb[0].mxu0
        %v3632 = vadd.f32 0.0, %v3631
        %v3633 = vpop.f32.mrb[0].mxu0
        %v3634 = vadd.f32 0.0, %v3633
        %3635 = vmatprep.mubr.f32.mxu0 0.0
        %3636 = vmatmul.mubr.f32.gmra.mrb[0].mxu0 %v3407
        %v3637 = vpop.f32.mrb[0].mxu0
        %v3638 = vadd.f32 0.0, %v3637
        %v3639 = vpop.f32.mrb[0].mxu0
        %v3640 = vadd.f32 0.0, %v3639
        %3641 = vmatprep.mubr.f32.mxu0 0.0
        %3642 = vmatmul.mubr.f32.gmra.mrb[0].mxu0 %v3410
        %v3643 = vpop.f32.mrb[0].mxu0
        %v3644 = vadd.f32 0.0, %v3643
        %v3645 = vpop.f32.mrb[0].mxu0
        %v3646 = vadd.f32 0.0, %v3645
        %3647 = vmatprep.mubr.f32.mxu0 0.0
        %3648 = vmatmul.mubr.f32.gmra.mrb[0].mxu0 %v3413
        %v3649 = vpop.f32.mrb[0].mxu0
        %v3650 = vadd.f32 0.0, %v3649
        %v3651 = vpop.f32.mrb[0].mxu0
        %v3652 = vadd.f32 0.0, %v3651
        %3653 = vmatprep.mubr.f32.mxu0 0.0
        %3654 = vmatmul.mubr.f32.gmra.mrb[0].mxu0 %v3416
        %v3655 = vpop.f32.mrb[0].mxu0
        %v3656 = vadd.f32 0.0, %v3655
        %v3657 = vpop.f32.mrb[0].mxu0
        %v3658 = vadd.f32 0.0, %v3657
        %3659 = vmatprep.mubr.f32.mxu0 0.0
        %3660 = vmatmul.mubr.f32.gmra.mrb[0].mxu0 %v3419
        %v3661 = vpop.f32.mrb[0].mxu0
        %v3662 = vadd.f32 0.0, %v3661
        %v3663 = vpop.f32.mrb[0].mxu0
        %v3664 = vadd.f32 0.0, %v3663
        %3665 = vmatprep.mubr.f32.mxu0 0.0
        %3666 = vmatmul.mubr.f32.gmra.mrb[0].mxu0 %v3422
        %v3667 = vpop.f32.mrb[0].mxu0
        %v3668 = vadd.f32 0.0, %v3667
        %v3669 = vpop.f32.mrb[0].mxu0
        %v3670 = vadd.f32 0.0, %v3669
        %3671 = vmatprep.mubr.f32.mxu0 0.0
        %3672 = vmatmul.mubr.f32.gmra.mrb[0].mxu0 %v3425
        %v3673 = vpop.f32.mrb[0].mxu0
        %v3674 = vadd.f32 0.0, %v3673
        %v3675 = vpop.f32.mrb[0].mxu0
        %v3676 = vadd.f32 0.0, %v3675
        %3677 = vmatprep.mubr.f32.mxu0 0.0
        %3678 = vmatmul.mubr.f32.gmra.mrb[0].mxu0 %v3428
        %v3679 = vpop.f32.mrb[0].mxu0
        %v3680 = vadd.f32 0.0, %v3679
        %v3681 = vpop.f32.mrb[0].mxu0
        %v3682 = vadd.f32 0.0, %v3681
        %3683 = vmatprep.mubr.f32.mxu0 0.0
        %3684 = vmatmul.mubr.f32.gmra.mrb[0].mxu0 %v3431
        %v3685 = vpop.f32.mrb[0].mxu0
        %v3686 = vadd.f32 0.0, %v3685
        %v3687 = vpop.f32.mrb[0].mxu0
        %v3688 = vadd.f32 0.0, %v3687
        %3689 = vdwg.mxu0
        %3690 = vxpose.xlu0.b32.start [1/16] %v752, 128
        %3691 = vxpose.xlu0.b32.cont [2/16] 0.0, 128
        %3692 = vxpose.xlu0.b32.cont [3/16] 0.0, 128
        %3693 = vxpose.xlu0.b32.cont [4/16] 0.0, 128
        %3694 = vxpose.xlu0.b32.cont [5/16] 0.0, 128
        %3695 = vxpose.xlu0.b32.cont [6/16] 0.0, 128
        %3696 = vxpose.xlu0.b32.cont [7/16] 0.0, 128
        %3697 = vxpose.xlu0.b32.cont [8/16] 0.0, 128
        %3698 = vxpose.xlu0.b32.cont [9/16] 0.0, 128
        %3699 = vxpose.xlu0.b32.cont [10/16] 0.0, 128
        %3700 = vxpose.xlu0.b32.cont [11/16] 0.0, 128
        %3701 = vxpose.xlu0.b32.cont [12/16] 0.0, 128
        %3702 = vxpose.xlu0.b32.cont [13/16] 0.0, 128
        %3703 = vxpose.xlu0.b32.cont [14/16] 0.0, 128
        %3704 = vxpose.xlu0.b32.cont [15/16] 0.0, 128
        %3705 = vxpose.xlu0.b32.end [16/16] 0.0, 128
        %v3706 = vpop.trf.xlu0
        %v3707 = vpop.trf.xlu0
        %v3708 = vpop.trf.xlu0
        %v3709 = vpop.trf.xlu0
        %v3710 = vpop.trf.xlu0
        %v3711 = vpop.trf.xlu0
        %v3712 = vpop.trf.xlu0
        %v3713 = vpop.trf.xlu0
        %v3714 = vpop.trf.xlu0
        %v3715 = vpop.trf.xlu0
        %v3716 = vpop.trf.xlu0
        %v3717 = vpop.trf.xlu0
        %v3718 = vpop.trf.xlu0
        %v3719 = vpop.trf.xlu0
        %v3720 = vpop.trf.xlu0
        %v3721 = vpop.trf.xlu0
        %3722 = vxpose.xlu0.b32.start [1/16] %v753, 128
        %3723 = vxpose.xlu0.b32.cont [2/16] 0.0, 128
        %3724 = vxpose.xlu0.b32.cont [3/16] 0.0, 128
        %3725 = vxpose.xlu0.b32.cont [4/16] 0.0, 128
        %3726 = vxpose.xlu0.b32.cont [5/16] 0.0, 128
        %3727 = vxpose.xlu0.b32.cont [6/16] 0.0, 128
        %3728 = vxpose.xlu0.b32.cont [7/16] 0.0, 128
        %3729 = vxpose.xlu0.b32.cont [8/16] 0.0, 128
        %3730 = vxpose.xlu0.b32.cont [9/16] 0.0, 128
        %3731 = vxpose.xlu0.b32.cont [10/16] 0.0, 128
        %3732 = vxpose.xlu0.b32.cont [11/16] 0.0, 128
        %3733 = vxpose.xlu0.b32.cont [12/16] 0.0, 128
        %3734 = vxpose.xlu0.b32.cont [13/16] 0.0, 128
        %3735 = vxpose.xlu0.b32.cont [14/16] 0.0, 128
        %3736 = vxpose.xlu0.b32.cont [15/16] 0.0, 128
        %3737 = vxpose.xlu0.b32.end [16/16] 0.0, 128
        %v3738 = vpop.trf.xlu0
        %v3739 = vpop.trf.xlu0
        %v3740 = vpop.trf.xlu0
        %v3741 = vpop.trf.xlu0
        %v3742 = vpop.trf.xlu0
        %v3743 = vpop.trf.xlu0
        %v3744 = vpop.trf.xlu0
        %v3745 = vpop.trf.xlu0
        %v3746 = vpop.trf.xlu0
        %v3747 = vpop.trf.xlu0
        %v3748 = vpop.trf.xlu0
        %v3749 = vpop.trf.xlu0
        %v3750 = vpop.trf.xlu0
        %v3751 = vpop.trf.xlu0
        %v3752 = vpop.trf.xlu0
        %v3753 = vpop.trf.xlu0
        %v3755 = vsel %vm834, %v3706, 0
        %v3758 = vsel %vm834, %v3707, 0
        %v3761 = vsel %vm834, %v3708, 0
        %v3764 = vsel %vm834, %v3709, 0
        %v3767 = vsel %vm834, %v3710, 0
        %v3770 = vsel %vm834, %v3711, 0
        %v3773 = vsel %vm834, %v3712, 0
        %v3776 = vsel %vm834, %v3713, 0
        %v3779 = vsel %vm834, %v3714, 0
        %v3782 = vsel %vm834, %v3715, 0
        %v3785 = vsel %vm834, %v3716, 0
        %v3788 = vsel %vm834, %v3717, 0
        %v3791 = vsel %vm834, %v3718, 0
        %v3794 = vsel %vm834, %v3719, 0
        %v3797 = vsel %vm834, %v3720, 0
        %v3800 = vsel %vm834, %v3721, 0
        %v3803 = vsel %vm834, %v3738, 0
        %v3806 = vsel %vm834, %v3739, 0
        %v3809 = vsel %vm834, %v3740, 0
        %v3812 = vsel %vm834, %v3741, 0
        %v3815 = vsel %vm834, %v3742, 0
        %v3818 = vsel %vm834, %v3743, 0
        %v3821 = vsel %vm834, %v3744, 0
        %v3824 = vsel %vm834, %v3745, 0
        %v3827 = vsel %vm834, %v3746, 0
        %v3830 = vsel %vm834, %v3747, 0
        %v3833 = vsel %vm834, %v3748, 0
        %v3836 = vsel %vm834, %v3749, 0
        %v3839 = vsel %vm834, %v3750, 0
        %v3842 = vsel %vm834, %v3751, 0
        %v3845 = vsel %vm834, %v3752, 0
        %v3848 = vsel %vm834, %v3753, 0
        %3850 = vmatprep.subr.mxu0 %v769
        %3851 = vmatpush1.msra.mxu0 %v768
        %3852 = vmatprep.subr.mxu0 0.0
        %3853 = vmatpush1.msra.mxu0 0.0
        %3854 = vmatprep.subr.mxu0 0.0
        %3855 = vmatpush1.msra.mxu0 0.0
        %3856 = vmatprep.subr.mxu0 0.0
        %3857 = vmatpush1.msra.mxu0 0.0
        %3858 = vmatprep.subr.mxu0 0.0
        %3859 = vmatpush1.msra.mxu0 0.0
        %3860 = vmatprep.subr.mxu0 0.0
        %3861 = vmatpush1.msra.mxu0 0.0
        %3862 = vmatprep.subr.mxu0 0.0
        %3863 = vmatpush1.msra.mxu0 0.0
        %3864 = vmatprep.subr.mxu0 0.0
        %3865 = vmatpush1.msra.mxu0 0.0
        %3866 = vmatprep.subr.mxu0 0.0
        %3867 = vmatpush1.msra.mxu0 0.0
        %3868 = vmatprep.subr.mxu0 0.0
        %3869 = vmatpush1.msra.mxu0 0.0
        %3870 = vmatprep.subr.mxu0 0.0
        %3871 = vmatpush1.msra.mxu0 0.0
        %3872 = vmatprep.subr.mxu0 0.0
        %3873 = vmatpush1.msra.mxu0 0.0
        %3874 = vmatprep.subr.mxu0 0.0
        %3875 = vmatpush1.msra.mxu0 0.0
        %3876 = vmatprep.subr.mxu0 0.0
        %3877 = vmatpush1.msra.mxu0 0.0
        %3878 = vmatprep.subr.mxu0 0.0
        %3879 = vmatpush1.msra.mxu0 0.0
        %3880 = vmatprep.subr.mxu0 0.0
        %3881 = vmatpush1.msra.mxu0 0.0
        %3882 = vmatprep.subr.mxu0 0.0
        %3883 = vmatpush1.msra.mxu0 0.0
        %3884 = vmatprep.subr.mxu0 0.0
        %3885 = vmatpush1.msra.mxu0 0.0
        %3886 = vmatprep.subr.mxu0 0.0
        %3887 = vmatpush1.msra.mxu0 0.0
        %3888 = vmatprep.subr.mxu0 0.0
        %3889 = vmatpush1.msra.mxu0 0.0
        %3890 = vmatprep.subr.mxu0 0.0
        %3891 = vmatpush1.msra.mxu0 0.0
        %3892 = vmatprep.subr.mxu0 0.0
        %3893 = vmatpush1.msra.mxu0 0.0
        %3894 = vmatprep.subr.mxu0 0.0
        %3895 = vmatpush1.msra.mxu0 0.0
        %3896 = vmatprep.subr.mxu0 0.0
        %3897 = vmatpush1.msra.mxu0 0.0
        %3898 = vmatprep.subr.mxu0 0.0
        %3899 = vmatpush1.msra.mxu0 0.0
        %3900 = vmatprep.subr.mxu0 0.0
        %3901 = vmatpush1.msra.mxu0 0.0
        %3902 = vmatprep.subr.mxu0 0.0
        %3903 = vmatpush1.msra.mxu0 0.0
        %3904 = vmatprep.subr.mxu0 0.0
        %3905 = vmatpush1.msra.mxu0 0.0
        %3906 = vmatprep.subr.mxu0 0.0
        %3907 = vmatpush1.msra.mxu0 0.0
        %3908 = vmatprep.subr.mxu0 0.0
        %3909 = vmatpush1.msra.mxu0 0.0
        %3910 = vmatprep.subr.mxu0 0.0
        %3911 = vmatpush1.msra.mxu0 0.0
        %3912 = vmatprep.subr.mxu0 0.0
        %3913 = vmatpush1.msra.mxu0 0.0
        %3914 = vmatprep.mubr.f32.mxu0 0.0
        %3915 = vmatmul.mubr.f32.gmra.mrb[0].mxu0 %v3755
        %v3916 = vpop.f32.mrb[0].mxu0
        %v3917 = vadd.f32 0.0, %v3916
        %v3918 = vpop.f32.mrb[0].mxu0
        %v3919 = vadd.f32 0.0, %v3918
        %3920 = vmatprep.mubr.f32.mxu0 0.0
        %3921 = vmatmul.mubr.f32.gmra.mrb[0].mxu0 %v3758
        %v3922 = vpop.f32.mrb[0].mxu0
        %v3923 = vadd.f32 0.0, %v3922
        %v3924 = vpop.f32.mrb[0].mxu0
        %v3925 = vadd.f32 0.0, %v3924
        %3926 = vmatprep.mubr.f32.mxu0 0.0
        %3927 = vmatmul.mubr.f32.gmra.mrb[0].mxu0 %v3761
        %v3928 = vpop.f32.mrb[0].mxu0
        %v3929 = vadd.f32 0.0, %v3928
        %v3930 = vpop.f32.mrb[0].mxu0
        %v3931 = vadd.f32 0.0, %v3930
        %3932 = vmatprep.mubr.f32.mxu0 0.0
        %3933 = vmatmul.mubr.f32.gmra.mrb[0].mxu0 %v3764
        %v3934 = vpop.f32.mrb[0].mxu0
        %v3935 = vadd.f32 0.0, %v3934
        %v3936 = vpop.f32.mrb[0].mxu0
        %v3937 = vadd.f32 0.0, %v3936
        %3938 = vmatprep.mubr.f32.mxu0 0.0
        %3939 = vmatmul.mubr.f32.gmra.mrb[0].mxu0 %v3767
        %v3940 = vpop.f32.mrb[0].mxu0
        %v3941 = vadd.f32 0.0, %v3940
        %v3942 = vpop.f32.mrb[0].mxu0
        %v3943 = vadd.f32 0.0, %v3942
        %3944 = vmatprep.mubr.f32.mxu0 0.0
        %3945 = vmatmul.mubr.f32.gmra.mrb[0].mxu0 %v3770
        %v3946 = vpop.f32.mrb[0].mxu0
        %v3947 = vadd.f32 0.0, %v3946
        %v3948 = vpop.f32.mrb[0].mxu0
        %v3949 = vadd.f32 0.0, %v3948
        %3950 = vmatprep.mubr.f32.mxu0 0.0
        %3951 = vmatmul.mubr.f32.gmra.mrb[0].mxu0 %v3773
        %v3952 = vpop.f32.mrb[0].mxu0
        %v3953 = vadd.f32 0.0, %v3952
        %v3954 = vpop.f32.mrb[0].mxu0
        %v3955 = vadd.f32 0.0, %v3954
        %3956 = vmatprep.mubr.f32.mxu0 0.0
        %3957 = vmatmul.mubr.f32.gmra.mrb[0].mxu0 %v3776
        %v3958 = vpop.f32.mrb[0].mxu0
        %v3959 = vadd.f32 0.0, %v3958
        %v3960 = vpop.f32.mrb[0].mxu0
        %v3961 = vadd.f32 0.0, %v3960
        %3962 = vmatprep.mubr.f32.mxu0 0.0
        %3963 = vmatmul.mubr.f32.gmra.mrb[0].mxu0 %v3779
        %v3964 = vpop.f32.mrb[0].mxu0
        %v3965 = vadd.f32 0.0, %v3964
        %v3966 = vpop.f32.mrb[0].mxu0
        %v3967 = vadd.f32 0.0, %v3966
        %3968 = vmatprep.mubr.f32.mxu0 0.0
        %3969 = vmatmul.mubr.f32.gmra.mrb[0].mxu0 %v3782
        %v3970 = vpop.f32.mrb[0].mxu0
        %v3971 = vadd.f32 0.0, %v3970
        %v3972 = vpop.f32.mrb[0].mxu0
        %v3973 = vadd.f32 0.0, %v3972
        %3974 = vmatprep.mubr.f32.mxu0 0.0
        %3975 = vmatmul.mubr.f32.gmra.mrb[0].mxu0 %v3785
        %v3976 = vpop.f32.mrb[0].mxu0
        %v3977 = vadd.f32 0.0, %v3976
        %v3978 = vpop.f32.mrb[0].mxu0
        %v3979 = vadd.f32 0.0, %v3978
        %3980 = vmatprep.mubr.f32.mxu0 0.0
        %3981 = vmatmul.mubr.f32.gmra.mrb[0].mxu0 %v3788
        %v3982 = vpop.f32.mrb[0].mxu0
        %v3983 = vadd.f32 0.0, %v3982
        %v3984 = vpop.f32.mrb[0].mxu0
        %v3985 = vadd.f32 0.0, %v3984
        %3986 = vmatprep.mubr.f32.mxu0 0.0
        %3987 = vmatmul.mubr.f32.gmra.mrb[0].mxu0 %v3791
        %v3988 = vpop.f32.mrb[0].mxu0
        %v3989 = vadd.f32 0.0, %v3988
        %v3990 = vpop.f32.mrb[0].mxu0
        %v3991 = vadd.f32 0.0, %v3990
        %3992 = vmatprep.mubr.f32.mxu0 0.0
        %3993 = vmatmul.mubr.f32.gmra.mrb[0].mxu0 %v3794
        %v3994 = vpop.f32.mrb[0].mxu0
        %v3995 = vadd.f32 0.0, %v3994
        %v3996 = vpop.f32.mrb[0].mxu0
        %v3997 = vadd.f32 0.0, %v3996
        %3998 = vmatprep.mubr.f32.mxu0 0.0
        %3999 = vmatmul.mubr.f32.gmra.mrb[0].mxu0 %v3797
        %v4000 = vpop.f32.mrb[0].mxu0
        %v4001 = vadd.f32 0.0, %v4000
        %v4002 = vpop.f32.mrb[0].mxu0
        %v4003 = vadd.f32 0.0, %v4002
        %4004 = vmatprep.mubr.f32.mxu0 0.0
        %4005 = vmatmul.mubr.f32.gmra.mrb[0].mxu0 %v3800
        %v4006 = vpop.f32.mrb[0].mxu0
        %v4007 = vadd.f32 0.0, %v4006
        %v4008 = vpop.f32.mrb[0].mxu0
        %v4009 = vadd.f32 0.0, %v4008
        %4010 = vmatprep.mubr.f32.mxu0 0.0
        %4011 = vmatmul.mubr.f32.gmra.mrb[0].mxu0 %v3803
        %v4012 = vpop.f32.mrb[0].mxu0
        %v4013 = vadd.f32 0.0, %v4012
        %v4014 = vpop.f32.mrb[0].mxu0
        %v4015 = vadd.f32 0.0, %v4014
        %4016 = vmatprep.mubr.f32.mxu0 0.0
        %4017 = vmatmul.mubr.f32.gmra.mrb[0].mxu0 %v3806
        %v4018 = vpop.f32.mrb[0].mxu0
        %v4019 = vadd.f32 0.0, %v4018
        %v4020 = vpop.f32.mrb[0].mxu0
        %v4021 = vadd.f32 0.0, %v4020
        %4022 = vmatprep.mubr.f32.mxu0 0.0
        %4023 = vmatmul.mubr.f32.gmra.mrb[0].mxu0 %v3809
        %v4024 = vpop.f32.mrb[0].mxu0
        %v4025 = vadd.f32 0.0, %v4024
        %v4026 = vpop.f32.mrb[0].mxu0
        %v4027 = vadd.f32 0.0, %v4026
        %4028 = vmatprep.mubr.f32.mxu0 0.0
        %4029 = vmatmul.mubr.f32.gmra.mrb[0].mxu0 %v3812
        %v4030 = vpop.f32.mrb[0].mxu0
        %v4031 = vadd.f32 0.0, %v4030
        %v4032 = vpop.f32.mrb[0].mxu0
        %v4033 = vadd.f32 0.0, %v4032
        %4034 = vmatprep.mubr.f32.mxu0 0.0
        %4035 = vmatmul.mubr.f32.gmra.mrb[0].mxu0 %v3815
        %v4036 = vpop.f32.mrb[0].mxu0
        %v4037 = vadd.f32 0.0, %v4036
        %v4038 = vpop.f32.mrb[0].mxu0
        %v4039 = vadd.f32 0.0, %v4038
        %4040 = vmatprep.mubr.f32.mxu0 0.0
        %4041 = vmatmul.mubr.f32.gmra.mrb[0].mxu0 %v3818
        %v4042 = vpop.f32.mrb[0].mxu0
        %v4043 = vadd.f32 0.0, %v4042
        %v4044 = vpop.f32.mrb[0].mxu0
        %v4045 = vadd.f32 0.0, %v4044
        %4046 = vmatprep.mubr.f32.mxu0 0.0
        %4047 = vmatmul.mubr.f32.gmra.mrb[0].mxu0 %v3821
        %v4048 = vpop.f32.mrb[0].mxu0
        %v4049 = vadd.f32 0.0, %v4048
        %v4050 = vpop.f32.mrb[0].mxu0
        %v4051 = vadd.f32 0.0, %v4050
        %4052 = vmatprep.mubr.f32.mxu0 0.0
        %4053 = vmatmul.mubr.f32.gmra.mrb[0].mxu0 %v3824
        %v4054 = vpop.f32.mrb[0].mxu0
        %v4055 = vadd.f32 0.0, %v4054
        %v4056 = vpop.f32.mrb[0].mxu0
        %v4057 = vadd.f32 0.0, %v4056
        %4058 = vmatprep.mubr.f32.mxu0 0.0
        %4059 = vmatmul.mubr.f32.gmra.mrb[0].mxu0 %v3827
        %v4060 = vpop.f32.mrb[0].mxu0
        %v4061 = vadd.f32 0.0, %v4060
        %v4062 = vpop.f32.mrb[0].mxu0
        %v4063 = vadd.f32 0.0, %v4062
        %4064 = vmatprep.mubr.f32.mxu0 0.0
        %4065 = vmatmul.mubr.f32.gmra.mrb[0].mxu0 %v3830
        %v4066 = vpop.f32.mrb[0].mxu0
        %v4067 = vadd.f32 0.0, %v4066
        %v4068 = vpop.f32.mrb[0].mxu0
        %v4069 = vadd.f32 0.0, %v4068
        %4070 = vmatprep.mubr.f32.mxu0 0.0
        %4071 = vmatmul.mubr.f32.gmra.mrb[0].mxu0 %v3833
        %v4072 = vpop.f32.mrb[0].mxu0
        %v4073 = vadd.f32 0.0, %v4072
        %v4074 = vpop.f32.mrb[0].mxu0
        %v4075 = vadd.f32 0.0, %v4074
        %4076 = vmatprep.mubr.f32.mxu0 0.0
        %4077 = vmatmul.mubr.f32.gmra.mrb[0].mxu0 %v3836
        %v4078 = vpop.f32.mrb[0].mxu0
        %v4079 = vadd.f32 0.0, %v4078
        %v4080 = vpop.f32.mrb[0].mxu0
        %v4081 = vadd.f32 0.0, %v4080
        %4082 = vmatprep.mubr.f32.mxu0 0.0
        %4083 = vmatmul.mubr.f32.gmra.mrb[0].mxu0 %v3839
        %v4084 = vpop.f32.mrb[0].mxu0
        %v4085 = vadd.f32 0.0, %v4084
        %v4086 = vpop.f32.mrb[0].mxu0
        %v4087 = vadd.f32 0.0, %v4086
        %4088 = vmatprep.mubr.f32.mxu0 0.0
        %4089 = vmatmul.mubr.f32.gmra.mrb[0].mxu0 %v3842
        %v4090 = vpop.f32.mrb[0].mxu0
        %v4091 = vadd.f32 0.0, %v4090
        %v4092 = vpop.f32.mrb[0].mxu0
        %v4093 = vadd.f32 0.0, %v4092
        %4094 = vmatprep.mubr.f32.mxu0 0.0
        %4095 = vmatmul.mubr.f32.gmra.mrb[0].mxu0 %v3845
        %v4096 = vpop.f32.mrb[0].mxu0
        %v4097 = vadd.f32 0.0, %v4096
        %v4098 = vpop.f32.mrb[0].mxu0
        %v4099 = vadd.f32 0.0, %v4098
        %4100 = vmatprep.mubr.f32.mxu0 0.0
        %4101 = vmatmul.mubr.f32.gmra.mrb[0].mxu0 %v3848
        %v4102 = vpop.f32.mrb[0].mxu0
        %v4103 = vadd.f32 0.0, %v4102
        %v4104 = vpop.f32.mrb[0].mxu0
        %v4105 = vadd.f32 0.0, %v4104
        %4106 = vdwg.mxu0
        %v4107 = vmax.f32 %v998, %v1000
        %4108 = vmax.xlane.f32.xlu0 %v4107
        %v4109 = vpop.xlane.xlu0 %4108
        %v4110 = vmax.f32 %v1004, %v1006
        %4111 = vmax.xlane.f32.xlu0 %v4110
        %v4112 = vpop.xlane.xlu0 %4111
        %v4113 = vmax.f32 %v1010, %v1012
        %4114 = vmax.xlane.f32.xlu0 %v4113
        %v4115 = vpop.xlane.xlu0 %4114
        %v4116 = vmax.f32 %v1016, %v1018
        %4117 = vmax.xlane.f32.xlu0 %v4116
        %v4118 = vpop.xlane.xlu0 %4117
        %v4119 = vmax.f32 %v1022, %v1024
        %4120 = vmax.xlane.f32.xlu0 %v4119
        %v4121 = vpop.xlane.xlu0 %4120
        %v4122 = vmax.f32 %v1028, %v1030
        %4123 = vmax.xlane.f32.xlu0 %v4122
        %v4124 = vpop.xlane.xlu0 %4123
        %v4125 = vmax.f32 %v1034, %v1036
        %4126 = vmax.xlane.f32.xlu0 %v4125
        %v4127 = vpop.xlane.xlu0 %4126
        %v4128 = vmax.f32 %v1040, %v1042
        %4129 = vmax.xlane.f32.xlu0 %v4128
        %v4130 = vpop.xlane.xlu0 %4129
        %v4131 = vmax.f32 %v1046, %v1048
        %4132 = vmax.xlane.f32.xlu0 %v4131
        %v4133 = vpop.xlane.xlu0 %4132
        %v4134 = vmax.f32 %v1052, %v1054
        %4135 = vmax.xlane.f32.xlu0 %v4134
        %v4136 = vpop.xlane.xlu0 %4135
        %v4137 = vmax.f32 %v1058, %v1060
        %4138 = vmax.xlane.f32.xlu0 %v4137
        %v4139 = vpop.xlane.xlu0 %4138
        %v4140 = vmax.f32 %v1064, %v1066
        %4141 = vmax.xlane.f32.xlu0 %v4140
        %v4142 = vpop.xlane.xlu0 %4141
        %v4143 = vmax.f32 %v1070, %v1072
        %4144 = vmax.xlane.f32.xlu0 %v4143
        %v4145 = vpop.xlane.xlu0 %4144
        %v4146 = vmax.f32 %v1076, %v1078
        %4147 = vmax.xlane.f32.xlu0 %v4146
        %v4148 = vpop.xlane.xlu0 %4147
        %v4149 = vmax.f32 %v1082, %v1084
        %4150 = vmax.xlane.f32.xlu0 %v4149
        %v4151 = vpop.xlane.xlu0 %4150
        %v4152 = vmax.f32 %v1088, %v1090
        %4153 = vmax.xlane.f32.xlu0 %v4152
        %v4154 = vpop.xlane.xlu0 %4153
        %v4155 = vmax.f32 %v1094, %v1096
        %4156 = vmax.xlane.f32.xlu0 %v4155
        %v4157 = vpop.xlane.xlu0 %4156
        %v4158 = vmax.f32 %v1100, %v1102
        %4159 = vmax.xlane.f32.xlu0 %v4158
        %v4160 = vpop.xlane.xlu0 %4159
        %v4161 = vmax.f32 %v1106, %v1108
        %4162 = vmax.xlane.f32.xlu0 %v4161
        %v4163 = vpop.xlane.xlu0 %4162
        %v4164 = vmax.f32 %v1112, %v1114
        %4165 = vmax.xlane.f32.xlu0 %v4164
        %v4166 = vpop.xlane.xlu0 %4165
        %v4167 = vmax.f32 %v1118, %v1120
        %4168 = vmax.xlane.f32.xlu0 %v4167
        %v4169 = vpop.xlane.xlu0 %4168
        %v4170 = vmax.f32 %v1124, %v1126
        %4171 = vmax.xlane.f32.xlu0 %v4170
        %v4172 = vpop.xlane.xlu0 %4171
        %v4173 = vmax.f32 %v1130, %v1132
        %4174 = vmax.xlane.f32.xlu0 %v4173
        %v4175 = vpop.xlane.xlu0 %4174
        %v4176 = vmax.f32 %v1136, %v1138
        %4177 = vmax.xlane.f32.xlu0 %v4176
        %v4178 = vpop.xlane.xlu0 %4177
        %v4179 = vmax.f32 %v1142, %v1144
        %4180 = vmax.xlane.f32.xlu0 %v4179
        %v4181 = vpop.xlane.xlu0 %4180
        %v4182 = vmax.f32 %v1148, %v1150
        %4183 = vmax.xlane.f32.xlu0 %v4182
        %v4184 = vpop.xlane.xlu0 %4183
        %v4185 = vmax.f32 %v1154, %v1156
        %4186 = vmax.xlane.f32.xlu0 %v4185
        %v4187 = vpop.xlane.xlu0 %4186
        %v4188 = vmax.f32 %v1160, %v1162
        %4189 = vmax.xlane.f32.xlu0 %v4188
        %v4190 = vpop.xlane.xlu0 %4189
        %v4191 = vmax.f32 %v1166, %v1168
        %4192 = vmax.xlane.f32.xlu0 %v4191
        %v4193 = vpop.xlane.xlu0 %4192
        %v4194 = vmax.f32 %v1172, %v1174
        %4195 = vmax.xlane.f32.xlu0 %v4194
        %v4196 = vpop.xlane.xlu0 %4195
        %v4197 = vmax.f32 %v1178, %v1180
        %4198 = vmax.xlane.f32.xlu0 %v4197
        %v4199 = vpop.xlane.xlu0 %4198
        %v4200 = vmax.f32 %v1184, %v1186
        %4201 = vmax.xlane.f32.xlu0 %v4200
        %v4202 = vpop.xlane.xlu0 %4201
        %v4203 = vmax.f32 %v1415, %v1417
        %4204 = vmax.xlane.f32.xlu0 %v4203
        %v4205 = vpop.xlane.xlu0 %4204
        %v4206 = vmax.f32 %v1421, %v1423
        %4207 = vmax.xlane.f32.xlu0 %v4206
        %v4208 = vpop.xlane.xlu0 %4207
        %v4209 = vmax.f32 %v1427, %v1429
        %4210 = vmax.xlane.f32.xlu0 %v4209
        %v4211 = vpop.xlane.xlu0 %4210
        %v4212 = vmax.f32 %v1433, %v1435
        %4213 = vmax.xlane.f32.xlu0 %v4212
        %v4214 = vpop.xlane.xlu0 %4213
        %v4215 = vmax.f32 %v1439, %v1441
        %4216 = vmax.xlane.f32.xlu0 %v4215
        %v4217 = vpop.xlane.xlu0 %4216
        %v4218 = vmax.f32 %v1445, %v1447
        %4219 = vmax.xlane.f32.xlu0 %v4218
        %v4220 = vpop.xlane.xlu0 %4219
        %v4221 = vmax.f32 %v1451, %v1453
        %4222 = vmax.xlane.f32.xlu0 %v4221
        %v4223 = vpop.xlane.xlu0 %4222
        %v4224 = vmax.f32 %v1457, %v1459
        %4225 = vmax.xlane.f32.xlu0 %v4224
        %v4226 = vpop.xlane.xlu0 %4225
        %v4227 = vmax.f32 %v1463, %v1465
        %4228 = vmax.xlane.f32.xlu0 %v4227
        %v4229 = vpop.xlane.xlu0 %4228
        %v4230 = vmax.f32 %v1469, %v1471
        %4231 = vmax.xlane.f32.xlu0 %v4230
        %v4232 = vpop.xlane.xlu0 %4231
        %v4233 = vmax.f32 %v1475, %v1477
        %4234 = vmax.xlane.f32.xlu0 %v4233
        %v4235 = vpop.xlane.xlu0 %4234
        %v4236 = vmax.f32 %v1481, %v1483
        %4237 = vmax.xlane.f32.xlu0 %v4236
        %v4238 = vpop.xlane.xlu0 %4237
        %v4239 = vmax.f32 %v1487, %v1489
        %4240 = vmax.xlane.f32.xlu0 %v4239
        %v4241 = vpop.xlane.xlu0 %4240
        %v4242 = vmax.f32 %v1493, %v1495
        %4243 = vmax.xlane.f32.xlu0 %v4242
        %v4244 = vpop.xlane.xlu0 %4243
        %v4245 = vmax.f32 %v1499, %v1501
        %4246 = vmax.xlane.f32.xlu0 %v4245
        %v4247 = vpop.xlane.xlu0 %4246
        %v4248 = vmax.f32 %v1505, %v1507
        %4249 = vmax.xlane.f32.xlu0 %v4248
        %v4250 = vpop.xlane.xlu0 %4249
        %v4251 = vmax.f32 %v1511, %v1513
        %4252 = vmax.xlane.f32.xlu0 %v4251
        %v4253 = vpop.xlane.xlu0 %4252
        %v4254 = vmax.f32 %v1517, %v1519
        %4255 = vmax.xlane.f32.xlu0 %v4254
        %v4256 = vpop.xlane.xlu0 %4255
        %v4257 = vmax.f32 %v1523, %v1525
        %4258 = vmax.xlane.f32.xlu0 %v4257
        %v4259 = vpop.xlane.xlu0 %4258
        %v4260 = vmax.f32 %v1529, %v1531
        %4261 = vmax.xlane.f32.xlu0 %v4260
        %v4262 = vpop.xlane.xlu0 %4261
        %v4263 = vmax.f32 %v1535, %v1537
        %4264 = vmax.xlane.f32.xlu0 %v4263
        %v4265 = vpop.xlane.xlu0 %4264
        %v4266 = vmax.f32 %v1541, %v1543
        %4267 = vmax.xlane.f32.xlu0 %v4266
        %v4268 = vpop.xlane.xlu0 %4267
        %v4269 = vmax.f32 %v1547, %v1549
        %4270 = vmax.xlane.f32.xlu0 %v4269
        %v4271 = vpop.xlane.xlu0 %4270
        %v4272 = vmax.f32 %v1553, %v1555
        %4273 = vmax.xlane.f32.xlu0 %v4272
        %v4274 = vpop.xlane.xlu0 %4273
        %v4275 = vmax.f32 %v1559, %v1561
        %4276 = vmax.xlane.f32.xlu0 %v4275
        %v4277 = vpop.xlane.xlu0 %4276
        %v4278 = vmax.f32 %v1565, %v1567
        %4279 = vmax.xlane.f32.xlu0 %v4278
        %v4280 = vpop.xlane.xlu0 %4279
        %v4281 = vmax.f32 %v1571, %v1573
        %4282 = vmax.xlane.f32.xlu0 %v4281
        %v4283 = vpop.xlane.xlu0 %4282
        %v4284 = vmax.f32 %v1577, %v1579
        %4285 = vmax.xlane.f32.xlu0 %v4284
        %v4286 = vpop.xlane.xlu0 %4285
        %v4287 = vmax.f32 %v1583, %v1585
        %4288 = vmax.xlane.f32.xlu0 %v4287
        %v4289 = vpop.xlane.xlu0 %4288
        %v4290 = vmax.f32 %v1589, %v1591
        %4291 = vmax.xlane.f32.xlu0 %v4290
        %v4292 = vpop.xlane.xlu0 %4291
        %v4293 = vmax.f32 %v1595, %v1597
        %4294 = vmax.xlane.f32.xlu0 %v4293
        %v4295 = vpop.xlane.xlu0 %4294
        %v4296 = vmax.f32 %v1601, %v1603
        %4297 = vmax.xlane.f32.xlu0 %v4296
        %v4298 = vpop.xlane.xlu0 %4297
        %v4299 = vmax.f32 %v1832, %v1834
        %4300 = vmax.xlane.f32.xlu0 %v4299
        %v4301 = vpop.xlane.xlu0 %4300
        %v4302 = vmax.f32 %v1838, %v1840
        %4303 = vmax.xlane.f32.xlu0 %v4302
        %v4304 = vpop.xlane.xlu0 %4303
        %v4305 = vmax.f32 %v1844, %v1846
        %4306 = vmax.xlane.f32.xlu0 %v4305
        %v4307 = vpop.xlane.xlu0 %4306
        %v4308 = vmax.f32 %v1850, %v1852
        %4309 = vmax.xlane.f32.xlu0 %v4308
        %v4310 = vpop.xlane.xlu0 %4309
        %v4311 = vmax.f32 %v1856, %v1858
        %4312 = vmax.xlane.f32.xlu0 %v4311
        %v4313 = vpop.xlane.xlu0 %4312
        %v4314 = vmax.f32 %v1862, %v1864
        %4315 = vmax.xlane.f32.xlu0 %v4314
        %v4316 = vpop.xlane.xlu0 %4315
        %v4317 = vmax.f32 %v1868, %v1870
        %4318 = vmax.xlane.f32.xlu0 %v4317
        %v4319 = vpop.xlane.xlu0 %4318
        %v4320 = vmax.f32 %v1874, %v1876
        %4321 = vmax.xlane.f32.xlu0 %v4320
        %v4322 = vpop.xlane.xlu0 %4321
        %v4323 = vmax.f32 %v1880, %v1882
        %4324 = vmax.xlane.f32.xlu0 %v4323
        %v4325 = vpop.xlane.xlu0 %4324
        %v4326 = vmax.f32 %v1886, %v1888
        %4327 = vmax.xlane.f32.xlu0 %v4326
        %v4328 = vpop.xlane.xlu0 %4327
        %v4329 = vmax.f32 %v1892, %v1894
        %4330 = vmax.xlane.f32.xlu0 %v4329
        %v4331 = vpop.xlane.xlu0 %4330
        %v4332 = vmax.f32 %v1898, %v1900
        %4333 = vmax.xlane.f32.xlu0 %v4332
        %v4334 = vpop.xlane.xlu0 %4333
        %v4335 = vmax.f32 %v1904, %v1906
        %4336 = vmax.xlane.f32.xlu0 %v4335
        %v4337 = vpop.xlane.xlu0 %4336
        %v4338 = vmax.f32 %v1910, %v1912
        %4339 = vmax.xlane.f32.xlu0 %v4338
        %v4340 = vpop.xlane.xlu0 %4339
        %v4341 = vmax.f32 %v1916, %v1918
        %4342 = vmax.xlane.f32.xlu0 %v4341
        %v4343 = vpop.xlane.xlu0 %4342
        %v4344 = vmax.f32 %v1922, %v1924
        %4345 = vmax.xlane.f32.xlu0 %v4344
        %v4346 = vpop.xlane.xlu0 %4345
        %v4347 = vmax.f32 %v1928, %v1930
        %4348 = vmax.xlane.f32.xlu0 %v4347
        %v4349 = vpop.xlane.xlu0 %4348
        %v4350 = vmax.f32 %v1934, %v1936
        %4351 = vmax.xlane.f32.xlu0 %v4350
        %v4352 = vpop.xlane.xlu0 %4351
        %v4353 = vmax.f32 %v1940, %v1942
        %4354 = vmax.xlane.f32.xlu0 %v4353
        %v4355 = vpop.xlane.xlu0 %4354
        %v4356 = vmax.f32 %v1946, %v1948
        %4357 = vmax.xlane.f32.xlu0 %v4356
        %v4358 = vpop.xlane.xlu0 %4357
        %v4359 = vmax.f32 %v1952, %v1954
        %4360 = vmax.xlane.f32.xlu0 %v4359
        %v4361 = vpop.xlane.xlu0 %4360
        %v4362 = vmax.f32 %v1958, %v1960
        %4363 = vmax.xlane.f32.xlu0 %v4362
        %v4364 = vpop.xlane.xlu0 %4363
        %v4365 = vmax.f32 %v1964, %v1966
        %4366 = vmax.xlane.f32.xlu0 %v4365
        %v4367 = vpop.xlane.xlu0 %4366
        %v4368 = vmax.f32 %v1970, %v1972
        %4369 = vmax.xlane.f32.xlu0 %v4368
        %v4370 = vpop.xlane.xlu0 %4369
        %v4371 = vmax.f32 %v1976, %v1978
        %4372 = vmax.xlane.f32.xlu0 %v4371
        %v4373 = vpop.xlane.xlu0 %4372
        %v4374 = vmax.f32 %v1982, %v1984
        %4375 = vmax.xlane.f32.xlu0 %v4374
        %v4376 = vpop.xlane.xlu0 %4375
        %v4377 = vmax.f32 %v1988, %v1990
        %4378 = vmax.xlane.f32.xlu0 %v4377
        %v4379 = vpop.xlane.xlu0 %4378
        %v4380 = vmax.f32 %v1994, %v1996
        %4381 = vmax.xlane.f32.xlu0 %v4380
        %v4382 = vpop.xlane.xlu0 %4381
        %v4383 = vmax.f32 %v2000, %v2002
        %4384 = vmax.xlane.f32.xlu0 %v4383
        %v4385 = vpop.xlane.xlu0 %4384
        %v4386 = vmax.f32 %v2006, %v2008
        %4387 = vmax.xlane.f32.xlu0 %v4386
        %v4388 = vpop.xlane.xlu0 %4387
        %v4389 = vmax.f32 %v2012, %v2014
        %4390 = vmax.xlane.f32.xlu0 %v4389
        %v4391 = vpop.xlane.xlu0 %4390
        %v4392 = vmax.f32 %v2018, %v2020
        %4393 = vmax.xlane.f32.xlu0 %v4392
        %v4394 = vpop.xlane.xlu0 %4393
        %v4395 = vmax.f32 %v2249, %v2251
        %4396 = vmax.xlane.f32.xlu0 %v4395
        %v4397 = vpop.xlane.xlu0 %4396
        %v4398 = vmax.f32 %v2255, %v2257
        %4399 = vmax.xlane.f32.xlu0 %v4398
        %v4400 = vpop.xlane.xlu0 %4399
        %v4401 = vmax.f32 %v2261, %v2263
        %4402 = vmax.xlane.f32.xlu0 %v4401
        %v4403 = vpop.xlane.xlu0 %4402
        %v4404 = vmax.f32 %v2267, %v2269
        %4405 = vmax.xlane.f32.xlu0 %v4404
        %v4406 = vpop.xlane.xlu0 %4405
        %v4407 = vmax.f32 %v2273, %v2275
        %4408 = vmax.xlane.f32.xlu0 %v4407
        %v4409 = vpop.xlane.xlu0 %4408
        %v4410 = vmax.f32 %v2279, %v2281
        %4411 = vmax.xlane.f32.xlu0 %v4410
        %v4412 = vpop.xlane.xlu0 %4411
        %v4413 = vmax.f32 %v2285, %v2287
        %4414 = vmax.xlane.f32.xlu0 %v4413
        %v4415 = vpop.xlane.xlu0 %4414
        %v4416 = vmax.f32 %v2291, %v2293
        %4417 = vmax.xlane.f32.xlu0 %v4416
        %v4418 = vpop.xlane.xlu0 %4417
        %v4419 = vmax.f32 %v2297, %v2299
        %4420 = vmax.xlane.f32.xlu0 %v4419
        %v4421 = vpop.xlane.xlu0 %4420
        %v4422 = vmax.f32 %v2303, %v2305
        %4423 = vmax.xlane.f32.xlu0 %v4422
        %v4424 = vpop.xlane.xlu0 %4423
        %v4425 = vmax.f32 %v2309, %v2311
        %4426 = vmax.xlane.f32.xlu0 %v4425
        %v4427 = vpop.xlane.xlu0 %4426
        %v4428 = vmax.f32 %v2315, %v2317
        %4429 = vmax.xlane.f32.xlu0 %v4428
        %v4430 = vpop.xlane.xlu0 %4429
        %v4431 = vmax.f32 %v2321, %v2323
        %4432 = vmax.xlane.f32.xlu0 %v4431
        %v4433 = vpop.xlane.xlu0 %4432
        %v4434 = vmax.f32 %v2327, %v2329
        %4435 = vmax.xlane.f32.xlu0 %v4434
        %v4436 = vpop.xlane.xlu0 %4435
        %v4437 = vmax.f32 %v2333, %v2335
        %4438 = vmax.xlane.f32.xlu0 %v4437
        %v4439 = vpop.xlane.xlu0 %4438
        %v4440 = vmax.f32 %v2339, %v2341
        %4441 = vmax.xlane.f32.xlu0 %v4440
        %v4442 = vpop.xlane.xlu0 %4441
        %v4443 = vmax.f32 %v2345, %v2347
        %4444 = vmax.xlane.f32.xlu0 %v4443
        %v4445 = vpop.xlane.xlu0 %4444
        %v4446 = vmax.f32 %v2351, %v2353
        %4447 = vmax.xlane.f32.xlu0 %v4446
        %v4448 = vpop.xlane.xlu0 %4447
        %v4449 = vmax.f32 %v2357, %v2359
        %4450 = vmax.xlane.f32.xlu0 %v4449
        %v4451 = vpop.xlane.xlu0 %4450
        %v4452 = vmax.f32 %v2363, %v2365
        %4453 = vmax.xlane.f32.xlu0 %v4452
        %v4454 = vpop.xlane.xlu0 %4453
        %v4455 = vmax.f32 %v2369, %v2371
        %4456 = vmax.xlane.f32.xlu0 %v4455
        %v4457 = vpop.xlane.xlu0 %4456
        %v4458 = vmax.f32 %v2375, %v2377
        %4459 = vmax.xlane.f32.xlu0 %v4458
        %v4460 = vpop.xlane.xlu0 %4459
        %v4461 = vmax.f32 %v2381, %v2383
        %4462 = vmax.xlane.f32.xlu0 %v4461
        %v4463 = vpop.xlane.xlu0 %4462
        %v4464 = vmax.f32 %v2387, %v2389
        %4465 = vmax.xlane.f32.xlu0 %v4464
        %v4466 = vpop.xlane.xlu0 %4465
        %v4467 = vmax.f32 %v2393, %v2395
        %4468 = vmax.xlane.f32.xlu0 %v4467
        %v4469 = vpop.xlane.xlu0 %4468
        %v4470 = vmax.f32 %v2399, %v2401
        %4471 = vmax.xlane.f32.xlu0 %v4470
        %v4472 = vpop.xlane.xlu0 %4471
        %v4473 = vmax.f32 %v2405, %v2407
        %4474 = vmax.xlane.f32.xlu0 %v4473
        %v4475 = vpop.xlane.xlu0 %4474
        %v4476 = vmax.f32 %v2411, %v2413
        %4477 = vmax.xlane.f32.xlu0 %v4476
        %v4478 = vpop.xlane.xlu0 %4477
        %v4479 = vmax.f32 %v2417, %v2419
        %4480 = vmax.xlane.f32.xlu0 %v4479
        %v4481 = vpop.xlane.xlu0 %4480
        %v4482 = vmax.f32 %v2423, %v2425
        %4483 = vmax.xlane.f32.xlu0 %v4482
        %v4484 = vpop.xlane.xlu0 %4483
        %v4485 = vmax.f32 %v2429, %v2431
        %4486 = vmax.xlane.f32.xlu0 %v4485
        %v4487 = vpop.xlane.xlu0 %4486
        %v4488 = vmax.f32 %v2435, %v2437
        %4489 = vmax.xlane.f32.xlu0 %v4488
        %v4490 = vpop.xlane.xlu0 %4489
        %v4491 = vmax.f32 %v2666, %v2668
        %4492 = vmax.xlane.f32.xlu0 %v4491
        %v4493 = vpop.xlane.xlu0 %4492
        %v4494 = vmax.f32 %v2672, %v2674
        %4495 = vmax.xlane.f32.xlu0 %v4494
        %v4496 = vpop.xlane.xlu0 %4495
        %v4497 = vmax.f32 %v2678, %v2680
        %4498 = vmax.xlane.f32.xlu0 %v4497
        %v4499 = vpop.xlane.xlu0 %4498
        %v4500 = vmax.f32 %v2684, %v2686
        %4501 = vmax.xlane.f32.xlu0 %v4500
        %v4502 = vpop.xlane.xlu0 %4501
        %v4503 = vmax.f32 %v2690, %v2692
        %4504 = vmax.xlane.f32.xlu0 %v4503
        %v4505 = vpop.xlane.xlu0 %4504
        %v4506 = vmax.f32 %v2696, %v2698
        %4507 = vmax.xlane.f32.xlu0 %v4506
        %v4508 = vpop.xlane.xlu0 %4507
        %v4509 = vmax.f32 %v2702, %v2704
        %4510 = vmax.xlane.f32.xlu0 %v4509
        %v4511 = vpop.xlane.xlu0 %4510
        %v4512 = vmax.f32 %v2708, %v2710
        %4513 = vmax.xlane.f32.xlu0 %v4512
        %v4514 = vpop.xlane.xlu0 %4513
        %v4515 = vmax.f32 %v2714, %v2716
        %4516 = vmax.xlane.f32.xlu0 %v4515
        %v4517 = vpop.xlane.xlu0 %4516
        %v4518 = vmax.f32 %v2720, %v2722
        %4519 = vmax.xlane.f32.xlu0 %v4518
        %v4520 = vpop.xlane.xlu0 %4519
        %v4521 = vmax.f32 %v2726, %v2728
        %4522 = vmax.xlane.f32.xlu0 %v4521
        %v4523 = vpop.xlane.xlu0 %4522
        %v4524 = vmax.f32 %v2732, %v2734
        %4525 = vmax.xlane.f32.xlu0 %v4524
        %v4526 = vpop.xlane.xlu0 %4525
        %v4527 = vmax.f32 %v2738, %v2740
        %4528 = vmax.xlane.f32.xlu0 %v4527
        %v4529 = vpop.xlane.xlu0 %4528
        %v4530 = vmax.f32 %v2744, %v2746
        %4531 = vmax.xlane.f32.xlu0 %v4530
        %v4532 = vpop.xlane.xlu0 %4531
        %v4533 = vmax.f32 %v2750, %v2752
        %4534 = vmax.xlane.f32.xlu0 %v4533
        %v4535 = vpop.xlane.xlu0 %4534
        %v4536 = vmax.f32 %v2756, %v2758
        %4537 = vmax.xlane.f32.xlu0 %v4536
        %v4538 = vpop.xlane.xlu0 %4537
        %v4539 = vmax.f32 %v2762, %v2764
        %4540 = vmax.xlane.f32.xlu0 %v4539
        %v4541 = vpop.xlane.xlu0 %4540
        %v4542 = vmax.f32 %v2768, %v2770
        %4543 = vmax.xlane.f32.xlu0 %v4542
        %v4544 = vpop.xlane.xlu0 %4543
        %v4545 = vmax.f32 %v2774, %v2776
        %4546 = vmax.xlane.f32.xlu0 %v4545
        %v4547 = vpop.xlane.xlu0 %4546
        %v4548 = vmax.f32 %v2780, %v2782
        %4549 = vmax.xlane.f32.xlu0 %v4548
        %v4550 = vpop.xlane.xlu0 %4549
        %v4551 = vmax.f32 %v2786, %v2788
        %4552 = vmax.xlane.f32.xlu0 %v4551
        %v4553 = vpop.xlane.xlu0 %4552
        %v4554 = vmax.f32 %v2792, %v2794
        %4555 = vmax.xlane.f32.xlu0 %v4554
        %v4556 = vpop.xlane.xlu0 %4555
        %v4557 = vmax.f32 %v2798, %v2800
        %4558 = vmax.xlane.f32.xlu0 %v4557
        %v4559 = vpop.xlane.xlu0 %4558
        %v4560 = vmax.f32 %v2804, %v2806
        %4561 = vmax.xlane.f32.xlu0 %v4560
        %v4562 = vpop.xlane.xlu0 %4561
        %v4563 = vmax.f32 %v2810, %v2812
        %4564 = vmax.xlane.f32.xlu0 %v4563
        %v4565 = vpop.xlane.xlu0 %4564
        %v4566 = vmax.f32 %v2816, %v2818
        %4567 = vmax.xlane.f32.xlu0 %v4566
        %v4568 = vpop.xlane.xlu0 %4567
        %v4569 = vmax.f32 %v2822, %v2824
        %4570 = vmax.xlane.f32.xlu0 %v4569
        %v4571 = vpop.xlane.xlu0 %4570
        %v4572 = vmax.f32 %v2828, %v2830
        %4573 = vmax.xlane.f32.xlu0 %v4572
        %v4574 = vpop.xlane.xlu0 %4573
        %v4575 = vmax.f32 %v2834, %v2836
        %4576 = vmax.xlane.f32.xlu0 %v4575
        %v4577 = vpop.xlane.xlu0 %4576
        %v4578 = vmax.f32 %v2840, %v2842
        %4579 = vmax.xlane.f32.xlu0 %v4578
        %v4580 = vpop.xlane.xlu0 %4579
        %v4581 = vmax.f32 %v2846, %v2848
        %4582 = vmax.xlane.f32.xlu0 %v4581
        %v4583 = vpop.xlane.xlu0 %4582
        %v4584 = vmax.f32 %v2852, %v2854
        %4585 = vmax.xlane.f32.xlu0 %v4584
        %v4586 = vpop.xlane.xlu0 %4585
        %v4587 = vmax.f32 %v3083, %v3085
        %4588 = vmax.xlane.f32.xlu0 %v4587
        %v4589 = vpop.xlane.xlu0 %4588
        %v4590 = vmax.f32 %v3089, %v3091
        %4591 = vmax.xlane.f32.xlu0 %v4590
        %v4592 = vpop.xlane.xlu0 %4591
        %v4593 = vmax.f32 %v3095, %v3097
        %4594 = vmax.xlane.f32.xlu0 %v4593
        %v4595 = vpop.xlane.xlu0 %4594
        %v4596 = vmax.f32 %v3101, %v3103
        %4597 = vmax.xlane.f32.xlu0 %v4596
        %v4598 = vpop.xlane.xlu0 %4597
        %v4599 = vmax.f32 %v3107, %v3109
        %4600 = vmax.xlane.f32.xlu0 %v4599
        %v4601 = vpop.xlane.xlu0 %4600
        %v4602 = vmax.f32 %v3113, %v3115
        %4603 = vmax.xlane.f32.xlu0 %v4602
        %v4604 = vpop.xlane.xlu0 %4603
        %v4605 = vmax.f32 %v3119, %v3121
        %4606 = vmax.xlane.f32.xlu0 %v4605
        %v4607 = vpop.xlane.xlu0 %4606
        %v4608 = vmax.f32 %v3125, %v3127
        %4609 = vmax.xlane.f32.xlu0 %v4608
        %v4610 = vpop.xlane.xlu0 %4609
        %v4611 = vmax.f32 %v3131, %v3133
        %4612 = vmax.xlane.f32.xlu0 %v4611
        %v4613 = vpop.xlane.xlu0 %4612
        %v4614 = vmax.f32 %v3137, %v3139
        %4615 = vmax.xlane.f32.xlu0 %v4614
        %v4616 = vpop.xlane.xlu0 %4615
        %v4617 = vmax.f32 %v3143, %v3145
        %4618 = vmax.xlane.f32.xlu0 %v4617
        %v4619 = vpop.xlane.xlu0 %4618
        %v4620 = vmax.f32 %v3149, %v3151
        %4621 = vmax.xlane.f32.xlu0 %v4620
        %v4622 = vpop.xlane.xlu0 %4621
        %v4623 = vmax.f32 %v3155, %v3157
        %4624 = vmax.xlane.f32.xlu0 %v4623
        %v4625 = vpop.xlane.xlu0 %4624
        %v4626 = vmax.f32 %v3161, %v3163
        %4627 = vmax.xlane.f32.xlu0 %v4626
        %v4628 = vpop.xlane.xlu0 %4627
        %v4629 = vmax.f32 %v3167, %v3169
        %4630 = vmax.xlane.f32.xlu0 %v4629
        %v4631 = vpop.xlane.xlu0 %4630
        %v4632 = vmax.f32 %v3173, %v3175
        %4633 = vmax.xlane.f32.xlu0 %v4632
        %v4634 = vpop.xlane.xlu0 %4633
        %v4635 = vmax.f32 %v3179, %v3181
        %4636 = vmax.xlane.f32.xlu0 %v4635
        %v4637 = vpop.xlane.xlu0 %4636
        %v4638 = vmax.f32 %v3185, %v3187
        %4639 = vmax.xlane.f32.xlu0 %v4638
        %v4640 = vpop.xlane.xlu0 %4639
        %v4641 = vmax.f32 %v3191, %v3193
        %4642 = vmax.xlane.f32.xlu0 %v4641
        %v4643 = vpop.xlane.xlu0 %4642
        %v4644 = vmax.f32 %v3197, %v3199
        %4645 = vmax.xlane.f32.xlu0 %v4644
        %v4646 = vpop.xlane.xlu0 %4645
        %v4647 = vmax.f32 %v3203, %v3205
        %4648 = vmax.xlane.f32.xlu0 %v4647
        %v4649 = vpop.xlane.xlu0 %4648
        %v4650 = vmax.f32 %v3209, %v3211
        %4651 = vmax.xlane.f32.xlu0 %v4650
        %v4652 = vpop.xlane.xlu0 %4651
        %v4653 = vmax.f32 %v3215, %v3217
        %4654 = vmax.xlane.f32.xlu0 %v4653
        %v4655 = vpop.xlane.xlu0 %4654
        %v4656 = vmax.f32 %v3221, %v3223
        %4657 = vmax.xlane.f32.xlu0 %v4656
        %v4658 = vpop.xlane.xlu0 %4657
        %v4659 = vmax.f32 %v3227, %v3229
        %4660 = vmax.xlane.f32.xlu0 %v4659
        %v4661 = vpop.xlane.xlu0 %4660
        %v4662 = vmax.f32 %v3233, %v3235
        %4663 = vmax.xlane.f32.xlu0 %v4662
        %v4664 = vpop.xlane.xlu0 %4663
        %v4665 = vmax.f32 %v3239, %v3241
        %4666 = vmax.xlane.f32.xlu0 %v4665
        %v4667 = vpop.xlane.xlu0 %4666
        %v4668 = vmax.f32 %v3245, %v3247
        %4669 = vmax.xlane.f32.xlu0 %v4668
        %v4670 = vpop.xlane.xlu0 %4669
        %v4671 = vmax.f32 %v3251, %v3253
        %4672 = vmax.xlane.f32.xlu0 %v4671
        %v4673 = vpop.xlane.xlu0 %4672
        %v4674 = vmax.f32 %v3257, %v3259
        %4675 = vmax.xlane.f32.xlu0 %v4674
        %v4676 = vpop.xlane.xlu0 %4675
        %v4677 = vmax.f32 %v3263, %v3265
        %4678 = vmax.xlane.f32.xlu0 %v4677
        %v4679 = vpop.xlane.xlu0 %4678
        %v4680 = vmax.f32 %v3269, %v3271
        %4681 = vmax.xlane.f32.xlu0 %v4680
        %v4682 = vpop.xlane.xlu0 %4681
        %v4683 = vmax.f32 %v3500, %v3502
        %4684 = vmax.xlane.f32.xlu0 %v4683
        %v4685 = vpop.xlane.xlu0 %4684
        %v4686 = vmax.f32 %v3506, %v3508
        %4687 = vmax.xlane.f32.xlu0 %v4686
        %v4688 = vpop.xlane.xlu0 %4687
        %v4689 = vmax.f32 %v3512, %v3514
        %4690 = vmax.xlane.f32.xlu0 %v4689
        %v4691 = vpop.xlane.xlu0 %4690
        %v4692 = vmax.f32 %v3518, %v3520
        %4693 = vmax.xlane.f32.xlu0 %v4692
        %v4694 = vpop.xlane.xlu0 %4693
        %v4695 = vmax.f32 %v3524, %v3526
        %4696 = vmax.xlane.f32.xlu0 %v4695
        %v4697 = vpop.xlane.xlu0 %4696
        %v4698 = vmax.f32 %v3530, %v3532
        %4699 = vmax.xlane.f32.xlu0 %v4698
        %v4700 = vpop.xlane.xlu0 %4699
        %v4701 = vmax.f32 %v3536, %v3538
        %4702 = vmax.xlane.f32.xlu0 %v4701
        %v4703 = vpop.xlane.xlu0 %4702
        %v4704 = vmax.f32 %v3542, %v3544
        %4705 = vmax.xlane.f32.xlu0 %v4704
        %v4706 = vpop.xlane.xlu0 %4705
        %v4707 = vmax.f32 %v3548, %v3550
        %4708 = vmax.xlane.f32.xlu0 %v4707
        %v4709 = vpop.xlane.xlu0 %4708
        %v4710 = vmax.f32 %v3554, %v3556
        %4711 = vmax.xlane.f32.xlu0 %v4710
        %v4712 = vpop.xlane.xlu0 %4711
        %v4713 = vmax.f32 %v3560, %v3562
        %4714 = vmax.xlane.f32.xlu0 %v4713
        %v4715 = vpop.xlane.xlu0 %4714
        %v4716 = vmax.f32 %v3566, %v3568
        %4717 = vmax.xlane.f32.xlu0 %v4716
        %v4718 = vpop.xlane.xlu0 %4717
        %v4719 = vmax.f32 %v3572, %v3574
        %4720 = vmax.xlane.f32.xlu0 %v4719
        %v4721 = vpop.xlane.xlu0 %4720
        %v4722 = vmax.f32 %v3578, %v3580
        %4723 = vmax.xlane.f32.xlu0 %v4722
        %v4724 = vpop.xlane.xlu0 %4723
        %v4725 = vmax.f32 %v3584, %v3586
        %4726 = vmax.xlane.f32.xlu0 %v4725
        %v4727 = vpop.xlane.xlu0 %4726
        %v4728 = vmax.f32 %v3590, %v3592
        %4729 = vmax.xlane.f32.xlu0 %v4728
        %v4730 = vpop.xlane.xlu0 %4729
        %v4731 = vmax.f32 %v3596, %v3598
        %4732 = vmax.xlane.f32.xlu0 %v4731
        %v4733 = vpop.xlane.xlu0 %4732
        %v4734 = vmax.f32 %v3602, %v3604
        %4735 = vmax.xlane.f32.xlu0 %v4734
        %v4736 = vpop.xlane.xlu0 %4735
        %v4737 = vmax.f32 %v3608, %v3610
        %4738 = vmax.xlane.f32.xlu0 %v4737
        %v4739 = vpop.xlane.xlu0 %4738
        %v4740 = vmax.f32 %v3614, %v3616
        %4741 = vmax.xlane.f32.xlu0 %v4740
        %v4742 = vpop.xlane.xlu0 %4741
        %v4743 = vmax.f32 %v3620, %v3622
        %4744 = vmax.xlane.f32.xlu0 %v4743
        %v4745 = vpop.xlane.xlu0 %4744
        %v4746 = vmax.f32 %v3626, %v3628
        %4747 = vmax.xlane.f32.xlu0 %v4746
        %v4748 = vpop.xlane.xlu0 %4747
        %v4749 = vmax.f32 %v3632, %v3634
        %4750 = vmax.xlane.f32.xlu0 %v4749
        %v4751 = vpop.xlane.xlu0 %4750
        %v4752 = vmax.f32 %v3638, %v3640
        %4753 = vmax.xlane.f32.xlu0 %v4752
        %v4754 = vpop.xlane.xlu0 %4753
        %v4755 = vmax.f32 %v3644, %v3646
        %4756 = vmax.xlane.f32.xlu0 %v4755
        %v4757 = vpop.xlane.xlu0 %4756
        %v4758 = vmax.f32 %v3650, %v3652
        %4759 = vmax.xlane.f32.xlu0 %v4758
        %v4760 = vpop.xlane.xlu0 %4759
        %v4761 = vmax.f32 %v3656, %v3658
        %4762 = vmax.xlane.f32.xlu0 %v4761
        %v4763 = vpop.xlane.xlu0 %4762
        %v4764 = vmax.f32 %v3662, %v3664
        %4765 = vmax.xlane.f32.xlu0 %v4764
        %v4766 = vpop.xlane.xlu0 %4765
        %v4767 = vmax.f32 %v3668, %v3670
        %4768 = vmax.xlane.f32.xlu0 %v4767
        %v4769 = vpop.xlane.xlu0 %4768
        %v4770 = vmax.f32 %v3674, %v3676
        %4771 = vmax.xlane.f32.xlu0 %v4770
        %v4772 = vpop.xlane.xlu0 %4771
        %v4773 = vmax.f32 %v3680, %v3682
        %4774 = vmax.xlane.f32.xlu0 %v4773
        %v4775 = vpop.xlane.xlu0 %4774
        %v4776 = vmax.f32 %v3686, %v3688
        %4777 = vmax.xlane.f32.xlu0 %v4776
        %v4778 = vpop.xlane.xlu0 %4777
        %v4779 = vmax.f32 %v3917, %v3919
        %4780 = vmax.xlane.f32.xlu0 %v4779
        %v4781 = vpop.xlane.xlu0 %4780
        %v4782 = vmax.f32 %v3923, %v3925
        %4783 = vmax.xlane.f32.xlu0 %v4782
        %v4784 = vpop.xlane.xlu0 %4783
        %v4785 = vmax.f32 %v3929, %v3931
        %4786 = vmax.xlane.f32.xlu0 %v4785
        %v4787 = vpop.xlane.xlu0 %4786
        %v4788 = vmax.f32 %v3935, %v3937
        %4789 = vmax.xlane.f32.xlu0 %v4788
        %v4790 = vpop.xlane.xlu0 %4789
        %v4791 = vmax.f32 %v3941, %v3943
        %4792 = vmax.xlane.f32.xlu0 %v4791
        %v4793 = vpop.xlane.xlu0 %4792
        %v4794 = vmax.f32 %v3947, %v3949
        %4795 = vmax.xlane.f32.xlu0 %v4794
        %v4796 = vpop.xlane.xlu0 %4795
        %v4797 = vmax.f32 %v3953, %v3955
        %4798 = vmax.xlane.f32.xlu0 %v4797
        %v4799 = vpop.xlane.xlu0 %4798
        %v4800 = vmax.f32 %v3959, %v3961
        %4801 = vmax.xlane.f32.xlu0 %v4800
        %v4802 = vpop.xlane.xlu0 %4801
        %v4803 = vmax.f32 %v3965, %v3967
        %4804 = vmax.xlane.f32.xlu0 %v4803
        %v4805 = vpop.xlane.xlu0 %4804
        %v4806 = vmax.f32 %v3971, %v3973
        %4807 = vmax.xlane.f32.xlu0 %v4806
        %v4808 = vpop.xlane.xlu0 %4807
        %v4809 = vmax.f32 %v3977, %v3979
        %4810 = vmax.xlane.f32.xlu0 %v4809
        %v4811 = vpop.xlane.xlu0 %4810
        %v4812 = vmax.f32 %v3983, %v3985
        %4813 = vmax.xlane.f32.xlu0 %v4812
        %v4814 = vpop.xlane.xlu0 %4813
        %v4815 = vmax.f32 %v3989, %v3991
        %4816 = vmax.xlane.f32.xlu0 %v4815
        %v4817 = vpop.xlane.xlu0 %4816
        %v4818 = vmax.f32 %v3995, %v3997
        %4819 = vmax.xlane.f32.xlu0 %v4818
        %v4820 = vpop.xlane.xlu0 %4819
        %v4821 = vmax.f32 %v4001, %v4003
        %4822 = vmax.xlane.f32.xlu0 %v4821
        %v4823 = vpop.xlane.xlu0 %4822
        %v4824 = vmax.f32 %v4007, %v4009
        %4825 = vmax.xlane.f32.xlu0 %v4824
        %v4826 = vpop.xlane.xlu0 %4825
        %v4827 = vmax.f32 %v4013, %v4015
        %4828 = vmax.xlane.f32.xlu0 %v4827
        %v4829 = vpop.xlane.xlu0 %4828
        %v4830 = vmax.f32 %v4019, %v4021
        %4831 = vmax.xlane.f32.xlu0 %v4830
        %v4832 = vpop.xlane.xlu0 %4831
        %v4833 = vmax.f32 %v4025, %v4027
        %4834 = vmax.xlane.f32.xlu0 %v4833
        %v4835 = vpop.xlane.xlu0 %4834
        %v4836 = vmax.f32 %v4031, %v4033
        %4837 = vmax.xlane.f32.xlu0 %v4836
        %v4838 = vpop.xlane.xlu0 %4837
        %v4839 = vmax.f32 %v4037, %v4039
        %4840 = vmax.xlane.f32.xlu0 %v4839
        %v4841 = vpop.xlane.xlu0 %4840
        %v4842 = vmax.f32 %v4043, %v4045
        %4843 = vmax.xlane.f32.xlu0 %v4842
        %v4844 = vpop.xlane.xlu0 %4843
        %v4845 = vmax.f32 %v4049, %v4051
        %4846 = vmax.xlane.f32.xlu0 %v4845
        %v4847 = vpop.xlane.xlu0 %4846
        %v4848 = vmax.f32 %v4055, %v4057
        %4849 = vmax.xlane.f32.xlu0 %v4848
        %v4850 = vpop.xlane.xlu0 %4849
        %v4851 = vmax.f32 %v4061, %v4063
        %4852 = vmax.xlane.f32.xlu0 %v4851
        %v4853 = vpop.xlane.xlu0 %4852
        %v4854 = vmax.f32 %v4067, %v4069
        %4855 = vmax.xlane.f32.xlu0 %v4854
        %v4856 = vpop.xlane.xlu0 %4855
        %v4857 = vmax.f32 %v4073, %v4075
        %4858 = vmax.xlane.f32.xlu0 %v4857
        %v4859 = vpop.xlane.xlu0 %4858
        %v4860 = vmax.f32 %v4079, %v4081
        %4861 = vmax.xlane.f32.xlu0 %v4860
        %v4862 = vpop.xlane.xlu0 %4861
        %v4863 = vmax.f32 %v4085, %v4087
        %4864 = vmax.xlane.f32.xlu0 %v4863
        %v4865 = vpop.xlane.xlu0 %4864
        %v4866 = vmax.f32 %v4091, %v4093
        %4867 = vmax.xlane.f32.xlu0 %v4866
        %v4868 = vpop.xlane.xlu0 %4867
        %v4869 = vmax.f32 %v4097, %v4099
        %4870 = vmax.xlane.f32.xlu0 %v4869
        %v4871 = vpop.xlane.xlu0 %4870
        %v4872 = vmax.f32 %v4103, %v4105
        %4873 = vmax.xlane.f32.xlu0 %v4872
        %v4874 = vpop.xlane.xlu0 %4873
        %v4875 = vsub.f32 %v998, %v4109
        %v4876 = vsub.f32 %v1000, %v4109
        %v4877 = vsub.f32 %v1004, %v4112
        %v4878 = vsub.f32 %v1006, %v4112
        %v4879 = vsub.f32 %v1010, %v4115
        %v4880 = vsub.f32 %v1012, %v4115
        %v4881 = vsub.f32 %v1016, %v4118
        %v4882 = vsub.f32 %v1018, %v4118
        %v4883 = vsub.f32 %v1022, %v4121
        %v4884 = vsub.f32 %v1024, %v4121
        %v4885 = vsub.f32 %v1028, %v4124
        %v4886 = vsub.f32 %v1030, %v4124
        %v4887 = vsub.f32 %v1034, %v4127
        %v4888 = vsub.f32 %v1036, %v4127
        %v4889 = vsub.f32 %v1040, %v4130
        %v4890 = vsub.f32 %v1042, %v4130
        %v4891 = vsub.f32 %v1046, %v4133
        %v4892 = vsub.f32 %v1048, %v4133
        %v4893 = vsub.f32 %v1052, %v4136
        %v4894 = vsub.f32 %v1054, %v4136
        %v4895 = vsub.f32 %v1058, %v4139
        %v4896 = vsub.f32 %v1060, %v4139
        %v4897 = vsub.f32 %v1064, %v4142
        %v4898 = vsub.f32 %v1066, %v4142
        %v4899 = vsub.f32 %v1070, %v4145
        %v4900 = vsub.f32 %v1072, %v4145
        %v4901 = vsub.f32 %v1076, %v4148
        %v4902 = vsub.f32 %v1078, %v4148
        %v4903 = vsub.f32 %v1082, %v4151
        %v4904 = vsub.f32 %v1084, %v4151
        %v4905 = vsub.f32 %v1088, %v4154
        %v4906 = vsub.f32 %v1090, %v4154
        %v4907 = vsub.f32 %v1094, %v4157
        %v4908 = vsub.f32 %v1096, %v4157
        %v4909 = vsub.f32 %v1100, %v4160
        %v4910 = vsub.f32 %v1102, %v4160
        %v4911 = vsub.f32 %v1106, %v4163
        %v4912 = vsub.f32 %v1108, %v4163
        %v4913 = vsub.f32 %v1112, %v4166
        %v4914 = vsub.f32 %v1114, %v4166
        %v4915 = vsub.f32 %v1118, %v4169
        %v4916 = vsub.f32 %v1120, %v4169
        %v4917 = vsub.f32 %v1124, %v4172
        %v4918 = vsub.f32 %v1126, %v4172
        %v4919 = vsub.f32 %v1130, %v4175
        %v4920 = vsub.f32 %v1132, %v4175
        %v4921 = vsub.f32 %v1136, %v4178
        %v4922 = vsub.f32 %v1138, %v4178
        %v4923 = vsub.f32 %v1142, %v4181
        %v4924 = vsub.f32 %v1144, %v4181
        %v4925 = vsub.f32 %v1148, %v4184
        %v4926 = vsub.f32 %v1150, %v4184
        %v4927 = vsub.f32 %v1154, %v4187
        %v4928 = vsub.f32 %v1156, %v4187
        %v4929 = vsub.f32 %v1160, %v4190
        %v4930 = vsub.f32 %v1162, %v4190
        %v4931 = vsub.f32 %v1166, %v4193
        %v4932 = vsub.f32 %v1168, %v4193
        %v4933 = vsub.f32 %v1172, %v4196
        %v4934 = vsub.f32 %v1174, %v4196
        %v4935 = vsub.f32 %v1178, %v4199
        %v4936 = vsub.f32 %v1180, %v4199
        %v4937 = vsub.f32 %v1184, %v4202
        %v4938 = vsub.f32 %v1186, %v4202
        %v4939 = vsub.f32 %v1415, %v4205
        %v4940 = vsub.f32 %v1417, %v4205
        %v4941 = vsub.f32 %v1421, %v4208
        %v4942 = vsub.f32 %v1423, %v4208
        %v4943 = vsub.f32 %v1427, %v4211
        %v4944 = vsub.f32 %v1429, %v4211
        %v4945 = vsub.f32 %v1433, %v4214
        %v4946 = vsub.f32 %v1435, %v4214
        %v4947 = vsub.f32 %v1439, %v4217
        %v4948 = vsub.f32 %v1441, %v4217
        %v4949 = vsub.f32 %v1445, %v4220
        %v4950 = vsub.f32 %v1447, %v4220
        %v4951 = vsub.f32 %v1451, %v4223
        %v4952 = vsub.f32 %v1453, %v4223
        %v4953 = vsub.f32 %v1457, %v4226
        %v4954 = vsub.f32 %v1459, %v4226
        %v4955 = vsub.f32 %v1463, %v4229
        %v4956 = vsub.f32 %v1465, %v4229
        %v4957 = vsub.f32 %v1469, %v4232
        %v4958 = vsub.f32 %v1471, %v4232
        %v4959 = vsub.f32 %v1475, %v4235
        %v4960 = vsub.f32 %v1477, %v4235
        %v4961 = vsub.f32 %v1481, %v4238
        %v4962 = vsub.f32 %v1483, %v4238
        %v4963 = vsub.f32 %v1487, %v4241
        %v4964 = vsub.f32 %v1489, %v4241
        %v4965 = vsub.f32 %v1493, %v4244
        %v4966 = vsub.f32 %v1495, %v4244
        %v4967 = vsub.f32 %v1499, %v4247
        %v4968 = vsub.f32 %v1501, %v4247
        %v4969 = vsub.f32 %v1505, %v4250
        %v4970 = vsub.f32 %v1507, %v4250
        %v4971 = vsub.f32 %v1511, %v4253
        %v4972 = vsub.f32 %v1513, %v4253
        %v4973 = vsub.f32 %v1517, %v4256
        %v4974 = vsub.f32 %v1519, %v4256
        %v4975 = vsub.f32 %v1523, %v4259
        %v4976 = vsub.f32 %v1525, %v4259
        %v4977 = vsub.f32 %v1529, %v4262
        %v4978 = vsub.f32 %v1531, %v4262
        %v4979 = vsub.f32 %v1535, %v4265
        %v4980 = vsub.f32 %v1537, %v4265
        %v4981 = vsub.f32 %v1541, %v4268
        %v4982 = vsub.f32 %v1543, %v4268
        %v4983 = vsub.f32 %v1547, %v4271
        %v4984 = vsub.f32 %v1549, %v4271
        %v4985 = vsub.f32 %v1553, %v4274
        %v4986 = vsub.f32 %v1555, %v4274
        %v4987 = vsub.f32 %v1559, %v4277
        %v4988 = vsub.f32 %v1561, %v4277
        %v4989 = vsub.f32 %v1565, %v4280
        %v4990 = vsub.f32 %v1567, %v4280
        %v4991 = vsub.f32 %v1571, %v4283
        %v4992 = vsub.f32 %v1573, %v4283
        %v4993 = vsub.f32 %v1577, %v4286
        %v4994 = vsub.f32 %v1579, %v4286
        %v4995 = vsub.f32 %v1583, %v4289
        %v4996 = vsub.f32 %v1585, %v4289
        %v4997 = vsub.f32 %v1589, %v4292
        %v4998 = vsub.f32 %v1591, %v4292
        %v4999 = vsub.f32 %v1595, %v4295
        %v5000 = vsub.f32 %v1597, %v4295
        %v5001 = vsub.f32 %v1601, %v4298
        %v5002 = vsub.f32 %v1603, %v4298
        %v5003 = vsub.f32 %v1832, %v4301
        %v5004 = vsub.f32 %v1834, %v4301
        %v5005 = vsub.f32 %v1838, %v4304
        %v5006 = vsub.f32 %v1840, %v4304
        %v5007 = vsub.f32 %v1844, %v4307
        %v5008 = vsub.f32 %v1846, %v4307
        %v5009 = vsub.f32 %v1850, %v4310
        %v5010 = vsub.f32 %v1852, %v4310
        %v5011 = vsub.f32 %v1856, %v4313
        %v5012 = vsub.f32 %v1858, %v4313
        %v5013 = vsub.f32 %v1862, %v4316
        %v5014 = vsub.f32 %v1864, %v4316
        %v5015 = vsub.f32 %v1868, %v4319
        %v5016 = vsub.f32 %v1870, %v4319
        %v5017 = vsub.f32 %v1874, %v4322
        %v5018 = vsub.f32 %v1876, %v4322
        %v5019 = vsub.f32 %v1880, %v4325
        %v5020 = vsub.f32 %v1882, %v4325
        %v5021 = vsub.f32 %v1886, %v4328
        %v5022 = vsub.f32 %v1888, %v4328
        %v5023 = vsub.f32 %v1892, %v4331
        %v5024 = vsub.f32 %v1894, %v4331
        %v5025 = vsub.f32 %v1898, %v4334
        %v5026 = vsub.f32 %v1900, %v4334
        %v5027 = vsub.f32 %v1904, %v4337
        %v5028 = vsub.f32 %v1906, %v4337
        %v5029 = vsub.f32 %v1910, %v4340
        %v5030 = vsub.f32 %v1912, %v4340
        %v5031 = vsub.f32 %v1916, %v4343
        %v5032 = vsub.f32 %v1918, %v4343
        %v5033 = vsub.f32 %v1922, %v4346
        %v5034 = vsub.f32 %v1924, %v4346
        %v5035 = vsub.f32 %v1928, %v4349
        %v5036 = vsub.f32 %v1930, %v4349
        %v5037 = vsub.f32 %v1934, %v4352
        %v5038 = vsub.f32 %v1936, %v4352
        %v5039 = vsub.f32 %v1940, %v4355
        %v5040 = vsub.f32 %v1942, %v4355
        %v5041 = vsub.f32 %v1946, %v4358
        %v5042 = vsub.f32 %v1948, %v4358
        %v5043 = vsub.f32 %v1952, %v4361
        %v5044 = vsub.f32 %v1954, %v4361
        %v5045 = vsub.f32 %v1958, %v4364
        %v5046 = vsub.f32 %v1960, %v4364
        %v5047 = vsub.f32 %v1964, %v4367
        %v5048 = vsub.f32 %v1966, %v4367
        %v5049 = vsub.f32 %v1970, %v4370
        %v5050 = vsub.f32 %v1972, %v4370
        %v5051 = vsub.f32 %v1976, %v4373
        %v5052 = vsub.f32 %v1978, %v4373
        %v5053 = vsub.f32 %v1982, %v4376
        %v5054 = vsub.f32 %v1984, %v4376
        %v5055 = vsub.f32 %v1988, %v4379
        %v5056 = vsub.f32 %v1990, %v4379
        %v5057 = vsub.f32 %v1994, %v4382
        %v5058 = vsub.f32 %v1996, %v4382
        %v5059 = vsub.f32 %v2000, %v4385
        %v5060 = vsub.f32 %v2002, %v4385
        %v5061 = vsub.f32 %v2006, %v4388
        %v5062 = vsub.f32 %v2008, %v4388
        %v5063 = vsub.f32 %v2012, %v4391
        %v5064 = vsub.f32 %v2014, %v4391
        %v5065 = vsub.f32 %v2018, %v4394
        %v5066 = vsub.f32 %v2020, %v4394
        %v5067 = vsub.f32 %v2249, %v4397
        %v5068 = vsub.f32 %v2251, %v4397
        %v5069 = vsub.f32 %v2255, %v4400
        %v5070 = vsub.f32 %v2257, %v4400
        %v5071 = vsub.f32 %v2261, %v4403
        %v5072 = vsub.f32 %v2263, %v4403
        %v5073 = vsub.f32 %v2267, %v4406
        %v5074 = vsub.f32 %v2269, %v4406
        %v5075 = vsub.f32 %v2273, %v4409
        %v5076 = vsub.f32 %v2275, %v4409
        %v5077 = vsub.f32 %v2279, %v4412
        %v5078 = vsub.f32 %v2281, %v4412
        %v5079 = vsub.f32 %v2285, %v4415
        %v5080 = vsub.f32 %v2287, %v4415
        %v5081 = vsub.f32 %v2291, %v4418
        %v5082 = vsub.f32 %v2293, %v4418
        %v5083 = vsub.f32 %v2297, %v4421
        %v5084 = vsub.f32 %v2299, %v4421
        %v5085 = vsub.f32 %v2303, %v4424
        %v5086 = vsub.f32 %v2305, %v4424
        %v5087 = vsub.f32 %v2309, %v4427
        %v5088 = vsub.f32 %v2311, %v4427
        %v5089 = vsub.f32 %v2315, %v4430
        %v5090 = vsub.f32 %v2317, %v4430
        %v5091 = vsub.f32 %v2321, %v4433
        %v5092 = vsub.f32 %v2323, %v4433
        %v5093 = vsub.f32 %v2327, %v4436
        %v5094 = vsub.f32 %v2329, %v4436
        %v5095 = vsub.f32 %v2333, %v4439
        %v5096 = vsub.f32 %v2335, %v4439
        %v5097 = vsub.f32 %v2339, %v4442
        %v5098 = vsub.f32 %v2341, %v4442
        %v5099 = vsub.f32 %v2345, %v4445
        %v5100 = vsub.f32 %v2347, %v4445
        %v5101 = vsub.f32 %v2351, %v4448
        %v5102 = vsub.f32 %v2353, %v4448
        %v5103 = vsub.f32 %v2357, %v4451
        %v5104 = vsub.f32 %v2359, %v4451
        %v5105 = vsub.f32 %v2363, %v4454
        %v5106 = vsub.f32 %v2365, %v4454
        %v5107 = vsub.f32 %v2369, %v4457
        %v5108 = vsub.f32 %v2371, %v4457
        %v5109 = vsub.f32 %v2375, %v4460
        %v5110 = vsub.f32 %v2377, %v4460
        %v5111 = vsub.f32 %v2381, %v4463
        %v5112 = vsub.f32 %v2383, %v4463
        %v5113 = vsub.f32 %v2387, %v4466
        %v5114 = vsub.f32 %v2389, %v4466
        %v5115 = vsub.f32 %v2393, %v4469
        %v5116 = vsub.f32 %v2395, %v4469
        %v5117 = vsub.f32 %v2399, %v4472
        %v5118 = vsub.f32 %v2401, %v4472
        %v5119 = vsub.f32 %v2405, %v4475
        %v5120 = vsub.f32 %v2407, %v4475
        %v5121 = vsub.f32 %v2411, %v4478
        %v5122 = vsub.f32 %v2413, %v4478
        %v5123 = vsub.f32 %v2417, %v4481
        %v5124 = vsub.f32 %v2419, %v4481
        %v5125 = vsub.f32 %v2423, %v4484
        %v5126 = vsub.f32 %v2425, %v4484
        %v5127 = vsub.f32 %v2429, %v4487
        %v5128 = vsub.f32 %v2431, %v4487
        %v5129 = vsub.f32 %v2435, %v4490
        %v5130 = vsub.f32 %v2437, %v4490
        %v5131 = vsub.f32 %v2666, %v4493
        %v5132 = vsub.f32 %v2668, %v4493
        %v5133 = vsub.f32 %v2672, %v4496
        %v5134 = vsub.f32 %v2674, %v4496
        %v5135 = vsub.f32 %v2678, %v4499
        %v5136 = vsub.f32 %v2680, %v4499
        %v5137 = vsub.f32 %v2684, %v4502
        %v5138 = vsub.f32 %v2686, %v4502
        %v5139 = vsub.f32 %v2690, %v4505
        %v5140 = vsub.f32 %v2692, %v4505
        %v5141 = vsub.f32 %v2696, %v4508
        %v5142 = vsub.f32 %v2698, %v4508
        %v5143 = vsub.f32 %v2702, %v4511
        %v5144 = vsub.f32 %v2704, %v4511
        %v5145 = vsub.f32 %v2708, %v4514
        %v5146 = vsub.f32 %v2710, %v4514
        %v5147 = vsub.f32 %v2714, %v4517
        %v5148 = vsub.f32 %v2716, %v4517
        %v5149 = vsub.f32 %v2720, %v4520
        %v5150 = vsub.f32 %v2722, %v4520
        %v5151 = vsub.f32 %v2726, %v4523
        %v5152 = vsub.f32 %v2728, %v4523
        %v5153 = vsub.f32 %v2732, %v4526
        %v5154 = vsub.f32 %v2734, %v4526
        %v5155 = vsub.f32 %v2738, %v4529
        %v5156 = vsub.f32 %v2740, %v4529
        %v5157 = vsub.f32 %v2744, %v4532
        %v5158 = vsub.f32 %v2746, %v4532
        %v5159 = vsub.f32 %v2750, %v4535
        %v5160 = vsub.f32 %v2752, %v4535
        %v5161 = vsub.f32 %v2756, %v4538
        %v5162 = vsub.f32 %v2758, %v4538
        %v5163 = vsub.f32 %v2762, %v4541
        %v5164 = vsub.f32 %v2764, %v4541
        %v5165 = vsub.f32 %v2768, %v4544
        %v5166 = vsub.f32 %v2770, %v4544
        %v5167 = vsub.f32 %v2774, %v4547
        %v5168 = vsub.f32 %v2776, %v4547
        %v5169 = vsub.f32 %v2780, %v4550
        %v5170 = vsub.f32 %v2782, %v4550
        %v5171 = vsub.f32 %v2786, %v4553
        %v5172 = vsub.f32 %v2788, %v4553
        %v5173 = vsub.f32 %v2792, %v4556
        %v5174 = vsub.f32 %v2794, %v4556
        %v5175 = vsub.f32 %v2798, %v4559
        %v5176 = vsub.f32 %v2800, %v4559
        %v5177 = vsub.f32 %v2804, %v4562
        %v5178 = vsub.f32 %v2806, %v4562
        %v5179 = vsub.f32 %v2810, %v4565
        %v5180 = vsub.f32 %v2812, %v4565
        %v5181 = vsub.f32 %v2816, %v4568
        %v5182 = vsub.f32 %v2818, %v4568
        %v5183 = vsub.f32 %v2822, %v4571
        %v5184 = vsub.f32 %v2824, %v4571
        %v5185 = vsub.f32 %v2828, %v4574
        %v5186 = vsub.f32 %v2830, %v4574
        %v5187 = vsub.f32 %v2834, %v4577
        %v5188 = vsub.f32 %v2836, %v4577
        %v5189 = vsub.f32 %v2840, %v4580
        %v5190 = vsub.f32 %v2842, %v4580
        %v5191 = vsub.f32 %v2846, %v4583
        %v5192 = vsub.f32 %v2848, %v4583
        %v5193 = vsub.f32 %v2852, %v4586
        %v5194 = vsub.f32 %v2854, %v4586
        %v5195 = vsub.f32 %v3083, %v4589
        %v5196 = vsub.f32 %v3085, %v4589
        %v5197 = vsub.f32 %v3089, %v4592
        %v5198 = vsub.f32 %v3091, %v4592
        %v5199 = vsub.f32 %v3095, %v4595
        %v5200 = vsub.f32 %v3097, %v4595
        %v5201 = vsub.f32 %v3101, %v4598
        %v5202 = vsub.f32 %v3103, %v4598
        %v5203 = vsub.f32 %v3107, %v4601
        %v5204 = vsub.f32 %v3109, %v4601
        %v5205 = vsub.f32 %v3113, %v4604
        %v5206 = vsub.f32 %v3115, %v4604
        %v5207 = vsub.f32 %v3119, %v4607
        %v5208 = vsub.f32 %v3121, %v4607
        %v5209 = vsub.f32 %v3125, %v4610
        %v5210 = vsub.f32 %v3127, %v4610
        %v5211 = vsub.f32 %v3131, %v4613
        %v5212 = vsub.f32 %v3133, %v4613
        %v5213 = vsub.f32 %v3137, %v4616
        %v5214 = vsub.f32 %v3139, %v4616
        %v5215 = vsub.f32 %v3143, %v4619
        %v5216 = vsub.f32 %v3145, %v4619
        %v5217 = vsub.f32 %v3149, %v4622
        %v5218 = vsub.f32 %v3151, %v4622
        %v5219 = vsub.f32 %v3155, %v4625
        %v5220 = vsub.f32 %v3157, %v4625
        %v5221 = vsub.f32 %v3161, %v4628
        %v5222 = vsub.f32 %v3163, %v4628
        %v5223 = vsub.f32 %v3167, %v4631
        %v5224 = vsub.f32 %v3169, %v4631
        %v5225 = vsub.f32 %v3173, %v4634
        %v5226 = vsub.f32 %v3175, %v4634
        %v5227 = vsub.f32 %v3179, %v4637
        %v5228 = vsub.f32 %v3181, %v4637
        %v5229 = vsub.f32 %v3185, %v4640
        %v5230 = vsub.f32 %v3187, %v4640
        %v5231 = vsub.f32 %v3191, %v4643
        %v5232 = vsub.f32 %v3193, %v4643
        %v5233 = vsub.f32 %v3197, %v4646
        %v5234 = vsub.f32 %v3199, %v4646
        %v5235 = vsub.f32 %v3203, %v4649
        %v5236 = vsub.f32 %v3205, %v4649
        %v5237 = vsub.f32 %v3209, %v4652
        %v5238 = vsub.f32 %v3211, %v4652
        %v5239 = vsub.f32 %v3215, %v4655
        %v5240 = vsub.f32 %v3217, %v4655
        %v5241 = vsub.f32 %v3221, %v4658
        %v5242 = vsub.f32 %v3223, %v4658
        %v5243 = vsub.f32 %v3227, %v4661
        %v5244 = vsub.f32 %v3229, %v4661
        %v5245 = vsub.f32 %v3233, %v4664
        %v5246 = vsub.f32 %v3235, %v4664
        %v5247 = vsub.f32 %v3239, %v4667
        %v5248 = vsub.f32 %v3241, %v4667
        %v5249 = vsub.f32 %v3245, %v4670
        %v5250 = vsub.f32 %v3247, %v4670
        %v5251 = vsub.f32 %v3251, %v4673
        %v5252 = vsub.f32 %v3253, %v4673
        %v5253 = vsub.f32 %v3257, %v4676
        %v5254 = vsub.f32 %v3259, %v4676
        %v5255 = vsub.f32 %v3263, %v4679
        %v5256 = vsub.f32 %v3265, %v4679
        %v5257 = vsub.f32 %v3269, %v4682
        %v5258 = vsub.f32 %v3271, %v4682
        %v5259 = vsub.f32 %v3500, %v4685
        %v5260 = vsub.f32 %v3502, %v4685
        %v5261 = vsub.f32 %v3506, %v4688
        %v5262 = vsub.f32 %v3508, %v4688
        %v5263 = vsub.f32 %v3512, %v4691
        %v5264 = vsub.f32 %v3514, %v4691
        %v5265 = vsub.f32 %v3518, %v4694
        %v5266 = vsub.f32 %v3520, %v4694
        %v5267 = vsub.f32 %v3524, %v4697
        %v5268 = vsub.f32 %v3526, %v4697
        %v5269 = vsub.f32 %v3530, %v4700
        %v5270 = vsub.f32 %v3532, %v4700
        %v5271 = vsub.f32 %v3536, %v4703
        %v5272 = vsub.f32 %v3538, %v4703
        %v5273 = vsub.f32 %v3542, %v4706
        %v5274 = vsub.f32 %v3544, %v4706
        %v5275 = vsub.f32 %v3548, %v4709
        %v5276 = vsub.f32 %v3550, %v4709
        %v5277 = vsub.f32 %v3554, %v4712
        %v5278 = vsub.f32 %v3556, %v4712
        %v5279 = vsub.f32 %v3560, %v4715
        %v5280 = vsub.f32 %v3562, %v4715
        %v5281 = vsub.f32 %v3566, %v4718
        %v5282 = vsub.f32 %v3568, %v4718
        %v5283 = vsub.f32 %v3572, %v4721
        %v5284 = vsub.f32 %v3574, %v4721
        %v5285 = vsub.f32 %v3578, %v4724
        %v5286 = vsub.f32 %v3580, %v4724
        %v5287 = vsub.f32 %v3584, %v4727
        %v5288 = vsub.f32 %v3586, %v4727
        %v5289 = vsub.f32 %v3590, %v4730
        %v5290 = vsub.f32 %v3592, %v4730
        %v5291 = vsub.f32 %v3596, %v4733
        %v5292 = vsub.f32 %v3598, %v4733
        %v5293 = vsub.f32 %v3602, %v4736
        %v5294 = vsub.f32 %v3604, %v4736
        %v5295 = vsub.f32 %v3608, %v4739
        %v5296 = vsub.f32 %v3610, %v4739
        %v5297 = vsub.f32 %v3614, %v4742
        %v5298 = vsub.f32 %v3616, %v4742
        %v5299 = vsub.f32 %v3620, %v4745
        %v5300 = vsub.f32 %v3622, %v4745
        %v5301 = vsub.f32 %v3626, %v4748
        %v5302 = vsub.f32 %v3628, %v4748
        %v5303 = vsub.f32 %v3632, %v4751
        %v5304 = vsub.f32 %v3634, %v4751
        %v5305 = vsub.f32 %v3638, %v4754
        %v5306 = vsub.f32 %v3640, %v4754
        %v5307 = vsub.f32 %v3644, %v4757
        %v5308 = vsub.f32 %v3646, %v4757
        %v5309 = vsub.f32 %v3650, %v4760
        %v5310 = vsub.f32 %v3652, %v4760
        %v5311 = vsub.f32 %v3656, %v4763
        %v5312 = vsub.f32 %v3658, %v4763
        %v5313 = vsub.f32 %v3662, %v4766
        %v5314 = vsub.f32 %v3664, %v4766
        %v5315 = vsub.f32 %v3668, %v4769
        %v5316 = vsub.f32 %v3670, %v4769
        %v5317 = vsub.f32 %v3674, %v4772
        %v5318 = vsub.f32 %v3676, %v4772
        %v5319 = vsub.f32 %v3680, %v4775
        %v5320 = vsub.f32 %v3682, %v4775
        %v5321 = vsub.f32 %v3686, %v4778
        %v5322 = vsub.f32 %v3688, %v4778
        %v5323 = vsub.f32 %v3917, %v4781
        %v5324 = vsub.f32 %v3919, %v4781
        %v5325 = vsub.f32 %v3923, %v4784
        %v5326 = vsub.f32 %v3925, %v4784
        %v5327 = vsub.f32 %v3929, %v4787
        %v5328 = vsub.f32 %v3931, %v4787
        %v5329 = vsub.f32 %v3935, %v4790
        %v5330 = vsub.f32 %v3937, %v4790
        %v5331 = vsub.f32 %v3941, %v4793
        %v5332 = vsub.f32 %v3943, %v4793
        %v5333 = vsub.f32 %v3947, %v4796
        %v5334 = vsub.f32 %v3949, %v4796
        %v5335 = vsub.f32 %v3953, %v4799
        %v5336 = vsub.f32 %v3955, %v4799
        %v5337 = vsub.f32 %v3959, %v4802
        %v5338 = vsub.f32 %v3961, %v4802
        %v5339 = vsub.f32 %v3965, %v4805
        %v5340 = vsub.f32 %v3967, %v4805
        %v5341 = vsub.f32 %v3971, %v4808
        %v5342 = vsub.f32 %v3973, %v4808
        %v5343 = vsub.f32 %v3977, %v4811
        %v5344 = vsub.f32 %v3979, %v4811
        %v5345 = vsub.f32 %v3983, %v4814
        %v5346 = vsub.f32 %v3985, %v4814
        %v5347 = vsub.f32 %v3989, %v4817
        %v5348 = vsub.f32 %v3991, %v4817
        %v5349 = vsub.f32 %v3995, %v4820
        %v5350 = vsub.f32 %v3997, %v4820
        %v5351 = vsub.f32 %v4001, %v4823
        %v5352 = vsub.f32 %v4003, %v4823
        %v5353 = vsub.f32 %v4007, %v4826
        %v5354 = vsub.f32 %v4009, %v4826
        %v5355 = vsub.f32 %v4013, %v4829
        %v5356 = vsub.f32 %v4015, %v4829
        %v5357 = vsub.f32 %v4019, %v4832
        %v5358 = vsub.f32 %v4021, %v4832
        %v5359 = vsub.f32 %v4025, %v4835
        %v5360 = vsub.f32 %v4027, %v4835
        %v5361 = vsub.f32 %v4031, %v4838
        %v5362 = vsub.f32 %v4033, %v4838
        %v5363 = vsub.f32 %v4037, %v4841
        %v5364 = vsub.f32 %v4039, %v4841
        %v5365 = vsub.f32 %v4043, %v4844
        %v5366 = vsub.f32 %v4045, %v4844
        %v5367 = vsub.f32 %v4049, %v4847
        %v5368 = vsub.f32 %v4051, %v4847
        %v5369 = vsub.f32 %v4055, %v4850
        %v5370 = vsub.f32 %v4057, %v4850
        %v5371 = vsub.f32 %v4061, %v4853
        %v5372 = vsub.f32 %v4063, %v4853
        %v5373 = vsub.f32 %v4067, %v4856
        %v5374 = vsub.f32 %v4069, %v4856
        %v5375 = vsub.f32 %v4073, %v4859
        %v5376 = vsub.f32 %v4075, %v4859
        %v5377 = vsub.f32 %v4079, %v4862
        %v5378 = vsub.f32 %v4081, %v4862
        %v5379 = vsub.f32 %v4085, %v4865
        %v5380 = vsub.f32 %v4087, %v4865
        %v5381 = vsub.f32 %v4091, %v4868
        %v5382 = vsub.f32 %v4093, %v4868
        %v5383 = vsub.f32 %v4097, %v4871
        %v5384 = vsub.f32 %v4099, %v4871
        %v5385 = vsub.f32 %v4103, %v4874
        %v5386 = vsub.f32 %v4105, %v4874
        %v5387 = vpack.c.bf16 %v4877, %v4875
        %v5388 = vpack.c.bf16 %v4878, %v4876
        %v5389 = vpack.c.bf16 %v4881, %v4879
        %v5390 = vpack.c.bf16 %v4882, %v4880
        %v5391 = vpack.c.bf16 %v4885, %v4883
        %v5392 = vpack.c.bf16 %v4886, %v4884
        %v5393 = vpack.c.bf16 %v4889, %v4887
        %v5394 = vpack.c.bf16 %v4890, %v4888
        %v5395 = vpack.c.bf16 %v4893, %v4891
        %v5396 = vpack.c.bf16 %v4894, %v4892
        %v5397 = vpack.c.bf16 %v4897, %v4895
        %v5398 = vpack.c.bf16 %v4898, %v4896
        %v5399 = vpack.c.bf16 %v4901, %v4899
        %v5400 = vpack.c.bf16 %v4902, %v4900
        %v5401 = vpack.c.bf16 %v4905, %v4903
        %v5402 = vpack.c.bf16 %v4906, %v4904
        %v5403 = vpack.c.bf16 %v4909, %v4907
        %v5404 = vpack.c.bf16 %v4910, %v4908
        %v5405 = vpack.c.bf16 %v4913, %v4911
        %v5406 = vpack.c.bf16 %v4914, %v4912
        %v5407 = vpack.c.bf16 %v4917, %v4915
        %v5408 = vpack.c.bf16 %v4918, %v4916
        %v5409 = vpack.c.bf16 %v4921, %v4919
        %v5410 = vpack.c.bf16 %v4922, %v4920
        %v5411 = vpack.c.bf16 %v4925, %v4923
        %v5412 = vpack.c.bf16 %v4926, %v4924
        %v5413 = vpack.c.bf16 %v4929, %v4927
        %v5414 = vpack.c.bf16 %v4930, %v4928
        %v5415 = vpack.c.bf16 %v4933, %v4931
        %v5416 = vpack.c.bf16 %v4934, %v4932
        %v5417 = vpack.c.bf16 %v4937, %v4935
        %v5418 = vpack.c.bf16 %v4938, %v4936
        %v5419 = vpack.c.bf16 %v4941, %v4939
        %v5420 = vpack.c.bf16 %v4942, %v4940
        %v5421 = vpack.c.bf16 %v4945, %v4943
        %v5422 = vpack.c.bf16 %v4946, %v4944
        %v5423 = vpack.c.bf16 %v4949, %v4947
        %v5424 = vpack.c.bf16 %v4950, %v4948
        %v5425 = vpack.c.bf16 %v4953, %v4951
        %v5426 = vpack.c.bf16 %v4954, %v4952
        %v5427 = vpack.c.bf16 %v4957, %v4955
        %v5428 = vpack.c.bf16 %v4958, %v4956
        %v5429 = vpack.c.bf16 %v4961, %v4959
        %v5430 = vpack.c.bf16 %v4962, %v4960
        %v5431 = vpack.c.bf16 %v4965, %v4963
        %v5432 = vpack.c.bf16 %v4966, %v4964
        %v5433 = vpack.c.bf16 %v4969, %v4967
        %v5434 = vpack.c.bf16 %v4970, %v4968
        %v5435 = vpack.c.bf16 %v4973, %v4971
        %v5436 = vpack.c.bf16 %v4974, %v4972
        %v5437 = vpack.c.bf16 %v4977, %v4975
        %v5438 = vpack.c.bf16 %v4978, %v4976
        %v5439 = vpack.c.bf16 %v4981, %v4979
        %v5440 = vpack.c.bf16 %v4982, %v4980
        %v5441 = vpack.c.bf16 %v4985, %v4983
        %v5442 = vpack.c.bf16 %v4986, %v4984
        %v5443 = vpack.c.bf16 %v4989, %v4987
        %v5444 = vpack.c.bf16 %v4990, %v4988
        %v5445 = vpack.c.bf16 %v4993, %v4991
        %v5446 = vpack.c.bf16 %v4994, %v4992
        %v5447 = vpack.c.bf16 %v4997, %v4995
        %v5448 = vpack.c.bf16 %v4998, %v4996
        %v5449 = vpack.c.bf16 %v5001, %v4999
        %v5450 = vpack.c.bf16 %v5002, %v5000
        %v5451 = vpack.c.bf16 %v5005, %v5003
        %v5452 = vpack.c.bf16 %v5006, %v5004
        %v5453 = vpack.c.bf16 %v5009, %v5007
        %v5454 = vpack.c.bf16 %v5010, %v5008
        %v5455 = vpack.c.bf16 %v5013, %v5011
        %v5456 = vpack.c.bf16 %v5014, %v5012
        %v5457 = vpack.c.bf16 %v5017, %v5015
        %v5458 = vpack.c.bf16 %v5018, %v5016
        %v5459 = vpack.c.bf16 %v5021, %v5019
        %v5460 = vpack.c.bf16 %v5022, %v5020
        %v5461 = vpack.c.bf16 %v5025, %v5023
        %v5462 = vpack.c.bf16 %v5026, %v5024
        %v5463 = vpack.c.bf16 %v5029, %v5027
        %v5464 = vpack.c.bf16 %v5030, %v5028
        %v5465 = vpack.c.bf16 %v5033, %v5031
        %v5466 = vpack.c.bf16 %v5034, %v5032
        %v5467 = vpack.c.bf16 %v5037, %v5035
        %v5468 = vpack.c.bf16 %v5038, %v5036
        %v5469 = vpack.c.bf16 %v5041, %v5039
        %v5470 = vpack.c.bf16 %v5042, %v5040
        %v5471 = vpack.c.bf16 %v5045, %v5043
        %v5472 = vpack.c.bf16 %v5046, %v5044
        %v5473 = vpack.c.bf16 %v5049, %v5047
        %v5474 = vpack.c.bf16 %v5050, %v5048
        %v5475 = vpack.c.bf16 %v5053, %v5051
        %v5476 = vpack.c.bf16 %v5054, %v5052
        %v5477 = vpack.c.bf16 %v5057, %v5055
        %v5478 = vpack.c.bf16 %v5058, %v5056
        %v5479 = vpack.c.bf16 %v5061, %v5059
        %v5480 = vpack.c.bf16 %v5062, %v5060
        %v5481 = vpack.c.bf16 %v5065, %v5063
        %v5482 = vpack.c.bf16 %v5066, %v5064
        %v5483 = vpack.c.bf16 %v5069, %v5067
        %v5484 = vpack.c.bf16 %v5070, %v5068
        %v5485 = vpack.c.bf16 %v5073, %v5071
        %v5486 = vpack.c.bf16 %v5074, %v5072
        %v5487 = vpack.c.bf16 %v5077, %v5075
        %v5488 = vpack.c.bf16 %v5078, %v5076
        %v5489 = vpack.c.bf16 %v5081, %v5079
        %v5490 = vpack.c.bf16 %v5082, %v5080
        %v5491 = vpack.c.bf16 %v5085, %v5083
        %v5492 = vpack.c.bf16 %v5086, %v5084
        %v5493 = vpack.c.bf16 %v5089, %v5087
        %v5494 = vpack.c.bf16 %v5090, %v5088
        %v5495 = vpack.c.bf16 %v5093, %v5091
        %v5496 = vpack.c.bf16 %v5094, %v5092
        %v5497 = vpack.c.bf16 %v5097, %v5095
        %v5498 = vpack.c.bf16 %v5098, %v5096
        %v5499 = vpack.c.bf16 %v5101, %v5099
        %v5500 = vpack.c.bf16 %v5102, %v5100
        %v5501 = vpack.c.bf16 %v5105, %v5103
        %v5502 = vpack.c.bf16 %v5106, %v5104
        %v5503 = vpack.c.bf16 %v5109, %v5107
        %v5504 = vpack.c.bf16 %v5110, %v5108
        %v5505 = vpack.c.bf16 %v5113, %v5111
        %v5506 = vpack.c.bf16 %v5114, %v5112
        %v5507 = vpack.c.bf16 %v5117, %v5115
        %v5508 = vpack.c.bf16 %v5118, %v5116
        %v5509 = vpack.c.bf16 %v5121, %v5119
        %v5510 = vpack.c.bf16 %v5122, %v5120
        %v5511 = vpack.c.bf16 %v5125, %v5123
        %v5512 = vpack.c.bf16 %v5126, %v5124
        %v5513 = vpack.c.bf16 %v5129, %v5127
        %v5514 = vpack.c.bf16 %v5130, %v5128
        %v5515 = vpack.c.bf16 %v5133, %v5131
        %v5516 = vpack.c.bf16 %v5134, %v5132
        %v5517 = vpack.c.bf16 %v5137, %v5135
        %v5518 = vpack.c.bf16 %v5138, %v5136
        %v5519 = vpack.c.bf16 %v5141, %v5139
        %v5520 = vpack.c.bf16 %v5142, %v5140
        %v5521 = vpack.c.bf16 %v5145, %v5143
        %v5522 = vpack.c.bf16 %v5146, %v5144
        %v5523 = vpack.c.bf16 %v5149, %v5147
        %v5524 = vpack.c.bf16 %v5150, %v5148
        %v5525 = vpack.c.bf16 %v5153, %v5151
        %v5526 = vpack.c.bf16 %v5154, %v5152
        %v5527 = vpack.c.bf16 %v5157, %v5155
        %v5528 = vpack.c.bf16 %v5158, %v5156
        %v5529 = vpack.c.bf16 %v5161, %v5159
        %v5530 = vpack.c.bf16 %v5162, %v5160
        %v5531 = vpack.c.bf16 %v5165, %v5163
        %v5532 = vpack.c.bf16 %v5166, %v5164
        %v5533 = vpack.c.bf16 %v5169, %v5167
        %v5534 = vpack.c.bf16 %v5170, %v5168
        %v5535 = vpack.c.bf16 %v5173, %v5171
        %v5536 = vpack.c.bf16 %v5174, %v5172
        %v5537 = vpack.c.bf16 %v5177, %v5175
        %v5538 = vpack.c.bf16 %v5178, %v5176
        %v5539 = vpack.c.bf16 %v5181, %v5179
        %v5540 = vpack.c.bf16 %v5182, %v5180
        %v5541 = vpack.c.bf16 %v5185, %v5183
        %v5542 = vpack.c.bf16 %v5186, %v5184
        %v5543 = vpack.c.bf16 %v5189, %v5187
        %v5544 = vpack.c.bf16 %v5190, %v5188
        %v5545 = vpack.c.bf16 %v5193, %v5191
        %v5546 = vpack.c.bf16 %v5194, %v5192
        %v5547 = vpack.c.bf16 %v5197, %v5195
        %v5548 = vpack.c.bf16 %v5198, %v5196
        %v5549 = vpack.c.bf16 %v5201, %v5199
        %v5550 = vpack.c.bf16 %v5202, %v5200
        %v5551 = vpack.c.bf16 %v5205, %v5203
        %v5552 = vpack.c.bf16 %v5206, %v5204
        %v5553 = vpack.c.bf16 %v5209, %v5207
        %v5554 = vpack.c.bf16 %v5210, %v5208
        %v5555 = vpack.c.bf16 %v5213, %v5211
        %v5556 = vpack.c.bf16 %v5214, %v5212
        %v5557 = vpack.c.bf16 %v5217, %v5215
        %v5558 = vpack.c.bf16 %v5218, %v5216
        %v5559 = vpack.c.bf16 %v5221, %v5219
        %v5560 = vpack.c.bf16 %v5222, %v5220
        %v5561 = vpack.c.bf16 %v5225, %v5223
        %v5562 = vpack.c.bf16 %v5226, %v5224
        %v5563 = vpack.c.bf16 %v5229, %v5227
        %v5564 = vpack.c.bf16 %v5230, %v5228
        %v5565 = vpack.c.bf16 %v5233, %v5231
        %v5566 = vpack.c.bf16 %v5234, %v5232
        %v5567 = vpack.c.bf16 %v5237, %v5235
        %v5568 = vpack.c.bf16 %v5238, %v5236
        %v5569 = vpack.c.bf16 %v5241, %v5239
        %v5570 = vpack.c.bf16 %v5242, %v5240
        %v5571 = vpack.c.bf16 %v5245, %v5243
        %v5572 = vpack.c.bf16 %v5246, %v5244
        %v5573 = vpack.c.bf16 %v5249, %v5247
        %v5574 = vpack.c.bf16 %v5250, %v5248
        %v5575 = vpack.c.bf16 %v5253, %v5251
        %v5576 = vpack.c.bf16 %v5254, %v5252
        %v5577 = vpack.c.bf16 %v5257, %v5255
        %v5578 = vpack.c.bf16 %v5258, %v5256
        %v5579 = vpack.c.bf16 %v5261, %v5259
        %v5580 = vpack.c.bf16 %v5262, %v5260
        %v5581 = vpack.c.bf16 %v5265, %v5263
        %v5582 = vpack.c.bf16 %v5266, %v5264
        %v5583 = vpack.c.bf16 %v5269, %v5267
        %v5584 = vpack.c.bf16 %v5270, %v5268
        %v5585 = vpack.c.bf16 %v5273, %v5271
        %v5586 = vpack.c.bf16 %v5274, %v5272
        %v5587 = vpack.c.bf16 %v5277, %v5275
        %v5588 = vpack.c.bf16 %v5278, %v5276
        %v5589 = vpack.c.bf16 %v5281, %v5279
        %v5590 = vpack.c.bf16 %v5282, %v5280
        %v5591 = vpack.c.bf16 %v5285, %v5283
        %v5592 = vpack.c.bf16 %v5286, %v5284
        %v5593 = vpack.c.bf16 %v5289, %v5287
        %v5594 = vpack.c.bf16 %v5290, %v5288
        %v5595 = vpack.c.bf16 %v5293, %v5291
        %v5596 = vpack.c.bf16 %v5294, %v5292
        %v5597 = vpack.c.bf16 %v5297, %v5295
        %v5598 = vpack.c.bf16 %v5298, %v5296
        %v5599 = vpack.c.bf16 %v5301, %v5299
        %v5600 = vpack.c.bf16 %v5302, %v5300
        %v5601 = vpack.c.bf16 %v5305, %v5303
        %v5602 = vpack.c.bf16 %v5306, %v5304
        %v5603 = vpack.c.bf16 %v5309, %v5307
        %v5604 = vpack.c.bf16 %v5310, %v5308
        %v5605 = vpack.c.bf16 %v5313, %v5311
        %v5606 = vpack.c.bf16 %v5314, %v5312
        %v5607 = vpack.c.bf16 %v5317, %v5315
        %v5608 = vpack.c.bf16 %v5318, %v5316
        %v5609 = vpack.c.bf16 %v5321, %v5319
        %v5610 = vpack.c.bf16 %v5322, %v5320
        %v5611 = vpack.c.bf16 %v5325, %v5323
        %v5612 = vpack.c.bf16 %v5326, %v5324
        %v5613 = vpack.c.bf16 %v5329, %v5327
        %v5614 = vpack.c.bf16 %v5330, %v5328
        %v5615 = vpack.c.bf16 %v5333, %v5331
        %v5616 = vpack.c.bf16 %v5334, %v5332
        %v5617 = vpack.c.bf16 %v5337, %v5335
        %v5618 = vpack.c.bf16 %v5338, %v5336
        %v5619 = vpack.c.bf16 %v5341, %v5339
        %v5620 = vpack.c.bf16 %v5342, %v5340
        %v5621 = vpack.c.bf16 %v5345, %v5343
        %v5622 = vpack.c.bf16 %v5346, %v5344
        %v5623 = vpack.c.bf16 %v5349, %v5347
        %v5624 = vpack.c.bf16 %v5350, %v5348
        %v5625 = vpack.c.bf16 %v5353, %v5351
        %v5626 = vpack.c.bf16 %v5354, %v5352
        %v5627 = vpack.c.bf16 %v5357, %v5355
        %v5628 = vpack.c.bf16 %v5358, %v5356
        %v5629 = vpack.c.bf16 %v5361, %v5359
        %v5630 = vpack.c.bf16 %v5362, %v5360
        %v5631 = vpack.c.bf16 %v5365, %v5363
        %v5632 = vpack.c.bf16 %v5366, %v5364
        %v5633 = vpack.c.bf16 %v5369, %v5367
        %v5634 = vpack.c.bf16 %v5370, %v5368
        %v5635 = vpack.c.bf16 %v5373, %v5371
        %v5636 = vpack.c.bf16 %v5374, %v5372
        %v5637 = vpack.c.bf16 %v5377, %v5375
        %v5638 = vpack.c.bf16 %v5378, %v5376
        %v5639 = vpack.c.bf16 %v5381, %v5379
        %v5640 = vpack.c.bf16 %v5382, %v5380
        %v5641 = vpack.c.bf16 %v5385, %v5383
        %v5642 = vpack.c.bf16 %v5386, %v5384
        %v5644 = vmul.bf16 %v5387, 1069105081
        %v5645 = vpow.bf16.pop %v5644
        %v5647 = vmul.bf16 %v5388, 1069105081
        %v5648 = vpow.bf16.pop %v5647
        %v5650 = vmul.bf16 %v5389, 1069105081
        %v5651 = vpow.bf16.pop %v5650
        %v5653 = vmul.bf16 %v5390, 1069105081
        %v5654 = vpow.bf16.pop %v5653
        %v5656 = vmul.bf16 %v5391, 1069105081
        %v5657 = vpow.bf16.pop %v5656
        %v5659 = vmul.bf16 %v5392, 1069105081
        %v5660 = vpow.bf16.pop %v5659
        %v5662 = vmul.bf16 %v5393, 1069105081
        %v5663 = vpow.bf16.pop %v5662
        %v5665 = vmul.bf16 %v5394, 1069105081
        %v5666 = vpow.bf16.pop %v5665
        %v5668 = vmul.bf16 %v5395, 1069105081
        %v5669 = vpow.bf16.pop %v5668
        %v5671 = vmul.bf16 %v5396, 1069105081
        %v5672 = vpow.bf16.pop %v5671
        %v5674 = vmul.bf16 %v5397, 1069105081
        %v5675 = vpow.bf16.pop %v5674
        %v5677 = vmul.bf16 %v5398, 1069105081
        %v5678 = vpow.bf16.pop %v5677
        %v5680 = vmul.bf16 %v5399, 1069105081
        %v5681 = vpow.bf16.pop %v5680
        %v5683 = vmul.bf16 %v5400, 1069105081
        %v5684 = vpow.bf16.pop %v5683
        %v5686 = vmul.bf16 %v5401, 1069105081
        %v5687 = vpow.bf16.pop %v5686
        %v5689 = vmul.bf16 %v5402, 1069105081
        %v5690 = vpow.bf16.pop %v5689
        %v5692 = vmul.bf16 %v5403, 1069105081
        %v5693 = vpow.bf16.pop %v5692
        %v5695 = vmul.bf16 %v5404, 1069105081
        %v5696 = vpow.bf16.pop %v5695
        %v5698 = vmul.bf16 %v5405, 1069105081
        %v5699 = vpow.bf16.pop %v5698
        %v5701 = vmul.bf16 %v5406, 1069105081
        %v5702 = vpow.bf16.pop %v5701
        %v5704 = vmul.bf16 %v5407, 1069105081
        %v5705 = vpow.bf16.pop %v5704
        %v5707 = vmul.bf16 %v5408, 1069105081
        %v5708 = vpow.bf16.pop %v5707
        %v5710 = vmul.bf16 %v5409, 1069105081
        %v5711 = vpow.bf16.pop %v5710
        %v5713 = vmul.bf16 %v5410, 1069105081
        %v5714 = vpow.bf16.pop %v5713
        %v5716 = vmul.bf16 %v5411, 1069105081
        %v5717 = vpow.bf16.pop %v5716
        %v5719 = vmul.bf16 %v5412, 1069105081
        %v5720 = vpow.bf16.pop %v5719
        %v5722 = vmul.bf16 %v5413, 1069105081
        %v5723 = vpow.bf16.pop %v5722
        %v5725 = vmul.bf16 %v5414, 1069105081
        %v5726 = vpow.bf16.pop %v5725
        %v5728 = vmul.bf16 %v5415, 1069105081
        %v5729 = vpow.bf16.pop %v5728
        %v5731 = vmul.bf16 %v5416, 1069105081
        %v5732 = vpow.bf16.pop %v5731
        %v5734 = vmul.bf16 %v5417, 1069105081
        %v5735 = vpow.bf16.pop %v5734
        %v5737 = vmul.bf16 %v5418, 1069105081
        %v5738 = vpow.bf16.pop %v5737
        %v5740 = vmul.bf16 %v5419, 1069105081
        %v5741 = vpow.bf16.pop %v5740
        %v5743 = vmul.bf16 %v5420, 1069105081
        %v5744 = vpow.bf16.pop %v5743
        %v5746 = vmul.bf16 %v5421, 1069105081
        %v5747 = vpow.bf16.pop %v5746
        %v5749 = vmul.bf16 %v5422, 1069105081
        %v5750 = vpow.bf16.pop %v5749
        %v5752 = vmul.bf16 %v5423, 1069105081
        %v5753 = vpow.bf16.pop %v5752
        %v5755 = vmul.bf16 %v5424, 1069105081
        %v5756 = vpow.bf16.pop %v5755
        %v5758 = vmul.bf16 %v5425, 1069105081
        %v5759 = vpow.bf16.pop %v5758
        %v5761 = vmul.bf16 %v5426, 1069105081
        %v5762 = vpow.bf16.pop %v5761
        %v5764 = vmul.bf16 %v5427, 1069105081
        %v5765 = vpow.bf16.pop %v5764
        %v5767 = vmul.bf16 %v5428, 1069105081
        %v5768 = vpow.bf16.pop %v5767
        %v5770 = vmul.bf16 %v5429, 1069105081
        %v5771 = vpow.bf16.pop %v5770
        %v5773 = vmul.bf16 %v5430, 1069105081
        %v5774 = vpow.bf16.pop %v5773
        %v5776 = vmul.bf16 %v5431, 1069105081
        %v5777 = vpow.bf16.pop %v5776
        %v5779 = vmul.bf16 %v5432, 1069105081
        %v5780 = vpow.bf16.pop %v5779
        %v5782 = vmul.bf16 %v5433, 1069105081
        %v5783 = vpow.bf16.pop %v5782
        %v5785 = vmul.bf16 %v5434, 1069105081
        %v5786 = vpow.bf16.pop %v5785
        %v5788 = vmul.bf16 %v5435, 1069105081
        %v5789 = vpow.bf16.pop %v5788
        %v5791 = vmul.bf16 %v5436, 1069105081
        %v5792 = vpow.bf16.pop %v5791
        %v5794 = vmul.bf16 %v5437, 1069105081
        %v5795 = vpow.bf16.pop %v5794
        %v5797 = vmul.bf16 %v5438, 1069105081
        %v5798 = vpow.bf16.pop %v5797
        %v5800 = vmul.bf16 %v5439, 1069105081
        %v5801 = vpow.bf16.pop %v5800
        %v5803 = vmul.bf16 %v5440, 1069105081
        %v5804 = vpow.bf16.pop %v5803
        %v5806 = vmul.bf16 %v5441, 1069105081
        %v5807 = vpow.bf16.pop %v5806
        %v5809 = vmul.bf16 %v5442, 1069105081
        %v5810 = vpow.bf16.pop %v5809
        %v5812 = vmul.bf16 %v5443, 1069105081
        %v5813 = vpow.bf16.pop %v5812
        %v5815 = vmul.bf16 %v5444, 1069105081
        %v5816 = vpow.bf16.pop %v5815
        %v5818 = vmul.bf16 %v5445, 1069105081
        %v5819 = vpow.bf16.pop %v5818
        %v5821 = vmul.bf16 %v5446, 1069105081
        %v5822 = vpow.bf16.pop %v5821
        %v5824 = vmul.bf16 %v5447, 1069105081
        %v5825 = vpow.bf16.pop %v5824
        %v5827 = vmul.bf16 %v5448, 1069105081
        %v5828 = vpow.bf16.pop %v5827
        %v5830 = vmul.bf16 %v5449, 1069105081
        %v5831 = vpow.bf16.pop %v5830
        %v5833 = vmul.bf16 %v5450, 1069105081
        %v5834 = vpow.bf16.pop %v5833
        %v5836 = vmul.bf16 %v5451, 1069105081
        %v5837 = vpow.bf16.pop %v5836
        %v5839 = vmul.bf16 %v5452, 1069105081
        %v5840 = vpow.bf16.pop %v5839
        %v5842 = vmul.bf16 %v5453, 1069105081
        %v5843 = vpow.bf16.pop %v5842
        %v5845 = vmul.bf16 %v5454, 1069105081
        %v5846 = vpow.bf16.pop %v5845
        %v5848 = vmul.bf16 %v5455, 1069105081
        %v5849 = vpow.bf16.pop %v5848
        %v5851 = vmul.bf16 %v5456, 1069105081
        %v5852 = vpow.bf16.pop %v5851
        %v5854 = vmul.bf16 %v5457, 1069105081
        %v5855 = vpow.bf16.pop %v5854
        %v5857 = vmul.bf16 %v5458, 1069105081
        %v5858 = vpow.bf16.pop %v5857
        %v5860 = vmul.bf16 %v5459, 1069105081
        %v5861 = vpow.bf16.pop %v5860
        %v5863 = vmul.bf16 %v5460, 1069105081
        %v5864 = vpow.bf16.pop %v5863
        %v5866 = vmul.bf16 %v5461, 1069105081
        %v5867 = vpow.bf16.pop %v5866
        %v5869 = vmul.bf16 %v5462, 1069105081
        %v5870 = vpow.bf16.pop %v5869
        %v5872 = vmul.bf16 %v5463, 1069105081
        %v5873 = vpow.bf16.pop %v5872
        %v5875 = vmul.bf16 %v5464, 1069105081
        %v5876 = vpow.bf16.pop %v5875
        %v5878 = vmul.bf16 %v5465, 1069105081
        %v5879 = vpow.bf16.pop %v5878
        %v5881 = vmul.bf16 %v5466, 1069105081
        %v5882 = vpow.bf16.pop %v5881
        %v5884 = vmul.bf16 %v5467, 1069105081
        %v5885 = vpow.bf16.pop %v5884
        %v5887 = vmul.bf16 %v5468, 1069105081
        %v5888 = vpow.bf16.pop %v5887
        %v5890 = vmul.bf16 %v5469, 1069105081
        %v5891 = vpow.bf16.pop %v5890
        %v5893 = vmul.bf16 %v5470, 1069105081
        %v5894 = vpow.bf16.pop %v5893
        %v5896 = vmul.bf16 %v5471, 1069105081
        %v5897 = vpow.bf16.pop %v5896
        %v5899 = vmul.bf16 %v5472, 1069105081
        %v5900 = vpow.bf16.pop %v5899
        %v5902 = vmul.bf16 %v5473, 1069105081
        %v5903 = vpow.bf16.pop %v5902
        %v5905 = vmul.bf16 %v5474, 1069105081
        %v5906 = vpow.bf16.pop %v5905
        %v5908 = vmul.bf16 %v5475, 1069105081
        %v5909 = vpow.bf16.pop %v5908
        %v5911 = vmul.bf16 %v5476, 1069105081
        %v5912 = vpow.bf16.pop %v5911
        %v5914 = vmul.bf16 %v5477, 1069105081
        %v5915 = vpow.bf16.pop %v5914
        %v5917 = vmul.bf16 %v5478, 1069105081
        %v5918 = vpow.bf16.pop %v5917
        %v5920 = vmul.bf16 %v5479, 1069105081
        %v5921 = vpow.bf16.pop %v5920
        %v5923 = vmul.bf16 %v5480, 1069105081
        %v5924 = vpow.bf16.pop %v5923
        %v5926 = vmul.bf16 %v5481, 1069105081
        %v5927 = vpow.bf16.pop %v5926
        %v5929 = vmul.bf16 %v5482, 1069105081
        %v5930 = vpow.bf16.pop %v5929
        %v5932 = vmul.bf16 %v5483, 1069105081
        %v5933 = vpow.bf16.pop %v5932
        %v5935 = vmul.bf16 %v5484, 1069105081
        %v5936 = vpow.bf16.pop %v5935
        %v5938 = vmul.bf16 %v5485, 1069105081
        %v5939 = vpow.bf16.pop %v5938
        %v5941 = vmul.bf16 %v5486, 1069105081
        %v5942 = vpow.bf16.pop %v5941
        %v5944 = vmul.bf16 %v5487, 1069105081
        %v5945 = vpow.bf16.pop %v5944
        %v5947 = vmul.bf16 %v5488, 1069105081
        %v5948 = vpow.bf16.pop %v5947
        %v5950 = vmul.bf16 %v5489, 1069105081
        %v5951 = vpow.bf16.pop %v5950
        %v5953 = vmul.bf16 %v5490, 1069105081
        %v5954 = vpow.bf16.pop %v5953
        %v5956 = vmul.bf16 %v5491, 1069105081
        %v5957 = vpow.bf16.pop %v5956
        %v5959 = vmul.bf16 %v5492, 1069105081
        %v5960 = vpow.bf16.pop %v5959
        %v5962 = vmul.bf16 %v5493, 1069105081
        %v5963 = vpow.bf16.pop %v5962
        %v5965 = vmul.bf16 %v5494, 1069105081
        %v5966 = vpow.bf16.pop %v5965
        %v5968 = vmul.bf16 %v5495, 1069105081
        %v5969 = vpow.bf16.pop %v5968
        %v5971 = vmul.bf16 %v5496, 1069105081
        %v5972 = vpow.bf16.pop %v5971
        %v5974 = vmul.bf16 %v5497, 1069105081
        %v5975 = vpow.bf16.pop %v5974
        %v5977 = vmul.bf16 %v5498, 1069105081
        %v5978 = vpow.bf16.pop %v5977
        %v5980 = vmul.bf16 %v5499, 1069105081
        %v5981 = vpow.bf16.pop %v5980
        %v5983 = vmul.bf16 %v5500, 1069105081
        %v5984 = vpow.bf16.pop %v5983
        %v5986 = vmul.bf16 %v5501, 1069105081
        %v5987 = vpow.bf16.pop %v5986
        %v5989 = vmul.bf16 %v5502, 1069105081
        %v5990 = vpow.bf16.pop %v5989
        %v5992 = vmul.bf16 %v5503, 1069105081
        %v5993 = vpow.bf16.pop %v5992
        %v5995 = vmul.bf16 %v5504, 1069105081
        %v5996 = vpow.bf16.pop %v5995
        %v5998 = vmul.bf16 %v5505, 1069105081
        %v5999 = vpow.bf16.pop %v5998
        %v6001 = vmul.bf16 %v5506, 1069105081
        %v6002 = vpow.bf16.pop %v6001
        %v6004 = vmul.bf16 %v5507, 1069105081
        %v6005 = vpow.bf16.pop %v6004
        %v6007 = vmul.bf16 %v5508, 1069105081
        %v6008 = vpow.bf16.pop %v6007
        %v6010 = vmul.bf16 %v5509, 1069105081
        %v6011 = vpow.bf16.pop %v6010
        %v6013 = vmul.bf16 %v5510, 1069105081
        %v6014 = vpow.bf16.pop %v6013
        %v6016 = vmul.bf16 %v5511, 1069105081
        %v6017 = vpow.bf16.pop %v6016
        %v6019 = vmul.bf16 %v5512, 1069105081
        %v6020 = vpow.bf16.pop %v6019
        %v6022 = vmul.bf16 %v5513, 1069105081
        %v6023 = vpow.bf16.pop %v6022
        %v6025 = vmul.bf16 %v5514, 1069105081
        %v6026 = vpow.bf16.pop %v6025
        %v6028 = vmul.bf16 %v5515, 1069105081
        %v6029 = vpow.bf16.pop %v6028
        %v6031 = vmul.bf16 %v5516, 1069105081
        %v6032 = vpow.bf16.pop %v6031
        %v6034 = vmul.bf16 %v5517, 1069105081
        %v6035 = vpow.bf16.pop %v6034
        %v6037 = vmul.bf16 %v5518, 1069105081
        %v6038 = vpow.bf16.pop %v6037
        %v6040 = vmul.bf16 %v5519, 1069105081
        %v6041 = vpow.bf16.pop %v6040
        %v6043 = vmul.bf16 %v5520, 1069105081
        %v6044 = vpow.bf16.pop %v6043
        %v6046 = vmul.bf16 %v5521, 1069105081
        %v6047 = vpow.bf16.pop %v6046
        %v6049 = vmul.bf16 %v5522, 1069105081
        %v6050 = vpow.bf16.pop %v6049
        %v6052 = vmul.bf16 %v5523, 1069105081
        %v6053 = vpow.bf16.pop %v6052
        %v6055 = vmul.bf16 %v5524, 1069105081
        %v6056 = vpow.bf16.pop %v6055
        %v6058 = vmul.bf16 %v5525, 1069105081
        %v6059 = vpow.bf16.pop %v6058
        %v6061 = vmul.bf16 %v5526, 1069105081
        %v6062 = vpow.bf16.pop %v6061
        %v6064 = vmul.bf16 %v5527, 1069105081
        %v6065 = vpow.bf16.pop %v6064
        %v6067 = vmul.bf16 %v5528, 1069105081
        %v6068 = vpow.bf16.pop %v6067
        %v6070 = vmul.bf16 %v5529, 1069105081
        %v6071 = vpow.bf16.pop %v6070
        %v6073 = vmul.bf16 %v5530, 1069105081
        %v6074 = vpow.bf16.pop %v6073
        %v6076 = vmul.bf16 %v5531, 1069105081
        %v6077 = vpow.bf16.pop %v6076
        %v6079 = vmul.bf16 %v5532, 1069105081
        %v6080 = vpow.bf16.pop %v6079
        %v6082 = vmul.bf16 %v5533, 1069105081
        %v6083 = vpow.bf16.pop %v6082
        %v6085 = vmul.bf16 %v5534, 1069105081
        %v6086 = vpow.bf16.pop %v6085
        %v6088 = vmul.bf16 %v5535, 1069105081
        %v6089 = vpow.bf16.pop %v6088
        %v6091 = vmul.bf16 %v5536, 1069105081
        %v6092 = vpow.bf16.pop %v6091
        %v6094 = vmul.bf16 %v5537, 1069105081
        %v6095 = vpow.bf16.pop %v6094
        %v6097 = vmul.bf16 %v5538, 1069105081
        %v6098 = vpow.bf16.pop %v6097
        %v6100 = vmul.bf16 %v5539, 1069105081
        %v6101 = vpow.bf16.pop %v6100
        %v6103 = vmul.bf16 %v5540, 1069105081
        %v6104 = vpow.bf16.pop %v6103
        %v6106 = vmul.bf16 %v5541, 1069105081
        %v6107 = vpow.bf16.pop %v6106
        %v6109 = vmul.bf16 %v5542, 1069105081
        %v6110 = vpow.bf16.pop %v6109
        %v6112 = vmul.bf16 %v5543, 1069105081
        %v6113 = vpow.bf16.pop %v6112
        %v6115 = vmul.bf16 %v5544, 1069105081
        %v6116 = vpow.bf16.pop %v6115
        %v6118 = vmul.bf16 %v5545, 1069105081
        %v6119 = vpow.bf16.pop %v6118
        %v6121 = vmul.bf16 %v5546, 1069105081
        %v6122 = vpow.bf16.pop %v6121
        %v6124 = vmul.bf16 %v5547, 1069105081
        %v6125 = vpow.bf16.pop %v6124
        %v6127 = vmul.bf16 %v5548, 1069105081
        %v6128 = vpow.bf16.pop %v6127
        %v6130 = vmul.bf16 %v5549, 1069105081
        %v6131 = vpow.bf16.pop %v6130
        %v6133 = vmul.bf16 %v5550, 1069105081
        %v6134 = vpow.bf16.pop %v6133
        %v6136 = vmul.bf16 %v5551, 1069105081
        %v6137 = vpow.bf16.pop %v6136
        %v6139 = vmul.bf16 %v5552, 1069105081
        %v6140 = vpow.bf16.pop %v6139
        %v6142 = vmul.bf16 %v5553, 1069105081
        %v6143 = vpow.bf16.pop %v6142
        %v6145 = vmul.bf16 %v5554, 1069105081
        %v6146 = vpow.bf16.pop %v6145
        %v6148 = vmul.bf16 %v5555, 1069105081
        %v6149 = vpow.bf16.pop %v6148
        %v6151 = vmul.bf16 %v5556, 1069105081
        %v6152 = vpow.bf16.pop %v6151
        %v6154 = vmul.bf16 %v5557, 1069105081
        %v6155 = vpow.bf16.pop %v6154
        %v6157 = vmul.bf16 %v5558, 1069105081
        %v6158 = vpow.bf16.pop %v6157
        %v6160 = vmul.bf16 %v5559, 1069105081
        %v6161 = vpow.bf16.pop %v6160
        %v6163 = vmul.bf16 %v5560, 1069105081
        %v6164 = vpow.bf16.pop %v6163
        %v6166 = vmul.bf16 %v5561, 1069105081
        %v6167 = vpow.bf16.pop %v6166
        %v6169 = vmul.bf16 %v5562, 1069105081
        %v6170 = vpow.bf16.pop %v6169
        %v6172 = vmul.bf16 %v5563, 1069105081
        %v6173 = vpow.bf16.pop %v6172
        %v6175 = vmul.bf16 %v5564, 1069105081
        %v6176 = vpow.bf16.pop %v6175
        %v6178 = vmul.bf16 %v5565, 1069105081
        %v6179 = vpow.bf16.pop %v6178
        %v6181 = vmul.bf16 %v5566, 1069105081
        %v6182 = vpow.bf16.pop %v6181
        %v6184 = vmul.bf16 %v5567, 1069105081
        %v6185 = vpow.bf16.pop %v6184
        %v6187 = vmul.bf16 %v5568, 1069105081
        %v6188 = vpow.bf16.pop %v6187
        %v6190 = vmul.bf16 %v5569, 1069105081
        %v6191 = vpow.bf16.pop %v6190
        %v6193 = vmul.bf16 %v5570, 1069105081
        %v6194 = vpow.bf16.pop %v6193
        %v6196 = vmul.bf16 %v5571, 1069105081
        %v6197 = vpow.bf16.pop %v6196
        %v6199 = vmul.bf16 %v5572, 1069105081
        %v6200 = vpow.bf16.pop %v6199
        %v6202 = vmul.bf16 %v5573, 1069105081
        %v6203 = vpow.bf16.pop %v6202
        %v6205 = vmul.bf16 %v5574, 1069105081
        %v6206 = vpow.bf16.pop %v6205
        %v6208 = vmul.bf16 %v5575, 1069105081
        %v6209 = vpow.bf16.pop %v6208
        %v6211 = vmul.bf16 %v5576, 1069105081
        %v6212 = vpow.bf16.pop %v6211
        %v6214 = vmul.bf16 %v5577, 1069105081
        %v6215 = vpow.bf16.pop %v6214
        %v6217 = vmul.bf16 %v5578, 1069105081
        %v6218 = vpow.bf16.pop %v6217
        %v6220 = vmul.bf16 %v5579, 1069105081
        %v6221 = vpow.bf16.pop %v6220
        %v6223 = vmul.bf16 %v5580, 1069105081
        %v6224 = vpow.bf16.pop %v6223
        %v6226 = vmul.bf16 %v5581, 1069105081
        %v6227 = vpow.bf16.pop %v6226
        %v6229 = vmul.bf16 %v5582, 1069105081
        %v6230 = vpow.bf16.pop %v6229
        %v6232 = vmul.bf16 %v5583, 1069105081
        %v6233 = vpow.bf16.pop %v6232
        %v6235 = vmul.bf16 %v5584, 1069105081
        %v6236 = vpow.bf16.pop %v6235
        %v6238 = vmul.bf16 %v5585, 1069105081
        %v6239 = vpow.bf16.pop %v6238
        %v6241 = vmul.bf16 %v5586, 1069105081
        %v6242 = vpow.bf16.pop %v6241
        %v6244 = vmul.bf16 %v5587, 1069105081
        %v6245 = vpow.bf16.pop %v6244
        %v6247 = vmul.bf16 %v5588, 1069105081
        %v6248 = vpow.bf16.pop %v6247
        %v6250 = vmul.bf16 %v5589, 1069105081
        %v6251 = vpow.bf16.pop %v6250
        %v6253 = vmul.bf16 %v5590, 1069105081
        %v6254 = vpow.bf16.pop %v6253
        %v6256 = vmul.bf16 %v5591, 1069105081
        %v6257 = vpow.bf16.pop %v6256
        %v6259 = vmul.bf16 %v5592, 1069105081
        %v6260 = vpow.bf16.pop %v6259
        %v6262 = vmul.bf16 %v5593, 1069105081
        %v6263 = vpow.bf16.pop %v6262
        %v6265 = vmul.bf16 %v5594, 1069105081
        %v6266 = vpow.bf16.pop %v6265
        %v6268 = vmul.bf16 %v5595, 1069105081
        %v6269 = vpow.bf16.pop %v6268
        %v6271 = vmul.bf16 %v5596, 1069105081
        %v6272 = vpow.bf16.pop %v6271
        %v6274 = vmul.bf16 %v5597, 1069105081
        %v6275 = vpow.bf16.pop %v6274
        %v6277 = vmul.bf16 %v5598, 1069105081
        %v6278 = vpow.bf16.pop %v6277
        %v6280 = vmul.bf16 %v5599, 1069105081
        %v6281 = vpow.bf16.pop %v6280
        %v6283 = vmul.bf16 %v5600, 1069105081
        %v6284 = vpow.bf16.pop %v6283
        %v6286 = vmul.bf16 %v5601, 1069105081
        %v6287 = vpow.bf16.pop %v6286
        %v6289 = vmul.bf16 %v5602, 1069105081
        %v6290 = vpow.bf16.pop %v6289
        %v6292 = vmul.bf16 %v5603, 1069105081
        %v6293 = vpow.bf16.pop %v6292
        %v6295 = vmul.bf16 %v5604, 1069105081
        %v6296 = vpow.bf16.pop %v6295
        %v6298 = vmul.bf16 %v5605, 1069105081
        %v6299 = vpow.bf16.pop %v6298
        %v6301 = vmul.bf16 %v5606, 1069105081
        %v6302 = vpow.bf16.pop %v6301
        %v6304 = vmul.bf16 %v5607, 1069105081
        %v6305 = vpow.bf16.pop %v6304
        %v6307 = vmul.bf16 %v5608, 1069105081
        %v6308 = vpow.bf16.pop %v6307
        %v6310 = vmul.bf16 %v5609, 1069105081
        %v6311 = vpow.bf16.pop %v6310
        %v6313 = vmul.bf16 %v5610, 1069105081
        %v6314 = vpow.bf16.pop %v6313
        %v6316 = vmul.bf16 %v5611, 1069105081
        %v6317 = vpow.bf16.pop %v6316
        %v6319 = vmul.bf16 %v5612, 1069105081
        %v6320 = vpow.bf16.pop %v6319
        %v6322 = vmul.bf16 %v5613, 1069105081
        %v6323 = vpow.bf16.pop %v6322
        %v6325 = vmul.bf16 %v5614, 1069105081
        %v6326 = vpow.bf16.pop %v6325
        %v6328 = vmul.bf16 %v5615, 1069105081
        %v6329 = vpow.bf16.pop %v6328
        %v6331 = vmul.bf16 %v5616, 1069105081
        %v6332 = vpow.bf16.pop %v6331
        %v6334 = vmul.bf16 %v5617, 1069105081
        %v6335 = vpow.bf16.pop %v6334
        %v6337 = vmul.bf16 %v5618, 1069105081
        %v6338 = vpow.bf16.pop %v6337
        %v6340 = vmul.bf16 %v5619, 1069105081
        %v6341 = vpow.bf16.pop %v6340
        %v6343 = vmul.bf16 %v5620, 1069105081
        %v6344 = vpow.bf16.pop %v6343
        %v6346 = vmul.bf16 %v5621, 1069105081
        %v6347 = vpow.bf16.pop %v6346
        %v6349 = vmul.bf16 %v5622, 1069105081
        %v6350 = vpow.bf16.pop %v6349
        %v6352 = vmul.bf16 %v5623, 1069105081
        %v6353 = vpow.bf16.pop %v6352
        %v6355 = vmul.bf16 %v5624, 1069105081
        %v6356 = vpow.bf16.pop %v6355
        %v6358 = vmul.bf16 %v5625, 1069105081
        %v6359 = vpow.bf16.pop %v6358
        %v6361 = vmul.bf16 %v5626, 1069105081
        %v6362 = vpow.bf16.pop %v6361
        %v6364 = vmul.bf16 %v5627, 1069105081
        %v6365 = vpow.bf16.pop %v6364
        %v6367 = vmul.bf16 %v5628, 1069105081
        %v6368 = vpow.bf16.pop %v6367
        %v6370 = vmul.bf16 %v5629, 1069105081
        %v6371 = vpow.bf16.pop %v6370
        %v6373 = vmul.bf16 %v5630, 1069105081
        %v6374 = vpow.bf16.pop %v6373
        %v6376 = vmul.bf16 %v5631, 1069105081
        %v6377 = vpow.bf16.pop %v6376
        %v6379 = vmul.bf16 %v5632, 1069105081
        %v6380 = vpow.bf16.pop %v6379
        %v6382 = vmul.bf16 %v5633, 1069105081
        %v6383 = vpow.bf16.pop %v6382
        %v6385 = vmul.bf16 %v5634, 1069105081
        %v6386 = vpow.bf16.pop %v6385
        %v6388 = vmul.bf16 %v5635, 1069105081
        %v6389 = vpow.bf16.pop %v6388
        %v6391 = vmul.bf16 %v5636, 1069105081
        %v6392 = vpow.bf16.pop %v6391
        %v6394 = vmul.bf16 %v5637, 1069105081
        %v6395 = vpow.bf16.pop %v6394
        %v6397 = vmul.bf16 %v5638, 1069105081
        %v6398 = vpow.bf16.pop %v6397
        %v6400 = vmul.bf16 %v5639, 1069105081
        %v6401 = vpow.bf16.pop %v6400
        %v6403 = vmul.bf16 %v5640, 1069105081
        %v6404 = vpow.bf16.pop %v6403
        %v6406 = vmul.bf16 %v5641, 1069105081
        %v6407 = vpow.bf16.pop %v6406
        %v6409 = vmul.bf16 %v5642, 1069105081
        %v6410 = vpow.bf16.pop %v6409
        %v6411 = vunpack.c.l.bf16 %v5645
        %v6412 = vunpack.c.l.bf16 %v5648
        %v6413 = vunpack.c.h.bf16 %v5645
        %v6414 = vunpack.c.h.bf16 %v5648
        %v6415 = vunpack.c.l.bf16 %v5651
        %v6416 = vunpack.c.l.bf16 %v5654
        %v6417 = vunpack.c.h.bf16 %v5651
        %v6418 = vunpack.c.h.bf16 %v5654
        %v6419 = vunpack.c.l.bf16 %v5657
        %v6420 = vunpack.c.l.bf16 %v5660
        %v6421 = vunpack.c.h.bf16 %v5657
        %v6422 = vunpack.c.h.bf16 %v5660
        %v6423 = vunpack.c.l.bf16 %v5663
        %v6424 = vunpack.c.l.bf16 %v5666
        %v6425 = vunpack.c.h.bf16 %v5663
        %v6426 = vunpack.c.h.bf16 %v5666
        %v6427 = vunpack.c.l.bf16 %v5669
        %v6428 = vunpack.c.l.bf16 %v5672
        %v6429 = vunpack.c.h.bf16 %v5669
        %v6430 = vunpack.c.h.bf16 %v5672
        %v6431 = vunpack.c.l.bf16 %v5675
        %v6432 = vunpack.c.l.bf16 %v5678
        %v6433 = vunpack.c.h.bf16 %v5675
        %v6434 = vunpack.c.h.bf16 %v5678
        %v6435 = vunpack.c.l.bf16 %v5681
        %v6436 = vunpack.c.l.bf16 %v5684
        %v6437 = vunpack.c.h.bf16 %v5681
        %v6438 = vunpack.c.h.bf16 %v5684
        %v6439 = vunpack.c.l.bf16 %v5687
        %v6440 = vunpack.c.l.bf16 %v5690
        %v6441 = vunpack.c.h.bf16 %v5687
        %v6442 = vunpack.c.h.bf16 %v5690
        %v6443 = vunpack.c.l.bf16 %v5693
        %v6444 = vunpack.c.l.bf16 %v5696
        %v6445 = vunpack.c.h.bf16 %v5693
        %v6446 = vunpack.c.h.bf16 %v5696
        %v6447 = vunpack.c.l.bf16 %v5699
        %v6448 = vunpack.c.l.bf16 %v5702
        %v6449 = vunpack.c.h.bf16 %v5699
        %v6450 = vunpack.c.h.bf16 %v5702
        %v6451 = vunpack.c.l.bf16 %v5705
        %v6452 = vunpack.c.l.bf16 %v5708
        %v6453 = vunpack.c.h.bf16 %v5705
        %v6454 = vunpack.c.h.bf16 %v5708
        %v6455 = vunpack.c.l.bf16 %v5711
        %v6456 = vunpack.c.l.bf16 %v5714
        %v6457 = vunpack.c.h.bf16 %v5711
        %v6458 = vunpack.c.h.bf16 %v5714
        %v6459 = vunpack.c.l.bf16 %v5717
        %v6460 = vunpack.c.l.bf16 %v5720
        %v6461 = vunpack.c.h.bf16 %v5717
        %v6462 = vunpack.c.h.bf16 %v5720
        %v6463 = vunpack.c.l.bf16 %v5723
        %v6464 = vunpack.c.l.bf16 %v5726
        %v6465 = vunpack.c.h.bf16 %v5723
        %v6466 = vunpack.c.h.bf16 %v5726
        %v6467 = vunpack.c.l.bf16 %v5729
        %v6468 = vunpack.c.l.bf16 %v5732
        %v6469 = vunpack.c.h.bf16 %v5729
        %v6470 = vunpack.c.h.bf16 %v5732
        %v6471 = vunpack.c.l.bf16 %v5735
        %v6472 = vunpack.c.l.bf16 %v5738
        %v6473 = vunpack.c.h.bf16 %v5735
        %v6474 = vunpack.c.h.bf16 %v5738
        %v6475 = vunpack.c.l.bf16 %v5741
        %v6476 = vunpack.c.l.bf16 %v5744
        %v6477 = vunpack.c.h.bf16 %v5741
        %v6478 = vunpack.c.h.bf16 %v5744
        %v6479 = vunpack.c.l.bf16 %v5747
        %v6480 = vunpack.c.l.bf16 %v5750
        %v6481 = vunpack.c.h.bf16 %v5747
        %v6482 = vunpack.c.h.bf16 %v5750
        %v6483 = vunpack.c.l.bf16 %v5753
        %v6484 = vunpack.c.l.bf16 %v5756
        %v6485 = vunpack.c.h.bf16 %v5753
        %v6486 = vunpack.c.h.bf16 %v5756
        %v6487 = vunpack.c.l.bf16 %v5759
        %v6488 = vunpack.c.l.bf16 %v5762
        %v6489 = vunpack.c.h.bf16 %v5759
        %v6490 = vunpack.c.h.bf16 %v5762
        %v6491 = vunpack.c.l.bf16 %v5765
        %v6492 = vunpack.c.l.bf16 %v5768
        %v6493 = vunpack.c.h.bf16 %v5765
        %v6494 = vunpack.c.h.bf16 %v5768
        %v6495 = vunpack.c.l.bf16 %v5771
        %v6496 = vunpack.c.l.bf16 %v5774
        %v6497 = vunpack.c.h.bf16 %v5771
        %v6498 = vunpack.c.h.bf16 %v5774
        %v6499 = vunpack.c.l.bf16 %v5777
        %v6500 = vunpack.c.l.bf16 %v5780
        %v6501 = vunpack.c.h.bf16 %v5777
        %v6502 = vunpack.c.h.bf16 %v5780
        %v6503 = vunpack.c.l.bf16 %v5783
        %v6504 = vunpack.c.l.bf16 %v5786
        %v6505 = vunpack.c.h.bf16 %v5783
        %v6506 = vunpack.c.h.bf16 %v5786
        %v6507 = vunpack.c.l.bf16 %v5789
        %v6508 = vunpack.c.l.bf16 %v5792
        %v6509 = vunpack.c.h.bf16 %v5789
        %v6510 = vunpack.c.h.bf16 %v5792
        %v6511 = vunpack.c.l.bf16 %v5795
        %v6512 = vunpack.c.l.bf16 %v5798
        %v6513 = vunpack.c.h.bf16 %v5795
        %v6514 = vunpack.c.h.bf16 %v5798
        %v6515 = vunpack.c.l.bf16 %v5801
        %v6516 = vunpack.c.l.bf16 %v5804
        %v6517 = vunpack.c.h.bf16 %v5801
        %v6518 = vunpack.c.h.bf16 %v5804
        %v6519 = vunpack.c.l.bf16 %v5807
        %v6520 = vunpack.c.l.bf16 %v5810
        %v6521 = vunpack.c.h.bf16 %v5807
        %v6522 = vunpack.c.h.bf16 %v5810
        %v6523 = vunpack.c.l.bf16 %v5813
        %v6524 = vunpack.c.l.bf16 %v5816
        %v6525 = vunpack.c.h.bf16 %v5813
        %v6526 = vunpack.c.h.bf16 %v5816
        %v6527 = vunpack.c.l.bf16 %v5819
        %v6528 = vunpack.c.l.bf16 %v5822
        %v6529 = vunpack.c.h.bf16 %v5819
        %v6530 = vunpack.c.h.bf16 %v5822
        %v6531 = vunpack.c.l.bf16 %v5825
        %v6532 = vunpack.c.l.bf16 %v5828
        %v6533 = vunpack.c.h.bf16 %v5825
        %v6534 = vunpack.c.h.bf16 %v5828
        %v6535 = vunpack.c.l.bf16 %v5831
        %v6536 = vunpack.c.l.bf16 %v5834
        %v6537 = vunpack.c.h.bf16 %v5831
        %v6538 = vunpack.c.h.bf16 %v5834
        %v6539 = vunpack.c.l.bf16 %v5837
        %v6540 = vunpack.c.l.bf16 %v5840
        %v6541 = vunpack.c.h.bf16 %v5837
        %v6542 = vunpack.c.h.bf16 %v5840
        %v6543 = vunpack.c.l.bf16 %v5843
        %v6544 = vunpack.c.l.bf16 %v5846
        %v6545 = vunpack.c.h.bf16 %v5843
        %v6546 = vunpack.c.h.bf16 %v5846
        %v6547 = vunpack.c.l.bf16 %v5849
        %v6548 = vunpack.c.l.bf16 %v5852
        %v6549 = vunpack.c.h.bf16 %v5849
        %v6550 = vunpack.c.h.bf16 %v5852
        %v6551 = vunpack.c.l.bf16 %v5855
        %v6552 = vunpack.c.l.bf16 %v5858
        %v6553 = vunpack.c.h.bf16 %v5855
        %v6554 = vunpack.c.h.bf16 %v5858
        %v6555 = vunpack.c.l.bf16 %v5861
        %v6556 = vunpack.c.l.bf16 %v5864
        %v6557 = vunpack.c.h.bf16 %v5861
        %v6558 = vunpack.c.h.bf16 %v5864
        %v6559 = vunpack.c.l.bf16 %v5867
        %v6560 = vunpack.c.l.bf16 %v5870
        %v6561 = vunpack.c.h.bf16 %v5867
        %v6562 = vunpack.c.h.bf16 %v5870
        %v6563 = vunpack.c.l.bf16 %v5873
        %v6564 = vunpack.c.l.bf16 %v5876
        %v6565 = vunpack.c.h.bf16 %v5873
        %v6566 = vunpack.c.h.bf16 %v5876
        %v6567 = vunpack.c.l.bf16 %v5879
        %v6568 = vunpack.c.l.bf16 %v5882
        %v6569 = vunpack.c.h.bf16 %v5879
        %v6570 = vunpack.c.h.bf16 %v5882
        %v6571 = vunpack.c.l.bf16 %v5885
        %v6572 = vunpack.c.l.bf16 %v5888
        %v6573 = vunpack.c.h.bf16 %v5885
        %v6574 = vunpack.c.h.bf16 %v5888
        %v6575 = vunpack.c.l.bf16 %v5891
        %v6576 = vunpack.c.l.bf16 %v5894
        %v6577 = vunpack.c.h.bf16 %v5891
        %v6578 = vunpack.c.h.bf16 %v5894
        %v6579 = vunpack.c.l.bf16 %v5897
        %v6580 = vunpack.c.l.bf16 %v5900
        %v6581 = vunpack.c.h.bf16 %v5897
        %v6582 = vunpack.c.h.bf16 %v5900
        %v6583 = vunpack.c.l.bf16 %v5903
        %v6584 = vunpack.c.l.bf16 %v5906
        %v6585 = vunpack.c.h.bf16 %v5903
        %v6586 = vunpack.c.h.bf16 %v5906
        %v6587 = vunpack.c.l.bf16 %v5909
        %v6588 = vunpack.c.l.bf16 %v5912
        %v6589 = vunpack.c.h.bf16 %v5909
        %v6590 = vunpack.c.h.bf16 %v5912
        %v6591 = vunpack.c.l.bf16 %v5915
        %v6592 = vunpack.c.l.bf16 %v5918
        %v6593 = vunpack.c.h.bf16 %v5915
        %v6594 = vunpack.c.h.bf16 %v5918
        %v6595 = vunpack.c.l.bf16 %v5921
        %v6596 = vunpack.c.l.bf16 %v5924
        %v6597 = vunpack.c.h.bf16 %v5921
        %v6598 = vunpack.c.h.bf16 %v5924
        %v6599 = vunpack.c.l.bf16 %v5927
        %v6600 = vunpack.c.l.bf16 %v5930
        %v6601 = vunpack.c.h.bf16 %v5927
        %v6602 = vunpack.c.h.bf16 %v5930
        %v6603 = vunpack.c.l.bf16 %v5933
        %v6604 = vunpack.c.l.bf16 %v5936
        %v6605 = vunpack.c.h.bf16 %v5933
        %v6606 = vunpack.c.h.bf16 %v5936
        %v6607 = vunpack.c.l.bf16 %v5939
        %v6608 = vunpack.c.l.bf16 %v5942
        %v6609 = vunpack.c.h.bf16 %v5939
        %v6610 = vunpack.c.h.bf16 %v5942
        %v6611 = vunpack.c.l.bf16 %v5945
        %v6612 = vunpack.c.l.bf16 %v5948
        %v6613 = vunpack.c.h.bf16 %v5945
        %v6614 = vunpack.c.h.bf16 %v5948
        %v6615 = vunpack.c.l.bf16 %v5951
        %v6616 = vunpack.c.l.bf16 %v5954
        %v6617 = vunpack.c.h.bf16 %v5951
        %v6618 = vunpack.c.h.bf16 %v5954
        %v6619 = vunpack.c.l.bf16 %v5957
        %v6620 = vunpack.c.l.bf16 %v5960
        %v6621 = vunpack.c.h.bf16 %v5957
        %v6622 = vunpack.c.h.bf16 %v5960
        %v6623 = vunpack.c.l.bf16 %v5963
        %v6624 = vunpack.c.l.bf16 %v5966
        %v6625 = vunpack.c.h.bf16 %v5963
        %v6626 = vunpack.c.h.bf16 %v5966
        %v6627 = vunpack.c.l.bf16 %v5969
        %v6628 = vunpack.c.l.bf16 %v5972
        %v6629 = vunpack.c.h.bf16 %v5969
        %v6630 = vunpack.c.h.bf16 %v5972
        %v6631 = vunpack.c.l.bf16 %v5975
        %v6632 = vunpack.c.l.bf16 %v5978
        %v6633 = vunpack.c.h.bf16 %v5975
        %v6634 = vunpack.c.h.bf16 %v5978
        %v6635 = vunpack.c.l.bf16 %v5981
        %v6636 = vunpack.c.l.bf16 %v5984
        %v6637 = vunpack.c.h.bf16 %v5981
        %v6638 = vunpack.c.h.bf16 %v5984
        %v6639 = vunpack.c.l.bf16 %v5987
        %v6640 = vunpack.c.l.bf16 %v5990
        %v6641 = vunpack.c.h.bf16 %v5987
        %v6642 = vunpack.c.h.bf16 %v5990
        %v6643 = vunpack.c.l.bf16 %v5993
        %v6644 = vunpack.c.l.bf16 %v5996
        %v6645 = vunpack.c.h.bf16 %v5993
        %v6646 = vunpack.c.h.bf16 %v5996
        %v6647 = vunpack.c.l.bf16 %v5999
        %v6648 = vunpack.c.l.bf16 %v6002
        %v6649 = vunpack.c.h.bf16 %v5999
        %v6650 = vunpack.c.h.bf16 %v6002
        %v6651 = vunpack.c.l.bf16 %v6005
        %v6652 = vunpack.c.l.bf16 %v6008
        %v6653 = vunpack.c.h.bf16 %v6005
        %v6654 = vunpack.c.h.bf16 %v6008
        %v6655 = vunpack.c.l.bf16 %v6011
        %v6656 = vunpack.c.l.bf16 %v6014
        %v6657 = vunpack.c.h.bf16 %v6011
        %v6658 = vunpack.c.h.bf16 %v6014
        %v6659 = vunpack.c.l.bf16 %v6017
        %v6660 = vunpack.c.l.bf16 %v6020
        %v6661 = vunpack.c.h.bf16 %v6017
        %v6662 = vunpack.c.h.bf16 %v6020
        %v6663 = vunpack.c.l.bf16 %v6023
        %v6664 = vunpack.c.l.bf16 %v6026
        %v6665 = vunpack.c.h.bf16 %v6023
        %v6666 = vunpack.c.h.bf16 %v6026
        %v6667 = vunpack.c.l.bf16 %v6029
        %v6668 = vunpack.c.l.bf16 %v6032
        %v6669 = vunpack.c.h.bf16 %v6029
        %v6670 = vunpack.c.h.bf16 %v6032
        %v6671 = vunpack.c.l.bf16 %v6035
        %v6672 = vunpack.c.l.bf16 %v6038
        %v6673 = vunpack.c.h.bf16 %v6035
        %v6674 = vunpack.c.h.bf16 %v6038
        %v6675 = vunpack.c.l.bf16 %v6041
        %v6676 = vunpack.c.l.bf16 %v6044
        %v6677 = vunpack.c.h.bf16 %v6041
        %v6678 = vunpack.c.h.bf16 %v6044
        %v6679 = vunpack.c.l.bf16 %v6047
        %v6680 = vunpack.c.l.bf16 %v6050
        %v6681 = vunpack.c.h.bf16 %v6047
        %v6682 = vunpack.c.h.bf16 %v6050
        %v6683 = vunpack.c.l.bf16 %v6053
        %v6684 = vunpack.c.l.bf16 %v6056
        %v6685 = vunpack.c.h.bf16 %v6053
        %v6686 = vunpack.c.h.bf16 %v6056
        %v6687 = vunpack.c.l.bf16 %v6059
        %v6688 = vunpack.c.l.bf16 %v6062
        %v6689 = vunpack.c.h.bf16 %v6059
        %v6690 = vunpack.c.h.bf16 %v6062
        %v6691 = vunpack.c.l.bf16 %v6065
        %v6692 = vunpack.c.l.bf16 %v6068
        %v6693 = vunpack.c.h.bf16 %v6065
        %v6694 = vunpack.c.h.bf16 %v6068
        %v6695 = vunpack.c.l.bf16 %v6071
        %v6696 = vunpack.c.l.bf16 %v6074
        %v6697 = vunpack.c.h.bf16 %v6071
        %v6698 = vunpack.c.h.bf16 %v6074
        %v6699 = vunpack.c.l.bf16 %v6077
        %v6700 = vunpack.c.l.bf16 %v6080
        %v6701 = vunpack.c.h.bf16 %v6077
        %v6702 = vunpack.c.h.bf16 %v6080
        %v6703 = vunpack.c.l.bf16 %v6083
        %v6704 = vunpack.c.l.bf16 %v6086
        %v6705 = vunpack.c.h.bf16 %v6083
        %v6706 = vunpack.c.h.bf16 %v6086
        %v6707 = vunpack.c.l.bf16 %v6089
        %v6708 = vunpack.c.l.bf16 %v6092
        %v6709 = vunpack.c.h.bf16 %v6089
        %v6710 = vunpack.c.h.bf16 %v6092
        %v6711 = vunpack.c.l.bf16 %v6095
        %v6712 = vunpack.c.l.bf16 %v6098
        %v6713 = vunpack.c.h.bf16 %v6095
        %v6714 = vunpack.c.h.bf16 %v6098
        %v6715 = vunpack.c.l.bf16 %v6101
        %v6716 = vunpack.c.l.bf16 %v6104
        %v6717 = vunpack.c.h.bf16 %v6101
        %v6718 = vunpack.c.h.bf16 %v6104
        %v6719 = vunpack.c.l.bf16 %v6107
        %v6720 = vunpack.c.l.bf16 %v6110
        %v6721 = vunpack.c.h.bf16 %v6107
        %v6722 = vunpack.c.h.bf16 %v6110
        %v6723 = vunpack.c.l.bf16 %v6113
        %v6724 = vunpack.c.l.bf16 %v6116
        %v6725 = vunpack.c.h.bf16 %v6113
        %v6726 = vunpack.c.h.bf16 %v6116
        %v6727 = vunpack.c.l.bf16 %v6119
        %v6728 = vunpack.c.l.bf16 %v6122
        %v6729 = vunpack.c.h.bf16 %v6119
        %v6730 = vunpack.c.h.bf16 %v6122
        %v6731 = vunpack.c.l.bf16 %v6125
        %v6732 = vunpack.c.l.bf16 %v6128
        %v6733 = vunpack.c.h.bf16 %v6125
        %v6734 = vunpack.c.h.bf16 %v6128
        %v6735 = vunpack.c.l.bf16 %v6131
        %v6736 = vunpack.c.l.bf16 %v6134
        %v6737 = vunpack.c.h.bf16 %v6131
        %v6738 = vunpack.c.h.bf16 %v6134
        %v6739 = vunpack.c.l.bf16 %v6137
        %v6740 = vunpack.c.l.bf16 %v6140
        %v6741 = vunpack.c.h.bf16 %v6137
        %v6742 = vunpack.c.h.bf16 %v6140
        %v6743 = vunpack.c.l.bf16 %v6143
        %v6744 = vunpack.c.l.bf16 %v6146
        %v6745 = vunpack.c.h.bf16 %v6143
        %v6746 = vunpack.c.h.bf16 %v6146
        %v6747 = vunpack.c.l.bf16 %v6149
        %v6748 = vunpack.c.l.bf16 %v6152
        %v6749 = vunpack.c.h.bf16 %v6149
        %v6750 = vunpack.c.h.bf16 %v6152
        %v6751 = vunpack.c.l.bf16 %v6155
        %v6752 = vunpack.c.l.bf16 %v6158
        %v6753 = vunpack.c.h.bf16 %v6155
        %v6754 = vunpack.c.h.bf16 %v6158
        %v6755 = vunpack.c.l.bf16 %v6161
        %v6756 = vunpack.c.l.bf16 %v6164
        %v6757 = vunpack.c.h.bf16 %v6161
        %v6758 = vunpack.c.h.bf16 %v6164
        %v6759 = vunpack.c.l.bf16 %v6167
        %v6760 = vunpack.c.l.bf16 %v6170
        %v6761 = vunpack.c.h.bf16 %v6167
        %v6762 = vunpack.c.h.bf16 %v6170
        %v6763 = vunpack.c.l.bf16 %v6173
        %v6764 = vunpack.c.l.bf16 %v6176
        %v6765 = vunpack.c.h.bf16 %v6173
        %v6766 = vunpack.c.h.bf16 %v6176
        %v6767 = vunpack.c.l.bf16 %v6179
        %v6768 = vunpack.c.l.bf16 %v6182
        %v6769 = vunpack.c.h.bf16 %v6179
        %v6770 = vunpack.c.h.bf16 %v6182
        %v6771 = vunpack.c.l.bf16 %v6185
        %v6772 = vunpack.c.l.bf16 %v6188
        %v6773 = vunpack.c.h.bf16 %v6185
        %v6774 = vunpack.c.h.bf16 %v6188
        %v6775 = vunpack.c.l.bf16 %v6191
        %v6776 = vunpack.c.l.bf16 %v6194
        %v6777 = vunpack.c.h.bf16 %v6191
        %v6778 = vunpack.c.h.bf16 %v6194
        %v6779 = vunpack.c.l.bf16 %v6197
        %v6780 = vunpack.c.l.bf16 %v6200
        %v6781 = vunpack.c.h.bf16 %v6197
        %v6782 = vunpack.c.h.bf16 %v6200
        %v6783 = vunpack.c.l.bf16 %v6203
        %v6784 = vunpack.c.l.bf16 %v6206
        %v6785 = vunpack.c.h.bf16 %v6203
        %v6786 = vunpack.c.h.bf16 %v6206
        %v6787 = vunpack.c.l.bf16 %v6209
        %v6788 = vunpack.c.l.bf16 %v6212
        %v6789 = vunpack.c.h.bf16 %v6209
        %v6790 = vunpack.c.h.bf16 %v6212
        %v6791 = vunpack.c.l.bf16 %v6215
        %v6792 = vunpack.c.l.bf16 %v6218
        %v6793 = vunpack.c.h.bf16 %v6215
        %v6794 = vunpack.c.h.bf16 %v6218
        %v6795 = vunpack.c.l.bf16 %v6221
        %v6796 = vunpack.c.l.bf16 %v6224
        %v6797 = vunpack.c.h.bf16 %v6221
        %v6798 = vunpack.c.h.bf16 %v6224
        %v6799 = vunpack.c.l.bf16 %v6227
        %v6800 = vunpack.c.l.bf16 %v6230
        %v6801 = vunpack.c.h.bf16 %v6227
        %v6802 = vunpack.c.h.bf16 %v6230
        %v6803 = vunpack.c.l.bf16 %v6233
        %v6804 = vunpack.c.l.bf16 %v6236
        %v6805 = vunpack.c.h.bf16 %v6233
        %v6806 = vunpack.c.h.bf16 %v6236
        %v6807 = vunpack.c.l.bf16 %v6239
        %v6808 = vunpack.c.l.bf16 %v6242
        %v6809 = vunpack.c.h.bf16 %v6239
        %v6810 = vunpack.c.h.bf16 %v6242
        %v6811 = vunpack.c.l.bf16 %v6245
        %v6812 = vunpack.c.l.bf16 %v6248
        %v6813 = vunpack.c.h.bf16 %v6245
        %v6814 = vunpack.c.h.bf16 %v6248
        %v6815 = vunpack.c.l.bf16 %v6251
        %v6816 = vunpack.c.l.bf16 %v6254
        %v6817 = vunpack.c.h.bf16 %v6251
        %v6818 = vunpack.c.h.bf16 %v6254
        %v6819 = vunpack.c.l.bf16 %v6257
        %v6820 = vunpack.c.l.bf16 %v6260
        %v6821 = vunpack.c.h.bf16 %v6257
        %v6822 = vunpack.c.h.bf16 %v6260
        %v6823 = vunpack.c.l.bf16 %v6263
        %v6824 = vunpack.c.l.bf16 %v6266
        %v6825 = vunpack.c.h.bf16 %v6263
        %v6826 = vunpack.c.h.bf16 %v6266
        %v6827 = vunpack.c.l.bf16 %v6269
        %v6828 = vunpack.c.l.bf16 %v6272
        %v6829 = vunpack.c.h.bf16 %v6269
        %v6830 = vunpack.c.h.bf16 %v6272
        %v6831 = vunpack.c.l.bf16 %v6275
        %v6832 = vunpack.c.l.bf16 %v6278
        %v6833 = vunpack.c.h.bf16 %v6275
        %v6834 = vunpack.c.h.bf16 %v6278
        %v6835 = vunpack.c.l.bf16 %v6281
        %v6836 = vunpack.c.l.bf16 %v6284
        %v6837 = vunpack.c.h.bf16 %v6281
        %v6838 = vunpack.c.h.bf16 %v6284
        %v6839 = vunpack.c.l.bf16 %v6287
        %v6840 = vunpack.c.l.bf16 %v6290
        %v6841 = vunpack.c.h.bf16 %v6287
        %v6842 = vunpack.c.h.bf16 %v6290
        %v6843 = vunpack.c.l.bf16 %v6293
        %v6844 = vunpack.c.l.bf16 %v6296
        %v6845 = vunpack.c.h.bf16 %v6293
        %v6846 = vunpack.c.h.bf16 %v6296
        %v6847 = vunpack.c.l.bf16 %v6299
        %v6848 = vunpack.c.l.bf16 %v6302
        %v6849 = vunpack.c.h.bf16 %v6299
        %v6850 = vunpack.c.h.bf16 %v6302
        %v6851 = vunpack.c.l.bf16 %v6305
        %v6852 = vunpack.c.l.bf16 %v6308
        %v6853 = vunpack.c.h.bf16 %v6305
        %v6854 = vunpack.c.h.bf16 %v6308
        %v6855 = vunpack.c.l.bf16 %v6311
        %v6856 = vunpack.c.l.bf16 %v6314
        %v6857 = vunpack.c.h.bf16 %v6311
        %v6858 = vunpack.c.h.bf16 %v6314
        %v6859 = vunpack.c.l.bf16 %v6317
        %v6860 = vunpack.c.l.bf16 %v6320
        %v6861 = vunpack.c.h.bf16 %v6317
        %v6862 = vunpack.c.h.bf16 %v6320
        %v6863 = vunpack.c.l.bf16 %v6323
        %v6864 = vunpack.c.l.bf16 %v6326
        %v6865 = vunpack.c.h.bf16 %v6323
        %v6866 = vunpack.c.h.bf16 %v6326
        %v6867 = vunpack.c.l.bf16 %v6329
        %v6868 = vunpack.c.l.bf16 %v6332
        %v6869 = vunpack.c.h.bf16 %v6329
        %v6870 = vunpack.c.h.bf16 %v6332
        %v6871 = vunpack.c.l.bf16 %v6335
        %v6872 = vunpack.c.l.bf16 %v6338
        %v6873 = vunpack.c.h.bf16 %v6335
        %v6874 = vunpack.c.h.bf16 %v6338
        %v6875 = vunpack.c.l.bf16 %v6341
        %v6876 = vunpack.c.l.bf16 %v6344
        %v6877 = vunpack.c.h.bf16 %v6341
        %v6878 = vunpack.c.h.bf16 %v6344
        %v6879 = vunpack.c.l.bf16 %v6347
        %v6880 = vunpack.c.l.bf16 %v6350
        %v6881 = vunpack.c.h.bf16 %v6347
        %v6882 = vunpack.c.h.bf16 %v6350
        %v6883 = vunpack.c.l.bf16 %v6353
        %v6884 = vunpack.c.l.bf16 %v6356
        %v6885 = vunpack.c.h.bf16 %v6353
        %v6886 = vunpack.c.h.bf16 %v6356
        %v6887 = vunpack.c.l.bf16 %v6359
        %v6888 = vunpack.c.l.bf16 %v6362
        %v6889 = vunpack.c.h.bf16 %v6359
        %v6890 = vunpack.c.h.bf16 %v6362
        %v6891 = vunpack.c.l.bf16 %v6365
        %v6892 = vunpack.c.l.bf16 %v6368
        %v6893 = vunpack.c.h.bf16 %v6365
        %v6894 = vunpack.c.h.bf16 %v6368
        %v6895 = vunpack.c.l.bf16 %v6371
        %v6896 = vunpack.c.l.bf16 %v6374
        %v6897 = vunpack.c.h.bf16 %v6371
        %v6898 = vunpack.c.h.bf16 %v6374
        %v6899 = vunpack.c.l.bf16 %v6377
        %v6900 = vunpack.c.l.bf16 %v6380
        %v6901 = vunpack.c.h.bf16 %v6377
        %v6902 = vunpack.c.h.bf16 %v6380
        %v6903 = vunpack.c.l.bf16 %v6383
        %v6904 = vunpack.c.l.bf16 %v6386
        %v6905 = vunpack.c.h.bf16 %v6383
        %v6906 = vunpack.c.h.bf16 %v6386
        %v6907 = vunpack.c.l.bf16 %v6389
        %v6908 = vunpack.c.l.bf16 %v6392
        %v6909 = vunpack.c.h.bf16 %v6389
        %v6910 = vunpack.c.h.bf16 %v6392
        %v6911 = vunpack.c.l.bf16 %v6395
        %v6912 = vunpack.c.l.bf16 %v6398
        %v6913 = vunpack.c.h.bf16 %v6395
        %v6914 = vunpack.c.h.bf16 %v6398
        %v6915 = vunpack.c.l.bf16 %v6401
        %v6916 = vunpack.c.l.bf16 %v6404
        %v6917 = vunpack.c.h.bf16 %v6401
        %v6918 = vunpack.c.h.bf16 %v6404
        %v6919 = vunpack.c.l.bf16 %v6407
        %v6920 = vunpack.c.l.bf16 %v6410
        %v6921 = vunpack.c.h.bf16 %v6407
        %v6922 = vunpack.c.h.bf16 %v6410
        %v6923 = vadd.f32 %v6411, %v6412
        %6924 = vadd.xlane.f32.xlu0 %v6923
        %v6925 = vpop.xlane.xlu0 %6924
        %v6926 = vadd.f32 %v6413, %v6414
        %6927 = vadd.xlane.f32.xlu0 %v6926
        %v6928 = vpop.xlane.xlu0 %6927
        %v6929 = vadd.f32 %v6415, %v6416
        %6930 = vadd.xlane.f32.xlu0 %v6929
        %v6931 = vpop.xlane.xlu0 %6930
        %v6932 = vadd.f32 %v6417, %v6418
        %6933 = vadd.xlane.f32.xlu0 %v6932
        %v6934 = vpop.xlane.xlu0 %6933
        %v6935 = vadd.f32 %v6419, %v6420
        %6936 = vadd.xlane.f32.xlu0 %v6935
        %v6937 = vpop.xlane.xlu0 %6936
        %v6938 = vadd.f32 %v6421, %v6422
        %6939 = vadd.xlane.f32.xlu0 %v6938
        %v6940 = vpop.xlane.xlu0 %6939
        %v6941 = vadd.f32 %v6423, %v6424
        %6942 = vadd.xlane.f32.xlu0 %v6941
        %v6943 = vpop.xlane.xlu0 %6942
        %v6944 = vadd.f32 %v6425, %v6426
        %6945 = vadd.xlane.f32.xlu0 %v6944
        %v6946 = vpop.xlane.xlu0 %6945
        %v6947 = vadd.f32 %v6427, %v6428
        %6948 = vadd.xlane.f32.xlu0 %v6947
        %v6949 = vpop.xlane.xlu0 %6948
        %v6950 = vadd.f32 %v6429, %v6430
        %6951 = vadd.xlane.f32.xlu0 %v6950
        %v6952 = vpop.xlane.xlu0 %6951
        %v6953 = vadd.f32 %v6431, %v6432
        %6954 = vadd.xlane.f32.xlu0 %v6953
        %v6955 = vpop.xlane.xlu0 %6954
        %v6956 = vadd.f32 %v6433, %v6434
        %6957 = vadd.xlane.f32.xlu0 %v6956
        %v6958 = vpop.xlane.xlu0 %6957
        %v6959 = vadd.f32 %v6435, %v6436
        %6960 = vadd.xlane.f32.xlu0 %v6959
        %v6961 = vpop.xlane.xlu0 %6960
        %v6962 = vadd.f32 %v6437, %v6438
        %6963 = vadd.xlane.f32.xlu0 %v6962
        %v6964 = vpop.xlane.xlu0 %6963
        %v6965 = vadd.f32 %v6439, %v6440
        %6966 = vadd.xlane.f32.xlu0 %v6965
        %v6967 = vpop.xlane.xlu0 %6966
        %v6968 = vadd.f32 %v6441, %v6442
        %6969 = vadd.xlane.f32.xlu0 %v6968
        %v6970 = vpop.xlane.xlu0 %6969
        %v6971 = vadd.f32 %v6443, %v6444
        %6972 = vadd.xlane.f32.xlu0 %v6971
        %v6973 = vpop.xlane.xlu0 %6972
        %v6974 = vadd.f32 %v6445, %v6446
        %6975 = vadd.xlane.f32.xlu0 %v6974
        %v6976 = vpop.xlane.xlu0 %6975
        %v6977 = vadd.f32 %v6447, %v6448
        %6978 = vadd.xlane.f32.xlu0 %v6977
        %v6979 = vpop.xlane.xlu0 %6978
        %v6980 = vadd.f32 %v6449, %v6450
        %6981 = vadd.xlane.f32.xlu0 %v6980
        %v6982 = vpop.xlane.xlu0 %6981
        %v6983 = vadd.f32 %v6451, %v6452
        %6984 = vadd.xlane.f32.xlu0 %v6983
        %v6985 = vpop.xlane.xlu0 %6984
        %v6986 = vadd.f32 %v6453, %v6454
        %6987 = vadd.xlane.f32.xlu0 %v6986
        %v6988 = vpop.xlane.xlu0 %6987
        %v6989 = vadd.f32 %v6455, %v6456
        %6990 = vadd.xlane.f32.xlu0 %v6989
        %v6991 = vpop.xlane.xlu0 %6990
        %v6992 = vadd.f32 %v6457, %v6458
        %6993 = vadd.xlane.f32.xlu0 %v6992
        %v6994 = vpop.xlane.xlu0 %6993
        %v6995 = vadd.f32 %v6459, %v6460
        %6996 = vadd.xlane.f32.xlu0 %v6995
        %v6997 = vpop.xlane.xlu0 %6996
        %v6998 = vadd.f32 %v6461, %v6462
        %6999 = vadd.xlane.f32.xlu0 %v6998
        %v7000 = vpop.xlane.xlu0 %6999
        %v7001 = vadd.f32 %v6463, %v6464
        %7002 = vadd.xlane.f32.xlu0 %v7001
        %v7003 = vpop.xlane.xlu0 %7002
        %v7004 = vadd.f32 %v6465, %v6466
        %7005 = vadd.xlane.f32.xlu0 %v7004
        %v7006 = vpop.xlane.xlu0 %7005
        %v7007 = vadd.f32 %v6467, %v6468
        %7008 = vadd.xlane.f32.xlu0 %v7007
        %v7009 = vpop.xlane.xlu0 %7008
        %v7010 = vadd.f32 %v6469, %v6470
        %7011 = vadd.xlane.f32.xlu0 %v7010
        %v7012 = vpop.xlane.xlu0 %7011
        %v7013 = vadd.f32 %v6471, %v6472
        %7014 = vadd.xlane.f32.xlu0 %v7013
        %v7015 = vpop.xlane.xlu0 %7014
        %v7016 = vadd.f32 %v6473, %v6474
        %7017 = vadd.xlane.f32.xlu0 %v7016
        %v7018 = vpop.xlane.xlu0 %7017
        %v7019 = vadd.f32 %v6475, %v6476
        %7020 = vadd.xlane.f32.xlu0 %v7019
        %v7021 = vpop.xlane.xlu0 %7020
        %v7022 = vadd.f32 %v6477, %v6478
        %7023 = vadd.xlane.f32.xlu0 %v7022
        %v7024 = vpop.xlane.xlu0 %7023
        %v7025 = vadd.f32 %v6479, %v6480
        %7026 = vadd.xlane.f32.xlu0 %v7025
        %v7027 = vpop.xlane.xlu0 %7026
        %v7028 = vadd.f32 %v6481, %v6482
        %7029 = vadd.xlane.f32.xlu0 %v7028
        %v7030 = vpop.xlane.xlu0 %7029
        %v7031 = vadd.f32 %v6483, %v6484
        %7032 = vadd.xlane.f32.xlu0 %v7031
        %v7033 = vpop.xlane.xlu0 %7032
        %v7034 = vadd.f32 %v6485, %v6486
        %7035 = vadd.xlane.f32.xlu0 %v7034
        %v7036 = vpop.xlane.xlu0 %7035
        %v7037 = vadd.f32 %v6487, %v6488
        %7038 = vadd.xlane.f32.xlu0 %v7037
        %v7039 = vpop.xlane.xlu0 %7038
        %v7040 = vadd.f32 %v6489, %v6490
        %7041 = vadd.xlane.f32.xlu0 %v7040
        %v7042 = vpop.xlane.xlu0 %7041
        %v7043 = vadd.f32 %v6491, %v6492
        %7044 = vadd.xlane.f32.xlu0 %v7043
        %v7045 = vpop.xlane.xlu0 %7044
        %v7046 = vadd.f32 %v6493, %v6494
        %7047 = vadd.xlane.f32.xlu0 %v7046
        %v7048 = vpop.xlane.xlu0 %7047
        %v7049 = vadd.f32 %v6495, %v6496
        %7050 = vadd.xlane.f32.xlu0 %v7049
        %v7051 = vpop.xlane.xlu0 %7050
        %v7052 = vadd.f32 %v6497, %v6498
        %7053 = vadd.xlane.f32.xlu0 %v7052
        %v7054 = vpop.xlane.xlu0 %7053
        %v7055 = vadd.f32 %v6499, %v6500
        %7056 = vadd.xlane.f32.xlu0 %v7055
        %v7057 = vpop.xlane.xlu0 %7056
        %v7058 = vadd.f32 %v6501, %v6502
        %7059 = vadd.xlane.f32.xlu0 %v7058
        %v7060 = vpop.xlane.xlu0 %7059
        %v7061 = vadd.f32 %v6503, %v6504
        %7062 = vadd.xlane.f32.xlu0 %v7061
        %v7063 = vpop.xlane.xlu0 %7062
        %v7064 = vadd.f32 %v6505, %v6506
        %7065 = vadd.xlane.f32.xlu0 %v7064
        %v7066 = vpop.xlane.xlu0 %7065
        %v7067 = vadd.f32 %v6507, %v6508
        %7068 = vadd.xlane.f32.xlu0 %v7067
        %v7069 = vpop.xlane.xlu0 %7068
        %v7070 = vadd.f32 %v6509, %v6510
        %7071 = vadd.xlane.f32.xlu0 %v7070
        %v7072 = vpop.xlane.xlu0 %7071
        %v7073 = vadd.f32 %v6511, %v6512
        %7074 = vadd.xlane.f32.xlu0 %v7073
        %v7075 = vpop.xlane.xlu0 %7074
        %v7076 = vadd.f32 %v6513, %v6514
        %7077 = vadd.xlane.f32.xlu0 %v7076
        %v7078 = vpop.xlane.xlu0 %7077
        %v7079 = vadd.f32 %v6515, %v6516
        %7080 = vadd.xlane.f32.xlu0 %v7079
        %v7081 = vpop.xlane.xlu0 %7080
        %v7082 = vadd.f32 %v6517, %v6518
        %7083 = vadd.xlane.f32.xlu0 %v7082
        %v7084 = vpop.xlane.xlu0 %7083
        %v7085 = vadd.f32 %v6519, %v6520
        %7086 = vadd.xlane.f32.xlu0 %v7085
        %v7087 = vpop.xlane.xlu0 %7086
        %v7088 = vadd.f32 %v6521, %v6522
        %7089 = vadd.xlane.f32.xlu0 %v7088
        %v7090 = vpop.xlane.xlu0 %7089
        %v7091 = vadd.f32 %v6523, %v6524
        %7092 = vadd.xlane.f32.xlu0 %v7091
        %v7093 = vpop.xlane.xlu0 %7092
        %v7094 = vadd.f32 %v6525, %v6526
        %7095 = vadd.xlane.f32.xlu0 %v7094
        %v7096 = vpop.xlane.xlu0 %7095
        %v7097 = vadd.f32 %v6527, %v6528
        %7098 = vadd.xlane.f32.xlu0 %v7097
        %v7099 = vpop.xlane.xlu0 %7098
        %v7100 = vadd.f32 %v6529, %v6530
        %7101 = vadd.xlane.f32.xlu0 %v7100
        %v7102 = vpop.xlane.xlu0 %7101
        %v7103 = vadd.f32 %v6531, %v6532
        %7104 = vadd.xlane.f32.xlu0 %v7103
        %v7105 = vpop.xlane.xlu0 %7104
        %v7106 = vadd.f32 %v6533, %v6534
        %7107 = vadd.xlane.f32.xlu0 %v7106
        %v7108 = vpop.xlane.xlu0 %7107
        %v7109 = vadd.f32 %v6535, %v6536
        %7110 = vadd.xlane.f32.xlu0 %v7109
        %v7111 = vpop.xlane.xlu0 %7110
        %v7112 = vadd.f32 %v6537, %v6538
        %7113 = vadd.xlane.f32.xlu0 %v7112
        %v7114 = vpop.xlane.xlu0 %7113
        %v7115 = vadd.f32 %v6539, %v6540
        %7116 = vadd.xlane.f32.xlu0 %v7115
        %v7117 = vpop.xlane.xlu0 %7116
        %v7118 = vadd.f32 %v6541, %v6542
        %7119 = vadd.xlane.f32.xlu0 %v7118
        %v7120 = vpop.xlane.xlu0 %7119
        %v7121 = vadd.f32 %v6543, %v6544
        %7122 = vadd.xlane.f32.xlu0 %v7121
        %v7123 = vpop.xlane.xlu0 %7122
        %v7124 = vadd.f32 %v6545, %v6546
        %7125 = vadd.xlane.f32.xlu0 %v7124
        %v7126 = vpop.xlane.xlu0 %7125
        %v7127 = vadd.f32 %v6547, %v6548
        %7128 = vadd.xlane.f32.xlu0 %v7127
        %v7129 = vpop.xlane.xlu0 %7128
        %v7130 = vadd.f32 %v6549, %v6550
        %7131 = vadd.xlane.f32.xlu0 %v7130
        %v7132 = vpop.xlane.xlu0 %7131
        %v7133 = vadd.f32 %v6551, %v6552
        %7134 = vadd.xlane.f32.xlu0 %v7133
        %v7135 = vpop.xlane.xlu0 %7134
        %v7136 = vadd.f32 %v6553, %v6554
        %7137 = vadd.xlane.f32.xlu0 %v7136
        %v7138 = vpop.xlane.xlu0 %7137
        %v7139 = vadd.f32 %v6555, %v6556
        %7140 = vadd.xlane.f32.xlu0 %v7139
        %v7141 = vpop.xlane.xlu0 %7140
        %v7142 = vadd.f32 %v6557, %v6558
        %7143 = vadd.xlane.f32.xlu0 %v7142
        %v7144 = vpop.xlane.xlu0 %7143
        %v7145 = vadd.f32 %v6559, %v6560
        %7146 = vadd.xlane.f32.xlu0 %v7145
        %v7147 = vpop.xlane.xlu0 %7146
        %v7148 = vadd.f32 %v6561, %v6562
        %7149 = vadd.xlane.f32.xlu0 %v7148
        %v7150 = vpop.xlane.xlu0 %7149
        %v7151 = vadd.f32 %v6563, %v6564
        %7152 = vadd.xlane.f32.xlu0 %v7151
        %v7153 = vpop.xlane.xlu0 %7152
        %v7154 = vadd.f32 %v6565, %v6566
        %7155 = vadd.xlane.f32.xlu0 %v7154
        %v7156 = vpop.xlane.xlu0 %7155
        %v7157 = vadd.f32 %v6567, %v6568
        %7158 = vadd.xlane.f32.xlu0 %v7157
        %v7159 = vpop.xlane.xlu0 %7158
        %v7160 = vadd.f32 %v6569, %v6570
        %7161 = vadd.xlane.f32.xlu0 %v7160
        %v7162 = vpop.xlane.xlu0 %7161
        %v7163 = vadd.f32 %v6571, %v6572
        %7164 = vadd.xlane.f32.xlu0 %v7163
        %v7165 = vpop.xlane.xlu0 %7164
        %v7166 = vadd.f32 %v6573, %v6574
        %7167 = vadd.xlane.f32.xlu0 %v7166
        %v7168 = vpop.xlane.xlu0 %7167
        %v7169 = vadd.f32 %v6575, %v6576
        %7170 = vadd.xlane.f32.xlu0 %v7169
        %v7171 = vpop.xlane.xlu0 %7170
        %v7172 = vadd.f32 %v6577, %v6578
        %7173 = vadd.xlane.f32.xlu0 %v7172
        %v7174 = vpop.xlane.xlu0 %7173
        %v7175 = vadd.f32 %v6579, %v6580
        %7176 = vadd.xlane.f32.xlu0 %v7175
        %v7177 = vpop.xlane.xlu0 %7176
        %v7178 = vadd.f32 %v6581, %v6582
        %7179 = vadd.xlane.f32.xlu0 %v7178
        %v7180 = vpop.xlane.xlu0 %7179
        %v7181 = vadd.f32 %v6583, %v6584
        %7182 = vadd.xlane.f32.xlu0 %v7181
        %v7183 = vpop.xlane.xlu0 %7182
        %v7184 = vadd.f32 %v6585, %v6586
        %7185 = vadd.xlane.f32.xlu0 %v7184
        %v7186 = vpop.xlane.xlu0 %7185
        %v7187 = vadd.f32 %v6587, %v6588
        %7188 = vadd.xlane.f32.xlu0 %v7187
        %v7189 = vpop.xlane.xlu0 %7188
        %v7190 = vadd.f32 %v6589, %v6590
        %7191 = vadd.xlane.f32.xlu0 %v7190
        %v7192 = vpop.xlane.xlu0 %7191
        %v7193 = vadd.f32 %v6591, %v6592
        %7194 = vadd.xlane.f32.xlu0 %v7193
        %v7195 = vpop.xlane.xlu0 %7194
        %v7196 = vadd.f32 %v6593, %v6594
        %7197 = vadd.xlane.f32.xlu0 %v7196
        %v7198 = vpop.xlane.xlu0 %7197
        %v7199 = vadd.f32 %v6595, %v6596
        %7200 = vadd.xlane.f32.xlu0 %v7199
        %v7201 = vpop.xlane.xlu0 %7200
        %v7202 = vadd.f32 %v6597, %v6598
        %7203 = vadd.xlane.f32.xlu0 %v7202
        %v7204 = vpop.xlane.xlu0 %7203
        %v7205 = vadd.f32 %v6599, %v6600
        %7206 = vadd.xlane.f32.xlu0 %v7205
        %v7207 = vpop.xlane.xlu0 %7206
        %v7208 = vadd.f32 %v6601, %v6602
        %7209 = vadd.xlane.f32.xlu0 %v7208
        %v7210 = vpop.xlane.xlu0 %7209
        %v7211 = vadd.f32 %v6603, %v6604
        %7212 = vadd.xlane.f32.xlu0 %v7211
        %v7213 = vpop.xlane.xlu0 %7212
        %v7214 = vadd.f32 %v6605, %v6606
        %7215 = vadd.xlane.f32.xlu0 %v7214
        %v7216 = vpop.xlane.xlu0 %7215
        %v7217 = vadd.f32 %v6607, %v6608
        %7218 = vadd.xlane.f32.xlu0 %v7217
        %v7219 = vpop.xlane.xlu0 %7218
        %v7220 = vadd.f32 %v6609, %v6610
        %7221 = vadd.xlane.f32.xlu0 %v7220
        %v7222 = vpop.xlane.xlu0 %7221
        %v7223 = vadd.f32 %v6611, %v6612
        %7224 = vadd.xlane.f32.xlu0 %v7223
        %v7225 = vpop.xlane.xlu0 %7224
        %v7226 = vadd.f32 %v6613, %v6614
        %7227 = vadd.xlane.f32.xlu0 %v7226
        %v7228 = vpop.xlane.xlu0 %7227
        %v7229 = vadd.f32 %v6615, %v6616
        %7230 = vadd.xlane.f32.xlu0 %v7229
        %v7231 = vpop.xlane.xlu0 %7230
        %v7232 = vadd.f32 %v6617, %v6618
        %7233 = vadd.xlane.f32.xlu0 %v7232
        %v7234 = vpop.xlane.xlu0 %7233
        %v7235 = vadd.f32 %v6619, %v6620
        %7236 = vadd.xlane.f32.xlu0 %v7235
        %v7237 = vpop.xlane.xlu0 %7236
        %v7238 = vadd.f32 %v6621, %v6622
        %7239 = vadd.xlane.f32.xlu0 %v7238
        %v7240 = vpop.xlane.xlu0 %7239
        %v7241 = vadd.f32 %v6623, %v6624
        %7242 = vadd.xlane.f32.xlu0 %v7241
        %v7243 = vpop.xlane.xlu0 %7242
        %v7244 = vadd.f32 %v6625, %v6626
        %7245 = vadd.xlane.f32.xlu0 %v7244
        %v7246 = vpop.xlane.xlu0 %7245
        %v7247 = vadd.f32 %v6627, %v6628
        %7248 = vadd.xlane.f32.xlu0 %v7247
        %v7249 = vpop.xlane.xlu0 %7248
        %v7250 = vadd.f32 %v6629, %v6630
        %7251 = vadd.xlane.f32.xlu0 %v7250
        %v7252 = vpop.xlane.xlu0 %7251
        %v7253 = vadd.f32 %v6631, %v6632
        %7254 = vadd.xlane.f32.xlu0 %v7253
        %v7255 = vpop.xlane.xlu0 %7254
        %v7256 = vadd.f32 %v6633, %v6634
        %7257 = vadd.xlane.f32.xlu0 %v7256
        %v7258 = vpop.xlane.xlu0 %7257
        %v7259 = vadd.f32 %v6635, %v6636
        %7260 = vadd.xlane.f32.xlu0 %v7259
        %v7261 = vpop.xlane.xlu0 %7260
        %v7262 = vadd.f32 %v6637, %v6638
        %7263 = vadd.xlane.f32.xlu0 %v7262
        %v7264 = vpop.xlane.xlu0 %7263
        %v7265 = vadd.f32 %v6639, %v6640
        %7266 = vadd.xlane.f32.xlu0 %v7265
        %v7267 = vpop.xlane.xlu0 %7266
        %v7268 = vadd.f32 %v6641, %v6642
        %7269 = vadd.xlane.f32.xlu0 %v7268
        %v7270 = vpop.xlane.xlu0 %7269
        %v7271 = vadd.f32 %v6643, %v6644
        %7272 = vadd.xlane.f32.xlu0 %v7271
        %v7273 = vpop.xlane.xlu0 %7272
        %v7274 = vadd.f32 %v6645, %v6646
        %7275 = vadd.xlane.f32.xlu0 %v7274
        %v7276 = vpop.xlane.xlu0 %7275
        %v7277 = vadd.f32 %v6647, %v6648
        %7278 = vadd.xlane.f32.xlu0 %v7277
        %v7279 = vpop.xlane.xlu0 %7278
        %v7280 = vadd.f32 %v6649, %v6650
        %7281 = vadd.xlane.f32.xlu0 %v7280
        %v7282 = vpop.xlane.xlu0 %7281
        %v7283 = vadd.f32 %v6651, %v6652
        %7284 = vadd.xlane.f32.xlu0 %v7283
        %v7285 = vpop.xlane.xlu0 %7284
        %v7286 = vadd.f32 %v6653, %v6654
        %7287 = vadd.xlane.f32.xlu0 %v7286
        %v7288 = vpop.xlane.xlu0 %7287
        %v7289 = vadd.f32 %v6655, %v6656
        %7290 = vadd.xlane.f32.xlu0 %v7289
        %v7291 = vpop.xlane.xlu0 %7290
        %v7292 = vadd.f32 %v6657, %v6658
        %7293 = vadd.xlane.f32.xlu0 %v7292
        %v7294 = vpop.xlane.xlu0 %7293
        %v7295 = vadd.f32 %v6659, %v6660
        %7296 = vadd.xlane.f32.xlu0 %v7295
        %v7297 = vpop.xlane.xlu0 %7296
        %v7298 = vadd.f32 %v6661, %v6662
        %7299 = vadd.xlane.f32.xlu0 %v7298
        %v7300 = vpop.xlane.xlu0 %7299
        %v7301 = vadd.f32 %v6663, %v6664
        %7302 = vadd.xlane.f32.xlu0 %v7301
        %v7303 = vpop.xlane.xlu0 %7302
        %v7304 = vadd.f32 %v6665, %v6666
        %7305 = vadd.xlane.f32.xlu0 %v7304
        %v7306 = vpop.xlane.xlu0 %7305
        %v7307 = vadd.f32 %v6667, %v6668
        %7308 = vadd.xlane.f32.xlu0 %v7307
        %v7309 = vpop.xlane.xlu0 %7308
        %v7310 = vadd.f32 %v6669, %v6670
        %7311 = vadd.xlane.f32.xlu0 %v7310
        %v7312 = vpop.xlane.xlu0 %7311
        %v7313 = vadd.f32 %v6671, %v6672
        %7314 = vadd.xlane.f32.xlu0 %v7313
        %v7315 = vpop.xlane.xlu0 %7314
        %v7316 = vadd.f32 %v6673, %v6674
        %7317 = vadd.xlane.f32.xlu0 %v7316
        %v7318 = vpop.xlane.xlu0 %7317
        %v7319 = vadd.f32 %v6675, %v6676
        %7320 = vadd.xlane.f32.xlu0 %v7319
        %v7321 = vpop.xlane.xlu0 %7320
        %v7322 = vadd.f32 %v6677, %v6678
        %7323 = vadd.xlane.f32.xlu0 %v7322
        %v7324 = vpop.xlane.xlu0 %7323
        %v7325 = vadd.f32 %v6679, %v6680
        %7326 = vadd.xlane.f32.xlu0 %v7325
        %v7327 = vpop.xlane.xlu0 %7326
        %v7328 = vadd.f32 %v6681, %v6682
        %7329 = vadd.xlane.f32.xlu0 %v7328
        %v7330 = vpop.xlane.xlu0 %7329
        %v7331 = vadd.f32 %v6683, %v6684
        %7332 = vadd.xlane.f32.xlu0 %v7331
        %v7333 = vpop.xlane.xlu0 %7332
        %v7334 = vadd.f32 %v6685, %v6686
        %7335 = vadd.xlane.f32.xlu0 %v7334
        %v7336 = vpop.xlane.xlu0 %7335
        %v7337 = vadd.f32 %v6687, %v6688
        %7338 = vadd.xlane.f32.xlu0 %v7337
        %v7339 = vpop.xlane.xlu0 %7338
        %v7340 = vadd.f32 %v6689, %v6690
        %7341 = vadd.xlane.f32.xlu0 %v7340
        %v7342 = vpop.xlane.xlu0 %7341
        %v7343 = vadd.f32 %v6691, %v6692
        %7344 = vadd.xlane.f32.xlu0 %v7343
        %v7345 = vpop.xlane.xlu0 %7344
        %v7346 = vadd.f32 %v6693, %v6694
        %7347 = vadd.xlane.f32.xlu0 %v7346
        %v7348 = vpop.xlane.xlu0 %7347
        %v7349 = vadd.f32 %v6695, %v6696
        %7350 = vadd.xlane.f32.xlu0 %v7349
        %v7351 = vpop.xlane.xlu0 %7350
        %v7352 = vadd.f32 %v6697, %v6698
        %7353 = vadd.xlane.f32.xlu0 %v7352
        %v7354 = vpop.xlane.xlu0 %7353
        %v7355 = vadd.f32 %v6699, %v6700
        %7356 = vadd.xlane.f32.xlu0 %v7355
        %v7357 = vpop.xlane.xlu0 %7356
        %v7358 = vadd.f32 %v6701, %v6702
        %7359 = vadd.xlane.f32.xlu0 %v7358
        %v7360 = vpop.xlane.xlu0 %7359
        %v7361 = vadd.f32 %v6703, %v6704
        %7362 = vadd.xlane.f32.xlu0 %v7361
        %v7363 = vpop.xlane.xlu0 %7362
        %v7364 = vadd.f32 %v6705, %v6706
        %7365 = vadd.xlane.f32.xlu0 %v7364
        %v7366 = vpop.xlane.xlu0 %7365
        %v7367 = vadd.f32 %v6707, %v6708
        %7368 = vadd.xlane.f32.xlu0 %v7367
        %v7369 = vpop.xlane.xlu0 %7368
        %v7370 = vadd.f32 %v6709, %v6710
        %7371 = vadd.xlane.f32.xlu0 %v7370
        %v7372 = vpop.xlane.xlu0 %7371
        %v7373 = vadd.f32 %v6711, %v6712
        %7374 = vadd.xlane.f32.xlu0 %v7373
        %v7375 = vpop.xlane.xlu0 %7374
        %v7376 = vadd.f32 %v6713, %v6714
        %7377 = vadd.xlane.f32.xlu0 %v7376
        %v7378 = vpop.xlane.xlu0 %7377
        %v7379 = vadd.f32 %v6715, %v6716
        %7380 = vadd.xlane.f32.xlu0 %v7379
        %v7381 = vpop.xlane.xlu0 %7380
        %v7382 = vadd.f32 %v6717, %v6718
        %7383 = vadd.xlane.f32.xlu0 %v7382
        %v7384 = vpop.xlane.xlu0 %7383
        %v7385 = vadd.f32 %v6719, %v6720
        %7386 = vadd.xlane.f32.xlu0 %v7385
        %v7387 = vpop.xlane.xlu0 %7386
        %v7388 = vadd.f32 %v6721, %v6722
        %7389 = vadd.xlane.f32.xlu0 %v7388
        %v7390 = vpop.xlane.xlu0 %7389
        %v7391 = vadd.f32 %v6723, %v6724
        %7392 = vadd.xlane.f32.xlu0 %v7391
        %v7393 = vpop.xlane.xlu0 %7392
        %v7394 = vadd.f32 %v6725, %v6726
        %7395 = vadd.xlane.f32.xlu0 %v7394
        %v7396 = vpop.xlane.xlu0 %7395
        %v7397 = vadd.f32 %v6727, %v6728
        %7398 = vadd.xlane.f32.xlu0 %v7397
        %v7399 = vpop.xlane.xlu0 %7398
        %v7400 = vadd.f32 %v6729, %v6730
        %7401 = vadd.xlane.f32.xlu0 %v7400
        %v7402 = vpop.xlane.xlu0 %7401
        %v7403 = vadd.f32 %v6731, %v6732
        %7404 = vadd.xlane.f32.xlu0 %v7403
        %v7405 = vpop.xlane.xlu0 %7404
        %v7406 = vadd.f32 %v6733, %v6734
        %7407 = vadd.xlane.f32.xlu0 %v7406
        %v7408 = vpop.xlane.xlu0 %7407
        %v7409 = vadd.f32 %v6735, %v6736
        %7410 = vadd.xlane.f32.xlu0 %v7409
        %v7411 = vpop.xlane.xlu0 %7410
        %v7412 = vadd.f32 %v6737, %v6738
        %7413 = vadd.xlane.f32.xlu0 %v7412
        %v7414 = vpop.xlane.xlu0 %7413
        %v7415 = vadd.f32 %v6739, %v6740
        %7416 = vadd.xlane.f32.xlu0 %v7415
        %v7417 = vpop.xlane.xlu0 %7416
        %v7418 = vadd.f32 %v6741, %v6742
        %7419 = vadd.xlane.f32.xlu0 %v7418
        %v7420 = vpop.xlane.xlu0 %7419
        %v7421 = vadd.f32 %v6743, %v6744
        %7422 = vadd.xlane.f32.xlu0 %v7421
        %v7423 = vpop.xlane.xlu0 %7422
        %v7424 = vadd.f32 %v6745, %v6746
        %7425 = vadd.xlane.f32.xlu0 %v7424
        %v7426 = vpop.xlane.xlu0 %7425
        %v7427 = vadd.f32 %v6747, %v6748
        %7428 = vadd.xlane.f32.xlu0 %v7427
        %v7429 = vpop.xlane.xlu0 %7428
        %v7430 = vadd.f32 %v6749, %v6750
        %7431 = vadd.xlane.f32.xlu0 %v7430
        %v7432 = vpop.xlane.xlu0 %7431
        %v7433 = vadd.f32 %v6751, %v6752
        %7434 = vadd.xlane.f32.xlu0 %v7433
        %v7435 = vpop.xlane.xlu0 %7434
        %v7436 = vadd.f32 %v6753, %v6754
        %7437 = vadd.xlane.f32.xlu0 %v7436
        %v7438 = vpop.xlane.xlu0 %7437
        %v7439 = vadd.f32 %v6755, %v6756
        %7440 = vadd.xlane.f32.xlu0 %v7439
        %v7441 = vpop.xlane.xlu0 %7440
        %v7442 = vadd.f32 %v6757, %v6758
        %7443 = vadd.xlane.f32.xlu0 %v7442
        %v7444 = vpop.xlane.xlu0 %7443
        %v7445 = vadd.f32 %v6759, %v6760
        %7446 = vadd.xlane.f32.xlu0 %v7445
        %v7447 = vpop.xlane.xlu0 %7446
        %v7448 = vadd.f32 %v6761, %v6762
        %7449 = vadd.xlane.f32.xlu0 %v7448
        %v7450 = vpop.xlane.xlu0 %7449
        %v7451 = vadd.f32 %v6763, %v6764
        %7452 = vadd.xlane.f32.xlu0 %v7451
        %v7453 = vpop.xlane.xlu0 %7452
        %v7454 = vadd.f32 %v6765, %v6766
        %7455 = vadd.xlane.f32.xlu0 %v7454
        %v7456 = vpop.xlane.xlu0 %7455
        %v7457 = vadd.f32 %v6767, %v6768
        %7458 = vadd.xlane.f32.xlu0 %v7457
        %v7459 = vpop.xlane.xlu0 %7458
        %v7460 = vadd.f32 %v6769, %v6770
        %7461 = vadd.xlane.f32.xlu0 %v7460
        %v7462 = vpop.xlane.xlu0 %7461
        %v7463 = vadd.f32 %v6771, %v6772
        %7464 = vadd.xlane.f32.xlu0 %v7463
        %v7465 = vpop.xlane.xlu0 %7464
        %v7466 = vadd.f32 %v6773, %v6774
        %7467 = vadd.xlane.f32.xlu0 %v7466
        %v7468 = vpop.xlane.xlu0 %7467
        %v7469 = vadd.f32 %v6775, %v6776
        %7470 = vadd.xlane.f32.xlu0 %v7469
        %v7471 = vpop.xlane.xlu0 %7470
        %v7472 = vadd.f32 %v6777, %v6778
        %7473 = vadd.xlane.f32.xlu0 %v7472
        %v7474 = vpop.xlane.xlu0 %7473
        %v7475 = vadd.f32 %v6779, %v6780
        %7476 = vadd.xlane.f32.xlu0 %v7475
        %v7477 = vpop.xlane.xlu0 %7476
        %v7478 = vadd.f32 %v6781, %v6782
        %7479 = vadd.xlane.f32.xlu0 %v7478
        %v7480 = vpop.xlane.xlu0 %7479
        %v7481 = vadd.f32 %v6783, %v6784
        %7482 = vadd.xlane.f32.xlu0 %v7481
        %v7483 = vpop.xlane.xlu0 %7482
        %v7484 = vadd.f32 %v6785, %v6786
        %7485 = vadd.xlane.f32.xlu0 %v7484
        %v7486 = vpop.xlane.xlu0 %7485
        %v7487 = vadd.f32 %v6787, %v6788
        %7488 = vadd.xlane.f32.xlu0 %v7487
        %v7489 = vpop.xlane.xlu0 %7488
        %v7490 = vadd.f32 %v6789, %v6790
        %7491 = vadd.xlane.f32.xlu0 %v7490
        %v7492 = vpop.xlane.xlu0 %7491
        %v7493 = vadd.f32 %v6791, %v6792
        %7494 = vadd.xlane.f32.xlu0 %v7493
        %v7495 = vpop.xlane.xlu0 %7494
        %v7496 = vadd.f32 %v6793, %v6794
        %7497 = vadd.xlane.f32.xlu0 %v7496
        %v7498 = vpop.xlane.xlu0 %7497
        %v7499 = vadd.f32 %v6795, %v6796
        %7500 = vadd.xlane.f32.xlu0 %v7499
        %v7501 = vpop.xlane.xlu0 %7500
        %v7502 = vadd.f32 %v6797, %v6798
        %7503 = vadd.xlane.f32.xlu0 %v7502
        %v7504 = vpop.xlane.xlu0 %7503
        %v7505 = vadd.f32 %v6799, %v6800
        %7506 = vadd.xlane.f32.xlu0 %v7505
        %v7507 = vpop.xlane.xlu0 %7506
        %v7508 = vadd.f32 %v6801, %v6802
        %7509 = vadd.xlane.f32.xlu0 %v7508
        %v7510 = vpop.xlane.xlu0 %7509
        %v7511 = vadd.f32 %v6803, %v6804
        %7512 = vadd.xlane.f32.xlu0 %v7511
        %v7513 = vpop.xlane.xlu0 %7512
        %v7514 = vadd.f32 %v6805, %v6806
        %7515 = vadd.xlane.f32.xlu0 %v7514
        %v7516 = vpop.xlane.xlu0 %7515
        %v7517 = vadd.f32 %v6807, %v6808
        %7518 = vadd.xlane.f32.xlu0 %v7517
        %v7519 = vpop.xlane.xlu0 %7518
        %v7520 = vadd.f32 %v6809, %v6810
        %7521 = vadd.xlane.f32.xlu0 %v7520
        %v7522 = vpop.xlane.xlu0 %7521
        %v7523 = vadd.f32 %v6811, %v6812
        %7524 = vadd.xlane.f32.xlu0 %v7523
        %v7525 = vpop.xlane.xlu0 %7524
        %v7526 = vadd.f32 %v6813, %v6814
        %7527 = vadd.xlane.f32.xlu0 %v7526
        %v7528 = vpop.xlane.xlu0 %7527
        %v7529 = vadd.f32 %v6815, %v6816
        %7530 = vadd.xlane.f32.xlu0 %v7529
        %v7531 = vpop.xlane.xlu0 %7530
        %v7532 = vadd.f32 %v6817, %v6818
        %7533 = vadd.xlane.f32.xlu0 %v7532
        %v7534 = vpop.xlane.xlu0 %7533
        %v7535 = vadd.f32 %v6819, %v6820
        %7536 = vadd.xlane.f32.xlu0 %v7535
        %v7537 = vpop.xlane.xlu0 %7536
        %v7538 = vadd.f32 %v6821, %v6822
        %7539 = vadd.xlane.f32.xlu0 %v7538
        %v7540 = vpop.xlane.xlu0 %7539
        %v7541 = vadd.f32 %v6823, %v6824
        %7542 = vadd.xlane.f32.xlu0 %v7541
        %v7543 = vpop.xlane.xlu0 %7542
        %v7544 = vadd.f32 %v6825, %v6826
        %7545 = vadd.xlane.f32.xlu0 %v7544
        %v7546 = vpop.xlane.xlu0 %7545
        %v7547 = vadd.f32 %v6827, %v6828
        %7548 = vadd.xlane.f32.xlu0 %v7547
        %v7549 = vpop.xlane.xlu0 %7548
        %v7550 = vadd.f32 %v6829, %v6830
        %7551 = vadd.xlane.f32.xlu0 %v7550
        %v7552 = vpop.xlane.xlu0 %7551
        %v7553 = vadd.f32 %v6831, %v6832
        %7554 = vadd.xlane.f32.xlu0 %v7553
        %v7555 = vpop.xlane.xlu0 %7554
        %v7556 = vadd.f32 %v6833, %v6834
        %7557 = vadd.xlane.f32.xlu0 %v7556
        %v7558 = vpop.xlane.xlu0 %7557
        %v7559 = vadd.f32 %v6835, %v6836
        %7560 = vadd.xlane.f32.xlu0 %v7559
        %v7561 = vpop.xlane.xlu0 %7560
        %v7562 = vadd.f32 %v6837, %v6838
        %7563 = vadd.xlane.f32.xlu0 %v7562
        %v7564 = vpop.xlane.xlu0 %7563
        %v7565 = vadd.f32 %v6839, %v6840
        %7566 = vadd.xlane.f32.xlu0 %v7565
        %v7567 = vpop.xlane.xlu0 %7566
        %v7568 = vadd.f32 %v6841, %v6842
        %7569 = vadd.xlane.f32.xlu0 %v7568
        %v7570 = vpop.xlane.xlu0 %7569
        %v7571 = vadd.f32 %v6843, %v6844
        %7572 = vadd.xlane.f32.xlu0 %v7571
        %v7573 = vpop.xlane.xlu0 %7572
        %v7574 = vadd.f32 %v6845, %v6846
        %7575 = vadd.xlane.f32.xlu0 %v7574
        %v7576 = vpop.xlane.xlu0 %7575
        %v7577 = vadd.f32 %v6847, %v6848
        %7578 = vadd.xlane.f32.xlu0 %v7577
        %v7579 = vpop.xlane.xlu0 %7578
        %v7580 = vadd.f32 %v6849, %v6850
        %7581 = vadd.xlane.f32.xlu0 %v7580
        %v7582 = vpop.xlane.xlu0 %7581
        %v7583 = vadd.f32 %v6851, %v6852
        %7584 = vadd.xlane.f32.xlu0 %v7583
        %v7585 = vpop.xlane.xlu0 %7584
        %v7586 = vadd.f32 %v6853, %v6854
        %7587 = vadd.xlane.f32.xlu0 %v7586
        %v7588 = vpop.xlane.xlu0 %7587
        %v7589 = vadd.f32 %v6855, %v6856
        %7590 = vadd.xlane.f32.xlu0 %v7589
        %v7591 = vpop.xlane.xlu0 %7590
        %v7592 = vadd.f32 %v6857, %v6858
        %7593 = vadd.xlane.f32.xlu0 %v7592
        %v7594 = vpop.xlane.xlu0 %7593
        %v7595 = vadd.f32 %v6859, %v6860
        %7596 = vadd.xlane.f32.xlu0 %v7595
        %v7597 = vpop.xlane.xlu0 %7596
        %v7598 = vadd.f32 %v6861, %v6862
        %7599 = vadd.xlane.f32.xlu0 %v7598
        %v7600 = vpop.xlane.xlu0 %7599
        %v7601 = vadd.f32 %v6863, %v6864
        %7602 = vadd.xlane.f32.xlu0 %v7601
        %v7603 = vpop.xlane.xlu0 %7602
        %v7604 = vadd.f32 %v6865, %v6866
        %7605 = vadd.xlane.f32.xlu0 %v7604
        %v7606 = vpop.xlane.xlu0 %7605
        %v7607 = vadd.f32 %v6867, %v6868
        %7608 = vadd.xlane.f32.xlu0 %v7607
        %v7609 = vpop.xlane.xlu0 %7608
        %v7610 = vadd.f32 %v6869, %v6870
        %7611 = vadd.xlane.f32.xlu0 %v7610
        %v7612 = vpop.xlane.xlu0 %7611
        %v7613 = vadd.f32 %v6871, %v6872
        %7614 = vadd.xlane.f32.xlu0 %v7613
        %v7615 = vpop.xlane.xlu0 %7614
        %v7616 = vadd.f32 %v6873, %v6874
        %7617 = vadd.xlane.f32.xlu0 %v7616
        %v7618 = vpop.xlane.xlu0 %7617
        %v7619 = vadd.f32 %v6875, %v6876
        %7620 = vadd.xlane.f32.xlu0 %v7619
        %v7621 = vpop.xlane.xlu0 %7620
        %v7622 = vadd.f32 %v6877, %v6878
        %7623 = vadd.xlane.f32.xlu0 %v7622
        %v7624 = vpop.xlane.xlu0 %7623
        %v7625 = vadd.f32 %v6879, %v6880
        %7626 = vadd.xlane.f32.xlu0 %v7625
        %v7627 = vpop.xlane.xlu0 %7626
        %v7628 = vadd.f32 %v6881, %v6882
        %7629 = vadd.xlane.f32.xlu0 %v7628
        %v7630 = vpop.xlane.xlu0 %7629
        %v7631 = vadd.f32 %v6883, %v6884
        %7632 = vadd.xlane.f32.xlu0 %v7631
        %v7633 = vpop.xlane.xlu0 %7632
        %v7634 = vadd.f32 %v6885, %v6886
        %7635 = vadd.xlane.f32.xlu0 %v7634
        %v7636 = vpop.xlane.xlu0 %7635
        %v7637 = vadd.f32 %v6887, %v6888
        %7638 = vadd.xlane.f32.xlu0 %v7637
        %v7639 = vpop.xlane.xlu0 %7638
        %v7640 = vadd.f32 %v6889, %v6890
        %7641 = vadd.xlane.f32.xlu0 %v7640
        %v7642 = vpop.xlane.xlu0 %7641
        %v7643 = vadd.f32 %v6891, %v6892
        %7644 = vadd.xlane.f32.xlu0 %v7643
        %v7645 = vpop.xlane.xlu0 %7644
        %v7646 = vadd.f32 %v6893, %v6894
        %7647 = vadd.xlane.f32.xlu0 %v7646
        %v7648 = vpop.xlane.xlu0 %7647
        %v7649 = vadd.f32 %v6895, %v6896
        %7650 = vadd.xlane.f32.xlu0 %v7649
        %v7651 = vpop.xlane.xlu0 %7650
        %v7652 = vadd.f32 %v6897, %v6898
        %7653 = vadd.xlane.f32.xlu0 %v7652
        %v7654 = vpop.xlane.xlu0 %7653
        %v7655 = vadd.f32 %v6899, %v6900
        %7656 = vadd.xlane.f32.xlu0 %v7655
        %v7657 = vpop.xlane.xlu0 %7656
        %v7658 = vadd.f32 %v6901, %v6902
        %7659 = vadd.xlane.f32.xlu0 %v7658
        %v7660 = vpop.xlane.xlu0 %7659
        %v7661 = vadd.f32 %v6903, %v6904
        %7662 = vadd.xlane.f32.xlu0 %v7661
        %v7663 = vpop.xlane.xlu0 %7662
        %v7664 = vadd.f32 %v6905, %v6906
        %7665 = vadd.xlane.f32.xlu0 %v7664
        %v7666 = vpop.xlane.xlu0 %7665
        %v7667 = vadd.f32 %v6907, %v6908
        %7668 = vadd.xlane.f32.xlu0 %v7667
        %v7669 = vpop.xlane.xlu0 %7668
        %v7670 = vadd.f32 %v6909, %v6910
        %7671 = vadd.xlane.f32.xlu0 %v7670
        %v7672 = vpop.xlane.xlu0 %7671
        %v7673 = vadd.f32 %v6911, %v6912
        %7674 = vadd.xlane.f32.xlu0 %v7673
        %v7675 = vpop.xlane.xlu0 %7674
        %v7676 = vadd.f32 %v6913, %v6914
        %7677 = vadd.xlane.f32.xlu0 %v7676
        %v7678 = vpop.xlane.xlu0 %7677
        %v7679 = vadd.f32 %v6915, %v6916
        %7680 = vadd.xlane.f32.xlu0 %v7679
        %v7681 = vpop.xlane.xlu0 %7680
        %v7682 = vadd.f32 %v6917, %v6918
        %7683 = vadd.xlane.f32.xlu0 %v7682
        %v7684 = vpop.xlane.xlu0 %7683
        %v7685 = vadd.f32 %v6919, %v6920
        %7686 = vadd.xlane.f32.xlu0 %v7685
        %v7687 = vpop.xlane.xlu0 %7686
        %v7688 = vadd.f32 %v6921, %v6922
        %7689 = vadd.xlane.f32.xlu0 %v7688
        %v7690 = vpop.xlane.xlu0 %7689
        %v7691 = vrcp.pop %v6925
        %v7692 = vrcp.pop %v6928
        %v7693 = vrcp.pop %v6931
        %v7694 = vrcp.pop %v6934
        %v7695 = vrcp.pop %v6937
        %v7696 = vrcp.pop %v6940
        %v7697 = vrcp.pop %v6943
        %v7698 = vrcp.pop %v6946
        %v7699 = vrcp.pop %v6949
        %v7700 = vrcp.pop %v6952
        %v7701 = vrcp.pop %v6955
        %v7702 = vrcp.pop %v6958
        %v7703 = vrcp.pop %v6961
        %v7704 = vrcp.pop %v6964
        %v7705 = vrcp.pop %v6967
        %v7706 = vrcp.pop %v6970
        %v7707 = vrcp.pop %v6973
        %v7708 = vrcp.pop %v6976
        %v7709 = vrcp.pop %v6979
        %v7710 = vrcp.pop %v6982
        %v7711 = vrcp.pop %v6985
        %v7712 = vrcp.pop %v6988
        %v7713 = vrcp.pop %v6991
        %v7714 = vrcp.pop %v6994
        %v7715 = vrcp.pop %v6997
        %v7716 = vrcp.pop %v7000
        %v7717 = vrcp.pop %v7003
        %v7718 = vrcp.pop %v7006
        %v7719 = vrcp.pop %v7009
        %v7720 = vrcp.pop %v7012
        %v7721 = vrcp.pop %v7015
        %v7722 = vrcp.pop %v7018
        %v7723 = vrcp.pop %v7021
        %v7724 = vrcp.pop %v7024
        %v7725 = vrcp.pop %v7027
        %v7726 = vrcp.pop %v7030
        %v7727 = vrcp.pop %v7033
        %v7728 = vrcp.pop %v7036
        %v7729 = vrcp.pop %v7039
        %v7730 = vrcp.pop %v7042
        %v7731 = vrcp.pop %v7045
        %v7732 = vrcp.pop %v7048
        %v7733 = vrcp.pop %v7051
        %v7734 = vrcp.pop %v7054
        %v7735 = vrcp.pop %v7057
        %v7736 = vrcp.pop %v7060
        %v7737 = vrcp.pop %v7063
        %v7738 = vrcp.pop %v7066
        %v7739 = vrcp.pop %v7069
        %v7740 = vrcp.pop %v7072
        %v7741 = vrcp.pop %v7075
        %v7742 = vrcp.pop %v7078
        %v7743 = vrcp.pop %v7081
        %v7744 = vrcp.pop %v7084
        %v7745 = vrcp.pop %v7087
        %v7746 = vrcp.pop %v7090
        %v7747 = vrcp.pop %v7093
        %v7748 = vrcp.pop %v7096
        %v7749 = vrcp.pop %v7099
        %v7750 = vrcp.pop %v7102
        %v7751 = vrcp.pop %v7105
        %v7752 = vrcp.pop %v7108
        %v7753 = vrcp.pop %v7111
        %v7754 = vrcp.pop %v7114
        %v7755 = vrcp.pop %v7117
        %v7756 = vrcp.pop %v7120
        %v7757 = vrcp.pop %v7123
        %v7758 = vrcp.pop %v7126
        %v7759 = vrcp.pop %v7129
        %v7760 = vrcp.pop %v7132
        %v7761 = vrcp.pop %v7135
        %v7762 = vrcp.pop %v7138
        %v7763 = vrcp.pop %v7141
        %v7764 = vrcp.pop %v7144
        %v7765 = vrcp.pop %v7147
        %v7766 = vrcp.pop %v7150
        %v7767 = vrcp.pop %v7153
        %v7768 = vrcp.pop %v7156
        %v7769 = vrcp.pop %v7159
        %v7770 = vrcp.pop %v7162
        %v7771 = vrcp.pop %v7165
        %v7772 = vrcp.pop %v7168
        %v7773 = vrcp.pop %v7171
        %v7774 = vrcp.pop %v7174
        %v7775 = vrcp.pop %v7177
        %v7776 = vrcp.pop %v7180
        %v7777 = vrcp.pop %v7183
        %v7778 = vrcp.pop %v7186
        %v7779 = vrcp.pop %v7189
        %v7780 = vrcp.pop %v7192
        %v7781 = vrcp.pop %v7195
        %v7782 = vrcp.pop %v7198
        %v7783 = vrcp.pop %v7201
        %v7784 = vrcp.pop %v7204
        %v7785 = vrcp.pop %v7207
        %v7786 = vrcp.pop %v7210
        %v7787 = vrcp.pop %v7213
        %v7788 = vrcp.pop %v7216
        %v7789 = vrcp.pop %v7219
        %v7790 = vrcp.pop %v7222
        %v7791 = vrcp.pop %v7225
        %v7792 = vrcp.pop %v7228
        %v7793 = vrcp.pop %v7231
        %v7794 = vrcp.pop %v7234
        %v7795 = vrcp.pop %v7237
        %v7796 = vrcp.pop %v7240
        %v7797 = vrcp.pop %v7243
        %v7798 = vrcp.pop %v7246
        %v7799 = vrcp.pop %v7249
        %v7800 = vrcp.pop %v7252
        %v7801 = vrcp.pop %v7255
        %v7802 = vrcp.pop %v7258
        %v7803 = vrcp.pop %v7261
        %v7804 = vrcp.pop %v7264
        %v7805 = vrcp.pop %v7267
        %v7806 = vrcp.pop %v7270
        %v7807 = vrcp.pop %v7273
        %v7808 = vrcp.pop %v7276
        %v7809 = vrcp.pop %v7279
        %v7810 = vrcp.pop %v7282
        %v7811 = vrcp.pop %v7285
        %v7812 = vrcp.pop %v7288
        %v7813 = vrcp.pop %v7291
        %v7814 = vrcp.pop %v7294
        %v7815 = vrcp.pop %v7297
        %v7816 = vrcp.pop %v7300
        %v7817 = vrcp.pop %v7303
        %v7818 = vrcp.pop %v7306
        %v7819 = vrcp.pop %v7309
        %v7820 = vrcp.pop %v7312
        %v7821 = vrcp.pop %v7315
        %v7822 = vrcp.pop %v7318
        %v7823 = vrcp.pop %v7321
        %v7824 = vrcp.pop %v7324
        %v7825 = vrcp.pop %v7327
        %v7826 = vrcp.pop %v7330
        %v7827 = vrcp.pop %v7333
        %v7828 = vrcp.pop %v7336
        %v7829 = vrcp.pop %v7339
        %v7830 = vrcp.pop %v7342
        %v7831 = vrcp.pop %v7345
        %v7832 = vrcp.pop %v7348
        %v7833 = vrcp.pop %v7351
        %v7834 = vrcp.pop %v7354
        %v7835 = vrcp.pop %v7357
        %v7836 = vrcp.pop %v7360
        %v7837 = vrcp.pop %v7363
        %v7838 = vrcp.pop %v7366
        %v7839 = vrcp.pop %v7369
        %v7840 = vrcp.pop %v7372
        %v7841 = vrcp.pop %v7375
        %v7842 = vrcp.pop %v7378
        %v7843 = vrcp.pop %v7381
        %v7844 = vrcp.pop %v7384
        %v7845 = vrcp.pop %v7387
        %v7846 = vrcp.pop %v7390
        %v7847 = vrcp.pop %v7393
        %v7848 = vrcp.pop %v7396
        %v7849 = vrcp.pop %v7399
        %v7850 = vrcp.pop %v7402
        %v7851 = vrcp.pop %v7405
        %v7852 = vrcp.pop %v7408
        %v7853 = vrcp.pop %v7411
        %v7854 = vrcp.pop %v7414
        %v7855 = vrcp.pop %v7417
        %v7856 = vrcp.pop %v7420
        %v7857 = vrcp.pop %v7423
        %v7858 = vrcp.pop %v7426
        %v7859 = vrcp.pop %v7429
        %v7860 = vrcp.pop %v7432
        %v7861 = vrcp.pop %v7435
        %v7862 = vrcp.pop %v7438
        %v7863 = vrcp.pop %v7441
        %v7864 = vrcp.pop %v7444
        %v7865 = vrcp.pop %v7447
        %v7866 = vrcp.pop %v7450
        %v7867 = vrcp.pop %v7453
        %v7868 = vrcp.pop %v7456
        %v7869 = vrcp.pop %v7459
        %v7870 = vrcp.pop %v7462
        %v7871 = vrcp.pop %v7465
        %v7872 = vrcp.pop %v7468
        %v7873 = vrcp.pop %v7471
        %v7874 = vrcp.pop %v7474
        %v7875 = vrcp.pop %v7477
        %v7876 = vrcp.pop %v7480
        %v7877 = vrcp.pop %v7483
        %v7878 = vrcp.pop %v7486
        %v7879 = vrcp.pop %v7489
        %v7880 = vrcp.pop %v7492
        %v7881 = vrcp.pop %v7495
        %v7882 = vrcp.pop %v7498
        %v7883 = vrcp.pop %v7501
        %v7884 = vrcp.pop %v7504
        %v7885 = vrcp.pop %v7507
        %v7886 = vrcp.pop %v7510
        %v7887 = vrcp.pop %v7513
        %v7888 = vrcp.pop %v7516
        %v7889 = vrcp.pop %v7519
        %v7890 = vrcp.pop %v7522
        %v7891 = vrcp.pop %v7525
        %v7892 = vrcp.pop %v7528
        %v7893 = vrcp.pop %v7531
        %v7894 = vrcp.pop %v7534
        %v7895 = vrcp.pop %v7537
        %v7896 = vrcp.pop %v7540
        %v7897 = vrcp.pop %v7543
        %v7898 = vrcp.pop %v7546
        %v7899 = vrcp.pop %v7549
        %v7900 = vrcp.pop %v7552
        %v7901 = vrcp.pop %v7555
        %v7902 = vrcp.pop %v7558
        %v7903 = vrcp.pop %v7561
        %v7904 = vrcp.pop %v7564
        %v7905 = vrcp.pop %v7567
        %v7906 = vrcp.pop %v7570
        %v7907 = vrcp.pop %v7573
        %v7908 = vrcp.pop %v7576
        %v7909 = vrcp.pop %v7579
        %v7910 = vrcp.pop %v7582
        %v7911 = vrcp.pop %v7585
        %v7912 = vrcp.pop %v7588
        %v7913 = vrcp.pop %v7591
        %v7914 = vrcp.pop %v7594
        %v7915 = vrcp.pop %v7597
        %v7916 = vrcp.pop %v7600
        %v7917 = vrcp.pop %v7603
        %v7918 = vrcp.pop %v7606
        %v7919 = vrcp.pop %v7609
        %v7920 = vrcp.pop %v7612
        %v7921 = vrcp.pop %v7615
        %v7922 = vrcp.pop %v7618
        %v7923 = vrcp.pop %v7621
        %v7924 = vrcp.pop %v7624
        %v7925 = vrcp.pop %v7627
        %v7926 = vrcp.pop %v7630
        %v7927 = vrcp.pop %v7633
        %v7928 = vrcp.pop %v7636
        %v7929 = vrcp.pop %v7639
        %v7930 = vrcp.pop %v7642
        %v7931 = vrcp.pop %v7645
        %v7932 = vrcp.pop %v7648
        %v7933 = vrcp.pop %v7651
        %v7934 = vrcp.pop %v7654
        %v7935 = vrcp.pop %v7657
        %v7936 = vrcp.pop %v7660
        %v7937 = vrcp.pop %v7663
        %v7938 = vrcp.pop %v7666
        %v7939 = vrcp.pop %v7669
        %v7940 = vrcp.pop %v7672
        %v7941 = vrcp.pop %v7675
        %v7942 = vrcp.pop %v7678
        %v7943 = vrcp.pop %v7681
        %v7944 = vrcp.pop %v7684
        %v7945 = vrcp.pop %v7687
        %v7946 = vrcp.pop %v7690
        %v7947 = vpack.c.bf16 %v7692, %v7691
        %v7948 = vpack.c.bf16 %v7694, %v7693
        %v7949 = vpack.c.bf16 %v7696, %v7695
        %v7950 = vpack.c.bf16 %v7698, %v7697
        %v7951 = vpack.c.bf16 %v7700, %v7699
        %v7952 = vpack.c.bf16 %v7702, %v7701
        %v7953 = vpack.c.bf16 %v7704, %v7703
        %v7954 = vpack.c.bf16 %v7706, %v7705
        %v7955 = vpack.c.bf16 %v7708, %v7707
        %v7956 = vpack.c.bf16 %v7710, %v7709
        %v7957 = vpack.c.bf16 %v7712, %v7711
        %v7958 = vpack.c.bf16 %v7714, %v7713
        %v7959 = vpack.c.bf16 %v7716, %v7715
        %v7960 = vpack.c.bf16 %v7718, %v7717
        %v7961 = vpack.c.bf16 %v7720, %v7719
        %v7962 = vpack.c.bf16 %v7722, %v7721
        %v7963 = vpack.c.bf16 %v7724, %v7723
        %v7964 = vpack.c.bf16 %v7726, %v7725
        %v7965 = vpack.c.bf16 %v7728, %v7727
        %v7966 = vpack.c.bf16 %v7730, %v7729
        %v7967 = vpack.c.bf16 %v7732, %v7731
        %v7968 = vpack.c.bf16 %v7734, %v7733
        %v7969 = vpack.c.bf16 %v7736, %v7735
        %v7970 = vpack.c.bf16 %v7738, %v7737
        %v7971 = vpack.c.bf16 %v7740, %v7739
        %v7972 = vpack.c.bf16 %v7742, %v7741
        %v7973 = vpack.c.bf16 %v7744, %v7743
        %v7974 = vpack.c.bf16 %v7746, %v7745
        %v7975 = vpack.c.bf16 %v7748, %v7747
        %v7976 = vpack.c.bf16 %v7750, %v7749
        %v7977 = vpack.c.bf16 %v7752, %v7751
        %v7978 = vpack.c.bf16 %v7754, %v7753
        %v7979 = vpack.c.bf16 %v7756, %v7755
        %v7980 = vpack.c.bf16 %v7758, %v7757
        %v7981 = vpack.c.bf16 %v7760, %v7759
        %v7982 = vpack.c.bf16 %v7762, %v7761
        %v7983 = vpack.c.bf16 %v7764, %v7763
        %v7984 = vpack.c.bf16 %v7766, %v7765
        %v7985 = vpack.c.bf16 %v7768, %v7767
        %v7986 = vpack.c.bf16 %v7770, %v7769
        %v7987 = vpack.c.bf16 %v7772, %v7771
        %v7988 = vpack.c.bf16 %v7774, %v7773
        %v7989 = vpack.c.bf16 %v7776, %v7775
        %v7990 = vpack.c.bf16 %v7778, %v7777
        %v7991 = vpack.c.bf16 %v7780, %v7779
        %v7992 = vpack.c.bf16 %v7782, %v7781
        %v7993 = vpack.c.bf16 %v7784, %v7783
        %v7994 = vpack.c.bf16 %v7786, %v7785
        %v7995 = vpack.c.bf16 %v7788, %v7787
        %v7996 = vpack.c.bf16 %v7790, %v7789
        %v7997 = vpack.c.bf16 %v7792, %v7791
        %v7998 = vpack.c.bf16 %v7794, %v7793
        %v7999 = vpack.c.bf16 %v7796, %v7795
        %v8000 = vpack.c.bf16 %v7798, %v7797
        %v8001 = vpack.c.bf16 %v7800, %v7799
        %v8002 = vpack.c.bf16 %v7802, %v7801
        %v8003 = vpack.c.bf16 %v7804, %v7803
        %v8004 = vpack.c.bf16 %v7806, %v7805
        %v8005 = vpack.c.bf16 %v7808, %v7807
        %v8006 = vpack.c.bf16 %v7810, %v7809
        %v8007 = vpack.c.bf16 %v7812, %v7811
        %v8008 = vpack.c.bf16 %v7814, %v7813
        %v8009 = vpack.c.bf16 %v7816, %v7815
        %v8010 = vpack.c.bf16 %v7818, %v7817
        %v8011 = vpack.c.bf16 %v7820, %v7819
        %v8012 = vpack.c.bf16 %v7822, %v7821
        %v8013 = vpack.c.bf16 %v7824, %v7823
        %v8014 = vpack.c.bf16 %v7826, %v7825
        %v8015 = vpack.c.bf16 %v7828, %v7827
        %v8016 = vpack.c.bf16 %v7830, %v7829
        %v8017 = vpack.c.bf16 %v7832, %v7831
        %v8018 = vpack.c.bf16 %v7834, %v7833
        %v8019 = vpack.c.bf16 %v7836, %v7835
        %v8020 = vpack.c.bf16 %v7838, %v7837
        %v8021 = vpack.c.bf16 %v7840, %v7839
        %v8022 = vpack.c.bf16 %v7842, %v7841
        %v8023 = vpack.c.bf16 %v7844, %v7843
        %v8024 = vpack.c.bf16 %v7846, %v7845
        %v8025 = vpack.c.bf16 %v7848, %v7847
        %v8026 = vpack.c.bf16 %v7850, %v7849
        %v8027 = vpack.c.bf16 %v7852, %v7851
        %v8028 = vpack.c.bf16 %v7854, %v7853
        %v8029 = vpack.c.bf16 %v7856, %v7855
        %v8030 = vpack.c.bf16 %v7858, %v7857
        %v8031 = vpack.c.bf16 %v7860, %v7859
        %v8032 = vpack.c.bf16 %v7862, %v7861
        %v8033 = vpack.c.bf16 %v7864, %v7863
        %v8034 = vpack.c.bf16 %v7866, %v7865
        %v8035 = vpack.c.bf16 %v7868, %v7867
        %v8036 = vpack.c.bf16 %v7870, %v7869
        %v8037 = vpack.c.bf16 %v7872, %v7871
        %v8038 = vpack.c.bf16 %v7874, %v7873
        %v8039 = vpack.c.bf16 %v7876, %v7875
        %v8040 = vpack.c.bf16 %v7878, %v7877
        %v8041 = vpack.c.bf16 %v7880, %v7879
        %v8042 = vpack.c.bf16 %v7882, %v7881
        %v8043 = vpack.c.bf16 %v7884, %v7883
        %v8044 = vpack.c.bf16 %v7886, %v7885
        %v8045 = vpack.c.bf16 %v7888, %v7887
        %v8046 = vpack.c.bf16 %v7890, %v7889
        %v8047 = vpack.c.bf16 %v7892, %v7891
        %v8048 = vpack.c.bf16 %v7894, %v7893
        %v8049 = vpack.c.bf16 %v7896, %v7895
        %v8050 = vpack.c.bf16 %v7898, %v7897
        %v8051 = vpack.c.bf16 %v7900, %v7899
        %v8052 = vpack.c.bf16 %v7902, %v7901
        %v8053 = vpack.c.bf16 %v7904, %v7903
        %v8054 = vpack.c.bf16 %v7906, %v7905
        %v8055 = vpack.c.bf16 %v7908, %v7907
        %v8056 = vpack.c.bf16 %v7910, %v7909
        %v8057 = vpack.c.bf16 %v7912, %v7911
        %v8058 = vpack.c.bf16 %v7914, %v7913
        %v8059 = vpack.c.bf16 %v7916, %v7915
        %v8060 = vpack.c.bf16 %v7918, %v7917
        %v8061 = vpack.c.bf16 %v7920, %v7919
        %v8062 = vpack.c.bf16 %v7922, %v7921
        %v8063 = vpack.c.bf16 %v7924, %v7923
        %v8064 = vpack.c.bf16 %v7926, %v7925
        %v8065 = vpack.c.bf16 %v7928, %v7927
        %v8066 = vpack.c.bf16 %v7930, %v7929
        %v8067 = vpack.c.bf16 %v7932, %v7931
        %v8068 = vpack.c.bf16 %v7934, %v7933
        %v8069 = vpack.c.bf16 %v7936, %v7935
        %v8070 = vpack.c.bf16 %v7938, %v7937
        %v8071 = vpack.c.bf16 %v7940, %v7939
        %v8072 = vpack.c.bf16 %v7942, %v7941
        %v8073 = vpack.c.bf16 %v7944, %v7943
        %v8074 = vpack.c.bf16 %v7946, %v7945
        %v8075 = vmul.bf16 %v5645, %v7947
        %v8076 = vmul.bf16 %v5648, %v7947
        %v8077 = vmul.bf16 %v5651, %v7948
        %v8078 = vmul.bf16 %v5654, %v7948
        %v8079 = vmul.bf16 %v5657, %v7949
        %v8080 = vmul.bf16 %v5660, %v7949
        %v8081 = vmul.bf16 %v5663, %v7950
        %v8082 = vmul.bf16 %v5666, %v7950
        %v8083 = vmul.bf16 %v5669, %v7951
        %v8084 = vmul.bf16 %v5672, %v7951
        %v8085 = vmul.bf16 %v5675, %v7952
        %v8086 = vmul.bf16 %v5678, %v7952
        %v8087 = vmul.bf16 %v5681, %v7953
        %v8088 = vmul.bf16 %v5684, %v7953
        %v8089 = vmul.bf16 %v5687, %v7954
        %v8090 = vmul.bf16 %v5690, %v7954
        %v8091 = vmul.bf16 %v5693, %v7955
        %v8092 = vmul.bf16 %v5696, %v7955
        %v8093 = vmul.bf16 %v5699, %v7956
        %v8094 = vmul.bf16 %v5702, %v7956
        %v8095 = vmul.bf16 %v5705, %v7957
        %v8096 = vmul.bf16 %v5708, %v7957
        %v8097 = vmul.bf16 %v5711, %v7958
        %v8098 = vmul.bf16 %v5714, %v7958
        %v8099 = vmul.bf16 %v5717, %v7959
        %v8100 = vmul.bf16 %v5720, %v7959
        %v8101 = vmul.bf16 %v5723, %v7960
        %v8102 = vmul.bf16 %v5726, %v7960
        %v8103 = vmul.bf16 %v5729, %v7961
        %v8104 = vmul.bf16 %v5732, %v7961
        %v8105 = vmul.bf16 %v5735, %v7962
        %v8106 = vmul.bf16 %v5738, %v7962
        %v8107 = vmul.bf16 %v5741, %v7963
        %v8108 = vmul.bf16 %v5744, %v7963
        %v8109 = vmul.bf16 %v5747, %v7964
        %v8110 = vmul.bf16 %v5750, %v7964
        %v8111 = vmul.bf16 %v5753, %v7965
        %v8112 = vmul.bf16 %v5756, %v7965
        %v8113 = vmul.bf16 %v5759, %v7966
        %v8114 = vmul.bf16 %v5762, %v7966
        %v8115 = vmul.bf16 %v5765, %v7967
        %v8116 = vmul.bf16 %v5768, %v7967
        %v8117 = vmul.bf16 %v5771, %v7968
        %v8118 = vmul.bf16 %v5774, %v7968
        %v8119 = vmul.bf16 %v5777, %v7969
        %v8120 = vmul.bf16 %v5780, %v7969
        %v8121 = vmul.bf16 %v5783, %v7970
        %v8122 = vmul.bf16 %v5786, %v7970
        %v8123 = vmul.bf16 %v5789, %v7971
        %v8124 = vmul.bf16 %v5792, %v7971
        %v8125 = vmul.bf16 %v5795, %v7972
        %v8126 = vmul.bf16 %v5798, %v7972
        %v8127 = vmul.bf16 %v5801, %v7973
        %v8128 = vmul.bf16 %v5804, %v7973
        %v8129 = vmul.bf16 %v5807, %v7974
        %v8130 = vmul.bf16 %v5810, %v7974
        %v8131 = vmul.bf16 %v5813, %v7975
        %v8132 = vmul.bf16 %v5816, %v7975
        %v8133 = vmul.bf16 %v5819, %v7976
        %v8134 = vmul.bf16 %v5822, %v7976
        %v8135 = vmul.bf16 %v5825, %v7977
        %v8136 = vmul.bf16 %v5828, %v7977
        %v8137 = vmul.bf16 %v5831, %v7978
        %v8138 = vmul.bf16 %v5834, %v7978
        %v8139 = vmul.bf16 %v5837, %v7979
        %v8140 = vmul.bf16 %v5840, %v7979
        %v8141 = vmul.bf16 %v5843, %v7980
        %v8142 = vmul.bf16 %v5846, %v7980
        %v8143 = vmul.bf16 %v5849, %v7981
        %v8144 = vmul.bf16 %v5852, %v7981
        %v8145 = vmul.bf16 %v5855, %v7982
        %v8146 = vmul.bf16 %v5858, %v7982
        %v8147 = vmul.bf16 %v5861, %v7983
        %v8148 = vmul.bf16 %v5864, %v7983
        %v8149 = vmul.bf16 %v5867, %v7984
        %v8150 = vmul.bf16 %v5870, %v7984
        %v8151 = vmul.bf16 %v5873, %v7985
        %v8152 = vmul.bf16 %v5876, %v7985
        %v8153 = vmul.bf16 %v5879, %v7986
        %v8154 = vmul.bf16 %v5882, %v7986
        %v8155 = vmul.bf16 %v5885, %v7987
        %v8156 = vmul.bf16 %v5888, %v7987
        %v8157 = vmul.bf16 %v5891, %v7988
        %v8158 = vmul.bf16 %v5894, %v7988
        %v8159 = vmul.bf16 %v5897, %v7989
        %v8160 = vmul.bf16 %v5900, %v7989
        %v8161 = vmul.bf16 %v5903, %v7990
        %v8162 = vmul.bf16 %v5906, %v7990
        %v8163 = vmul.bf16 %v5909, %v7991
        %v8164 = vmul.bf16 %v5912, %v7991
        %v8165 = vmul.bf16 %v5915, %v7992
        %v8166 = vmul.bf16 %v5918, %v7992
        %v8167 = vmul.bf16 %v5921, %v7993
        %v8168 = vmul.bf16 %v5924, %v7993
        %v8169 = vmul.bf16 %v5927, %v7994
        %v8170 = vmul.bf16 %v5930, %v7994
        %v8171 = vmul.bf16 %v5933, %v7995
        %v8172 = vmul.bf16 %v5936, %v7995
        %v8173 = vmul.bf16 %v5939, %v7996
        %v8174 = vmul.bf16 %v5942, %v7996
        %v8175 = vmul.bf16 %v5945, %v7997
        %v8176 = vmul.bf16 %v5948, %v7997
        %v8177 = vmul.bf16 %v5951, %v7998
        %v8178 = vmul.bf16 %v5954, %v7998
        %v8179 = vmul.bf16 %v5957, %v7999
        %v8180 = vmul.bf16 %v5960, %v7999
        %v8181 = vmul.bf16 %v5963, %v8000
        %v8182 = vmul.bf16 %v5966, %v8000
        %v8183 = vmul.bf16 %v5969, %v8001
        %v8184 = vmul.bf16 %v5972, %v8001
        %v8185 = vmul.bf16 %v5975, %v8002
        %v8186 = vmul.bf16 %v5978, %v8002
        %v8187 = vmul.bf16 %v5981, %v8003
        %v8188 = vmul.bf16 %v5984, %v8003
        %v8189 = vmul.bf16 %v5987, %v8004
        %v8190 = vmul.bf16 %v5990, %v8004
        %v8191 = vmul.bf16 %v5993, %v8005
        %v8192 = vmul.bf16 %v5996, %v8005
        %v8193 = vmul.bf16 %v5999, %v8006
        %v8194 = vmul.bf16 %v6002, %v8006
        %v8195 = vmul.bf16 %v6005, %v8007
        %v8196 = vmul.bf16 %v6008, %v8007
        %v8197 = vmul.bf16 %v6011, %v8008
        %v8198 = vmul.bf16 %v6014, %v8008
        %v8199 = vmul.bf16 %v6017, %v8009
        %v8200 = vmul.bf16 %v6020, %v8009
        %v8201 = vmul.bf16 %v6023, %v8010
        %v8202 = vmul.bf16 %v6026, %v8010
        %v8203 = vmul.bf16 %v6029, %v8011
        %v8204 = vmul.bf16 %v6032, %v8011
        %v8205 = vmul.bf16 %v6035, %v8012
        %v8206 = vmul.bf16 %v6038, %v8012
        %v8207 = vmul.bf16 %v6041, %v8013
        %v8208 = vmul.bf16 %v6044, %v8013
        %v8209 = vmul.bf16 %v6047, %v8014
        %v8210 = vmul.bf16 %v6050, %v8014
        %v8211 = vmul.bf16 %v6053, %v8015
        %v8212 = vmul.bf16 %v6056, %v8015
        %v8213 = vmul.bf16 %v6059, %v8016
        %v8214 = vmul.bf16 %v6062, %v8016
        %v8215 = vmul.bf16 %v6065, %v8017
        %v8216 = vmul.bf16 %v6068, %v8017
        %v8217 = vmul.bf16 %v6071, %v8018
        %v8218 = vmul.bf16 %v6074, %v8018
        %v8219 = vmul.bf16 %v6077, %v8019
        %v8220 = vmul.bf16 %v6080, %v8019
        %v8221 = vmul.bf16 %v6083, %v8020
        %v8222 = vmul.bf16 %v6086, %v8020
        %v8223 = vmul.bf16 %v6089, %v8021
        %v8224 = vmul.bf16 %v6092, %v8021
        %v8225 = vmul.bf16 %v6095, %v8022
        %v8226 = vmul.bf16 %v6098, %v8022
        %v8227 = vmul.bf16 %v6101, %v8023
        %v8228 = vmul.bf16 %v6104, %v8023
        %v8229 = vmul.bf16 %v6107, %v8024
        %v8230 = vmul.bf16 %v6110, %v8024
        %v8231 = vmul.bf16 %v6113, %v8025
        %v8232 = vmul.bf16 %v6116, %v8025
        %v8233 = vmul.bf16 %v6119, %v8026
        %v8234 = vmul.bf16 %v6122, %v8026
        %v8235 = vmul.bf16 %v6125, %v8027
        %v8236 = vmul.bf16 %v6128, %v8027
        %v8237 = vmul.bf16 %v6131, %v8028
        %v8238 = vmul.bf16 %v6134, %v8028
        %v8239 = vmul.bf16 %v6137, %v8029
        %v8240 = vmul.bf16 %v6140, %v8029
        %v8241 = vmul.bf16 %v6143, %v8030
        %v8242 = vmul.bf16 %v6146, %v8030
        %v8243 = vmul.bf16 %v6149, %v8031
        %v8244 = vmul.bf16 %v6152, %v8031
        %v8245 = vmul.bf16 %v6155, %v8032
        %v8246 = vmul.bf16 %v6158, %v8032
        %v8247 = vmul.bf16 %v6161, %v8033
        %v8248 = vmul.bf16 %v6164, %v8033
        %v8249 = vmul.bf16 %v6167, %v8034
        %v8250 = vmul.bf16 %v6170, %v8034
        %v8251 = vmul.bf16 %v6173, %v8035
        %v8252 = vmul.bf16 %v6176, %v8035
        %v8253 = vmul.bf16 %v6179, %v8036
        %v8254 = vmul.bf16 %v6182, %v8036
        %v8255 = vmul.bf16 %v6185, %v8037
        %v8256 = vmul.bf16 %v6188, %v8037
        %v8257 = vmul.bf16 %v6191, %v8038
        %v8258 = vmul.bf16 %v6194, %v8038
        %v8259 = vmul.bf16 %v6197, %v8039
        %v8260 = vmul.bf16 %v6200, %v8039
        %v8261 = vmul.bf16 %v6203, %v8040
        %v8262 = vmul.bf16 %v6206, %v8040
        %v8263 = vmul.bf16 %v6209, %v8041
        %v8264 = vmul.bf16 %v6212, %v8041
        %v8265 = vmul.bf16 %v6215, %v8042
        %v8266 = vmul.bf16 %v6218, %v8042
        %v8267 = vmul.bf16 %v6221, %v8043
        %v8268 = vmul.bf16 %v6224, %v8043
        %v8269 = vmul.bf16 %v6227, %v8044
        %v8270 = vmul.bf16 %v6230, %v8044
        %v8271 = vmul.bf16 %v6233, %v8045
        %v8272 = vmul.bf16 %v6236, %v8045
        %v8273 = vmul.bf16 %v6239, %v8046
        %v8274 = vmul.bf16 %v6242, %v8046
        %v8275 = vmul.bf16 %v6245, %v8047
        %v8276 = vmul.bf16 %v6248, %v8047
        %v8277 = vmul.bf16 %v6251, %v8048
        %v8278 = vmul.bf16 %v6254, %v8048
        %v8279 = vmul.bf16 %v6257, %v8049
        %v8280 = vmul.bf16 %v6260, %v8049
        %v8281 = vmul.bf16 %v6263, %v8050
        %v8282 = vmul.bf16 %v6266, %v8050
        %v8283 = vmul.bf16 %v6269, %v8051
        %v8284 = vmul.bf16 %v6272, %v8051
        %v8285 = vmul.bf16 %v6275, %v8052
        %v8286 = vmul.bf16 %v6278, %v8052
        %v8287 = vmul.bf16 %v6281, %v8053
        %v8288 = vmul.bf16 %v6284, %v8053
        %v8289 = vmul.bf16 %v6287, %v8054
        %v8290 = vmul.bf16 %v6290, %v8054
        %v8291 = vmul.bf16 %v6293, %v8055
        %v8292 = vmul.bf16 %v6296, %v8055
        %v8293 = vmul.bf16 %v6299, %v8056
        %v8294 = vmul.bf16 %v6302, %v8056
        %v8295 = vmul.bf16 %v6305, %v8057
        %v8296 = vmul.bf16 %v6308, %v8057
        %v8297 = vmul.bf16 %v6311, %v8058
        %v8298 = vmul.bf16 %v6314, %v8058
        %v8299 = vmul.bf16 %v6317, %v8059
        %v8300 = vmul.bf16 %v6320, %v8059
        %v8301 = vmul.bf16 %v6323, %v8060
        %v8302 = vmul.bf16 %v6326, %v8060
        %v8303 = vmul.bf16 %v6329, %v8061
        %v8304 = vmul.bf16 %v6332, %v8061
        %v8305 = vmul.bf16 %v6335, %v8062
        %v8306 = vmul.bf16 %v6338, %v8062
        %v8307 = vmul.bf16 %v6341, %v8063
        %v8308 = vmul.bf16 %v6344, %v8063
        %v8309 = vmul.bf16 %v6347, %v8064
        %v8310 = vmul.bf16 %v6350, %v8064
        %v8311 = vmul.bf16 %v6353, %v8065
        %v8312 = vmul.bf16 %v6356, %v8065
        %v8313 = vmul.bf16 %v6359, %v8066
        %v8314 = vmul.bf16 %v6362, %v8066
        %v8315 = vmul.bf16 %v6365, %v8067
        %v8316 = vmul.bf16 %v6368, %v8067
        %v8317 = vmul.bf16 %v6371, %v8068
        %v8318 = vmul.bf16 %v6374, %v8068
        %v8319 = vmul.bf16 %v6377, %v8069
        %v8320 = vmul.bf16 %v6380, %v8069
        %v8321 = vmul.bf16 %v6383, %v8070
        %v8322 = vmul.bf16 %v6386, %v8070
        %v8323 = vmul.bf16 %v6389, %v8071
        %v8324 = vmul.bf16 %v6392, %v8071
        %v8325 = vmul.bf16 %v6395, %v8072
        %v8326 = vmul.bf16 %v6398, %v8072
        %v8327 = vmul.bf16 %v6401, %v8073
        %v8328 = vmul.bf16 %v6404, %v8073
        %v8329 = vmul.bf16 %v6407, %v8074
        %v8330 = vmul.bf16 %v6410, %v8074
        %v8331 = vld [vmem:[#allocation4] sm:$0xff]
        %v8332 = vld [vmem:[#allocation4 + $0x8] sm:$0xff]
        %v8333 = vld [vmem:[#allocation4 + $0x10] sm:$0xff]
        %v8334 = vld [vmem:[#allocation4 + $0x18] sm:$0xff]
        %v8335 = vld [vmem:[#allocation4 + $0x20] sm:$0xff]
        %v8336 = vld [vmem:[#allocation4 + $0x28] sm:$0xff]
        %v8337 = vld [vmem:[#allocation4 + $0x30] sm:$0xff]
        %v8338 = vld [vmem:[#allocation4 + $0x38] sm:$0xff]
        %v8339 = vld [vmem:[#allocation4 + $0x40] sm:$0xff]
        %v8340 = vld [vmem:[#allocation4 + $0x48] sm:$0xff]
        %v8341 = vld [vmem:[#allocation4 + $0x50] sm:$0xff]
        %v8342 = vld [vmem:[#allocation4 + $0x58] sm:$0xff]
        %v8343 = vld [vmem:[#allocation4 + $0x60] sm:$0xff]
        %v8344 = vld [vmem:[#allocation4 + $0x68] sm:$0xff]
        %v8345 = vld [vmem:[#allocation4 + $0x70] sm:$0xff]
        %v8346 = vld [vmem:[#allocation4 + $0x78] sm:$0xff]
        %v8347 = vpack.c.bf16 %v8331, %v8331
        %v8348 = vpack.c.bf16 %v8332, %v8332
        %v8349 = vpack.c.bf16 %v8333, %v8333
        %v8350 = vpack.c.bf16 %v8334, %v8334
        %v8351 = vpack.c.bf16 %v8335, %v8335
        %v8352 = vpack.c.bf16 %v8336, %v8336
        %v8353 = vpack.c.bf16 %v8337, %v8337
        %v8354 = vpack.c.bf16 %v8338, %v8338
        %v8355 = vpack.c.bf16 %v8339, %v8339
        %v8356 = vpack.c.bf16 %v8340, %v8340
        %v8357 = vpack.c.bf16 %v8341, %v8341
        %v8358 = vpack.c.bf16 %v8342, %v8342
        %v8359 = vpack.c.bf16 %v8343, %v8343
        %v8360 = vpack.c.bf16 %v8344, %v8344
        %v8361 = vpack.c.bf16 %v8345, %v8345
        %v8362 = vpack.c.bf16 %v8346, %v8346
        %8363 = vmatprep.subr.bf16.mxu0 %v8076
        %8364 = vmatpush1.bf16.xpose.msra.mxu0 %v8075
        %8365 = vmatprep.subr.bf16.mxu0 %v8078
        %8366 = vmatpush1.bf16.xpose.msra.mxu0 %v8077
        %8367 = vmatprep.subr.bf16.mxu0 %v8080
        %8368 = vmatpush1.bf16.xpose.msra.mxu0 %v8079
        %8369 = vmatprep.subr.bf16.mxu0 %v8082
        %8370 = vmatpush1.bf16.xpose.msra.mxu0 %v8081
        %8371 = vmatprep.subr.bf16.mxu0 %v8084
        %8372 = vmatpush1.bf16.xpose.msra.mxu0 %v8083
        %8373 = vmatprep.subr.bf16.mxu0 %v8086
        %8374 = vmatpush1.bf16.xpose.msra.mxu0 %v8085
        %8375 = vmatprep.subr.bf16.mxu0 %v8088
        %8376 = vmatpush1.bf16.xpose.msra.mxu0 %v8087
        %8377 = vmatprep.subr.bf16.mxu0 %v8090
        %8378 = vmatpush1.bf16.xpose.msra.mxu0 %v8089
        %8379 = vmatprep.subr.bf16.mxu0 %v8092
        %8380 = vmatpush1.bf16.xpose.msra.mxu0 %v8091
        %8381 = vmatprep.subr.bf16.mxu0 %v8094
        %8382 = vmatpush1.bf16.xpose.msra.mxu0 %v8093
        %8383 = vmatprep.subr.bf16.mxu0 %v8096
        %8384 = vmatpush1.bf16.xpose.msra.mxu0 %v8095
        %8385 = vmatprep.subr.bf16.mxu0 %v8098
        %8386 = vmatpush1.bf16.xpose.msra.mxu0 %v8097
        %8387 = vmatprep.subr.bf16.mxu0 %v8100
        %8388 = vmatpush1.bf16.xpose.msra.mxu0 %v8099
        %8389 = vmatprep.subr.bf16.mxu0 %v8102
        %8390 = vmatpush1.bf16.xpose.msra.mxu0 %v8101
        %8391 = vmatprep.subr.bf16.mxu0 %v8104
        %8392 = vmatpush1.bf16.xpose.msra.mxu0 %v8103
        %8393 = vmatprep.subr.bf16.mxu0 %v8106
        %8394 = vmatpush1.bf16.xpose.msra.mxu0 %v8105
        %8395 = vmatprep.mubr.bf16.mxu0 %v8348
        %8396 = vmatmul.mubr.bf16.gmra.mrb[0].mxu0 %v8347
        %v8397 = vpop.f32.mrb[0].mxu0
        %v8398 = vadd.f32 0.0, %v8397
        %v8399 = vpop.f32.mrb[0].mxu0
        %v8400 = vadd.f32 0.0, %v8399
        %v8401 = vpop.f32.mrb[0].mxu0
        %v8402 = vpop.f32.mrb[0].mxu0
        %8403 = vdwg.mxu0
        %8404 = vmatprep.subr.bf16.mxu0 %v8108
        %8405 = vmatpush1.bf16.xpose.msra.mxu0 %v8107
        %8406 = vmatprep.subr.bf16.mxu0 %v8110
        %8407 = vmatpush1.bf16.xpose.msra.mxu0 %v8109
        %8408 = vmatprep.subr.bf16.mxu0 %v8112
        %8409 = vmatpush1.bf16.xpose.msra.mxu0 %v8111
        %8410 = vmatprep.subr.bf16.mxu0 %v8114
        %8411 = vmatpush1.bf16.xpose.msra.mxu0 %v8113
        %8412 = vmatprep.subr.bf16.mxu0 %v8116
        %8413 = vmatpush1.bf16.xpose.msra.mxu0 %v8115
        %8414 = vmatprep.subr.bf16.mxu0 %v8118
        %8415 = vmatpush1.bf16.xpose.msra.mxu0 %v8117
        %8416 = vmatprep.subr.bf16.mxu0 %v8120
        %8417 = vmatpush1.bf16.xpose.msra.mxu0 %v8119
        %8418 = vmatprep.subr.bf16.mxu0 %v8122
        %8419 = vmatpush1.bf16.xpose.msra.mxu0 %v8121
        %8420 = vmatprep.subr.bf16.mxu0 %v8124
        %8421 = vmatpush1.bf16.xpose.msra.mxu0 %v8123
        %8422 = vmatprep.subr.bf16.mxu0 %v8126
        %8423 = vmatpush1.bf16.xpose.msra.mxu0 %v8125
        %8424 = vmatprep.subr.bf16.mxu0 %v8128
        %8425 = vmatpush1.bf16.xpose.msra.mxu0 %v8127
        %8426 = vmatprep.subr.bf16.mxu0 %v8130
        %8427 = vmatpush1.bf16.xpose.msra.mxu0 %v8129
        %8428 = vmatprep.subr.bf16.mxu0 %v8132
        %8429 = vmatpush1.bf16.xpose.msra.mxu0 %v8131
        %8430 = vmatprep.subr.bf16.mxu0 %v8134
        %8431 = vmatpush1.bf16.xpose.msra.mxu0 %v8133
        %8432 = vmatprep.subr.bf16.mxu0 %v8136
        %8433 = vmatpush1.bf16.xpose.msra.mxu0 %v8135
        %8434 = vmatprep.subr.bf16.mxu0 %v8138
        %8435 = vmatpush1.bf16.xpose.msra.mxu0 %v8137
        %8436 = vmatprep.mubr.bf16.mxu0 %v8350
        %8437 = vmatmul.mubr.bf16.gmra.mrb[0].mxu0 %v8349
        %v8438 = vpop.f32.mrb[0].mxu0
        %v8439 = vadd.f32 0.0, %v8438
        %v8440 = vpop.f32.mrb[0].mxu0
        %v8441 = vadd.f32 0.0, %v8440
        %v8442 = vpop.f32.mrb[0].mxu0
        %v8443 = vpop.f32.mrb[0].mxu0
        %8444 = vdwg.mxu0
        %8445 = vmatprep.subr.bf16.mxu0 %v8140
        %8446 = vmatpush1.bf16.xpose.msra.mxu0 %v8139
        %8447 = vmatprep.subr.bf16.mxu0 %v8142
        %8448 = vmatpush1.bf16.xpose.msra.mxu0 %v8141
        %8449 = vmatprep.subr.bf16.mxu0 %v8144
        %8450 = vmatpush1.bf16.xpose.msra.mxu0 %v8143
        %8451 = vmatprep.subr.bf16.mxu0 %v8146
        %8452 = vmatpush1.bf16.xpose.msra.mxu0 %v8145
        %8453 = vmatprep.subr.bf16.mxu0 %v8148
        %8454 = vmatpush1.bf16.xpose.msra.mxu0 %v8147
        %8455 = vmatprep.subr.bf16.mxu0 %v8150
        %8456 = vmatpush1.bf16.xpose.msra.mxu0 %v8149
        %8457 = vmatprep.subr.bf16.mxu0 %v8152
        %8458 = vmatpush1.bf16.xpose.msra.mxu0 %v8151
        %8459 = vmatprep.subr.bf16.mxu0 %v8154
        %8460 = vmatpush1.bf16.xpose.msra.mxu0 %v8153
        %8461 = vmatprep.subr.bf16.mxu0 %v8156
        %8462 = vmatpush1.bf16.xpose.msra.mxu0 %v8155
        %8463 = vmatprep.subr.bf16.mxu0 %v8158
        %8464 = vmatpush1.bf16.xpose.msra.mxu0 %v8157
        %8465 = vmatprep.subr.bf16.mxu0 %v8160
        %8466 = vmatpush1.bf16.xpose.msra.mxu0 %v8159
        %8467 = vmatprep.subr.bf16.mxu0 %v8162
        %8468 = vmatpush1.bf16.xpose.msra.mxu0 %v8161
        %8469 = vmatprep.subr.bf16.mxu0 %v8164
        %8470 = vmatpush1.bf16.xpose.msra.mxu0 %v8163
        %8471 = vmatprep.subr.bf16.mxu0 %v8166
        %8472 = vmatpush1.bf16.xpose.msra.mxu0 %v8165
        %8473 = vmatprep.subr.bf16.mxu0 %v8168
        %8474 = vmatpush1.bf16.xpose.msra.mxu0 %v8167
        %8475 = vmatprep.subr.bf16.mxu0 %v8170
        %8476 = vmatpush1.bf16.xpose.msra.mxu0 %v8169
        %8477 = vmatprep.mubr.bf16.mxu0 %v8352
        %8478 = vmatmul.mubr.bf16.gmra.mrb[0].mxu0 %v8351
        %v8479 = vpop.f32.mrb[0].mxu0
        %v8480 = vadd.f32 0.0, %v8479
        %v8481 = vpop.f32.mrb[0].mxu0
        %v8482 = vadd.f32 0.0, %v8481
        %v8483 = vpop.f32.mrb[0].mxu0
        %v8484 = vpop.f32.mrb[0].mxu0
        %8485 = vdwg.mxu0
        %8486 = vmatprep.subr.bf16.mxu0 %v8172
        %8487 = vmatpush1.bf16.xpose.msra.mxu0 %v8171
        %8488 = vmatprep.subr.bf16.mxu0 %v8174
        %8489 = vmatpush1.bf16.xpose.msra.mxu0 %v8173
        %8490 = vmatprep.subr.bf16.mxu0 %v8176
        %8491 = vmatpush1.bf16.xpose.msra.mxu0 %v8175
        %8492 = vmatprep.subr.bf16.mxu0 %v8178
        %8493 = vmatpush1.bf16.xpose.msra.mxu0 %v8177
        %8494 = vmatprep.subr.bf16.mxu0 %v8180
        %8495 = vmatpush1.bf16.xpose.msra.mxu0 %v8179
        %8496 = vmatprep.subr.bf16.mxu0 %v8182
        %8497 = vmatpush1.bf16.xpose.msra.mxu0 %v8181
        %8498 = vmatprep.subr.bf16.mxu0 %v8184
        %8499 = vmatpush1.bf16.xpose.msra.mxu0 %v8183
        %8500 = vmatprep.subr.bf16.mxu0 %v8186
        %8501 = vmatpush1.bf16.xpose.msra.mxu0 %v8185
        %8502 = vmatprep.subr.bf16.mxu0 %v8188
        %8503 = vmatpush1.bf16.xpose.msra.mxu0 %v8187
        %8504 = vmatprep.subr.bf16.mxu0 %v8190
        %8505 = vmatpush1.bf16.xpose.msra.mxu0 %v8189
        %8506 = vmatprep.subr.bf16.mxu0 %v8192
        %8507 = vmatpush1.bf16.xpose.msra.mxu0 %v8191
        %8508 = vmatprep.subr.bf16.mxu0 %v8194
        %8509 = vmatpush1.bf16.xpose.msra.mxu0 %v8193
        %8510 = vmatprep.subr.bf16.mxu0 %v8196
        %8511 = vmatpush1.bf16.xpose.msra.mxu0 %v8195
        %8512 = vmatprep.subr.bf16.mxu0 %v8198
        %8513 = vmatpush1.bf16.xpose.msra.mxu0 %v8197
        %8514 = vmatprep.subr.bf16.mxu0 %v8200
        %8515 = vmatpush1.bf16.xpose.msra.mxu0 %v8199
        %8516 = vmatprep.subr.bf16.mxu0 %v8202
        %8517 = vmatpush1.bf16.xpose.msra.mxu0 %v8201
        %8518 = vmatprep.mubr.bf16.mxu0 %v8354
        %8519 = vmatmul.mubr.bf16.gmra.mrb[0].mxu0 %v8353
        %v8520 = vpop.f32.mrb[0].mxu0
        %v8521 = vadd.f32 0.0, %v8520
        %v8522 = vpop.f32.mrb[0].mxu0
        %v8523 = vadd.f32 0.0, %v8522
        %v8524 = vpop.f32.mrb[0].mxu0
        %v8525 = vpop.f32.mrb[0].mxu0
        %8526 = vdwg.mxu0
        %8527 = vmatprep.subr.bf16.mxu0 %v8204
        %8528 = vmatpush1.bf16.xpose.msra.mxu0 %v8203
        %8529 = vmatprep.subr.bf16.mxu0 %v8206
        %8530 = vmatpush1.bf16.xpose.msra.mxu0 %v8205
        %8531 = vmatprep.subr.bf16.mxu0 %v8208
        %8532 = vmatpush1.bf16.xpose.msra.mxu0 %v8207
        %8533 = vmatprep.subr.bf16.mxu0 %v8210
        %8534 = vmatpush1.bf16.xpose.msra.mxu0 %v8209
        %8535 = vmatprep.subr.bf16.mxu0 %v8212
        %8536 = vmatpush1.bf16.xpose.msra.mxu0 %v8211
        %8537 = vmatprep.subr.bf16.mxu0 %v8214
        %8538 = vmatpush1.bf16.xpose.msra.mxu0 %v8213
        %8539 = vmatprep.subr.bf16.mxu0 %v8216
        %8540 = vmatpush1.bf16.xpose.msra.mxu0 %v8215
        %8541 = vmatprep.subr.bf16.mxu0 %v8218
        %8542 = vmatpush1.bf16.xpose.msra.mxu0 %v8217
        %8543 = vmatprep.subr.bf16.mxu0 %v8220
        %8544 = vmatpush1.bf16.xpose.msra.mxu0 %v8219
        %8545 = vmatprep.subr.bf16.mxu0 %v8222
        %8546 = vmatpush1.bf16.xpose.msra.mxu0 %v8221
        %8547 = vmatprep.subr.bf16.mxu0 %v8224
        %8548 = vmatpush1.bf16.xpose.msra.mxu0 %v8223
        %8549 = vmatprep.subr.bf16.mxu0 %v8226
        %8550 = vmatpush1.bf16.xpose.msra.mxu0 %v8225
        %8551 = vmatprep.subr.bf16.mxu0 %v8228
        %8552 = vmatpush1.bf16.xpose.msra.mxu0 %v8227
        %8553 = vmatprep.subr.bf16.mxu0 %v8230
        %8554 = vmatpush1.bf16.xpose.msra.mxu0 %v8229
        %8555 = vmatprep.subr.bf16.mxu0 %v8232
        %8556 = vmatpush1.bf16.xpose.msra.mxu0 %v8231
        %8557 = vmatprep.subr.bf16.mxu0 %v8234
        %8558 = vmatpush1.bf16.xpose.msra.mxu0 %v8233
        %8559 = vmatprep.mubr.bf16.mxu0 %v8356
        %8560 = vmatmul.mubr.bf16.gmra.mrb[0].mxu0 %v8355
        %v8561 = vpop.f32.mrb[0].mxu0
        %v8562 = vadd.f32 0.0, %v8561
        %v8563 = vpop.f32.mrb[0].mxu0
        %v8564 = vadd.f32 0.0, %v8563
        %v8565 = vpop.f32.mrb[0].mxu0
        %v8566 = vpop.f32.mrb[0].mxu0
        %8567 = vdwg.mxu0
        %8568 = vmatprep.subr.bf16.mxu0 %v8236
        %8569 = vmatpush1.bf16.xpose.msra.mxu0 %v8235
        %8570 = vmatprep.subr.bf16.mxu0 %v8238
        %8571 = vmatpush1.bf16.xpose.msra.mxu0 %v8237
        %8572 = vmatprep.subr.bf16.mxu0 %v8240
        %8573 = vmatpush1.bf16.xpose.msra.mxu0 %v8239
        %8574 = vmatprep.subr.bf16.mxu0 %v8242
        %8575 = vmatpush1.bf16.xpose.msra.mxu0 %v8241
        %8576 = vmatprep.subr.bf16.mxu0 %v8244
        %8577 = vmatpush1.bf16.xpose.msra.mxu0 %v8243
        %8578 = vmatprep.subr.bf16.mxu0 %v8246
        %8579 = vmatpush1.bf16.xpose.msra.mxu0 %v8245
        %8580 = vmatprep.subr.bf16.mxu0 %v8248
        %8581 = vmatpush1.bf16.xpose.msra.mxu0 %v8247
        %8582 = vmatprep.subr.bf16.mxu0 %v8250
        %8583 = vmatpush1.bf16.xpose.msra.mxu0 %v8249
        %8584 = vmatprep.subr.bf16.mxu0 %v8252
        %8585 = vmatpush1.bf16.xpose.msra.mxu0 %v8251
        %8586 = vmatprep.subr.bf16.mxu0 %v8254
        %8587 = vmatpush1.bf16.xpose.msra.mxu0 %v8253
        %8588 = vmatprep.subr.bf16.mxu0 %v8256
        %8589 = vmatpush1.bf16.xpose.msra.mxu0 %v8255
        %8590 = vmatprep.subr.bf16.mxu0 %v8258
        %8591 = vmatpush1.bf16.xpose.msra.mxu0 %v8257
        %8592 = vmatprep.subr.bf16.mxu0 %v8260
        %8593 = vmatpush1.bf16.xpose.msra.mxu0 %v8259
        %8594 = vmatprep.subr.bf16.mxu0 %v8262
        %8595 = vmatpush1.bf16.xpose.msra.mxu0 %v8261
        %8596 = vmatprep.subr.bf16.mxu0 %v8264
        %8597 = vmatpush1.bf16.xpose.msra.mxu0 %v8263
        %8598 = vmatprep.subr.bf16.mxu0 %v8266
        %8599 = vmatpush1.bf16.xpose.msra.mxu0 %v8265
        %8600 = vmatprep.mubr.bf16.mxu0 %v8358
        %8601 = vmatmul.mubr.bf16.gmra.mrb[0].mxu0 %v8357
        %v8602 = vpop.f32.mrb[0].mxu0
        %v8603 = vadd.f32 0.0, %v8602
        %v8604 = vpop.f32.mrb[0].mxu0
        %v8605 = vadd.f32 0.0, %v8604
        %v8606 = vpop.f32.mrb[0].mxu0
        %v8607 = vpop.f32.mrb[0].mxu0
        %8608 = vdwg.mxu0
        %8609 = vmatprep.subr.bf16.mxu0 %v8268
        %8610 = vmatpush1.bf16.xpose.msra.mxu0 %v8267
        %8611 = vmatprep.subr.bf16.mxu0 %v8270
        %8612 = vmatpush1.bf16.xpose.msra.mxu0 %v8269
        %8613 = vmatprep.subr.bf16.mxu0 %v8272
        %8614 = vmatpush1.bf16.xpose.msra.mxu0 %v8271
        %8615 = vmatprep.subr.bf16.mxu0 %v8274
        %8616 = vmatpush1.bf16.xpose.msra.mxu0 %v8273
        %8617 = vmatprep.subr.bf16.mxu0 %v8276
        %8618 = vmatpush1.bf16.xpose.msra.mxu0 %v8275
        %8619 = vmatprep.subr.bf16.mxu0 %v8278
        %8620 = vmatpush1.bf16.xpose.msra.mxu0 %v8277
        %8621 = vmatprep.subr.bf16.mxu0 %v8280
        %8622 = vmatpush1.bf16.xpose.msra.mxu0 %v8279
        %8623 = vmatprep.subr.bf16.mxu0 %v8282
        %8624 = vmatpush1.bf16.xpose.msra.mxu0 %v8281
        %8625 = vmatprep.subr.bf16.mxu0 %v8284
        %8626 = vmatpush1.bf16.xpose.msra.mxu0 %v8283
        %8627 = vmatprep.subr.bf16.mxu0 %v8286
        %8628 = vmatpush1.bf16.xpose.msra.mxu0 %v8285
        %8629 = vmatprep.subr.bf16.mxu0 %v8288
        %8630 = vmatpush1.bf16.xpose.msra.mxu0 %v8287
        %8631 = vmatprep.subr.bf16.mxu0 %v8290
        %8632 = vmatpush1.bf16.xpose.msra.mxu0 %v8289
        %8633 = vmatprep.subr.bf16.mxu0 %v8292
        %8634 = vmatpush1.bf16.xpose.msra.mxu0 %v8291
        %8635 = vmatprep.subr.bf16.mxu0 %v8294
        %8636 = vmatpush1.bf16.xpose.msra.mxu0 %v8293
        %8637 = vmatprep.subr.bf16.mxu0 %v8296
        %8638 = vmatpush1.bf16.xpose.msra.mxu0 %v8295
        %8639 = vmatprep.subr.bf16.mxu0 %v8298
        %8640 = vmatpush1.bf16.xpose.msra.mxu0 %v8297
        %8641 = vmatprep.mubr.bf16.mxu0 %v8360
        %8642 = vmatmul.mubr.bf16.gmra.mrb[0].mxu0 %v8359
        %v8643 = vpop.f32.mrb[0].mxu0
        %v8644 = vadd.f32 0.0, %v8643
        %v8645 = vpop.f32.mrb[0].mxu0
        %v8646 = vadd.f32 0.0, %v8645
        %v8647 = vpop.f32.mrb[0].mxu0
        %v8648 = vpop.f32.mrb[0].mxu0
        %8649 = vdwg.mxu0
        %8650 = vmatprep.subr.bf16.mxu0 %v8300
        %8651 = vmatpush1.bf16.xpose.msra.mxu0 %v8299
        %8652 = vmatprep.subr.bf16.mxu0 %v8302
        %8653 = vmatpush1.bf16.xpose.msra.mxu0 %v8301
        %8654 = vmatprep.subr.bf16.mxu0 %v8304
        %8655 = vmatpush1.bf16.xpose.msra.mxu0 %v8303
        %8656 = vmatprep.subr.bf16.mxu0 %v8306
        %8657 = vmatpush1.bf16.xpose.msra.mxu0 %v8305
        %8658 = vmatprep.subr.bf16.mxu0 %v8308
        %8659 = vmatpush1.bf16.xpose.msra.mxu0 %v8307
        %8660 = vmatprep.subr.bf16.mxu0 %v8310
        %8661 = vmatpush1.bf16.xpose.msra.mxu0 %v8309
        %8662 = vmatprep.subr.bf16.mxu0 %v8312
        %8663 = vmatpush1.bf16.xpose.msra.mxu0 %v8311
        %8664 = vmatprep.subr.bf16.mxu0 %v8314
        %8665 = vmatpush1.bf16.xpose.msra.mxu0 %v8313
        %8666 = vmatprep.subr.bf16.mxu0 %v8316
        %8667 = vmatpush1.bf16.xpose.msra.mxu0 %v8315
        %8668 = vmatprep.subr.bf16.mxu0 %v8318
        %8669 = vmatpush1.bf16.xpose.msra.mxu0 %v8317
        %8670 = vmatprep.subr.bf16.mxu0 %v8320
        %8671 = vmatpush1.bf16.xpose.msra.mxu0 %v8319
        %8672 = vmatprep.subr.bf16.mxu0 %v8322
        %8673 = vmatpush1.bf16.xpose.msra.mxu0 %v8321
        %8674 = vmatprep.subr.bf16.mxu0 %v8324
        %8675 = vmatpush1.bf16.xpose.msra.mxu0 %v8323
        %8676 = vmatprep.subr.bf16.mxu0 %v8326
        %8677 = vmatpush1.bf16.xpose.msra.mxu0 %v8325
        %8678 = vmatprep.subr.bf16.mxu0 %v8328
        %8679 = vmatpush1.bf16.xpose.msra.mxu0 %v8327
        %8680 = vmatprep.subr.bf16.mxu0 %v8330
        %8681 = vmatpush1.bf16.xpose.msra.mxu0 %v8329
        %8682 = vmatprep.mubr.bf16.mxu0 %v8362
        %8683 = vmatmul.mubr.bf16.gmra.mrb[0].mxu0 %v8361
        %v8684 = vpop.f32.mrb[0].mxu0
        %v8685 = vadd.f32 0.0, %v8684
        %v8686 = vpop.f32.mrb[0].mxu0
        %v8687 = vadd.f32 0.0, %v8686
        %v8688 = vpop.f32.mrb[0].mxu0
        %v8689 = vpop.f32.mrb[0].mxu0
        %8690 = vdwg.mxu0
        %v8691 = vpack.c.bf16 %v8439, %v8398
        %v8692 = vpack.c.bf16 %v8441, %v8400
        %v8693 = vpack.c.bf16 %v8521, %v8480
        %v8694 = vpack.c.bf16 %v8523, %v8482
        %v8695 = vpack.c.bf16 %v8603, %v8562
        %v8696 = vpack.c.bf16 %v8605, %v8564
        %v8697 = vpack.c.bf16 %v8685, %v8644
        %v8698 = vpack.c.bf16 %v8687, %v8646
        %v8699 = vld [vmem:[%s3] sm:$0xf]
        %v8700 = vld [vmem:[%s3 + $0x4] sm:$0xf]
        %v8701 = vld [vmem:[%s3 + $0x8] sm:$0xf]
        %v8702 = vld [vmem:[%s3 + $0xc] sm:$0xf]
        %v8703 = vld [vmem:[%s3 + $0x10] sm:$0xf]
        %v8704 = vld [vmem:[%s3 + $0x14] sm:$0xf]
        %v8705 = vld [vmem:[%s3 + $0x18] sm:$0xf]
        %v8706 = vld [vmem:[%s3 + $0x1c] sm:$0xf]
        %v8707 = vld [vmem:[%s4] sm:$0xff]
        %v8708 = vld [vmem:[%s4 + $0x8] sm:$0xff]
        %v8709 = vld [vmem:[%s4 + $0x10] sm:$0xff]
        %v8710 = vld [vmem:[%s4 + $0x18] sm:$0xff]
        %v8711 = vld [vmem:[%s4 + $0x20] sm:$0xff]
        %v8712 = vld [vmem:[%s4 + $0x28] sm:$0xff]
        %v8713 = vld [vmem:[%s4 + $0x30] sm:$0xff]
        %v8714 = vld [vmem:[%s4 + $0x38] sm:$0xff]
        %8716 = vset.pattern.permute.xlu0 0
        %8717 = vperm.xlu0 %8716, %v8707
        %v8718 = vpop.permute.xlu0 %8717
        %8721 = vset.pattern.permute.xlu0 0
        %8722 = vperm.xlu0 %8721, %v8708
        %v8723 = vpop.permute.xlu0 %8722
        %8726 = vset.pattern.permute.xlu0 0
        %8727 = vperm.xlu0 %8726, %v8709
        %v8728 = vpop.permute.xlu0 %8727
        %8731 = vset.pattern.permute.xlu0 0
        %8732 = vperm.xlu0 %8731, %v8710
        %v8733 = vpop.permute.xlu0 %8732
        %8736 = vset.pattern.permute.xlu0 0
        %8737 = vperm.xlu0 %8736, %v8711
        %v8738 = vpop.permute.xlu0 %8737
        %8741 = vset.pattern.permute.xlu0 0
        %8742 = vperm.xlu0 %8741, %v8712
        %v8743 = vpop.permute.xlu0 %8742
        %8746 = vset.pattern.permute.xlu0 0
        %8747 = vperm.xlu0 %8746, %v8713
        %v8748 = vpop.permute.xlu0 %8747
        %8751 = vset.pattern.permute.xlu0 0
        %8752 = vperm.xlu0 %8751, %v8714
        %v8753 = vpop.permute.xlu0 %8752
        %v8763 = vunpack.c.l.b16 %v8699
        %v8764 = vunpack.c.l.b16 %v8700
        %v8765 = vunpack.c.l.b16 %v8701
        %v8766 = vunpack.c.l.b16 %v8702
        %v8767 = vunpack.c.l.b16 %v8703
        %v8768 = vunpack.c.l.b16 %v8704
        %v8769 = vunpack.c.l.b16 %v8705
        %v8770 = vunpack.c.l.b16 %v8706
        %v8771 = vpack.c.b16 %v8764, %v8763
        %v8772 = vpack.c.b16 %v8766, %v8765
        %v8773 = vpack.c.b16 %v8768, %v8767
        %v8774 = vpack.c.b16 %v8770, %v8769
        %vm8775 = vcmask 523264
        %v8777 = vsel %vm8775, %v8771, 0
        %v8780 = vsel %vm8775, %v8772, 0
        %v8783 = vsel %vm8775, %v8773, 0
        %v8786 = vsel %vm8775, %v8774, 0
        %8788 = vmatprep.subr.bf16.mxu0 %v8692
        %8789 = vmatpush1.bf16.msra.mxu0 %v8691
        %8790 = vmatprep.subr.bf16.mxu0 %v8694
        %8791 = vmatpush1.bf16.msra.mxu0 %v8693
        %8792 = vmatprep.subr.bf16.mxu0 %v8696
        %8793 = vmatpush1.bf16.msra.mxu0 %v8695
        %8794 = vmatprep.subr.bf16.mxu0 %v8698
        %8795 = vmatpush1.bf16.msra.mxu0 %v8697
        %8796 = vmatprep.subr.bf16.mxu0 0
        %8797 = vmatpush1.bf16.msra.mxu0 0
        %8798 = vmatprep.subr.bf16.mxu0 0
        %8799 = vmatpush1.bf16.msra.mxu0 0
        %8800 = vmatprep.subr.bf16.mxu0 0
        %8801 = vmatpush1.bf16.msra.mxu0 0
        %8802 = vmatprep.subr.bf16.mxu0 0
        %8803 = vmatpush1.bf16.msra.mxu0 0
        %8804 = vmatprep.subr.bf16.mxu0 0
        %8805 = vmatpush1.bf16.msra.mxu0 0
        %8806 = vmatprep.subr.bf16.mxu0 0
        %8807 = vmatpush1.bf16.msra.mxu0 0
        %8808 = vmatprep.subr.bf16.mxu0 0
        %8809 = vmatpush1.bf16.msra.mxu0 0
        %8810 = vmatprep.subr.bf16.mxu0 0
        %8811 = vmatpush1.bf16.msra.mxu0 0
        %8812 = vmatprep.subr.bf16.mxu0 0
        %8813 = vmatpush1.bf16.msra.mxu0 0
        %8814 = vmatprep.subr.bf16.mxu0 0
        %8815 = vmatpush1.bf16.msra.mxu0 0
        %8816 = vmatprep.subr.bf16.mxu0 0
        %8817 = vmatpush1.bf16.msra.mxu0 0
        %8818 = vmatprep.subr.bf16.mxu0 0
        %8819 = vmatpush1.bf16.msra.mxu0 0
        %8820 = vmatprep.mubr.bf16.mxu0 0
        %8821 = vmatmul.mubr.bf16.gmra.mrb[0].mxu0 %v8777
        %v8822 = vpop.f32.mrb[0].mxu0
        %v8823 = vadd.f32 %v8718, %v8822
        %v8824 = vpop.f32.mrb[0].mxu0
        %v8825 = vadd.f32 %v8718, %v8824
        %v8826 = vpop.f32.mrb[0].mxu0
        %v8827 = vadd.f32 %v8723, %v8826
        %v8828 = vpop.f32.mrb[0].mxu0
        %v8829 = vadd.f32 %v8723, %v8828
        %8830 = vmatprep.mubr.bf16.mxu0 0
        %8831 = vmatmul.mubr.bf16.gmra.mrb[0].mxu0 %v8780
        %v8832 = vpop.f32.mrb[0].mxu0
        %v8833 = vadd.f32 %v8728, %v8832
        %v8834 = vpop.f32.mrb[0].mxu0
        %v8835 = vadd.f32 %v8728, %v8834
        %v8836 = vpop.f32.mrb[0].mxu0
        %v8837 = vadd.f32 %v8733, %v8836
        %v8838 = vpop.f32.mrb[0].mxu0
        %v8839 = vadd.f32 %v8733, %v8838
        %8840 = vmatprep.mubr.bf16.mxu0 0
        %8841 = vmatmul.mubr.bf16.gmra.mrb[0].mxu0 %v8783
        %v8842 = vpop.f32.mrb[0].mxu0
        %v8843 = vadd.f32 %v8738, %v8842
        %v8844 = vpop.f32.mrb[0].mxu0
        %v8845 = vadd.f32 %v8738, %v8844
        %v8846 = vpop.f32.mrb[0].mxu0
        %v8847 = vadd.f32 %v8743, %v8846
        %v8848 = vpop.f32.mrb[0].mxu0
        %v8849 = vadd.f32 %v8743, %v8848
        %8850 = vmatprep.mubr.bf16.mxu0 0
        %8851 = vmatmul.mubr.bf16.gmra.mrb[0].mxu0 %v8786
        %v8852 = vpop.f32.mrb[0].mxu0
        %v8853 = vadd.f32 %v8748, %v8852
        %v8854 = vpop.f32.mrb[0].mxu0
        %v8855 = vadd.f32 %v8748, %v8854
        %v8856 = vpop.f32.mrb[0].mxu0
        %v8857 = vadd.f32 %v8753, %v8856
        %v8858 = vpop.f32.mrb[0].mxu0
        %v8859 = vadd.f32 %v8753, %v8858
        %8860 = vdwg.mxu0
        %8861 = vst [vmem:[%s231] sm:$0xff] %v8823
        %8862 = vst [vmem:[%s231 + $0x8] sm:$0xff] %v8825
        %8863 = vst [vmem:[%s231 + $0x10] sm:$0xff] %v8827
        %8864 = vst [vmem:[%s231 + $0x18] sm:$0xff] %v8829
        %8865 = vst [vmem:[%s231 + $0x20] sm:$0xff] %v8833
        %8866 = vst [vmem:[%s231 + $0x28] sm:$0xff] %v8835
        %8867 = vst [vmem:[%s231 + $0x30] sm:$0xff] %v8837
        %8868 = vst [vmem:[%s231 + $0x38] sm:$0xff] %v8839
        %8869 = vst [vmem:[%s231 + $0x40] sm:$0xff] %v8843
        %8870 = vst [vmem:[%s231 + $0x48] sm:$0xff] %v8845
        %8871 = vst [vmem:[%s231 + $0x50] sm:$0xff] %v8847
        %8872 = vst [vmem:[%s231 + $0x58] sm:$0xff] %v8849
        %8873 = vst [vmem:[%s231 + $0x60] sm:$0xff] %v8853
        %8874 = vst [vmem:[%s231 + $0x68] sm:$0xff] %v8855
        %8875 = vst [vmem:[%s231 + $0x70] sm:$0xff] %v8857
        %8876 = vst [vmem:[%s231 + $0x78] sm:$0xff] %v8859
        %s8877 = sand.u32 %s151, 1
        %s8878 = scalar_lea.sflag [#allocation6], %s8877
        %s8879 = sand.u32 %s151, 1
        %s8880 = smul.addr %s8879, 128
        %s8881 = scalar_lea.vmem [#allocation5], %s8880
        // Predicated region
        $region45: #{tpu_custom_call.1} parent=39 // pred_check
          %p8882 = pneg %p161
        $region46: #{tpu_custom_call.1} parent=39 // pred_check_branch
          %8884 = sbr.rel (%p8882) target = $region48
        $region47: #{tpu_custom_call.1} parent=39 // pred_region
          %s8885 = smul.u32 2, %s24
          %s8887 = ssub.s32 2048, 2048
          %8888 = vsyncadd %s8878, %s8887
          %s8889 = smul.addr %s23, 16
          %s8890 = sadd.s32 %s8885, %s8889
          %s8891 = smul.addr %s8890, 128
          %s8892 = scalar_lea.hbm %s5, %s8891
          %s8893 = sshll.u32 %s8881, 4
          %s8894 = int_to_ptr.vmem [resolvable:$true] %s8893
          %8899 = dma.vmem_to_hbm [thread:$0]  %s8894, 2048, %s8892, %s8878, 256, 256, 16
        $region48: #{tpu_custom_call.1} parent=39 // pred_fallthru
          _
      $region40: #{tpu_custom_call.1} parent=5 // pred_fallthru
        _
      %p8900 = scmp.le.s32.totalorder 2, %s14
      // Predicated region
      $region49: #{tpu_custom_call.1} parent=5 // pred_check
        %p8901 = pneg %p8900
      $region50: #{tpu_custom_call.1} parent=5 // pred_check_branch
        %8903 = sbr.rel (%p8901) target = $region52
      $region51: #{tpu_custom_call.1} parent=5 // pred_region
        %s8904 = ssub.s32 %s14, 2
        // Predicated region
        $region53: #{tpu_custom_call.1} parent=51 // pred_check
          %p8905 = pneg %p167
        $region54: #{tpu_custom_call.1} parent=51 // pred_check_branch
          %8907 = sbr.rel (%p8905) target = $region56
        $region55: #{tpu_custom_call.1} parent=51 // pred_region
          %s8908 = sand.u32 %s152, 1
          %s8909 = scalar_lea.sflag [#allocation6], %s8908
          %s8910 = sand.u32 %s152, 1
          %s8911 = smul.addr %s8910, 128
          %s8912 = scalar_lea.vmem [#allocation5], %s8911
          %8913 = dma.done %s8909, 2048
        $region56: #{tpu_custom_call.1} parent=51 // pred_fallthru
          _
      $region52: #{tpu_custom_call.1} parent=5 // pred_fallthru
        _
    $region6: #{tpu_custom_call.1} parent=1 // loop_footer
      %s18 = sadd.s32 1, %s14
    $region7: #{tpu_custom_call.1} parent=1 // loop_footer_branch
      %13 = sbr.rel target = $region3
    $region8: #{tpu_custom_call.1} parent=1 // loop_exit
      _
    %8914 = vsyncpa [#allocation6], 1
    %s8915 = scalar_lea.sflag [#allocation6], 1
    %8916 = vsyncpa %s8915, 1

</llo_original>
